<compile_context>
chip_gen: v6e
topology: v6e:2x2x1
jax: 0.10.0
libtpu: 0.0.40
codegen_flags: <defaults>
</compile_context>

<pallas_src>
import jax
import jax.numpy as jnp
from jax.experimental import pallas as pl
from jax.experimental.pallas import tpu as pltpu

LRELU_SLOPE = 0.2
CPAD = 128  # every channel dimension is padded to one full lane register


# ------------------------------------------------------------------- kernel --

def _make_kernel(img_size, channels, n_classes):
    H = W = img_size
    ds = img_size // 16
    hs = [H, H // 2, H // 4, H // 8]          # input spatial size of each block

    def kernel(x_ref, w1, p1, w2, p2, w3, p3, w4, p4, wh, bh, o_ref,
               s1, s2, s3, s4):
        # ---- stage 0: scatter the NHWC image rows into the zero-initialised,
        #      spatially padded, channel-padded scratch (in-kernel padding).
        s1[...] = jnp.zeros(s1.shape, s1.dtype)
        wp0 = W + 2
        for h in range(H):
            r0 = (1 + h) * wp0 + 1
            s1[r0:r0 + W, 0:channels] = x_ref[0, h * W:(h + 1) * W, :]

        def conv_block(src, h_in, w_ref, p_ref, dst=None):
            """3x3 stride-2 pad-1 conv + bias + LeakyReLU(0.2) + folded eval BN.

            src: flattened padded activation scratch ((h_in+2)*(h_in+2), 128).
            If dst is given, the (padded) output rows are written straight into
            the next block's padded scratch; otherwise the activation is
            returned as a (Ho*Wo, 128) value.
            """
            wp_in = h_in + 2
            ho_n = wo_n = h_in // 2
            wp_out = wo_n + 2
            if dst is not None:
                dst[...] = jnp.zeros(dst.shape, dst.dtype)

            wmat = w_ref[...]                      # (9*128, 128) bf16, resident
            bias = p_ref[0:1, :]
            scale = p_ref[1:2, :]
            shift = p_ref[2:3, :]

            outs = []
            for ho in range(ho_n):
                pieces = []
                for ky in range(3):
                    base = (2 * ho + ky) * wp_in
                    for kx in range(3):
                        if wo_n > 1:
                            idx = pl.ds(base + kx, wo_n, stride=2)
                        else:
                            idx = pl.ds(base + kx, 1)
                        pieces.append(src[idx, :])            # (Wo, 128)
                patch = jnp.concatenate(pieces, axis=1)       # (Wo, 9*128)
                acc = jnp.dot(patch.astype(jnp.bfloat16), wmat,
                              preferred_element_type=jnp.float32)  # (Wo, 128)
                acc = acc + bias
                acc = jnp.maximum(acc, LRELU_SLOPE * acc)     # LeakyReLU(0.2)
                # Dropout2d(0.25): identity at inference.
                acc = acc * scale + shift                     # folded BatchNorm
                if dst is not None:
                    r0 = (1 + ho) * wp_out + 1
                    dst[r0:r0 + wo_n, :] = acc
                else:
                    outs.append(acc)
            if dst is None:
                return outs[0] if len(outs) == 1 else jnp.concatenate(outs, 0)
            return None

        conv_block(s1, hs[0], w1, p1, dst=s2)
        conv_block(s2, hs[1], w2, p2, dst=s3)
        conv_block(s3, hs[2], w3, p3, dst=s4)
        feat = conv_block(s4, hs[3], w4, p4, dst=None)        # (ds*ds, 128)

        # ---- fused classification head: one padded 128-lane matmul.
        logits = bh[...]                                      # (1, 128) f32
        for j in range(ds * ds):
            logits = logits + jnp.dot(
                feat[j:j + 1, :].astype(jnp.bfloat16),
                wh[j * CPAD:(j + 1) * CPAD, :],
                preferred_element_type=jnp.float32)

        lane = jax.lax.broadcasted_iota(jnp.int32, (1, CPAD), 1)
        # adv head (lane 0): Sigmoid via the numerically stable tanh form.
        sig = 0.5 * (jnp.tanh(0.5 * logits) + 1.0)
        # aux head (lanes 1..n_classes): masked Softmax.
        cls = (lane >= 1) & (lane <= n_classes)
        masked = jnp.where(cls, logits, -1e30)
        m = jnp.max(masked, axis=-1, keepdims=True)
        e = jnp.where(cls, jnp.exp(masked - m), 0.0)
        sm = e * pl.reciprocal(jnp.sum(e, axis=-1, keepdims=True), approx=True)
        o_ref[0] = jnp.where(lane == 0, sig, sm)              # lane-dense store

    return kernel


# ------------------------------------------------------------------ wrapper --

def build_forward(channels, img_size, n_classes):
    assert img_size % 16 == 0 and img_size >= 16
    H = W = img_size
    hs = [H, H // 2, H // 4, H // 8]
    kern = _make_kernel(img_size, channels, n_classes)

    def full(shape):
        return pl.BlockSpec(shape, lambda b, _n=len(shape): (0,) * _n)

    def fwd(packed, img_nchw):
        B = img_nchw.shape[0]
        # Only JAX-side preprocessing: NCHW -> NHWC row-major rows.
        x = jnp.transpose(img_nchw, (0, 2, 3, 1)).reshape(B, H * W, channels)

        in_specs = [pl.BlockSpec((1, H * W, channels), lambda b: (b, 0, 0))]
        args = [x]
        for blk in packed["blocks"]:
            in_specs += [full(blk["w"].shape), full(blk["p"].shape)]
            args += [blk["w"], blk["p"]]
        in_specs += [full(packed["head_w"].shape), full(packed["head_b"].shape)]
        args += [packed["head_w"], packed["head_b"]]

        scratch = [pltpu.VMEM(((h + 2) * (h + 2), CPAD), jnp.float32)
                   for h in hs]

        out = pl.pallas_call(
            kern,
            out_shape=jax.ShapeDtypeStruct((B, 1, CPAD), jnp.float32),
            grid_spec=pltpu.PrefetchScalarGridSpec(
                num_scalar_prefetch=0,
                grid=(B,),
                in_specs=in_specs,
                out_specs=pl.BlockSpec((1, 1, CPAD), lambda b: (b, 0, 0)),
                scratch_shapes=scratch,
            ),
            compiler_params=pltpu.CompilerParams(
                dimension_semantics=("parallel",)),
        )(*args)

        out = out[:, 0, :]                       # (B, 128) lane-dense slab
        return out[:, 0:1], out[:, 1:1 + n_classes]

    return fwd


# --------------------------------------------------------------- parameters --

def init_params(key, channels, n_classes, img_size):
    """PyTorch-layout parameters + folded eval BatchNorm scale/shift."""
    filters = [channels, 16, 32, 64, 128]
    has_bn = [False, True, True, True]
    params = {"blocks": []}
    for i in range(4):
        cin, cout = filters[i], filters[i + 1]
        key, kw, kb, kg, kbt, km, kv = jax.random.split(key, 7)
        w = 0.1 * jax.random.normal(kw, (cout, cin, 3, 3), jnp.float32)
        b = 0.05 * jax.random.normal(kb, (cout,), jnp.float32)
        if has_bn[i]:
            eps = 0.8  # nn.BatchNorm2d(out_filters, 0.8): 2nd positional arg is eps
            gamma = 1.0 + 0.05 * jax.random.normal(kg, (cout,), jnp.float32)
            beta = 0.05 * jax.random.normal(kbt, (cout,), jnp.float32)
            rmean = 0.05 * jax.random.normal(km, (cout,), jnp.float32)
            rvar = 1.0 + 0.1 * jax.random.uniform(kv, (cout,), jnp.float32)
            scale = gamma / jnp.sqrt(rvar + eps)
            shift = beta - rmean * scale
        else:
            scale = jnp.ones((cout,), jnp.float32)
            shift = jnp.zeros((cout,), jnp.float32)
        params["blocks"].append({"w": w, "b": b, "scale": scale, "shift": shift})

    ds = img_size // 16
    feat = 128 * ds * ds
    key, k1, k2, k3, k4 = jax.random.split(key, 5)
    params["adv_w"] = 0.1 * jax.random.normal(k1, (feat, 1), jnp.float32)
    params["adv_b"] = 0.05 * jax.random.normal(k2, (1,), jnp.float32)
    params["aux_w"] = 0.1 * jax.random.normal(k3, (feat, n_classes), jnp.float32)
    params["aux_b"] = 0.05 * jax.random.normal(k4, (n_classes,), jnp.float32)
    return params


def pack_params(params, n_classes, img_size):
    """Repack weights into kernel-ready, 128-lane padded bf16 matrices."""
    ds = img_size // 16
    packed = {"blocks": []}
    for blk in params["blocks"]:
        w = blk["w"]                                   # (Cout, Cin, 3, 3)
        cout, cin = w.shape[0], w.shape[1]
        wm = jnp.transpose(w, (2, 3, 1, 0))            # (3, 3, Cin, Cout)
        wm = jnp.pad(wm, ((0, 0), (0, 0), (0, CPAD - cin), (0, CPAD - cout)))
        wm = wm.reshape(9 * CPAD, CPAD).astype(jnp.bfloat16)
        p = jnp.stack([
            jnp.pad(blk["b"], (0, CPAD - cout)),
            jnp.pad(blk["scale"], (0, CPAD - cout)),
            jnp.pad(blk["shift"], (0, CPAD - cout)),
        ]).astype(jnp.float32)                         # (3, 128)
        packed["blocks"].append({"w": wm, "p": p})

    # Head: [adv | aux | 0-pad] columns, rows reordered from PyTorch's NCHW
    # flatten order (c, h, w) to the kernel's NHWC row order (h, w, c).
    feat = 128 * ds * ds
    wh = jnp.concatenate([params["adv_w"], params["aux_w"]], axis=1)
    wh = jnp.pad(wh, ((0, 0), (0, CPAD - 1 - n_classes)))
    wh = wh.reshape(128, ds, ds, CPAD).transpose(1, 2, 0, 3).reshape(feat, CPAD)
    packed["head_w"] = wh.astype(jnp.bfloat16)
    bh = jnp.concatenate([params["adv_b"], params["aux_b"]])
    packed["head_b"] = jnp.pad(bh, (0, CPAD - 1 - n_classes)) \
                          .reshape(1, CPAD).astype(jnp.float32)
    return packed


# ---------------------------------------------------------- plain-JAX check --

def reference_forward(params, img_nchw):
    x = jnp.transpose(img_nchw, (0, 2, 3, 1))          # NHWC, f32
    for blk in params["blocks"]:
        w = jnp.transpose(blk["w"], (2, 3, 1, 0)).astype(jnp.bfloat16)  # HWIO
        y = jax.lax.conv_general_dilated(
            x.astype(jnp.bfloat16), w, (2, 2), ((1, 1), (1, 1)),
            dimension_numbers=("NHWC", "HWIO", "NHWC"),
            preferred_element_type=jnp.float32)
        y = y + blk["b"]
        y = jnp.maximum(y, LRELU_SLOPE * y)
        x = y * blk["scale"] + blk["shift"]
    B = x.shape[0]
    flat = jnp.transpose(x, (0, 3, 1, 2)).reshape(B, -1)   # PyTorch flatten order
    adv = jnp.dot(flat.astype(jnp.bfloat16),
                  params["adv_w"].astype(jnp.bfloat16),
                  preferred_element_type=jnp.float32) + params["adv_b"]
    aux = jnp.dot(flat.astype(jnp.bfloat16),
                  params["aux_w"].astype(jnp.bfloat16),
                  preferred_element_type=jnp.float32) + params["aux_b"]
    return jax.nn.sigmoid(adv), jax.nn.softmax(aux, axis=1)


# --------------------------------------------------------------------- main --

if __name__ == "__main__":
    batch, channels, img_size, n_classes = 2, 4, 16, 10

    key = jax.random.PRNGKey(0)
    k_img, k_par = jax.random.split(key)
    img = jax.random.normal(k_img, (batch, channels, img_size, img_size),
                            jnp.float32)
    params = init_params(k_par, channels, n_classes, img_size)
    packed = pack_params(params, n_classes, img_size)

    fwd = jax.jit(build_forward(channels, img_size, n_classes))
    validity, label = fwd(packed, img)
    jax.block_until_ready((validity, label))

    assert validity.shape == (batch, 1)
    assert label.shape == (batch, n_classes)

    # Numerical sanity check against a plain-JAX (same bf16-matmul) reference.
    ref_v, ref_l = reference_forward(params, img)
    assert jnp.allclose(validity, ref_v, atol=2e-2)
    assert jnp.allclose(label, ref_l, atol=2e-2)
    assert jnp.allclose(jnp.sum(label, axis=1), 1.0, atol=1e-2)

    print("KERNEL_OK")
</pallas_src>

<mosaic_0001>
module attributes {stable_mosaic.version = 11 : i64} {
  func.func @kernel(%arg0: i32, %arg1: memref<1x256x4xf32, #tpu.memory_space<vmem>>, %arg2: memref<1152x128xbf16, #tpu.memory_space<vmem>>, %arg3: memref<3x128xf32, #tpu.memory_space<vmem>>, %arg4: memref<1152x128xbf16, #tpu.memory_space<vmem>>, %arg5: memref<3x128xf32, #tpu.memory_space<vmem>>, %arg6: memref<1152x128xbf16, #tpu.memory_space<vmem>>, %arg7: memref<3x128xf32, #tpu.memory_space<vmem>>, %arg8: memref<1152x128xbf16, #tpu.memory_space<vmem>>, %arg9: memref<3x128xf32, #tpu.memory_space<vmem>>, %arg10: memref<128x128xbf16, #tpu.memory_space<vmem>>, %arg11: memref<1x128xf32, #tpu.memory_space<vmem>>, %arg12: memref<1x1x128xf32, #tpu.memory_space<vmem>>, %arg13: memref<324x128xf32, #tpu.memory_space<vmem>>, %arg14: memref<100x128xf32, #tpu.memory_space<vmem>>, %arg15: memref<36x128xf32, #tpu.memory_space<vmem>>, %arg16: memref<16x128xf32, #tpu.memory_space<vmem>>) attributes {dimension_semantics = [#tpu.dimension_semantics<parallel>], iteration_bounds = array<i64: 2>, scalar_prefetch = 0 : i64, scratch_operands = 4 : i64, tpu.core_type = #tpu.core_type<tc>, window_params = [{transform_indices = @transform_0, window_bounds = array<i64: 1, 256, 4>}, {pipeline_mode = #tpu.pipeline_mode<synchronous>, transform_indices = @transform_1, window_bounds = array<i64: 1152, 128>}, {pipeline_mode = #tpu.pipeline_mode<synchronous>, transform_indices = @transform_2, window_bounds = array<i64: 3, 128>}, {pipeline_mode = #tpu.pipeline_mode<synchronous>, transform_indices = @transform_3, window_bounds = array<i64: 1152, 128>}, {pipeline_mode = #tpu.pipeline_mode<synchronous>, transform_indices = @transform_4, window_bounds = array<i64: 3, 128>}, {pipeline_mode = #tpu.pipeline_mode<synchronous>, transform_indices = @transform_5, window_bounds = array<i64: 1152, 128>}, {pipeline_mode = #tpu.pipeline_mode<synchronous>, transform_indices = @transform_6, window_bounds = array<i64: 3, 128>}, {pipeline_mode = #tpu.pipeline_mode<synchronous>, transform_indices = @transform_7, window_bounds = array<i64: 1152, 128>}, {pipeline_mode = #tpu.pipeline_mode<synchronous>, transform_indices = @transform_8, window_bounds = array<i64: 3, 128>}, {pipeline_mode = #tpu.pipeline_mode<synchronous>, transform_indices = @transform_9, window_bounds = array<i64: 128, 128>}, {pipeline_mode = #tpu.pipeline_mode<synchronous>, transform_indices = @transform_10, window_bounds = array<i64: 1, 128>}, {transform_indices = @transform_11, window_bounds = array<i64: 1, 1, 128>}]} {
    %cst = arith.constant 0.000000e+00 : f32
    %0 = vector.broadcast %cst : f32 to vector<324x128xf32>
    %c0 = arith.constant 0 : index
    %c0_0 = arith.constant 0 : index
    %1 = vector.load %arg13[%c0, %c0_0] : memref<324x128xf32, #tpu.memory_space<vmem>>, vector<324x128xf32>
    tpu.vector_store %arg13[%c0, %c0_0], %0 {strides = array<i32>} : memref<324x128xf32, #tpu.memory_space<vmem>>, vector<324x128xf32>,
    %c0_1 = arith.constant 0 : index
    %c0_2 = arith.constant 0 : index
    %c0_3 = arith.constant 0 : index
    %2 = vector.load %arg1[%c0_1, %c0_2, %c0_3] : memref<1x256x4xf32, #tpu.memory_space<vmem>>, vector<1x16x4xf32>
    %3 = vector.shape_cast %2 : vector<1x16x4xf32> to vector<16x4xf32>
    %c19 = arith.constant 19 : index
    %c0_4 = arith.constant 0 : index
    %4 = vector.load %arg13[%c19, %c0_4] : memref<324x128xf32, #tpu.memory_space<vmem>>, vector<16x4xf32>
    tpu.vector_store %arg13[%c19, %c0_4], %3 {strides = array<i32>} : memref<324x128xf32, #tpu.memory_space<vmem>>, vector<16x4xf32>,
    %c0_5 = arith.constant 0 : index
    %c16 = arith.constant 16 : index
    %c0_6 = arith.constant 0 : index
    %5 = vector.load %arg1[%c0_5, %c16, %c0_6] : memref<1x256x4xf32, #tpu.memory_space<vmem>>, vector<1x16x4xf32>
    %6 = vector.shape_cast %5 : vector<1x16x4xf32> to vector<16x4xf32>
    %c37 = arith.constant 37 : index
    %c0_7 = arith.constant 0 : index
    %7 = vector.load %arg13[%c37, %c0_7] : memref<324x128xf32, #tpu.memory_space<vmem>>, vector<16x4xf32>
    tpu.vector_store %arg13[%c37, %c0_7], %6 {strides = array<i32>} : memref<324x128xf32, #tpu.memory_space<vmem>>, vector<16x4xf32>,
    %c0_8 = arith.constant 0 : index
    %c32 = arith.constant 32 : index
    %c0_9 = arith.constant 0 : index
    %8 = vector.load %arg1[%c0_8, %c32, %c0_9] : memref<1x256x4xf32, #tpu.memory_space<vmem>>, vector<1x16x4xf32>
    %9 = vector.shape_cast %8 : vector<1x16x4xf32> to vector<16x4xf32>
    %c55 = arith.constant 55 : index
    %c0_10 = arith.constant 0 : index
    %10 = vector.load %arg13[%c55, %c0_10] : memref<324x128xf32, #tpu.memory_space<vmem>>, vector<16x4xf32>
    tpu.vector_store %arg13[%c55, %c0_10], %9 {strides = array<i32>} : memref<324x128xf32, #tpu.memory_space<vmem>>, vector<16x4xf32>,
    %c0_11 = arith.constant 0 : index
    %c48 = arith.constant 48 : index
    %c0_12 = arith.constant 0 : index
    %11 = vector.load %arg1[%c0_11, %c48, %c0_12] : memref<1x256x4xf32, #tpu.memory_space<vmem>>, vector<1x16x4xf32>
    %12 = vector.shape_cast %11 : vector<1x16x4xf32> to vector<16x4xf32>
    %c73 = arith.constant 73 : index
    %c0_13 = arith.constant 0 : index
    %13 = vector.load %arg13[%c73, %c0_13] : memref<324x128xf32, #tpu.memory_space<vmem>>, vector<16x4xf32>
    tpu.vector_store %arg13[%c73, %c0_13], %12 {strides = array<i32>} : memref<324x128xf32, #tpu.memory_space<vmem>>, vector<16x4xf32>,
    %c0_14 = arith.constant 0 : index
    %c64 = arith.constant 64 : index
    %c0_15 = arith.constant 0 : index
    %14 = vector.load %arg1[%c0_14, %c64, %c0_15] : memref<1x256x4xf32, #tpu.memory_space<vmem>>, vector<1x16x4xf32>
    %15 = vector.shape_cast %14 : vector<1x16x4xf32> to vector<16x4xf32>
    %c91 = arith.constant 91 : index
    %c0_16 = arith.constant 0 : index
    %16 = vector.load %arg13[%c91, %c0_16] : memref<324x128xf32, #tpu.memory_space<vmem>>, vector<16x4xf32>
    tpu.vector_store %arg13[%c91, %c0_16], %15 {strides = array<i32>} : memref<324x128xf32, #tpu.memory_space<vmem>>, vector<16x4xf32>,
    %c0_17 = arith.constant 0 : index
    %c80 = arith.constant 80 : index
    %c0_18 = arith.constant 0 : index
    %17 = vector.load %arg1[%c0_17, %c80, %c0_18] : memref<1x256x4xf32, #tpu.memory_space<vmem>>, vector<1x16x4xf32>
    %18 = vector.shape_cast %17 : vector<1x16x4xf32> to vector<16x4xf32>
    %c109 = arith.constant 109 : index
    %c0_19 = arith.constant 0 : index
    %19 = vector.load %arg13[%c109, %c0_19] : memref<324x128xf32, #tpu.memory_space<vmem>>, vector<16x4xf32>
    tpu.vector_store %arg13[%c109, %c0_19], %18 {strides = array<i32>} : memref<324x128xf32, #tpu.memory_space<vmem>>, vector<16x4xf32>,
    %c0_20 = arith.constant 0 : index
    %c96 = arith.constant 96 : index
    %c0_21 = arith.constant 0 : index
    %20 = vector.load %arg1[%c0_20, %c96, %c0_21] : memref<1x256x4xf32, #tpu.memory_space<vmem>>, vector<1x16x4xf32>
    %21 = vector.shape_cast %20 : vector<1x16x4xf32> to vector<16x4xf32>
    %c127 = arith.constant 127 : index
    %c0_22 = arith.constant 0 : index
    %22 = vector.load %arg13[%c127, %c0_22] : memref<324x128xf32, #tpu.memory_space<vmem>>, vector<16x4xf32>
    tpu.vector_store %arg13[%c127, %c0_22], %21 {strides = array<i32>} : memref<324x128xf32, #tpu.memory_space<vmem>>, vector<16x4xf32>,
    %c0_23 = arith.constant 0 : index
    %c112 = arith.constant 112 : index
    %c0_24 = arith.constant 0 : index
    %23 = vector.load %arg1[%c0_23, %c112, %c0_24] : memref<1x256x4xf32, #tpu.memory_space<vmem>>, vector<1x16x4xf32>
    %24 = vector.shape_cast %23 : vector<1x16x4xf32> to vector<16x4xf32>
    %c145 = arith.constant 145 : index
    %c0_25 = arith.constant 0 : index
    %25 = vector.load %arg13[%c145, %c0_25] : memref<324x128xf32, #tpu.memory_space<vmem>>, vector<16x4xf32>
    tpu.vector_store %arg13[%c145, %c0_25], %24 {strides = array<i32>} : memref<324x128xf32, #tpu.memory_space<vmem>>, vector<16x4xf32>,
    %c0_26 = arith.constant 0 : index
    %c128 = arith.constant 128 : index
    %c0_27 = arith.constant 0 : index
    %26 = vector.load %arg1[%c0_26, %c128, %c0_27] : memref<1x256x4xf32, #tpu.memory_space<vmem>>, vector<1x16x4xf32>
    %27 = vector.shape_cast %26 : vector<1x16x4xf32> to vector<16x4xf32>
    %c163 = arith.constant 163 : index
    %c0_28 = arith.constant 0 : index
    %28 = vector.load %arg13[%c163, %c0_28] : memref<324x128xf32, #tpu.memory_space<vmem>>, vector<16x4xf32>
    tpu.vector_store %arg13[%c163, %c0_28], %27 {strides = array<i32>} : memref<324x128xf32, #tpu.memory_space<vmem>>, vector<16x4xf32>,
    %c0_29 = arith.constant 0 : index
    %c144 = arith.constant 144 : index
    %c0_30 = arith.constant 0 : index
    %29 = vector.load %arg1[%c0_29, %c144, %c0_30] : memref<1x256x4xf32, #tpu.memory_space<vmem>>, vector<1x16x4xf32>
    %30 = vector.shape_cast %29 : vector<1x16x4xf32> to vector<16x4xf32>
    %c181 = arith.constant 181 : index
    %c0_31 = arith.constant 0 : index
    %31 = vector.load %arg13[%c181, %c0_31] : memref<324x128xf32, #tpu.memory_space<vmem>>, vector<16x4xf32>
    tpu.vector_store %arg13[%c181, %c0_31], %30 {strides = array<i32>} : memref<324x128xf32, #tpu.memory_space<vmem>>, vector<16x4xf32>,
    %c0_32 = arith.constant 0 : index
    %c160 = arith.constant 160 : index
    %c0_33 = arith.constant 0 : index
    %32 = vector.load %arg1[%c0_32, %c160, %c0_33] : memref<1x256x4xf32, #tpu.memory_space<vmem>>, vector<1x16x4xf32>
    %33 = vector.shape_cast %32 : vector<1x16x4xf32> to vector<16x4xf32>
    %c199 = arith.constant 199 : index
    %c0_34 = arith.constant 0 : index
    %34 = vector.load %arg13[%c199, %c0_34] : memref<324x128xf32, #tpu.memory_space<vmem>>, vector<16x4xf32>
    tpu.vector_store %arg13[%c199, %c0_34], %33 {strides = array<i32>} : memref<324x128xf32, #tpu.memory_space<vmem>>, vector<16x4xf32>,
    %c0_35 = arith.constant 0 : index
    %c176 = arith.constant 176 : index
    %c0_36 = arith.constant 0 : index
    %35 = vector.load %arg1[%c0_35, %c176, %c0_36] : memref<1x256x4xf32, #tpu.memory_space<vmem>>, vector<1x16x4xf32>
    %36 = vector.shape_cast %35 : vector<1x16x4xf32> to vector<16x4xf32>
    %c217 = arith.constant 217 : index
    %c0_37 = arith.constant 0 : index
    %37 = vector.load %arg13[%c217, %c0_37] : memref<324x128xf32, #tpu.memory_space<vmem>>, vector<16x4xf32>
    tpu.vector_store %arg13[%c217, %c0_37], %36 {strides = array<i32>} : memref<324x128xf32, #tpu.memory_space<vmem>>, vector<16x4xf32>,
    %c0_38 = arith.constant 0 : index
    %c192 = arith.constant 192 : index
    %c0_39 = arith.constant 0 : index
    %38 = vector.load %arg1[%c0_38, %c192, %c0_39] : memref<1x256x4xf32, #tpu.memory_space<vmem>>, vector<1x16x4xf32>
    %39 = vector.shape_cast %38 : vector<1x16x4xf32> to vector<16x4xf32>
    %c235 = arith.constant 235 : index
    %c0_40 = arith.constant 0 : index
    %40 = vector.load %arg13[%c235, %c0_40] : memref<324x128xf32, #tpu.memory_space<vmem>>, vector<16x4xf32>
    tpu.vector_store %arg13[%c235, %c0_40], %39 {strides = array<i32>} : memref<324x128xf32, #tpu.memory_space<vmem>>, vector<16x4xf32>,
    %c0_41 = arith.constant 0 : index
    %c208 = arith.constant 208 : index
    %c0_42 = arith.constant 0 : index
    %41 = vector.load %arg1[%c0_41, %c208, %c0_42] : memref<1x256x4xf32, #tpu.memory_space<vmem>>, vector<1x16x4xf32>
    %42 = vector.shape_cast %41 : vector<1x16x4xf32> to vector<16x4xf32>
    %c253 = arith.constant 253 : index
    %c0_43 = arith.constant 0 : index
    %43 = vector.load %arg13[%c253, %c0_43] : memref<324x128xf32, #tpu.memory_space<vmem>>, vector<16x4xf32>
    tpu.vector_store %arg13[%c253, %c0_43], %42 {strides = array<i32>} : memref<324x128xf32, #tpu.memory_space<vmem>>, vector<16x4xf32>,
    %c0_44 = arith.constant 0 : index
    %c224 = arith.constant 224 : index
    %c0_45 = arith.constant 0 : index
    %44 = vector.load %arg1[%c0_44, %c224, %c0_45] : memref<1x256x4xf32, #tpu.memory_space<vmem>>, vector<1x16x4xf32>
    %45 = vector.shape_cast %44 : vector<1x16x4xf32> to vector<16x4xf32>
    %c271 = arith.constant 271 : index
    %c0_46 = arith.constant 0 : index
    %46 = vector.load %arg13[%c271, %c0_46] : memref<324x128xf32, #tpu.memory_space<vmem>>, vector<16x4xf32>
    tpu.vector_store %arg13[%c271, %c0_46], %45 {strides = array<i32>} : memref<324x128xf32, #tpu.memory_space<vmem>>, vector<16x4xf32>,
    %c0_47 = arith.constant 0 : index
    %c240 = arith.constant 240 : index
    %c0_48 = arith.constant 0 : index
    %47 = vector.load %arg1[%c0_47, %c240, %c0_48] : memref<1x256x4xf32, #tpu.memory_space<vmem>>, vector<1x16x4xf32>
    %48 = vector.shape_cast %47 : vector<1x16x4xf32> to vector<16x4xf32>
    %c289 = arith.constant 289 : index
    %c0_49 = arith.constant 0 : index
    %49 = vector.load %arg13[%c289, %c0_49] : memref<324x128xf32, #tpu.memory_space<vmem>>, vector<16x4xf32>
    tpu.vector_store %arg13[%c289, %c0_49], %48 {strides = array<i32>} : memref<324x128xf32, #tpu.memory_space<vmem>>, vector<16x4xf32>,
    %cst_50 = arith.constant 0.000000e+00 : f32
    %50 = vector.broadcast %cst_50 : f32 to vector<100x128xf32>
    %c0_51 = arith.constant 0 : index
    %c0_52 = arith.constant 0 : index
    %51 = vector.load %arg14[%c0_51, %c0_52] : memref<100x128xf32, #tpu.memory_space<vmem>>, vector<100x128xf32>
    tpu.vector_store %arg14[%c0_51, %c0_52], %50 {strides = array<i32>} : memref<100x128xf32, #tpu.memory_space<vmem>>, vector<100x128xf32>,
    %c0_53 = arith.constant 0 : index
    %c0_54 = arith.constant 0 : index
    %52 = vector.load %arg2[%c0_53, %c0_54] : memref<1152x128xbf16, #tpu.memory_space<vmem>>, vector<1152x128xbf16>
    %c0_55 = arith.constant 0 : index
    %c0_56 = arith.constant 0 : index
    %53 = vector.load %arg3[%c0_55, %c0_56] : memref<3x128xf32, #tpu.memory_space<vmem>>, vector<1x128xf32>
    %c1 = arith.constant 1 : index
    %c0_57 = arith.constant 0 : index
    %54 = vector.load %arg3[%c1, %c0_57] : memref<3x128xf32, #tpu.memory_space<vmem>>, vector<1x128xf32>
    %c2 = arith.constant 2 : index
    %c0_58 = arith.constant 0 : index
    %55 = vector.load %arg3[%c2, %c0_58] : memref<3x128xf32, #tpu.memory_space<vmem>>, vector<1x128xf32>
    %c0_59 = arith.constant 0 : index
    %c0_60 = arith.constant 0 : index
    %56 = tpu.strided_load %arg13[%c0_59, %c0_60] {strides = array<i32: 2, 1>} : memref<324x128xf32, #tpu.memory_space<vmem>>, vector<8x128xf32>
    %c1_61 = arith.constant 1 : index
    %c0_62 = arith.constant 0 : index
    %57 = tpu.strided_load %arg13[%c1_61, %c0_62] {strides = array<i32: 2, 1>} : memref<324x128xf32, #tpu.memory_space<vmem>>, vector<8x128xf32>
    %c2_63 = arith.constant 2 : index
    %c0_64 = arith.constant 0 : index
    %58 = tpu.strided_load %arg13[%c2_63, %c0_64] {strides = array<i32: 2, 1>} : memref<324x128xf32, #tpu.memory_space<vmem>>, vector<8x128xf32>
    %c18 = arith.constant 18 : index
    %c0_65 = arith.constant 0 : index
    %59 = tpu.strided_load %arg13[%c18, %c0_65] {strides = array<i32: 2, 1>} : memref<324x128xf32, #tpu.memory_space<vmem>>, vector<8x128xf32>
    %c19_66 = arith.constant 19 : index
    %c0_67 = arith.constant 0 : index
    %60 = tpu.strided_load %arg13[%c19_66, %c0_67] {strides = array<i32: 2, 1>} : memref<324x128xf32, #tpu.memory_space<vmem>>, vector<8x128xf32>
    %c20 = arith.constant 20 : index
    %c0_68 = arith.constant 0 : index
    %61 = tpu.strided_load %arg13[%c20, %c0_68] {strides = array<i32: 2, 1>} : memref<324x128xf32, #tpu.memory_space<vmem>>, vector<8x128xf32>
    %c36 = arith.constant 36 : index
    %c0_69 = arith.constant 0 : index
    %62 = tpu.strided_load %arg13[%c36, %c0_69] {strides = array<i32: 2, 1>} : memref<324x128xf32, #tpu.memory_space<vmem>>, vector<8x128xf32>
    %c37_70 = arith.constant 37 : index
    %c0_71 = arith.constant 0 : index
    %63 = tpu.strided_load %arg13[%c37_70, %c0_71] {strides = array<i32: 2, 1>} : memref<324x128xf32, #tpu.memory_space<vmem>>, vector<8x128xf32>
    %c38 = arith.constant 38 : index
    %c0_72 = arith.constant 0 : index
    %64 = tpu.strided_load %arg13[%c38, %c0_72] {strides = array<i32: 2, 1>} : memref<324x128xf32, #tpu.memory_space<vmem>>, vector<8x128xf32>
    %65 = tpu.concatenate %56, %57, %58, %59, %60, %61, %62, %63, %64 in 1 : vector<8x128xf32>, vector<8x128xf32>, vector<8x128xf32>, vector<8x128xf32>, vector<8x128xf32>, vector<8x128xf32>, vector<8x128xf32>, vector<8x128xf32>, vector<8x128xf32> -> vector<8x1152xf32>
    %66 = arith.truncf %65 : vector<8x1152xf32> to vector<8x1152xbf16>
    %cst_73 = arith.constant dense<0.000000e+00> : vector<8x128xf32>
    %67 = tpu.matmul %66, %52, %cst_73 {dimension_numbers = #tpu.dot_dimension_numbers<[1], [0], [0], [1], [0, 0, 1, 1], [], []>} : vector<8x1152xbf16>, vector<1152x128xbf16>, vector<8x128xf32> -> vector<8x128xf32>
    %68 = vector.broadcast %53 : vector<1x128xf32> to vector<8x128xf32>
    %69 = arith.addf %67, %68 : vector<8x128xf32>
    %cst_74 = arith.constant 2.000000e-01 : f32
    %70 = vector.broadcast %cst_74 : f32 to vector<8x128xf32>
    %71 = arith.mulf %70, %69 : vector<8x128xf32>
    %72 = arith.maximumf %69, %71 : vector<8x128xf32>
    %73 = vector.broadcast %54 : vector<1x128xf32> to vector<8x128xf32>
    %74 = arith.mulf %72, %73 : vector<8x128xf32>
    %75 = vector.broadcast %55 : vector<1x128xf32> to vector<8x128xf32>
    %76 = arith.addf %74, %75 : vector<8x128xf32>
    %c11 = arith.constant 11 : index
    %c0_75 = arith.constant 0 : index
    %77 = vector.load %arg14[%c11, %c0_75] : memref<100x128xf32, #tpu.memory_space<vmem>>, vector<8x128xf32>
    tpu.vector_store %arg14[%c11, %c0_75], %76 {strides = array<i32>} : memref<100x128xf32, #tpu.memory_space<vmem>>, vector<8x128xf32>,
    %c36_76 = arith.constant 36 : index
    %c0_77 = arith.constant 0 : index
    %78 = tpu.strided_load %arg13[%c36_76, %c0_77] {strides = array<i32: 2, 1>} : memref<324x128xf32, #tpu.memory_space<vmem>>, vector<8x128xf32>
    %c37_78 = arith.constant 37 : index
    %c0_79 = arith.constant 0 : index
    %79 = tpu.strided_load %arg13[%c37_78, %c0_79] {strides = array<i32: 2, 1>} : memref<324x128xf32, #tpu.memory_space<vmem>>, vector<8x128xf32>
    %c38_80 = arith.constant 38 : index
    %c0_81 = arith.constant 0 : index
    %80 = tpu.strided_load %arg13[%c38_80, %c0_81] {strides = array<i32: 2, 1>} : memref<324x128xf32, #tpu.memory_space<vmem>>, vector<8x128xf32>
    %c54 = arith.constant 54 : index
    %c0_82 = arith.constant 0 : index
    %81 = tpu.strided_load %arg13[%c54, %c0_82] {strides = array<i32: 2, 1>} : memref<324x128xf32, #tpu.memory_space<vmem>>, vector<8x128xf32>
    %c55_83 = arith.constant 55 : index
    %c0_84 = arith.constant 0 : index
    %82 = tpu.strided_load %arg13[%c55_83, %c0_84] {strides = array<i32: 2, 1>} : memref<324x128xf32, #tpu.memory_space<vmem>>, vector<8x128xf32>
    %c56 = arith.constant 56 : index
    %c0_85 = arith.constant 0 : index
    %83 = tpu.strided_load %arg13[%c56, %c0_85] {strides = array<i32: 2, 1>} : memref<324x128xf32, #tpu.memory_space<vmem>>, vector<8x128xf32>
    %c72 = arith.constant 72 : index
    %c0_86 = arith.constant 0 : index
    %84 = tpu.strided_load %arg13[%c72, %c0_86] {strides = array<i32: 2, 1>} : memref<324x128xf32, #tpu.memory_space<vmem>>, vector<8x128xf32>
    %c73_87 = arith.constant 73 : index
    %c0_88 = arith.constant 0 : index
    %85 = tpu.strided_load %arg13[%c73_87, %c0_88] {strides = array<i32: 2, 1>} : memref<324x128xf32, #tpu.memory_space<vmem>>, vector<8x128xf32>
    %c74 = arith.constant 74 : index
    %c0_89 = arith.constant 0 : index
    %86 = tpu.strided_load %arg13[%c74, %c0_89] {strides = array<i32: 2, 1>} : memref<324x128xf32, #tpu.memory_space<vmem>>, vector<8x128xf32>
    %87 = tpu.concatenate %78, %79, %80, %81, %82, %83, %84, %85, %86 in 1 : vector<8x128xf32>, vector<8x128xf32>, vector<8x128xf32>, vector<8x128xf32>, vector<8x128xf32>, vector<8x128xf32>, vector<8x128xf32>, vector<8x128xf32>, vector<8x128xf32> -> vector<8x1152xf32>
    %88 = arith.truncf %87 : vector<8x1152xf32> to vector<8x1152xbf16>
    %cst_90 = arith.constant dense<0.000000e+00> : vector<8x128xf32>
    %89 = tpu.matmul %88, %52, %cst_90 {dimension_numbers = #tpu.dot_dimension_numbers<[1], [0], [0], [1], [0, 0, 1, 1], [], []>} : vector<8x1152xbf16>, vector<1152x128xbf16>, vector<8x128xf32> -> vector<8x128xf32>
    %90 = vector.broadcast %53 : vector<1x128xf32> to vector<8x128xf32>
    %91 = arith.addf %89, %90 : vector<8x128xf32>
    %cst_91 = arith.constant 2.000000e-01 : f32
    %92 = vector.broadcast %cst_91 : f32 to vector<8x128xf32>
    %93 = arith.mulf %92, %91 : vector<8x128xf32>
    %94 = arith.maximumf %91, %93 : vector<8x128xf32>
    %95 = vector.broadcast %54 : vector<1x128xf32> to vector<8x128xf32>
    %96 = arith.mulf %94, %95 : vector<8x128xf32>
    %97 = vector.broadcast %55 : vector<1x128xf32> to vector<8x128xf32>
    %98 = arith.addf %96, %97 : vector<8x128xf32>
    %c21 = arith.constant 21 : index
    %c0_92 = arith.constant 0 : index
    %99 = vector.load %arg14[%c21, %c0_92] : memref<100x128xf32, #tpu.memory_space<vmem>>, vector<8x128xf32>
    tpu.vector_store %arg14[%c21, %c0_92], %98 {strides = array<i32>} : memref<100x128xf32, #tpu.memory_space<vmem>>, vector<8x128xf32>,
    %c72_93 = arith.constant 72 : index
    %c0_94 = arith.constant 0 : index
    %100 = tpu.strided_load %arg13[%c72_93, %c0_94] {strides = array<i32: 2, 1>} : memref<324x128xf32, #tpu.memory_space<vmem>>, vector<8x128xf32>
    %c73_95 = arith.constant 73 : index
    %c0_96 = arith.constant 0 : index
    %101 = tpu.strided_load %arg13[%c73_95, %c0_96] {strides = array<i32: 2, 1>} : memref<324x128xf32, #tpu.memory_space<vmem>>, vector<8x128xf32>
    %c74_97 = arith.constant 74 : index
    %c0_98 = arith.constant 0 : index
    %102 = tpu.strided_load %arg13[%c74_97, %c0_98] {strides = array<i32: 2, 1>} : memref<324x128xf32, #tpu.memory_space<vmem>>, vector<8x128xf32>
    %c90 = arith.constant 90 : index
    %c0_99 = arith.constant 0 : index
    %103 = tpu.strided_load %arg13[%c90, %c0_99] {strides = array<i32: 2, 1>} : memref<324x128xf32, #tpu.memory_space<vmem>>, vector<8x128xf32>
    %c91_100 = arith.constant 91 : index
    %c0_101 = arith.constant 0 : index
    %104 = tpu.strided_load %arg13[%c91_100, %c0_101] {strides = array<i32: 2, 1>} : memref<324x128xf32, #tpu.memory_space<vmem>>, vector<8x128xf32>
    %c92 = arith.constant 92 : index
    %c0_102 = arith.constant 0 : index
    %105 = tpu.strided_load %arg13[%c92, %c0_102] {strides = array<i32: 2, 1>} : memref<324x128xf32, #tpu.memory_space<vmem>>, vector<8x128xf32>
    %c108 = arith.constant 108 : index
    %c0_103 = arith.constant 0 : index
    %106 = tpu.strided_load %arg13[%c108, %c0_103] {strides = array<i32: 2, 1>} : memref<324x128xf32, #tpu.memory_space<vmem>>, vector<8x128xf32>
    %c109_104 = arith.constant 109 : index
    %c0_105 = arith.constant 0 : index
    %107 = tpu.strided_load %arg13[%c109_104, %c0_105] {strides = array<i32: 2, 1>} : memref<324x128xf32, #tpu.memory_space<vmem>>, vector<8x128xf32>
    %c110 = arith.constant 110 : index
    %c0_106 = arith.constant 0 : index
    %108 = tpu.strided_load %arg13[%c110, %c0_106] {strides = array<i32: 2, 1>} : memref<324x128xf32, #tpu.memory_space<vmem>>, vector<8x128xf32>
    %109 = tpu.concatenate %100, %101, %102, %103, %104, %105, %106, %107, %108 in 1 : vector<8x128xf32>, vector<8x128xf32>, vector<8x128xf32>, vector<8x128xf32>, vector<8x128xf32>, vector<8x128xf32>, vector<8x128xf32>, vector<8x128xf32>, vector<8x128xf32> -> vector<8x1152xf32>
    %110 = arith.truncf %109 : vector<8x1152xf32> to vector<8x1152xbf16>
    %cst_107 = arith.constant dense<0.000000e+00> : vector<8x128xf32>
    %111 = tpu.matmul %110, %52, %cst_107 {dimension_numbers = #tpu.dot_dimension_numbers<[1], [0], [0], [1], [0, 0, 1, 1], [], []>} : vector<8x1152xbf16>, vector<1152x128xbf16>, vector<8x128xf32> -> vector<8x128xf32>
    %112 = vector.broadcast %53 : vector<1x128xf32> to vector<8x128xf32>
    %113 = arith.addf %111, %112 : vector<8x128xf32>
    %cst_108 = arith.constant 2.000000e-01 : f32
    %114 = vector.broadcast %cst_108 : f32 to vector<8x128xf32>
    %115 = arith.mulf %114, %113 : vector<8x128xf32>
    %116 = arith.maximumf %113, %115 : vector<8x128xf32>
    %117 = vector.broadcast %54 : vector<1x128xf32> to vector<8x128xf32>
    %118 = arith.mulf %116, %117 : vector<8x128xf32>
    %119 = vector.broadcast %55 : vector<1x128xf32> to vector<8x128xf32>
    %120 = arith.addf %118, %119 : vector<8x128xf32>
    %c31 = arith.constant 31 : index
    %c0_109 = arith.constant 0 : index
    %121 = vector.load %arg14[%c31, %c0_109] : memref<100x128xf32, #tpu.memory_space<vmem>>, vector<8x128xf32>
    tpu.vector_store %arg14[%c31, %c0_109], %120 {strides = array<i32>} : memref<100x128xf32, #tpu.memory_space<vmem>>, vector<8x128xf32>,
    %c108_110 = arith.constant 108 : index
    %c0_111 = arith.constant 0 : index
    %122 = tpu.strided_load %arg13[%c108_110, %c0_111] {strides = array<i32: 2, 1>} : memref<324x128xf32, #tpu.memory_space<vmem>>, vector<8x128xf32>
    %c109_112 = arith.constant 109 : index
    %c0_113 = arith.constant 0 : index
    %123 = tpu.strided_load %arg13[%c109_112, %c0_113] {strides = array<i32: 2, 1>} : memref<324x128xf32, #tpu.memory_space<vmem>>, vector<8x128xf32>
    %c110_114 = arith.constant 110 : index
    %c0_115 = arith.constant 0 : index
    %124 = tpu.strided_load %arg13[%c110_114, %c0_115] {strides = array<i32: 2, 1>} : memref<324x128xf32, #tpu.memory_space<vmem>>, vector<8x128xf32>
    %c126 = arith.constant 126 : index
    %c0_116 = arith.constant 0 : index
    %125 = tpu.strided_load %arg13[%c126, %c0_116] {strides = array<i32: 2, 1>} : memref<324x128xf32, #tpu.memory_space<vmem>>, vector<8x128xf32>
    %c127_117 = arith.constant 127 : index
    %c0_118 = arith.constant 0 : index
    %126 = tpu.strided_load %arg13[%c127_117, %c0_118] {strides = array<i32: 2, 1>} : memref<324x128xf32, #tpu.memory_space<vmem>>, vector<8x128xf32>
    %c128_119 = arith.constant 128 : index
    %c0_120 = arith.constant 0 : index
    %127 = tpu.strided_load %arg13[%c128_119, %c0_120] {strides = array<i32: 2, 1>} : memref<324x128xf32, #tpu.memory_space<vmem>>, vector<8x128xf32>
    %c144_121 = arith.constant 144 : index
    %c0_122 = arith.constant 0 : index
    %128 = tpu.strided_load %arg13[%c144_121, %c0_122] {strides = array<i32: 2, 1>} : memref<324x128xf32, #tpu.memory_space<vmem>>, vector<8x128xf32>
    %c145_123 = arith.constant 145 : index
    %c0_124 = arith.constant 0 : index
    %129 = tpu.strided_load %arg13[%c145_123, %c0_124] {strides = array<i32: 2, 1>} : memref<324x128xf32, #tpu.memory_space<vmem>>, vector<8x128xf32>
    %c146 = arith.constant 146 : index
    %c0_125 = arith.constant 0 : index
    %130 = tpu.strided_load %arg13[%c146, %c0_125] {strides = array<i32: 2, 1>} : memref<324x128xf32, #tpu.memory_space<vmem>>, vector<8x128xf32>
    %131 = tpu.concatenate %122, %123, %124, %125, %126, %127, %128, %129, %130 in 1 : vector<8x128xf32>, vector<8x128xf32>, vector<8x128xf32>, vector<8x128xf32>, vector<8x128xf32>, vector<8x128xf32>, vector<8x128xf32>, vector<8x128xf32>, vector<8x128xf32> -> vector<8x1152xf32>
    %132 = arith.truncf %131 : vector<8x1152xf32> to vector<8x1152xbf16>
    %cst_126 = arith.constant dense<0.000000e+00> : vector<8x128xf32>
    %133 = tpu.matmul %132, %52, %cst_126 {dimension_numbers = #tpu.dot_dimension_numbers<[1], [0], [0], [1], [0, 0, 1, 1], [], []>} : vector<8x1152xbf16>, vector<1152x128xbf16>, vector<8x128xf32> -> vector<8x128xf32>
    %134 = vector.broadcast %53 : vector<1x128xf32> to vector<8x128xf32>
    %135 = arith.addf %133, %134 : vector<8x128xf32>
    %cst_127 = arith.constant 2.000000e-01 : f32
    %136 = vector.broadcast %cst_127 : f32 to vector<8x128xf32>
    %137 = arith.mulf %136, %135 : vector<8x128xf32>
    %138 = arith.maximumf %135, %137 : vector<8x128xf32>
    %139 = vector.broadcast %54 : vector<1x128xf32> to vector<8x128xf32>
    %140 = arith.mulf %138, %139 : vector<8x128xf32>
    %141 = vector.broadcast %55 : vector<1x128xf32> to vector<8x128xf32>
    %142 = arith.addf %140, %141 : vector<8x128xf32>
    %c41 = arith.constant 41 : index
    %c0_128 = arith.constant 0 : index
    %143 = vector.load %arg14[%c41, %c0_128] : memref<100x128xf32, #tpu.memory_space<vmem>>, vector<8x128xf32>
    tpu.vector_store %arg14[%c41, %c0_128], %142 {strides = array<i32>} : memref<100x128xf32, #tpu.memory_space<vmem>>, vector<8x128xf32>,
    %c144_129 = arith.constant 144 : index
    %c0_130 = arith.constant 0 : index
    %144 = tpu.strided_load %arg13[%c144_129, %c0_130] {strides = array<i32: 2, 1>} : memref<324x128xf32, #tpu.memory_space<vmem>>, vector<8x128xf32>
    %c145_131 = arith.constant 145 : index
    %c0_132 = arith.constant 0 : index
    %145 = tpu.strided_load %arg13[%c145_131, %c0_132] {strides = array<i32: 2, 1>} : memref<324x128xf32, #tpu.memory_space<vmem>>, vector<8x128xf32>
    %c146_133 = arith.constant 146 : index
    %c0_134 = arith.constant 0 : index
    %146 = tpu.strided_load %arg13[%c146_133, %c0_134] {strides = array<i32: 2, 1>} : memref<324x128xf32, #tpu.memory_space<vmem>>, vector<8x128xf32>
    %c162 = arith.constant 162 : index
    %c0_135 = arith.constant 0 : index
    %147 = tpu.strided_load %arg13[%c162, %c0_135] {strides = array<i32: 2, 1>} : memref<324x128xf32, #tpu.memory_space<vmem>>, vector<8x128xf32>
    %c163_136 = arith.constant 163 : index
    %c0_137 = arith.constant 0 : index
    %148 = tpu.strided_load %arg13[%c163_136, %c0_137] {strides = array<i32: 2, 1>} : memref<324x128xf32, #tpu.memory_space<vmem>>, vector<8x128xf32>
    %c164 = arith.constant 164 : index
    %c0_138 = arith.constant 0 : index
    %149 = tpu.strided_load %arg13[%c164, %c0_138] {strides = array<i32: 2, 1>} : memref<324x128xf32, #tpu.memory_space<vmem>>, vector<8x128xf32>
    %c180 = arith.constant 180 : index
    %c0_139 = arith.constant 0 : index
    %150 = tpu.strided_load %arg13[%c180, %c0_139] {strides = array<i32: 2, 1>} : memref<324x128xf32, #tpu.memory_space<vmem>>, vector<8x128xf32>
    %c181_140 = arith.constant 181 : index
    %c0_141 = arith.constant 0 : index
    %151 = tpu.strided_load %arg13[%c181_140, %c0_141] {strides = array<i32: 2, 1>} : memref<324x128xf32, #tpu.memory_space<vmem>>, vector<8x128xf32>
    %c182 = arith.constant 182 : index
    %c0_142 = arith.constant 0 : index
    %152 = tpu.strided_load %arg13[%c182, %c0_142] {strides = array<i32: 2, 1>} : memref<324x128xf32, #tpu.memory_space<vmem>>, vector<8x128xf32>
    %153 = tpu.concatenate %144, %145, %146, %147, %148, %149, %150, %151, %152 in 1 : vector<8x128xf32>, vector<8x128xf32>, vector<8x128xf32>, vector<8x128xf32>, vector<8x128xf32>, vector<8x128xf32>, vector<8x128xf32>, vector<8x128xf32>, vector<8x128xf32> -> vector<8x1152xf32>
    %154 = arith.truncf %153 : vector<8x1152xf32> to vector<8x1152xbf16>
    %cst_143 = arith.constant dense<0.000000e+00> : vector<8x128xf32>
    %155 = tpu.matmul %154, %52, %cst_143 {dimension_numbers = #tpu.dot_dimension_numbers<[1], [0], [0], [1], [0, 0, 1, 1], [], []>} : vector<8x1152xbf16>, vector<1152x128xbf16>, vector<8x128xf32> -> vector<8x128xf32>
    %156 = vector.broadcast %53 : vector<1x128xf32> to vector<8x128xf32>
    %157 = arith.addf %155, %156 : vector<8x128xf32>
    %cst_144 = arith.constant 2.000000e-01 : f32
    %158 = vector.broadcast %cst_144 : f32 to vector<8x128xf32>
    %159 = arith.mulf %158, %157 : vector<8x128xf32>
    %160 = arith.maximumf %157, %159 : vector<8x128xf32>
    %161 = vector.broadcast %54 : vector<1x128xf32> to vector<8x128xf32>
    %162 = arith.mulf %160, %161 : vector<8x128xf32>
    %163 = vector.broadcast %55 : vector<1x128xf32> to vector<8x128xf32>
    %164 = arith.addf %162, %163 : vector<8x128xf32>
    %c51 = arith.constant 51 : index
    %c0_145 = arith.constant 0 : index
    %165 = vector.load %arg14[%c51, %c0_145] : memref<100x128xf32, #tpu.memory_space<vmem>>, vector<8x128xf32>
    tpu.vector_store %arg14[%c51, %c0_145], %164 {strides = array<i32>} : memref<100x128xf32, #tpu.memory_space<vmem>>, vector<8x128xf32>,
    %c180_146 = arith.constant 180 : index
    %c0_147 = arith.constant 0 : index
    %166 = tpu.strided_load %arg13[%c180_146, %c0_147] {strides = array<i32: 2, 1>} : memref<324x128xf32, #tpu.memory_space<vmem>>, vector<8x128xf32>
    %c181_148 = arith.constant 181 : index
    %c0_149 = arith.constant 0 : index
    %167 = tpu.strided_load %arg13[%c181_148, %c0_149] {strides = array<i32: 2, 1>} : memref<324x128xf32, #tpu.memory_space<vmem>>, vector<8x128xf32>
    %c182_150 = arith.constant 182 : index
    %c0_151 = arith.constant 0 : index
    %168 = tpu.strided_load %arg13[%c182_150, %c0_151] {strides = array<i32: 2, 1>} : memref<324x128xf32, #tpu.memory_space<vmem>>, vector<8x128xf32>
    %c198 = arith.constant 198 : index
    %c0_152 = arith.constant 0 : index
    %169 = tpu.strided_load %arg13[%c198, %c0_152] {strides = array<i32: 2, 1>} : memref<324x128xf32, #tpu.memory_space<vmem>>, vector<8x128xf32>
    %c199_153 = arith.constant 199 : index
    %c0_154 = arith.constant 0 : index
    %170 = tpu.strided_load %arg13[%c199_153, %c0_154] {strides = array<i32: 2, 1>} : memref<324x128xf32, #tpu.memory_space<vmem>>, vector<8x128xf32>
    %c200 = arith.constant 200 : index
    %c0_155 = arith.constant 0 : index
    %171 = tpu.strided_load %arg13[%c200, %c0_155] {strides = array<i32: 2, 1>} : memref<324x128xf32, #tpu.memory_space<vmem>>, vector<8x128xf32>
    %c216 = arith.constant 216 : index
    %c0_156 = arith.constant 0 : index
    %172 = tpu.strided_load %arg13[%c216, %c0_156] {strides = array<i32: 2, 1>} : memref<324x128xf32, #tpu.memory_space<vmem>>, vector<8x128xf32>
    %c217_157 = arith.constant 217 : index
    %c0_158 = arith.constant 0 : index
    %173 = tpu.strided_load %arg13[%c217_157, %c0_158] {strides = array<i32: 2, 1>} : memref<324x128xf32, #tpu.memory_space<vmem>>, vector<8x128xf32>
    %c218 = arith.constant 218 : index
    %c0_159 = arith.constant 0 : index
    %174 = tpu.strided_load %arg13[%c218, %c0_159] {strides = array<i32: 2, 1>} : memref<324x128xf32, #tpu.memory_space<vmem>>, vector<8x128xf32>
    %175 = tpu.concatenate %166, %167, %168, %169, %170, %171, %172, %173, %174 in 1 : vector<8x128xf32>, vector<8x128xf32>, vector<8x128xf32>, vector<8x128xf32>, vector<8x128xf32>, vector<8x128xf32>, vector<8x128xf32>, vector<8x128xf32>, vector<8x128xf32> -> vector<8x1152xf32>
    %176 = arith.truncf %175 : vector<8x1152xf32> to vector<8x1152xbf16>
    %cst_160 = arith.constant dense<0.000000e+00> : vector<8x128xf32>
    %177 = tpu.matmul %176, %52, %cst_160 {dimension_numbers = #tpu.dot_dimension_numbers<[1], [0], [0], [1], [0, 0, 1, 1], [], []>} : vector<8x1152xbf16>, vector<1152x128xbf16>, vector<8x128xf32> -> vector<8x128xf32>
    %178 = vector.broadcast %53 : vector<1x128xf32> to vector<8x128xf32>
    %179 = arith.addf %177, %178 : vector<8x128xf32>
    %cst_161 = arith.constant 2.000000e-01 : f32
    %180 = vector.broadcast %cst_161 : f32 to vector<8x128xf32>
    %181 = arith.mulf %180, %179 : vector<8x128xf32>
    %182 = arith.maximumf %179, %181 : vector<8x128xf32>
    %183 = vector.broadcast %54 : vector<1x128xf32> to vector<8x128xf32>
    %184 = arith.mulf %182, %183 : vector<8x128xf32>
    %185 = vector.broadcast %55 : vector<1x128xf32> to vector<8x128xf32>
    %186 = arith.addf %184, %185 : vector<8x128xf32>
    %c61 = arith.constant 61 : index
    %c0_162 = arith.constant 0 : index
    %187 = vector.load %arg14[%c61, %c0_162] : memref<100x128xf32, #tpu.memory_space<vmem>>, vector<8x128xf32>
    tpu.vector_store %arg14[%c61, %c0_162], %186 {strides = array<i32>} : memref<100x128xf32, #tpu.memory_space<vmem>>, vector<8x128xf32>,
    %c216_163 = arith.constant 216 : index
    %c0_164 = arith.constant 0 : index
    %188 = tpu.strided_load %arg13[%c216_163, %c0_164] {strides = array<i32: 2, 1>} : memref<324x128xf32, #tpu.memory_space<vmem>>, vector<8x128xf32>
    %c217_165 = arith.constant 217 : index
    %c0_166 = arith.constant 0 : index
    %189 = tpu.strided_load %arg13[%c217_165, %c0_166] {strides = array<i32: 2, 1>} : memref<324x128xf32, #tpu.memory_space<vmem>>, vector<8x128xf32>
    %c218_167 = arith.constant 218 : index
    %c0_168 = arith.constant 0 : index
    %190 = tpu.strided_load %arg13[%c218_167, %c0_168] {strides = array<i32: 2, 1>} : memref<324x128xf32, #tpu.memory_space<vmem>>, vector<8x128xf32>
    %c234 = arith.constant 234 : index
    %c0_169 = arith.constant 0 : index
    %191 = tpu.strided_load %arg13[%c234, %c0_169] {strides = array<i32: 2, 1>} : memref<324x128xf32, #tpu.memory_space<vmem>>, vector<8x128xf32>
    %c235_170 = arith.constant 235 : index
    %c0_171 = arith.constant 0 : index
    %192 = tpu.strided_load %arg13[%c235_170, %c0_171] {strides = array<i32: 2, 1>} : memref<324x128xf32, #tpu.memory_space<vmem>>, vector<8x128xf32>
    %c236 = arith.constant 236 : index
    %c0_172 = arith.constant 0 : index
    %193 = tpu.strided_load %arg13[%c236, %c0_172] {strides = array<i32: 2, 1>} : memref<324x128xf32, #tpu.memory_space<vmem>>, vector<8x128xf32>
    %c252 = arith.constant 252 : index
    %c0_173 = arith.constant 0 : index
    %194 = tpu.strided_load %arg13[%c252, %c0_173] {strides = array<i32: 2, 1>} : memref<324x128xf32, #tpu.memory_space<vmem>>, vector<8x128xf32>
    %c253_174 = arith.constant 253 : index
    %c0_175 = arith.constant 0 : index
    %195 = tpu.strided_load %arg13[%c253_174, %c0_175] {strides = array<i32: 2, 1>} : memref<324x128xf32, #tpu.memory_space<vmem>>, vector<8x128xf32>
    %c254 = arith.constant 254 : index
    %c0_176 = arith.constant 0 : index
    %196 = tpu.strided_load %arg13[%c254, %c0_176] {strides = array<i32: 2, 1>} : memref<324x128xf32, #tpu.memory_space<vmem>>, vector<8x128xf32>
    %197 = tpu.concatenate %188, %189, %190, %191, %192, %193, %194, %195, %196 in 1 : vector<8x128xf32>, vector<8x128xf32>, vector<8x128xf32>, vector<8x128xf32>, vector<8x128xf32>, vector<8x128xf32>, vector<8x128xf32>, vector<8x128xf32>, vector<8x128xf32> -> vector<8x1152xf32>
    %198 = arith.truncf %197 : vector<8x1152xf32> to vector<8x1152xbf16>
    %cst_177 = arith.constant dense<0.000000e+00> : vector<8x128xf32>
    %199 = tpu.matmul %198, %52, %cst_177 {dimension_numbers = #tpu.dot_dimension_numbers<[1], [0], [0], [1], [0, 0, 1, 1], [], []>} : vector<8x1152xbf16>, vector<1152x128xbf16>, vector<8x128xf32> -> vector<8x128xf32>
    %200 = vector.broadcast %53 : vector<1x128xf32> to vector<8x128xf32>
    %201 = arith.addf %199, %200 : vector<8x128xf32>
    %cst_178 = arith.constant 2.000000e-01 : f32
    %202 = vector.broadcast %cst_178 : f32 to vector<8x128xf32>
    %203 = arith.mulf %202, %201 : vector<8x128xf32>
    %204 = arith.maximumf %201, %203 : vector<8x128xf32>
    %205 = vector.broadcast %54 : vector<1x128xf32> to vector<8x128xf32>
    %206 = arith.mulf %204, %205 : vector<8x128xf32>
    %207 = vector.broadcast %55 : vector<1x128xf32> to vector<8x128xf32>
    %208 = arith.addf %206, %207 : vector<8x128xf32>
    %c71 = arith.constant 71 : index
    %c0_179 = arith.constant 0 : index
    %209 = vector.load %arg14[%c71, %c0_179] : memref<100x128xf32, #tpu.memory_space<vmem>>, vector<8x128xf32>
    tpu.vector_store %arg14[%c71, %c0_179], %208 {strides = array<i32>} : memref<100x128xf32, #tpu.memory_space<vmem>>, vector<8x128xf32>,
    %c252_180 = arith.constant 252 : index
    %c0_181 = arith.constant 0 : index
    %210 = tpu.strided_load %arg13[%c252_180, %c0_181] {strides = array<i32: 2, 1>} : memref<324x128xf32, #tpu.memory_space<vmem>>, vector<8x128xf32>
    %c253_182 = arith.constant 253 : index
    %c0_183 = arith.constant 0 : index
    %211 = tpu.strided_load %arg13[%c253_182, %c0_183] {strides = array<i32: 2, 1>} : memref<324x128xf32, #tpu.memory_space<vmem>>, vector<8x128xf32>
    %c254_184 = arith.constant 254 : index
    %c0_185 = arith.constant 0 : index
    %212 = tpu.strided_load %arg13[%c254_184, %c0_185] {strides = array<i32: 2, 1>} : memref<324x128xf32, #tpu.memory_space<vmem>>, vector<8x128xf32>
    %c270 = arith.constant 270 : index
    %c0_186 = arith.constant 0 : index
    %213 = tpu.strided_load %arg13[%c270, %c0_186] {strides = array<i32: 2, 1>} : memref<324x128xf32, #tpu.memory_space<vmem>>, vector<8x128xf32>
    %c271_187 = arith.constant 271 : index
    %c0_188 = arith.constant 0 : index
    %214 = tpu.strided_load %arg13[%c271_187, %c0_188] {strides = array<i32: 2, 1>} : memref<324x128xf32, #tpu.memory_space<vmem>>, vector<8x128xf32>
    %c272 = arith.constant 272 : index
    %c0_189 = arith.constant 0 : index
    %215 = tpu.strided_load %arg13[%c272, %c0_189] {strides = array<i32: 2, 1>} : memref<324x128xf32, #tpu.memory_space<vmem>>, vector<8x128xf32>
    %c288 = arith.constant 288 : index
    %c0_190 = arith.constant 0 : index
    %216 = tpu.strided_load %arg13[%c288, %c0_190] {strides = array<i32: 2, 1>} : memref<324x128xf32, #tpu.memory_space<vmem>>, vector<8x128xf32>
    %c289_191 = arith.constant 289 : index
    %c0_192 = arith.constant 0 : index
    %217 = tpu.strided_load %arg13[%c289_191, %c0_192] {strides = array<i32: 2, 1>} : memref<324x128xf32, #tpu.memory_space<vmem>>, vector<8x128xf32>
    %c290 = arith.constant 290 : index
    %c0_193 = arith.constant 0 : index
    %218 = tpu.strided_load %arg13[%c290, %c0_193] {strides = array<i32: 2, 1>} : memref<324x128xf32, #tpu.memory_space<vmem>>, vector<8x128xf32>
    %219 = tpu.concatenate %210, %211, %212, %213, %214, %215, %216, %217, %218 in 1 : vector<8x128xf32>, vector<8x128xf32>, vector<8x128xf32>, vector<8x128xf32>, vector<8x128xf32>, vector<8x128xf32>, vector<8x128xf32>, vector<8x128xf32>, vector<8x128xf32> -> vector<8x1152xf32>
    %220 = arith.truncf %219 : vector<8x1152xf32> to vector<8x1152xbf16>
    %cst_194 = arith.constant dense<0.000000e+00> : vector<8x128xf32>
    %221 = tpu.matmul %220, %52, %cst_194 {dimension_numbers = #tpu.dot_dimension_numbers<[1], [0], [0], [1], [0, 0, 1, 1], [], []>} : vector<8x1152xbf16>, vector<1152x128xbf16>, vector<8x128xf32> -> vector<8x128xf32>
    %222 = vector.broadcast %53 : vector<1x128xf32> to vector<8x128xf32>
    %223 = arith.addf %221, %222 : vector<8x128xf32>
    %cst_195 = arith.constant 2.000000e-01 : f32
    %224 = vector.broadcast %cst_195 : f32 to vector<8x128xf32>
    %225 = arith.mulf %224, %223 : vector<8x128xf32>
    %226 = arith.maximumf %223, %225 : vector<8x128xf32>
    %227 = vector.broadcast %54 : vector<1x128xf32> to vector<8x128xf32>
    %228 = arith.mulf %226, %227 : vector<8x128xf32>
    %229 = vector.broadcast %55 : vector<1x128xf32> to vector<8x128xf32>
    %230 = arith.addf %228, %229 : vector<8x128xf32>
    %c81 = arith.constant 81 : index
    %c0_196 = arith.constant 0 : index
    %231 = vector.load %arg14[%c81, %c0_196] : memref<100x128xf32, #tpu.memory_space<vmem>>, vector<8x128xf32>
    tpu.vector_store %arg14[%c81, %c0_196], %230 {strides = array<i32>} : memref<100x128xf32, #tpu.memory_space<vmem>>, vector<8x128xf32>,
    %cst_197 = arith.constant 0.000000e+00 : f32
    %232 = vector.broadcast %cst_197 : f32 to vector<36x128xf32>
    %c0_198 = arith.constant 0 : index
    %c0_199 = arith.constant 0 : index
    %233 = vector.load %arg15[%c0_198, %c0_199] : memref<36x128xf32, #tpu.memory_space<vmem>>, vector<36x128xf32>
    tpu.vector_store %arg15[%c0_198, %c0_199], %232 {strides = array<i32>} : memref<36x128xf32, #tpu.memory_space<vmem>>, vector<36x128xf32>,
    %c0_200 = arith.constant 0 : index
    %c0_201 = arith.constant 0 : index
    %234 = vector.load %arg4[%c0_200, %c0_201] : memref<1152x128xbf16, #tpu.memory_space<vmem>>, vector<1152x128xbf16>
    %c0_202 = arith.constant 0 : index
    %c0_203 = arith.constant 0 : index
    %235 = vector.load %arg5[%c0_202, %c0_203] : memref<3x128xf32, #tpu.memory_space<vmem>>, vector<1x128xf32>
    %c1_204 = arith.constant 1 : index
    %c0_205 = arith.constant 0 : index
    %236 = vector.load %arg5[%c1_204, %c0_205] : memref<3x128xf32, #tpu.memory_space<vmem>>, vector<1x128xf32>
    %c2_206 = arith.constant 2 : index
    %c0_207 = arith.constant 0 : index
    %237 = vector.load %arg5[%c2_206, %c0_207] : memref<3x128xf32, #tpu.memory_space<vmem>>, vector<1x128xf32>
    %c0_208 = arith.constant 0 : index
    %c0_209 = arith.constant 0 : index
    %238 = tpu.strided_load %arg14[%c0_208, %c0_209] {strides = array<i32: 2, 1>} : memref<100x128xf32, #tpu.memory_space<vmem>>, vector<4x128xf32>
    %c1_210 = arith.constant 1 : index
    %c0_211 = arith.constant 0 : index
    %239 = tpu.strided_load %arg14[%c1_210, %c0_211] {strides = array<i32: 2, 1>} : memref<100x128xf32, #tpu.memory_space<vmem>>, vector<4x128xf32>
    %c2_212 = arith.constant 2 : index
    %c0_213 = arith.constant 0 : index
    %240 = tpu.strided_load %arg14[%c2_212, %c0_213] {strides = array<i32: 2, 1>} : memref<100x128xf32, #tpu.memory_space<vmem>>, vector<4x128xf32>
    %c10 = arith.constant 10 : index
    %c0_214 = arith.constant 0 : index
    %241 = tpu.strided_load %arg14[%c10, %c0_214] {strides = array<i32: 2, 1>} : memref<100x128xf32, #tpu.memory_space<vmem>>, vector<4x128xf32>
    %c11_215 = arith.constant 11 : index
    %c0_216 = arith.constant 0 : index
    %242 = tpu.strided_load %arg14[%c11_215, %c0_216] {strides = array<i32: 2, 1>} : memref<100x128xf32, #tpu.memory_space<vmem>>, vector<4x128xf32>
    %c12 = arith.constant 12 : index
    %c0_217 = arith.constant 0 : index
    %243 = tpu.strided_load %arg14[%c12, %c0_217] {strides = array<i32: 2, 1>} : memref<100x128xf32, #tpu.memory_space<vmem>>, vector<4x128xf32>
    %c20_218 = arith.constant 20 : index
    %c0_219 = arith.constant 0 : index
    %244 = tpu.strided_load %arg14[%c20_218, %c0_219] {strides = array<i32: 2, 1>} : memref<100x128xf32, #tpu.memory_space<vmem>>, vector<4x128xf32>
    %c21_220 = arith.constant 21 : index
    %c0_221 = arith.constant 0 : index
    %245 = tpu.strided_load %arg14[%c21_220, %c0_221] {strides = array<i32: 2, 1>} : memref<100x128xf32, #tpu.memory_space<vmem>>, vector<4x128xf32>
    %c22 = arith.constant 22 : index
    %c0_222 = arith.constant 0 : index
    %246 = tpu.strided_load %arg14[%c22, %c0_222] {strides = array<i32: 2, 1>} : memref<100x128xf32, #tpu.memory_space<vmem>>, vector<4x128xf32>
    %247 = tpu.concatenate %238, %239, %240, %241, %242, %243, %244, %245, %246 in 1 : vector<4x128xf32>, vector<4x128xf32>, vector<4x128xf32>, vector<4x128xf32>, vector<4x128xf32>, vector<4x128xf32>, vector<4x128xf32>, vector<4x128xf32>, vector<4x128xf32> -> vector<4x1152xf32>
    %248 = arith.truncf %247 : vector<4x1152xf32> to vector<4x1152xbf16>
    %cst_223 = arith.constant dense<0.000000e+00> : vector<4x128xf32>
    %249 = tpu.matmul %248, %234, %cst_223 {dimension_numbers = #tpu.dot_dimension_numbers<[1], [0], [0], [1], [0, 0, 1, 1], [], []>} : vector<4x1152xbf16>, vector<1152x128xbf16>, vector<4x128xf32> -> vector<4x128xf32>
    %250 = vector.broadcast %235 : vector<1x128xf32> to vector<4x128xf32>
    %251 = arith.addf %249, %250 : vector<4x128xf32>
    %cst_224 = arith.constant 2.000000e-01 : f32
    %252 = vector.broadcast %cst_224 : f32 to vector<4x128xf32>
    %253 = arith.mulf %252, %251 : vector<4x128xf32>
    %254 = arith.maximumf %251, %253 : vector<4x128xf32>
    %255 = vector.broadcast %236 : vector<1x128xf32> to vector<4x128xf32>
    %256 = arith.mulf %254, %255 : vector<4x128xf32>
    %257 = vector.broadcast %237 : vector<1x128xf32> to vector<4x128xf32>
    %258 = arith.addf %256, %257 : vector<4x128xf32>
    %c7 = arith.constant 7 : index
    %c0_225 = arith.constant 0 : index
    %259 = vector.load %arg15[%c7, %c0_225] : memref<36x128xf32, #tpu.memory_space<vmem>>, vector<4x128xf32>
    tpu.vector_store %arg15[%c7, %c0_225], %258 {strides = array<i32>} : memref<36x128xf32, #tpu.memory_space<vmem>>, vector<4x128xf32>,
    %c20_226 = arith.constant 20 : index
    %c0_227 = arith.constant 0 : index
    %260 = tpu.strided_load %arg14[%c20_226, %c0_227] {strides = array<i32: 2, 1>} : memref<100x128xf32, #tpu.memory_space<vmem>>, vector<4x128xf32>
    %c21_228 = arith.constant 21 : index
    %c0_229 = arith.constant 0 : index
    %261 = tpu.strided_load %arg14[%c21_228, %c0_229] {strides = array<i32: 2, 1>} : memref<100x128xf32, #tpu.memory_space<vmem>>, vector<4x128xf32>
    %c22_230 = arith.constant 22 : index
    %c0_231 = arith.constant 0 : index
    %262 = tpu.strided_load %arg14[%c22_230, %c0_231] {strides = array<i32: 2, 1>} : memref<100x128xf32, #tpu.memory_space<vmem>>, vector<4x128xf32>
    %c30 = arith.constant 30 : index
    %c0_232 = arith.constant 0 : index
    %263 = tpu.strided_load %arg14[%c30, %c0_232] {strides = array<i32: 2, 1>} : memref<100x128xf32, #tpu.memory_space<vmem>>, vector<4x128xf32>
    %c31_233 = arith.constant 31 : index
    %c0_234 = arith.constant 0 : index
    %264 = tpu.strided_load %arg14[%c31_233, %c0_234] {strides = array<i32: 2, 1>} : memref<100x128xf32, #tpu.memory_space<vmem>>, vector<4x128xf32>
    %c32_235 = arith.constant 32 : index
    %c0_236 = arith.constant 0 : index
    %265 = tpu.strided_load %arg14[%c32_235, %c0_236] {strides = array<i32: 2, 1>} : memref<100x128xf32, #tpu.memory_space<vmem>>, vector<4x128xf32>
    %c40 = arith.constant 40 : index
    %c0_237 = arith.constant 0 : index
    %266 = tpu.strided_load %arg14[%c40, %c0_237] {strides = array<i32: 2, 1>} : memref<100x128xf32, #tpu.memory_space<vmem>>, vector<4x128xf32>
    %c41_238 = arith.constant 41 : index
    %c0_239 = arith.constant 0 : index
    %267 = tpu.strided_load %arg14[%c41_238, %c0_239] {strides = array<i32: 2, 1>} : memref<100x128xf32, #tpu.memory_space<vmem>>, vector<4x128xf32>
    %c42 = arith.constant 42 : index
    %c0_240 = arith.constant 0 : index
    %268 = tpu.strided_load %arg14[%c42, %c0_240] {strides = array<i32: 2, 1>} : memref<100x128xf32, #tpu.memory_space<vmem>>, vector<4x128xf32>
    %269 = tpu.concatenate %260, %261, %262, %263, %264, %265, %266, %267, %268 in 1 : vector<4x128xf32>, vector<4x128xf32>, vector<4x128xf32>, vector<4x128xf32>, vector<4x128xf32>, vector<4x128xf32>, vector<4x128xf32>, vector<4x128xf32>, vector<4x128xf32> -> vector<4x1152xf32>
    %270 = arith.truncf %269 : vector<4x1152xf32> to vector<4x1152xbf16>
    %cst_241 = arith.constant dense<0.000000e+00> : vector<4x128xf32>
    %271 = tpu.matmul %270, %234, %cst_241 {dimension_numbers = #tpu.dot_dimension_numbers<[1], [0], [0], [1], [0, 0, 1, 1], [], []>} : vector<4x1152xbf16>, vector<1152x128xbf16>, vector<4x128xf32> -> vector<4x128xf32>
    %272 = vector.broadcast %235 : vector<1x128xf32> to vector<4x128xf32>
    %273 = arith.addf %271, %272 : vector<4x128xf32>
    %cst_242 = arith.constant 2.000000e-01 : f32
    %274 = vector.broadcast %cst_242 : f32 to vector<4x128xf32>
    %275 = arith.mulf %274, %273 : vector<4x128xf32>
    %276 = arith.maximumf %273, %275 : vector<4x128xf32>
    %277 = vector.broadcast %236 : vector<1x128xf32> to vector<4x128xf32>
    %278 = arith.mulf %276, %277 : vector<4x128xf32>
    %279 = vector.broadcast %237 : vector<1x128xf32> to vector<4x128xf32>
    %280 = arith.addf %278, %279 : vector<4x128xf32>
    %c13 = arith.constant 13 : index
    %c0_243 = arith.constant 0 : index
    %281 = vector.load %arg15[%c13, %c0_243] : memref<36x128xf32, #tpu.memory_space<vmem>>, vector<4x128xf32>
    tpu.vector_store %arg15[%c13, %c0_243], %280 {strides = array<i32>} : memref<36x128xf32, #tpu.memory_space<vmem>>, vector<4x128xf32>,
    %c40_244 = arith.constant 40 : index
    %c0_245 = arith.constant 0 : index
    %282 = tpu.strided_load %arg14[%c40_244, %c0_245] {strides = array<i32: 2, 1>} : memref<100x128xf32, #tpu.memory_space<vmem>>, vector<4x128xf32>
    %c41_246 = arith.constant 41 : index
    %c0_247 = arith.constant 0 : index
    %283 = tpu.strided_load %arg14[%c41_246, %c0_247] {strides = array<i32: 2, 1>} : memref<100x128xf32, #tpu.memory_space<vmem>>, vector<4x128xf32>
    %c42_248 = arith.constant 42 : index
    %c0_249 = arith.constant 0 : index
    %284 = tpu.strided_load %arg14[%c42_248, %c0_249] {strides = array<i32: 2, 1>} : memref<100x128xf32, #tpu.memory_space<vmem>>, vector<4x128xf32>
    %c50 = arith.constant 50 : index
    %c0_250 = arith.constant 0 : index
    %285 = tpu.strided_load %arg14[%c50, %c0_250] {strides = array<i32: 2, 1>} : memref<100x128xf32, #tpu.memory_space<vmem>>, vector<4x128xf32>
    %c51_251 = arith.constant 51 : index
    %c0_252 = arith.constant 0 : index
    %286 = tpu.strided_load %arg14[%c51_251, %c0_252] {strides = array<i32: 2, 1>} : memref<100x128xf32, #tpu.memory_space<vmem>>, vector<4x128xf32>
    %c52 = arith.constant 52 : index
    %c0_253 = arith.constant 0 : index
    %287 = tpu.strided_load %arg14[%c52, %c0_253] {strides = array<i32: 2, 1>} : memref<100x128xf32, #tpu.memory_space<vmem>>, vector<4x128xf32>
    %c60 = arith.constant 60 : index
    %c0_254 = arith.constant 0 : index
    %288 = tpu.strided_load %arg14[%c60, %c0_254] {strides = array<i32: 2, 1>} : memref<100x128xf32, #tpu.memory_space<vmem>>, vector<4x128xf32>
    %c61_255 = arith.constant 61 : index
    %c0_256 = arith.constant 0 : index
    %289 = tpu.strided_load %arg14[%c61_255, %c0_256] {strides = array<i32: 2, 1>} : memref<100x128xf32, #tpu.memory_space<vmem>>, vector<4x128xf32>
    %c62 = arith.constant 62 : index
    %c0_257 = arith.constant 0 : index
    %290 = tpu.strided_load %arg14[%c62, %c0_257] {strides = array<i32: 2, 1>} : memref<100x128xf32, #tpu.memory_space<vmem>>, vector<4x128xf32>
    %291 = tpu.concatenate %282, %283, %284, %285, %286, %287, %288, %289, %290 in 1 : vector<4x128xf32>, vector<4x128xf32>, vector<4x128xf32>, vector<4x128xf32>, vector<4x128xf32>, vector<4x128xf32>, vector<4x128xf32>, vector<4x128xf32>, vector<4x128xf32> -> vector<4x1152xf32>
    %292 = arith.truncf %291 : vector<4x1152xf32> to vector<4x1152xbf16>
    %cst_258 = arith.constant dense<0.000000e+00> : vector<4x128xf32>
    %293 = tpu.matmul %292, %234, %cst_258 {dimension_numbers = #tpu.dot_dimension_numbers<[1], [0], [0], [1], [0, 0, 1, 1], [], []>} : vector<4x1152xbf16>, vector<1152x128xbf16>, vector<4x128xf32> -> vector<4x128xf32>
    %294 = vector.broadcast %235 : vector<1x128xf32> to vector<4x128xf32>
    %295 = arith.addf %293, %294 : vector<4x128xf32>
    %cst_259 = arith.constant 2.000000e-01 : f32
    %296 = vector.broadcast %cst_259 : f32 to vector<4x128xf32>
    %297 = arith.mulf %296, %295 : vector<4x128xf32>
    %298 = arith.maximumf %295, %297 : vector<4x128xf32>
    %299 = vector.broadcast %236 : vector<1x128xf32> to vector<4x128xf32>
    %300 = arith.mulf %298, %299 : vector<4x128xf32>
    %301 = vector.broadcast %237 : vector<1x128xf32> to vector<4x128xf32>
    %302 = arith.addf %300, %301 : vector<4x128xf32>
    %c19_260 = arith.constant 19 : index
    %c0_261 = arith.constant 0 : index
    %303 = vector.load %arg15[%c19_260, %c0_261] : memref<36x128xf32, #tpu.memory_space<vmem>>, vector<4x128xf32>
    tpu.vector_store %arg15[%c19_260, %c0_261], %302 {strides = array<i32>} : memref<36x128xf32, #tpu.memory_space<vmem>>, vector<4x128xf32>,
    %c60_262 = arith.constant 60 : index
    %c0_263 = arith.constant 0 : index
    %304 = tpu.strided_load %arg14[%c60_262, %c0_263] {strides = array<i32: 2, 1>} : memref<100x128xf32, #tpu.memory_space<vmem>>, vector<4x128xf32>
    %c61_264 = arith.constant 61 : index
    %c0_265 = arith.constant 0 : index
    %305 = tpu.strided_load %arg14[%c61_264, %c0_265] {strides = array<i32: 2, 1>} : memref<100x128xf32, #tpu.memory_space<vmem>>, vector<4x128xf32>
    %c62_266 = arith.constant 62 : index
    %c0_267 = arith.constant 0 : index
    %306 = tpu.strided_load %arg14[%c62_266, %c0_267] {strides = array<i32: 2, 1>} : memref<100x128xf32, #tpu.memory_space<vmem>>, vector<4x128xf32>
    %c70 = arith.constant 70 : index
    %c0_268 = arith.constant 0 : index
    %307 = tpu.strided_load %arg14[%c70, %c0_268] {strides = array<i32: 2, 1>} : memref<100x128xf32, #tpu.memory_space<vmem>>, vector<4x128xf32>
    %c71_269 = arith.constant 71 : index
    %c0_270 = arith.constant 0 : index
    %308 = tpu.strided_load %arg14[%c71_269, %c0_270] {strides = array<i32: 2, 1>} : memref<100x128xf32, #tpu.memory_space<vmem>>, vector<4x128xf32>
    %c72_271 = arith.constant 72 : index
    %c0_272 = arith.constant 0 : index
    %309 = tpu.strided_load %arg14[%c72_271, %c0_272] {strides = array<i32: 2, 1>} : memref<100x128xf32, #tpu.memory_space<vmem>>, vector<4x128xf32>
    %c80_273 = arith.constant 80 : index
    %c0_274 = arith.constant 0 : index
    %310 = tpu.strided_load %arg14[%c80_273, %c0_274] {strides = array<i32: 2, 1>} : memref<100x128xf32, #tpu.memory_space<vmem>>, vector<4x128xf32>
    %c81_275 = arith.constant 81 : index
    %c0_276 = arith.constant 0 : index
    %311 = tpu.strided_load %arg14[%c81_275, %c0_276] {strides = array<i32: 2, 1>} : memref<100x128xf32, #tpu.memory_space<vmem>>, vector<4x128xf32>
    %c82 = arith.constant 82 : index
    %c0_277 = arith.constant 0 : index
    %312 = tpu.strided_load %arg14[%c82, %c0_277] {strides = array<i32: 2, 1>} : memref<100x128xf32, #tpu.memory_space<vmem>>, vector<4x128xf32>
    %313 = tpu.concatenate %304, %305, %306, %307, %308, %309, %310, %311, %312 in 1 : vector<4x128xf32>, vector<4x128xf32>, vector<4x128xf32>, vector<4x128xf32>, vector<4x128xf32>, vector<4x128xf32>, vector<4x128xf32>, vector<4x128xf32>, vector<4x128xf32> -> vector<4x1152xf32>
    %314 = arith.truncf %313 : vector<4x1152xf32> to vector<4x1152xbf16>
    %cst_278 = arith.constant dense<0.000000e+00> : vector<4x128xf32>
    %315 = tpu.matmul %314, %234, %cst_278 {dimension_numbers = #tpu.dot_dimension_numbers<[1], [0], [0], [1], [0, 0, 1, 1], [], []>} : vector<4x1152xbf16>, vector<1152x128xbf16>, vector<4x128xf32> -> vector<4x128xf32>
    %316 = vector.broadcast %235 : vector<1x128xf32> to vector<4x128xf32>
    %317 = arith.addf %315, %316 : vector<4x128xf32>
    %cst_279 = arith.constant 2.000000e-01 : f32
    %318 = vector.broadcast %cst_279 : f32 to vector<4x128xf32>
    %319 = arith.mulf %318, %317 : vector<4x128xf32>
    %320 = arith.maximumf %317, %319 : vector<4x128xf32>
    %321 = vector.broadcast %236 : vector<1x128xf32> to vector<4x128xf32>
    %322 = arith.mulf %320, %321 : vector<4x128xf32>
    %323 = vector.broadcast %237 : vector<1x128xf32> to vector<4x128xf32>
    %324 = arith.addf %322, %323 : vector<4x128xf32>
    %c25 = arith.constant 25 : index
    %c0_280 = arith.constant 0 : index
    %325 = vector.load %arg15[%c25, %c0_280] : memref<36x128xf32, #tpu.memory_space<vmem>>, vector<4x128xf32>
    tpu.vector_store %arg15[%c25, %c0_280], %324 {strides = array<i32>} : memref<36x128xf32, #tpu.memory_space<vmem>>, vector<4x128xf32>,
    %cst_281 = arith.constant 0.000000e+00 : f32
    %326 = vector.broadcast %cst_281 : f32 to vector<16x128xf32>
    %c0_282 = arith.constant 0 : index
    %c0_283 = arith.constant 0 : index
    %327 = vector.load %arg16[%c0_282, %c0_283] : memref<16x128xf32, #tpu.memory_space<vmem>>, vector<16x128xf32>
    tpu.vector_store %arg16[%c0_282, %c0_283], %326 {strides = array<i32>} : memref<16x128xf32, #tpu.memory_space<vmem>>, vector<16x128xf32>,
    %c0_284 = arith.constant 0 : index
    %c0_285 = arith.constant 0 : index
    %328 = vector.load %arg6[%c0_284, %c0_285] : memref<1152x128xbf16, #tpu.memory_space<vmem>>, vector<1152x128xbf16>
    %c0_286 = arith.constant 0 : index
    %c0_287 = arith.constant 0 : index
    %329 = vector.load %arg7[%c0_286, %c0_287] : memref<3x128xf32, #tpu.memory_space<vmem>>, vector<1x128xf32>
    %c1_288 = arith.constant 1 : index
    %c0_289 = arith.constant 0 : index
    %330 = vector.load %arg7[%c1_288, %c0_289] : memref<3x128xf32, #tpu.memory_space<vmem>>, vector<1x128xf32>
    %c2_290 = arith.constant 2 : index
    %c0_291 = arith.constant 0 : index
    %331 = vector.load %arg7[%c2_290, %c0_291] : memref<3x128xf32, #tpu.memory_space<vmem>>, vector<1x128xf32>
    %c0_292 = arith.constant 0 : index
    %c0_293 = arith.constant 0 : index
    %332 = tpu.strided_load %arg15[%c0_292, %c0_293] {strides = array<i32: 2, 1>} : memref<36x128xf32, #tpu.memory_space<vmem>>, vector<2x128xf32>
    %c1_294 = arith.constant 1 : index
    %c0_295 = arith.constant 0 : index
    %333 = tpu.strided_load %arg15[%c1_294, %c0_295] {strides = array<i32: 2, 1>} : memref<36x128xf32, #tpu.memory_space<vmem>>, vector<2x128xf32>
    %c2_296 = arith.constant 2 : index
    %c0_297 = arith.constant 0 : index
    %334 = tpu.strided_load %arg15[%c2_296, %c0_297] {strides = array<i32: 2, 1>} : memref<36x128xf32, #tpu.memory_space<vmem>>, vector<2x128xf32>
    %c6 = arith.constant 6 : index
    %c0_298 = arith.constant 0 : index
    %335 = tpu.strided_load %arg15[%c6, %c0_298] {strides = array<i32: 2, 1>} : memref<36x128xf32, #tpu.memory_space<vmem>>, vector<2x128xf32>
    %c7_299 = arith.constant 7 : index
    %c0_300 = arith.constant 0 : index
    %336 = tpu.strided_load %arg15[%c7_299, %c0_300] {strides = array<i32: 2, 1>} : memref<36x128xf32, #tpu.memory_space<vmem>>, vector<2x128xf32>
    %c8 = arith.constant 8 : index
    %c0_301 = arith.constant 0 : index
    %337 = tpu.strided_load %arg15[%c8, %c0_301] {strides = array<i32: 2, 1>} : memref<36x128xf32, #tpu.memory_space<vmem>>, vector<2x128xf32>
    %c12_302 = arith.constant 12 : index
    %c0_303 = arith.constant 0 : index
    %338 = tpu.strided_load %arg15[%c12_302, %c0_303] {strides = array<i32: 2, 1>} : memref<36x128xf32, #tpu.memory_space<vmem>>, vector<2x128xf32>
    %c13_304 = arith.constant 13 : index
    %c0_305 = arith.constant 0 : index
    %339 = tpu.strided_load %arg15[%c13_304, %c0_305] {strides = array<i32: 2, 1>} : memref<36x128xf32, #tpu.memory_space<vmem>>, vector<2x128xf32>
    %c14 = arith.constant 14 : index
    %c0_306 = arith.constant 0 : index
    %340 = tpu.strided_load %arg15[%c14, %c0_306] {strides = array<i32: 2, 1>} : memref<36x128xf32, #tpu.memory_space<vmem>>, vector<2x128xf32>
    %341 = tpu.concatenate %332, %333, %334, %335, %336, %337, %338, %339, %340 in 1 : vector<2x128xf32>, vector<2x128xf32>, vector<2x128xf32>, vector<2x128xf32>, vector<2x128xf32>, vector<2x128xf32>, vector<2x128xf32>, vector<2x128xf32>, vector<2x128xf32> -> vector<2x1152xf32>
    %342 = arith.truncf %341 : vector<2x1152xf32> to vector<2x1152xbf16>
    %cst_307 = arith.constant dense<0.000000e+00> : vector<2x128xf32>
    %343 = tpu.matmul %342, %328, %cst_307 {dimension_numbers = #tpu.dot_dimension_numbers<[1], [0], [0], [1], [0, 0, 1, 1], [], []>} : vector<2x1152xbf16>, vector<1152x128xbf16>, vector<2x128xf32> -> vector<2x128xf32>
    %344 = vector.broadcast %329 : vector<1x128xf32> to vector<2x128xf32>
    %345 = arith.addf %343, %344 : vector<2x128xf32>
    %cst_308 = arith.constant 2.000000e-01 : f32
    %346 = vector.broadcast %cst_308 : f32 to vector<2x128xf32>
    %347 = arith.mulf %346, %345 : vector<2x128xf32>
    %348 = arith.maximumf %345, %347 : vector<2x128xf32>
    %349 = vector.broadcast %330 : vector<1x128xf32> to vector<2x128xf32>
    %350 = arith.mulf %348, %349 : vector<2x128xf32>
    %351 = vector.broadcast %331 : vector<1x128xf32> to vector<2x128xf32>
    %352 = arith.addf %350, %351 : vector<2x128xf32>
    %c5 = arith.constant 5 : index
    %c0_309 = arith.constant 0 : index
    %353 = vector.load %arg16[%c5, %c0_309] : memref<16x128xf32, #tpu.memory_space<vmem>>, vector<2x128xf32>
    tpu.vector_store %arg16[%c5, %c0_309], %352 {strides = array<i32>} : memref<16x128xf32, #tpu.memory_space<vmem>>, vector<2x128xf32>,
    %c12_310 = arith.constant 12 : index
    %c0_311 = arith.constant 0 : index
    %354 = tpu.strided_load %arg15[%c12_310, %c0_311] {strides = array<i32: 2, 1>} : memref<36x128xf32, #tpu.memory_space<vmem>>, vector<2x128xf32>
    %c13_312 = arith.constant 13 : index
    %c0_313 = arith.constant 0 : index
    %355 = tpu.strided_load %arg15[%c13_312, %c0_313] {strides = array<i32: 2, 1>} : memref<36x128xf32, #tpu.memory_space<vmem>>, vector<2x128xf32>
    %c14_314 = arith.constant 14 : index
    %c0_315 = arith.constant 0 : index
    %356 = tpu.strided_load %arg15[%c14_314, %c0_315] {strides = array<i32: 2, 1>} : memref<36x128xf32, #tpu.memory_space<vmem>>, vector<2x128xf32>
    %c18_316 = arith.constant 18 : index
    %c0_317 = arith.constant 0 : index
    %357 = tpu.strided_load %arg15[%c18_316, %c0_317] {strides = array<i32: 2, 1>} : memref<36x128xf32, #tpu.memory_space<vmem>>, vector<2x128xf32>
    %c19_318 = arith.constant 19 : index
    %c0_319 = arith.constant 0 : index
    %358 = tpu.strided_load %arg15[%c19_318, %c0_319] {strides = array<i32: 2, 1>} : memref<36x128xf32, #tpu.memory_space<vmem>>, vector<2x128xf32>
    %c20_320 = arith.constant 20 : index
    %c0_321 = arith.constant 0 : index
    %359 = tpu.strided_load %arg15[%c20_320, %c0_321] {strides = array<i32: 2, 1>} : memref<36x128xf32, #tpu.memory_space<vmem>>, vector<2x128xf32>
    %c24 = arith.constant 24 : index
    %c0_322 = arith.constant 0 : index
    %360 = tpu.strided_load %arg15[%c24, %c0_322] {strides = array<i32: 2, 1>} : memref<36x128xf32, #tpu.memory_space<vmem>>, vector<2x128xf32>
    %c25_323 = arith.constant 25 : index
    %c0_324 = arith.constant 0 : index
    %361 = tpu.strided_load %arg15[%c25_323, %c0_324] {strides = array<i32: 2, 1>} : memref<36x128xf32, #tpu.memory_space<vmem>>, vector<2x128xf32>
    %c26 = arith.constant 26 : index
    %c0_325 = arith.constant 0 : index
    %362 = tpu.strided_load %arg15[%c26, %c0_325] {strides = array<i32: 2, 1>} : memref<36x128xf32, #tpu.memory_space<vmem>>, vector<2x128xf32>
    %363 = tpu.concatenate %354, %355, %356, %357, %358, %359, %360, %361, %362 in 1 : vector<2x128xf32>, vector<2x128xf32>, vector<2x128xf32>, vector<2x128xf32>, vector<2x128xf32>, vector<2x128xf32>, vector<2x128xf32>, vector<2x128xf32>, vector<2x128xf32> -> vector<2x1152xf32>
    %364 = arith.truncf %363 : vector<2x1152xf32> to vector<2x1152xbf16>
    %cst_326 = arith.constant dense<0.000000e+00> : vector<2x128xf32>
    %365 = tpu.matmul %364, %328, %cst_326 {dimension_numbers = #tpu.dot_dimension_numbers<[1], [0], [0], [1], [0, 0, 1, 1], [], []>} : vector<2x1152xbf16>, vector<1152x128xbf16>, vector<2x128xf32> -> vector<2x128xf32>
    %366 = vector.broadcast %329 : vector<1x128xf32> to vector<2x128xf32>
    %367 = arith.addf %365, %366 : vector<2x128xf32>
    %cst_327 = arith.constant 2.000000e-01 : f32
    %368 = vector.broadcast %cst_327 : f32 to vector<2x128xf32>
    %369 = arith.mulf %368, %367 : vector<2x128xf32>
    %370 = arith.maximumf %367, %369 : vector<2x128xf32>
    %371 = vector.broadcast %330 : vector<1x128xf32> to vector<2x128xf32>
    %372 = arith.mulf %370, %371 : vector<2x128xf32>
    %373 = vector.broadcast %331 : vector<1x128xf32> to vector<2x128xf32>
    %374 = arith.addf %372, %373 : vector<2x128xf32>
    %c9 = arith.constant 9 : index
    %c0_328 = arith.constant 0 : index
    %375 = vector.load %arg16[%c9, %c0_328] : memref<16x128xf32, #tpu.memory_space<vmem>>, vector<2x128xf32>
    tpu.vector_store %arg16[%c9, %c0_328], %374 {strides = array<i32>} : memref<16x128xf32, #tpu.memory_space<vmem>>, vector<2x128xf32>,
    %c0_329 = arith.constant 0 : index
    %c0_330 = arith.constant 0 : index
    %376 = vector.load %arg8[%c0_329, %c0_330] : memref<1152x128xbf16, #tpu.memory_space<vmem>>, vector<1152x128xbf16>
    %c0_331 = arith.constant 0 : index
    %c0_332 = arith.constant 0 : index
    %377 = vector.load %arg9[%c0_331, %c0_332] : memref<3x128xf32, #tpu.memory_space<vmem>>, vector<1x128xf32>
    %c1_333 = arith.constant 1 : index
    %c0_334 = arith.constant 0 : index
    %378 = vector.load %arg9[%c1_333, %c0_334] : memref<3x128xf32, #tpu.memory_space<vmem>>, vector<1x128xf32>
    %c2_335 = arith.constant 2 : index
    %c0_336 = arith.constant 0 : index
    %379 = vector.load %arg9[%c2_335, %c0_336] : memref<3x128xf32, #tpu.memory_space<vmem>>, vector<1x128xf32>
    %c0_337 = arith.constant 0 : index
    %c0_338 = arith.constant 0 : index
    %380 = vector.load %arg16[%c0_337, %c0_338] : memref<16x128xf32, #tpu.memory_space<vmem>>, vector<1x128xf32>
    %c1_339 = arith.constant 1 : index
    %c0_340 = arith.constant 0 : index
    %381 = vector.load %arg16[%c1_339, %c0_340] : memref<16x128xf32, #tpu.memory_space<vmem>>, vector<1x128xf32>
    %c2_341 = arith.constant 2 : index
    %c0_342 = arith.constant 0 : index
    %382 = vector.load %arg16[%c2_341, %c0_342] : memref<16x128xf32, #tpu.memory_space<vmem>>, vector<1x128xf32>
    %c4 = arith.constant 4 : index
    %c0_343 = arith.constant 0 : index
    %383 = vector.load %arg16[%c4, %c0_343] : memref<16x128xf32, #tpu.memory_space<vmem>>, vector<1x128xf32>
    %c5_344 = arith.constant 5 : index
    %c0_345 = arith.constant 0 : index
    %384 = vector.load %arg16[%c5_344, %c0_345] : memref<16x128xf32, #tpu.memory_space<vmem>>, vector<1x128xf32>
    %c6_346 = arith.constant 6 : index
    %c0_347 = arith.constant 0 : index
    %385 = vector.load %arg16[%c6_346, %c0_347] : memref<16x128xf32, #tpu.memory_space<vmem>>, vector<1x128xf32>
    %c8_348 = arith.constant 8 : index
    %c0_349 = arith.constant 0 : index
    %386 = vector.load %arg16[%c8_348, %c0_349] : memref<16x128xf32, #tpu.memory_space<vmem>>, vector<1x128xf32>
    %c9_350 = arith.constant 9 : index
    %c0_351 = arith.constant 0 : index
    %387 = vector.load %arg16[%c9_350, %c0_351] : memref<16x128xf32, #tpu.memory_space<vmem>>, vector<1x128xf32>
    %c10_352 = arith.constant 10 : index
    %c0_353 = arith.constant 0 : index
    %388 = vector.load %arg16[%c10_352, %c0_353] : memref<16x128xf32, #tpu.memory_space<vmem>>, vector<1x128xf32>
    %389 = tpu.concatenate %380, %381, %382, %383, %384, %385, %386, %387, %388 in 1 : vector<1x128xf32>, vector<1x128xf32>, vector<1x128xf32>, vector<1x128xf32>, vector<1x128xf32>, vector<1x128xf32>, vector<1x128xf32>, vector<1x128xf32>, vector<1x128xf32> -> vector<1x1152xf32>
    %390 = arith.truncf %389 : vector<1x1152xf32> to vector<1x1152xbf16>
    %cst_354 = arith.constant dense<0.000000e+00> : vector<1x128xf32>
    %391 = tpu.matmul %390, %376, %cst_354 {dimension_numbers = #tpu.dot_dimension_numbers<[1], [0], [0], [1], [0, 0, 1, 1], [], []>} : vector<1x1152xbf16>, vector<1152x128xbf16>, vector<1x128xf32> -> vector<1x128xf32>
    %392 = arith.addf %391, %377 : vector<1x128xf32>
    %cst_355 = arith.constant 2.000000e-01 : f32
    %393 = vector.broadcast %cst_355 : f32 to vector<1x128xf32>
    %394 = arith.mulf %393, %392 : vector<1x128xf32>
    %395 = arith.maximumf %392, %394 : vector<1x128xf32>
    %396 = arith.mulf %395, %378 : vector<1x128xf32>
    %397 = arith.addf %396, %379 : vector<1x128xf32>
    %c0_356 = arith.constant 0 : index
    %c0_357 = arith.constant 0 : index
    %398 = vector.load %arg11[%c0_356, %c0_357] : memref<1x128xf32, #tpu.memory_space<vmem>>, vector<1x128xf32>
    %399 = arith.truncf %397 : vector<1x128xf32> to vector<1x128xbf16>
    %c0_358 = arith.constant 0 : index
    %c0_359 = arith.constant 0 : index
    %400 = vector.load %arg10[%c0_358, %c0_359] : memref<128x128xbf16, #tpu.memory_space<vmem>>, vector<128x128xbf16>
    %cst_360 = arith.constant dense<0.000000e+00> : vector<1x128xf32>
    %401 = tpu.matmul %399, %400, %cst_360 {dimension_numbers = #tpu.dot_dimension_numbers<[1], [0], [0], [1], [0, 0, 1, 1], [], []>} : vector<1x128xbf16>, vector<128x128xbf16>, vector<1x128xf32> -> vector<1x128xf32>
    %402 = arith.addf %398, %401 : vector<1x128xf32>
    %403 = tpu.iota {dimensions = array<i32: 1>} : vector<1x128xi32>
    %cst_361 = arith.constant 5.000000e-01 : f32
    %404 = vector.broadcast %cst_361 : f32 to vector<1x128xf32>
    %405 = arith.mulf %404, %402 : vector<1x128xf32>
    %406 = math.tanh %405 : vector<1x128xf32>
    %cst_362 = arith.constant 1.000000e+00 : f32
    %407 = vector.broadcast %cst_362 : f32 to vector<1x128xf32>
    %408 = arith.addf %406, %407 : vector<1x128xf32>
    %cst_363 = arith.constant 5.000000e-01 : f32
    %409 = vector.broadcast %cst_363 : f32 to vector<1x128xf32>
    %410 = arith.mulf %409, %408 : vector<1x128xf32>
    %c1_i32 = arith.constant 1 : i32
    %411 = vector.broadcast %c1_i32 : i32 to vector<1x128xi32>
    %412 = arith.cmpi sge, %403, %411 : vector<1x128xi32>
    %c10_i32 = arith.constant 10 : i32
    %413 = vector.broadcast %c10_i32 : i32 to vector<1x128xi32>
    %414 = arith.cmpi sle, %403, %413 : vector<1x128xi32>
    %415 = arith.andi %412, %414 : vector<1x128xi1>
    %cst_364 = arith.constant -1.000000e+30 : f32
    %416 = vector.broadcast %cst_364 : f32 to vector<1x128xf32>
    %417 = arith.select %415, %402, %416 : vector<1x128xi1>, vector<1x128xf32>
    %cst_365 = arith.constant dense<0xFF800000> : vector<1xf32>
    %418 = vector.multi_reduction <maximumf>, %417, %cst_365 [1] : vector<1x128xf32> to vector<1xf32>
    %419 = vector.shape_cast %418 : vector<1xf32> to vector<1x1xf32>
    %420 = vector.broadcast %419 : vector<1x1xf32> to vector<1x128xf32>
    %421 = arith.subf %417, %420 : vector<1x128xf32>
    %422 = math.exp %421 : vector<1x128xf32>
    %cst_366 = arith.constant 0.000000e+00 : f32
    %423 = vector.broadcast %cst_366 : f32 to vector<1x128xf32>
    %424 = arith.select %415, %422, %423 : vector<1x128xi1>, vector<1x128xf32>
    %cst_367 = arith.constant dense<0.000000e+00> : vector<1xf32>
    %425 = vector.multi_reduction <add>, %424, %cst_367 [1] : vector<1x128xf32> to vector<1xf32>
    %426 = vector.shape_cast %425 : vector<1xf32> to vector<1x1xf32>
    %427 = tpu.reciprocal %426 {approx = true} : vector<1x1xf32> -> vector<1x1xf32>
    %428 = vector.broadcast %427 : vector<1x1xf32> to vector<1x128xf32>
    %429 = arith.mulf %424, %428 : vector<1x128xf32>
    %c0_i32 = arith.constant 0 : i32
    %430 = vector.broadcast %c0_i32 : i32 to vector<1x128xi32>
    %431 = arith.cmpi eq, %403, %430 : vector<1x128xi32>
    %432 = arith.select %431, %410, %429 : vector<1x128xi1>, vector<1x128xf32>
    %c0_368 = arith.constant 0 : index
    %c0_369 = arith.constant 0 : index
    %c0_370 = arith.constant 0 : index
    %433 = vector.load %arg12[%c0_368, %c0_369, %c0_370] : memref<1x1x128xf32, #tpu.memory_space<vmem>>, vector<1x1x128xf32>
    %434 = vector.shape_cast %433 : vector<1x1x128xf32> to vector<1x128xf32>
    %435 = vector.shape_cast %432 : vector<1x128xf32> to vector<1x1x128xf32>
    tpu.vector_store %arg12[%c0_368, %c0_369, %c0_370], %435 {strides = array<i32>} : memref<1x1x128xf32, #tpu.memory_space<vmem>>, vector<1x1x128xf32>,
    return
  }
  func.func @transform_0(%arg0: i32) -> (i32, i32, i32) {
    %c0_i32 = arith.constant 0 : i32
    %c0_i32_0 = arith.constant 0 : i32
    %c0_i32_1 = arith.constant 0 : i32
    return %arg0, %c0_i32, %c0_i32_0 : i32, i32, i32
  }
  func.func @transform_1(%arg0: i32) -> (i32, i32) {
    %c0_i32 = arith.constant 0 : i32
    %c0_i32_0 = arith.constant 0 : i32
    %c0_i32_1 = arith.constant 0 : i32
    return %c0_i32, %c0_i32_0 : i32, i32
  }
  func.func @transform_2(%arg0: i32) -> (i32, i32) {
    %c0_i32 = arith.constant 0 : i32
    %c0_i32_0 = arith.constant 0 : i32
    %c0_i32_1 = arith.constant 0 : i32
    return %c0_i32, %c0_i32_0 : i32, i32
  }
  func.func @transform_3(%arg0: i32) -> (i32, i32) {
    %c0_i32 = arith.constant 0 : i32
    %c0_i32_0 = arith.constant 0 : i32
    %c0_i32_1 = arith.constant 0 : i32
    return %c0_i32, %c0_i32_0 : i32, i32
  }
  func.func @transform_4(%arg0: i32) -> (i32, i32) {
    %c0_i32 = arith.constant 0 : i32
    %c0_i32_0 = arith.constant 0 : i32
    %c0_i32_1 = arith.constant 0 : i32
    return %c0_i32, %c0_i32_0 : i32, i32
  }
  func.func @transform_5(%arg0: i32) -> (i32, i32) {
    %c0_i32 = arith.constant 0 : i32
    %c0_i32_0 = arith.constant 0 : i32
    %c0_i32_1 = arith.constant 0 : i32
    return %c0_i32, %c0_i32_0 : i32, i32
  }
  func.func @transform_6(%arg0: i32) -> (i32, i32) {
    %c0_i32 = arith.constant 0 : i32
    %c0_i32_0 = arith.constant 0 : i32
    %c0_i32_1 = arith.constant 0 : i32
    return %c0_i32, %c0_i32_0 : i32, i32
  }
  func.func @transform_7(%arg0: i32) -> (i32, i32) {
    %c0_i32 = arith.constant 0 : i32
    %c0_i32_0 = arith.constant 0 : i32
    %c0_i32_1 = arith.constant 0 : i32
    return %c0_i32, %c0_i32_0 : i32, i32
  }
  func.func @transform_8(%arg0: i32) -> (i32, i32) {
    %c0_i32 = arith.constant 0 : i32
    %c0_i32_0 = arith.constant 0 : i32
    %c0_i32_1 = arith.constant 0 : i32
    return %c0_i32, %c0_i32_0 : i32, i32
  }
  func.func @transform_9(%arg0: i32) -> (i32, i32) {
    %c0_i32 = arith.constant 0 : i32
    %c0_i32_0 = arith.constant 0 : i32
    %c0_i32_1 = arith.constant 0 : i32
    return %c0_i32, %c0_i32_0 : i32, i32
  }
  func.func @transform_10(%arg0: i32) -> (i32, i32) {
    %c0_i32 = arith.constant 0 : i32
    %c0_i32_0 = arith.constant 0 : i32
    %c0_i32_1 = arith.constant 0 : i32
    return %c0_i32, %c0_i32_0 : i32, i32
  }
  func.func @transform_11(%arg0: i32) -> (i32, i32, i32) {
    %c0_i32 = arith.constant 0 : i32
    %c0_i32_0 = arith.constant 0 : i32
    %c0_i32_1 = arith.constant 0 : i32
    return %arg0, %c0_i32, %c0_i32_0 : i32, i32, i32
  }
}

</mosaic_0001>

<llo_original>
// kernel: fwd.1
$region0: #{fwd.1}
  #allocation0 [shape = 'u32[]', space=smem, size = 0x4, offset = 0x4, fixed_abs, tag = 'smem constant byte address 0x4 - core index']
  #allocation1 [shape = 'u32[144,128]{1,0:T(1,128)}', space=vmem, size = 0x12000, scoped, tag = 'internal scratch']
  #allocation2 [shape = 'f32[324,128]{1,0:T(8,128)}', space=vmem, size = 0x29000, scoped, tag = 'scratch operand']
  #allocation3 [shape = 'f32[100,128]{1,0:T(8,128)}', space=vmem, size = 0xd000, scoped, tag = 'scratch operand']
  #allocation4 [shape = 'f32[36,128]{1,0:T(8,128)}', space=vmem, size = 0x5000, scoped, tag = 'scratch operand']
  #allocation5 [shape = 'f32[16,128]{1,0:T(8,128)}', space=vmem, size = 0x2000, scoped, tag = 'scratch operand']
  %s0 = inlined_call_operand.vmem [shape: f32[2,256,4], index: 0, kind: input, shape index: {}]
  %s1 = inlined_call_operand.vmem [shape: bf16[1152,128], index: 1, kind: input, shape index: {}]
  %s2 = inlined_call_operand.vmem [shape: f32[3,128], index: 2, kind: input, shape index: {}]
  %s3 = inlined_call_operand.hbm [shape: bf16[1152,128], index: 3, kind: input, shape index: {}]
  %s4 = inlined_call_operand.hbm [shape: f32[3,128], index: 4, kind: input, shape index: {}]
  %s5 = inlined_call_operand.hbm [shape: bf16[1152,128], index: 5, kind: input, shape index: {}]
  %s6 = inlined_call_operand.vmem [shape: f32[3,128], index: 6, kind: input, shape index: {}]
  %s7 = inlined_call_operand.hbm [shape: bf16[1152,128], index: 7, kind: input, shape index: {}]
  %s8 = inlined_call_operand.hbm [shape: f32[3,128], index: 8, kind: input, shape index: {}]
  %s9 = inlined_call_operand.vmem [shape: bf16[128,128], index: 9, kind: input, shape index: {}]
  %s10 = inlined_call_operand.vmem [shape: f32[1,128], index: 10, kind: input, shape index: {}]
  %s11 = inlined_call_operand.vmem [shape: f32[2,1,128], index: 11, kind: output, shape index: {}]
  %s12 = sld [smem:[#allocation0]]
  $region97: #{fwd.1} parent=0
    _
  %s14 = ssub.s32 1, %s12
  %s15 = scalar_select 0, %s14, %s12
  $region1: #{fwd.1} parent=0
    #allocation6 [shape = 'u8[294912]{0}', space=vmem, size = 0x48000, scoped, tag = 'input window, operand 3, single buffered']
    #allocation7 [shape = 's32[2]{0}', space=sflag, size = 0x8, scoped, tag = 'scoped memory for fwd.1']
    #allocation8 [shape = 'u8[2048]{0}', space=vmem, size = 0x800, scoped, tag = 'input window, operand 4, single buffered']
    #allocation9 [shape = 's32[1]{0}', space=sflag, size = 0x4, scoped, tag = 'scoped memory for fwd.1']
    #allocation10 [shape = 'u8[294912]{0}', space=vmem, size = 0x48000, scoped, tag = 'input window, operand 5, single buffered']
    #allocation11 [shape = 'u8[294912]{0}', space=vmem, size = 0x48000, scoped, tag = 'input window, operand 7, single buffered']
    #allocation12 [shape = 's32[1]{0}', space=sflag, size = 0x4, scoped, tag = 'scoped memory for fwd.1']
    #allocation13 [shape = 'u8[2048]{0}', space=vmem, size = 0x800, scoped, tag = 'input window, operand 8, single buffered']
    %16 = vsyncpa [#allocation7], 0
    %17 = vsyncpa [#allocation9], 0
    %18 = vsyncpa [#allocation12], 0
    loop: start=0, step=1, limit=4
    $region2: #{fwd.1} parent=1 // loop_pre_header
      _
    $region3: #{fwd.1} parent=1 // loop_header
      %s20 = sphi 0, %s24
      %p21 = scmp.ge.s32.totalorder %s20, 4
      %s30 = sphi 0, %s32
      %s33 = sphi 0, %s30
      %s34 = sphi 0, %s33
      %s50 = sphi 0, %s34
      %s54 = sphi 0, %s54
      %s56 = sphi 0, %s54
      %s57 = sphi 0, %s56
      %s71 = sphi 0, %s57
      %s75 = sphi 0, %s75
      %s77 = sphi 0, %s75
      %s78 = sphi 0, %s77
      %s92 = sphi 0, %s78
      %s96 = sphi 0, %s96
      %s98 = sphi 0, %s96
      %s99 = sphi 0, %s98
      %s113 = sphi 0, %s99
      %s117 = sphi 0, %s117
      %s119 = sphi 0, %s117
      %s120 = sphi 0, %s119
      %s134 = sphi 0, %s120
      %s138 = sphi 0, %s138
      %s140 = sphi 0, %s138
      %s141 = sphi 0, %s140
      %s155 = sphi 0, %s141
      %s159 = sphi 0, %s159
      %s161 = sphi 0, %s159
      %s162 = sphi 0, %s161
      %s176 = sphi 0, %s162
      %s180 = sphi 0, %s180
      %s182 = sphi 0, %s180
      %s183 = sphi 0, %s182
      %s197 = sphi 0, %s183
      %s201 = sphi 0, %s201
      %s203 = sphi 0, %s201
      %s204 = sphi 0, %s203
      %s218 = sphi 0, %s204
      %s222 = sphi 0, %s222
      %s224 = sphi 0, %s222
      %s225 = sphi 0, %s224
      %s239 = sphi 0, %s225
      %s243 = sphi 0, %s243
      %s245 = sphi 0, %s243
      %s246 = sphi 0, %s245
      %s260 = sphi 0, %s246
      %s266 = sphi 0, %s268
      %s269 = sphi 0, %s266
      %s270 = sphi 0, %s269
      %s286 = sphi 0, %s270
    $region4: #{fwd.1} parent=1 // loop_header_branch
      %23 = sbr.rel (%p21) target = $region8
    $region5: #{fwd.1} parent=1 // loop_body
      %s25 = ssub.s32 %s20, 1
      %s26 = ssub.s32 %s20, 2
      %s27 = sadd.s32 %s20, 1
      %s28 = ssub.s32 %s20, %s27
      %p29 = scmp.eq.s32.totalorder %s28, 0
      %s31 = sadd.s32 %s30, 1
      %s32 = scalar_select %p29, %s30, %s31
      %p35 = pneg %p29
      %p36 = scmp.eq.s32.totalorder %s20, 1
      %p37 = por %p35, %p36
      %p38 = scmp.ne.s32.totalorder %s30, %s33
      %p39 = scmp.eq.s32.totalorder %s20, 0
      %p40 = por %p38, %p39
      %p41 = scmp.ne.s32.totalorder %s30, %s33
      %p42 = scmp.eq.s32.totalorder %s25, 1
      %p43 = por %p41, %p42
      %p44 = scmp.ne.s32.totalorder %s33, %s34
      %p45 = scmp.eq.s32.totalorder %s25, 0
      %p46 = por %p44, %p45
      %p47 = scmp.ne.s32.totalorder %s33, %s34
      %p48 = scmp.eq.s32.totalorder %s26, 1
      %p49 = por %p47, %p48
      %p51 = scmp.ne.s32.totalorder %s34, %s50
      %p52 = scmp.eq.s32.totalorder %s26, 0
      %p53 = por %p51, %p52
      %s55 = sadd.s32 %s54, 1
      %p58 = scmp.eq.s32.totalorder %s20, 1
      %p59 = scmp.ne.s32.totalorder %s54, %s56
      %p60 = scmp.eq.s32.totalorder %s20, 0
      %p61 = por %p59, %p60
      %p62 = scmp.ne.s32.totalorder %s54, %s56
      %p63 = scmp.eq.s32.totalorder %s25, 1
      %p64 = por %p62, %p63
      %p65 = scmp.ne.s32.totalorder %s56, %s57
      %p66 = scmp.eq.s32.totalorder %s25, 0
      %p67 = por %p65, %p66
      %p68 = scmp.ne.s32.totalorder %s56, %s57
      %p69 = scmp.eq.s32.totalorder %s26, 1
      %p70 = por %p68, %p69
      %p72 = scmp.ne.s32.totalorder %s57, %s71
      %p73 = scmp.eq.s32.totalorder %s26, 0
      %p74 = por %p72, %p73
      %s76 = sadd.s32 %s75, 1
      %p79 = scmp.eq.s32.totalorder %s20, 1
      %p80 = scmp.ne.s32.totalorder %s75, %s77
      %p81 = scmp.eq.s32.totalorder %s20, 0
      %p82 = por %p80, %p81
      %p83 = scmp.ne.s32.totalorder %s75, %s77
      %p84 = scmp.eq.s32.totalorder %s25, 1
      %p85 = por %p83, %p84
      %p86 = scmp.ne.s32.totalorder %s77, %s78
      %p87 = scmp.eq.s32.totalorder %s25, 0
      %p88 = por %p86, %p87
      %p89 = scmp.ne.s32.totalorder %s77, %s78
      %p90 = scmp.eq.s32.totalorder %s26, 1
      %p91 = por %p89, %p90
      %p93 = scmp.ne.s32.totalorder %s78, %s92
      %p94 = scmp.eq.s32.totalorder %s26, 0
      %p95 = por %p93, %p94
      %s97 = sadd.s32 %s96, 1
      %p100 = scmp.eq.s32.totalorder %s20, 1
      %p101 = scmp.ne.s32.totalorder %s96, %s98
      %p102 = scmp.eq.s32.totalorder %s20, 0
      %p103 = por %p101, %p102
      %p104 = scmp.ne.s32.totalorder %s96, %s98
      %p105 = scmp.eq.s32.totalorder %s25, 1
      %p106 = por %p104, %p105
      %p107 = scmp.ne.s32.totalorder %s98, %s99
      %p108 = scmp.eq.s32.totalorder %s25, 0
      %p109 = por %p107, %p108
      %p110 = scmp.ne.s32.totalorder %s98, %s99
      %p111 = scmp.eq.s32.totalorder %s26, 1
      %p112 = por %p110, %p111
      %p114 = scmp.ne.s32.totalorder %s99, %s113
      %p115 = scmp.eq.s32.totalorder %s26, 0
      %p116 = por %p114, %p115
      %s118 = sadd.s32 %s117, 1
      %p121 = scmp.eq.s32.totalorder %s20, 1
      %p122 = scmp.ne.s32.totalorder %s117, %s119
      %p123 = scmp.eq.s32.totalorder %s20, 0
      %p124 = por %p122, %p123
      %p125 = scmp.ne.s32.totalorder %s117, %s119
      %p126 = scmp.eq.s32.totalorder %s25, 1
      %p127 = por %p125, %p126
      %p128 = scmp.ne.s32.totalorder %s119, %s120
      %p129 = scmp.eq.s32.totalorder %s25, 0
      %p130 = por %p128, %p129
      %p131 = scmp.ne.s32.totalorder %s119, %s120
      %p132 = scmp.eq.s32.totalorder %s26, 1
      %p133 = por %p131, %p132
      %p135 = scmp.ne.s32.totalorder %s120, %s134
      %p136 = scmp.eq.s32.totalorder %s26, 0
      %p137 = por %p135, %p136
      %s139 = sadd.s32 %s138, 1
      %p142 = scmp.eq.s32.totalorder %s20, 1
      %p143 = scmp.ne.s32.totalorder %s138, %s140
      %p144 = scmp.eq.s32.totalorder %s20, 0
      %p145 = por %p143, %p144
      %p146 = scmp.ne.s32.totalorder %s138, %s140
      %p147 = scmp.eq.s32.totalorder %s25, 1
      %p148 = por %p146, %p147
      %p149 = scmp.ne.s32.totalorder %s140, %s141
      %p150 = scmp.eq.s32.totalorder %s25, 0
      %p151 = por %p149, %p150
      %p152 = scmp.ne.s32.totalorder %s140, %s141
      %p153 = scmp.eq.s32.totalorder %s26, 1
      %p154 = por %p152, %p153
      %p156 = scmp.ne.s32.totalorder %s141, %s155
      %p157 = scmp.eq.s32.totalorder %s26, 0
      %p158 = por %p156, %p157
      %s160 = sadd.s32 %s159, 1
      %p163 = scmp.eq.s32.totalorder %s20, 1
      %p164 = scmp.ne.s32.totalorder %s159, %s161
      %p165 = scmp.eq.s32.totalorder %s20, 0
      %p166 = por %p164, %p165
      %p167 = scmp.ne.s32.totalorder %s159, %s161
      %p168 = scmp.eq.s32.totalorder %s25, 1
      %p169 = por %p167, %p168
      %p170 = scmp.ne.s32.totalorder %s161, %s162
      %p171 = scmp.eq.s32.totalorder %s25, 0
      %p172 = por %p170, %p171
      %p173 = scmp.ne.s32.totalorder %s161, %s162
      %p174 = scmp.eq.s32.totalorder %s26, 1
      %p175 = por %p173, %p174
      %p177 = scmp.ne.s32.totalorder %s162, %s176
      %p178 = scmp.eq.s32.totalorder %s26, 0
      %p179 = por %p177, %p178
      %s181 = sadd.s32 %s180, 1
      %p184 = scmp.eq.s32.totalorder %s20, 1
      %p185 = scmp.ne.s32.totalorder %s180, %s182
      %p186 = scmp.eq.s32.totalorder %s20, 0
      %p187 = por %p185, %p186
      %p188 = scmp.ne.s32.totalorder %s180, %s182
      %p189 = scmp.eq.s32.totalorder %s25, 1
      %p190 = por %p188, %p189
      %p191 = scmp.ne.s32.totalorder %s182, %s183
      %p192 = scmp.eq.s32.totalorder %s25, 0
      %p193 = por %p191, %p192
      %p194 = scmp.ne.s32.totalorder %s182, %s183
      %p195 = scmp.eq.s32.totalorder %s26, 1
      %p196 = por %p194, %p195
      %p198 = scmp.ne.s32.totalorder %s183, %s197
      %p199 = scmp.eq.s32.totalorder %s26, 0
      %p200 = por %p198, %p199
      %s202 = sadd.s32 %s201, 1
      %p205 = scmp.eq.s32.totalorder %s20, 1
      %p206 = scmp.ne.s32.totalorder %s201, %s203
      %p207 = scmp.eq.s32.totalorder %s20, 0
      %p208 = por %p206, %p207
      %p209 = scmp.ne.s32.totalorder %s201, %s203
      %p210 = scmp.eq.s32.totalorder %s25, 1
      %p211 = por %p209, %p210
      %p212 = scmp.ne.s32.totalorder %s203, %s204
      %p213 = scmp.eq.s32.totalorder %s25, 0
      %p214 = por %p212, %p213
      %p215 = scmp.ne.s32.totalorder %s203, %s204
      %p216 = scmp.eq.s32.totalorder %s26, 1
      %p217 = por %p215, %p216
      %p219 = scmp.ne.s32.totalorder %s204, %s218
      %p220 = scmp.eq.s32.totalorder %s26, 0
      %p221 = por %p219, %p220
      %s223 = sadd.s32 %s222, 1
      %p226 = scmp.eq.s32.totalorder %s20, 1
      %p227 = scmp.ne.s32.totalorder %s222, %s224
      %p228 = scmp.eq.s32.totalorder %s20, 0
      %p229 = por %p227, %p228
      %p230 = scmp.ne.s32.totalorder %s222, %s224
      %p231 = scmp.eq.s32.totalorder %s25, 1
      %p232 = por %p230, %p231
      %p233 = scmp.ne.s32.totalorder %s224, %s225
      %p234 = scmp.eq.s32.totalorder %s25, 0
      %p235 = por %p233, %p234
      %p236 = scmp.ne.s32.totalorder %s224, %s225
      %p237 = scmp.eq.s32.totalorder %s26, 1
      %p238 = por %p236, %p237
      %p240 = scmp.ne.s32.totalorder %s225, %s239
      %p241 = scmp.eq.s32.totalorder %s26, 0
      %p242 = por %p240, %p241
      %s244 = sadd.s32 %s243, 1
      %p247 = scmp.eq.s32.totalorder %s20, 1
      %p248 = scmp.ne.s32.totalorder %s243, %s245
      %p249 = scmp.eq.s32.totalorder %s20, 0
      %p250 = por %p248, %p249
      %p251 = scmp.ne.s32.totalorder %s243, %s245
      %p252 = scmp.eq.s32.totalorder %s25, 1
      %p253 = por %p251, %p252
      %p254 = scmp.ne.s32.totalorder %s245, %s246
      %p255 = scmp.eq.s32.totalorder %s25, 0
      %p256 = por %p254, %p255
      %p257 = scmp.ne.s32.totalorder %s245, %s246
      %p258 = scmp.eq.s32.totalorder %s26, 1
      %p259 = por %p257, %p258
      %p261 = scmp.ne.s32.totalorder %s246, %s260
      %p262 = scmp.eq.s32.totalorder %s26, 0
      %p263 = por %p261, %p262
      %s264 = ssub.s32 %s20, %s27
      %p265 = scmp.eq.s32.totalorder %s264, 0
      %s267 = sadd.s32 %s266, 1
      %s268 = scalar_select %p265, %s266, %s267
      %p271 = pneg %p265
      %p272 = scmp.eq.s32.totalorder %s20, 1
      %p273 = por %p271, %p272
      %p274 = scmp.ne.s32.totalorder %s266, %s269
      %p275 = scmp.eq.s32.totalorder %s20, 0
      %p276 = por %p274, %p275
      %p277 = scmp.ne.s32.totalorder %s266, %s269
      %p278 = scmp.eq.s32.totalorder %s25, 1
      %p279 = por %p277, %p278
      %p280 = scmp.ne.s32.totalorder %s269, %s270
      %p281 = scmp.eq.s32.totalorder %s25, 0
      %p282 = por %p280, %p281
      %p283 = scmp.ne.s32.totalorder %s269, %s270
      %p284 = scmp.eq.s32.totalorder %s26, 1
      %p285 = por %p283, %p284
      %p287 = scmp.ne.s32.totalorder %s270, %s286
      %p288 = scmp.eq.s32.totalorder %s26, 0
      %p289 = por %p287, %p288
      %p290 = scmp.le.s32.totalorder 1, %s20
      %p291 = scmp.lt.s32.totalorder %s20, 3
      %p292 = pnand %p290, %p291
      %p293 = pneg %p292
      // Predicated region
      $region9: #{fwd.1} parent=5 // pred_check
        _
      $region10: #{fwd.1} parent=5 // pred_check_branch
        %295 = sbr.rel (%p292) target = $region12
      $region11: #{fwd.1} parent=5 // pred_region
        %s296 = ssub.s32 %s20, 1
        // Predicated region
        $region13: #{fwd.1} parent=11 // pred_check
          %p297 = pneg %p67
        $region14: #{fwd.1} parent=11 // pred_check_branch
          %299 = sbr.rel (%p297) target = $region16
        $region15: #{fwd.1} parent=11 // pred_region
          _
        $region16: #{fwd.1} parent=11 // pred_fallthru
          _
        // Predicated region
        $region17: #{fwd.1} parent=11 // pred_check
          %p300 = pneg %p88
        $region18: #{fwd.1} parent=11 // pred_check_branch
          %302 = sbr.rel (%p300) target = $region20
        $region19: #{fwd.1} parent=11 // pred_region
          _
        $region20: #{fwd.1} parent=11 // pred_fallthru
          _
        // Predicated region
        $region21: #{fwd.1} parent=11 // pred_check
          %p303 = pneg %p109
        $region22: #{fwd.1} parent=11 // pred_check_branch
          %305 = sbr.rel (%p303) target = $region24
        $region23: #{fwd.1} parent=11 // pred_region
          %s307 = ssub.s32 9216, 9216
          %308 = vsyncadd [#allocation7], %s307
          %s309 = sshll.u32 [#allocation6], 4
          %s310 = int_to_ptr.vmem [resolvable:$true] %s309
          %315 = dma.hbm_to_vmem [thread:$0]  %s3, 9216, %s310, [#allocation7], 64, 64, 4
        $region24: #{fwd.1} parent=11 // pred_fallthru
          _
        // Predicated region
        $region25: #{fwd.1} parent=11 // pred_check
          %p316 = pneg %p130
        $region26: #{fwd.1} parent=11 // pred_check_branch
          %318 = sbr.rel (%p316) target = $region28
        $region27: #{fwd.1} parent=11 // pred_region
          %s320 = ssub.s32 64, 64
          %321 = vsyncadd [#allocation9], %s320
          %s323 = sshll.u32 [#allocation8], 4
          %s324 = int_to_ptr.vmem [resolvable:$true] %s323
          %326 = dma.hbm_to_vmem [thread:$0]  %s4, 64, %s324, [#allocation9]
        $region28: #{fwd.1} parent=11 // pred_fallthru
          _
        // Predicated region
        $region29: #{fwd.1} parent=11 // pred_check
          %p327 = pneg %p151
        $region30: #{fwd.1} parent=11 // pred_check_branch
          %329 = sbr.rel (%p327) target = $region32
        $region31: #{fwd.1} parent=11 // pred_region
          %s331 = ssub.s32 9216, 9216
          %332 = vsyncadd [#allocation9], %s331
          %s333 = sshll.u32 [#allocation10], 4
          %s334 = int_to_ptr.vmem [resolvable:$true] %s333
          %339 = dma.hbm_to_vmem [thread:$0]  %s5, 9216, %s334, [#allocation9], 64, 64, 4
        $region32: #{fwd.1} parent=11 // pred_fallthru
          _
        // Predicated region
        $region33: #{fwd.1} parent=11 // pred_check
          %p340 = pneg %p172
        $region34: #{fwd.1} parent=11 // pred_check_branch
          %342 = sbr.rel (%p340) target = $region36
        $region35: #{fwd.1} parent=11 // pred_region
          _
        $region36: #{fwd.1} parent=11 // pred_fallthru
          _
        // Predicated region
        $region37: #{fwd.1} parent=11 // pred_check
          %p343 = pneg %p193
        $region38: #{fwd.1} parent=11 // pred_check_branch
          %345 = sbr.rel (%p343) target = $region40
        $region39: #{fwd.1} parent=11 // pred_region
          %s347 = ssub.s32 9216, 9216
          %348 = vsyncadd [#allocation12], %s347
          %s349 = sshll.u32 [#allocation11], 4
          %s350 = int_to_ptr.vmem [resolvable:$true] %s349
          %355 = dma.hbm_to_vmem [thread:$0]  %s7, 9216, %s350, [#allocation12], 64, 64, 4
        $region40: #{fwd.1} parent=11 // pred_fallthru
          _
        // Predicated region
        $region41: #{fwd.1} parent=11 // pred_check
          %p356 = pneg %p214
        $region42: #{fwd.1} parent=11 // pred_check_branch
          %358 = sbr.rel (%p356) target = $region44
        $region43: #{fwd.1} parent=11 // pred_region
          %s360 = ssub.s32 64, 64
          %361 = vsyncadd [#allocation12], %s360
          %s363 = sshll.u32 [#allocation13], 4
          %s364 = int_to_ptr.vmem [resolvable:$true] %s363
          %366 = dma.hbm_to_vmem [thread:$0]  %s8, 64, %s364, [#allocation12]
        $region44: #{fwd.1} parent=11 // pred_fallthru
          _
        // Predicated region
        $region45: #{fwd.1} parent=11 // pred_check
          %p367 = pneg %p235
        $region46: #{fwd.1} parent=11 // pred_check_branch
          %369 = sbr.rel (%p367) target = $region48
        $region47: #{fwd.1} parent=11 // pred_region
          _
        $region48: #{fwd.1} parent=11 // pred_fallthru
          _
        // Predicated region
        $region49: #{fwd.1} parent=11 // pred_check
          %p370 = pneg %p256
        $region50: #{fwd.1} parent=11 // pred_check_branch
          %372 = sbr.rel (%p370) target = $region52
        $region51: #{fwd.1} parent=11 // pred_region
          _
        $region52: #{fwd.1} parent=11 // pred_fallthru
          _
      $region12: #{fwd.1} parent=5 // pred_fallthru
        _
      %p373 = scmp.lt.s32.totalorder %s20, 2
      // Predicated region
      $region53: #{fwd.1} parent=5 // pred_check
        %p374 = pneg %p373
      $region54: #{fwd.1} parent=5 // pred_check_branch
        %376 = sbr.rel (%p374) target = $region56
      $region55: #{fwd.1} parent=5 // pred_region
        // Predicated region
        $region57: #{fwd.1} parent=55 // pred_check
          %p377 = pneg %p40
        $region58: #{fwd.1} parent=55 // pred_check_branch
          %379 = sbr.rel (%p377) target = $region60
        $region59: #{fwd.1} parent=55 // pred_region
          %p380 = scmp.lt.s32.totalorder %s20, 1
          %s381 = scalar_select %p380, %s20, 1
          %s382 = smul.addr %s381, 32
          %s383 = smul.addr %s382, 8
          %s384 = scalar_lea.vmem %s0, %s383
        $region60: #{fwd.1} parent=55 // pred_fallthru
          _
      $region56: #{fwd.1} parent=5 // pred_fallthru
        _
      %p385 = scmp.le.s32.totalorder 1, %s20
      %p386 = scmp.lt.s32.totalorder %s20, 3
      %p387 = pnand %p385, %p386
      %p388 = pneg %p387
      // Predicated region
      $region61: #{fwd.1} parent=5 // pred_check
        _
      $region62: #{fwd.1} parent=5 // pred_check_branch
        %390 = sbr.rel (%p387) target = $region64
      $region63: #{fwd.1} parent=5 // pred_region
        %s391 = ssub.s32 %s20, 1
        // Predicated region
        $region65: #{fwd.1} parent=63 // pred_check
          %p392 = pneg %p109
        $region66: #{fwd.1} parent=63 // pred_check_branch
          %394 = sbr.rel (%p392) target = $region68
        $region67: #{fwd.1} parent=63 // pred_region
          %395 = dma.done [#allocation7], 9216
        $region68: #{fwd.1} parent=63 // pred_fallthru
          _
        // Predicated region
        $region69: #{fwd.1} parent=63 // pred_check
          %p396 = pneg %p130
        $region70: #{fwd.1} parent=63 // pred_check_branch
          %398 = sbr.rel (%p396) target = $region72
        $region71: #{fwd.1} parent=63 // pred_region
          %399 = dma.done [#allocation9], 64
        $region72: #{fwd.1} parent=63 // pred_fallthru
          _
        // Predicated region
        $region73: #{fwd.1} parent=63 // pred_check
          %p400 = pneg %p151
        $region74: #{fwd.1} parent=63 // pred_check_branch
          %402 = sbr.rel (%p400) target = $region76
        $region75: #{fwd.1} parent=63 // pred_region
          %403 = dma.done [#allocation9], 9216
        $region76: #{fwd.1} parent=63 // pred_fallthru
          _
        // Predicated region
        $region77: #{fwd.1} parent=63 // pred_check
          %p404 = pneg %p193
        $region78: #{fwd.1} parent=63 // pred_check_branch
          %406 = sbr.rel (%p404) target = $region80
        $region79: #{fwd.1} parent=63 // pred_region
          %407 = dma.done [#allocation12], 9216
        $region80: #{fwd.1} parent=63 // pred_fallthru
          _
        // Predicated region
        $region81: #{fwd.1} parent=63 // pred_check
          %p408 = pneg %p214
        $region82: #{fwd.1} parent=63 // pred_check_branch
          %410 = sbr.rel (%p408) target = $region84
        $region83: #{fwd.1} parent=63 // pred_region
          %411 = dma.done [#allocation12], 64
        $region84: #{fwd.1} parent=63 // pred_fallthru
          _
        %p412 = scmp.lt.s32.totalorder %s25, 1
        %s413 = scalar_select %p412, %s25, 1
        %s414 = smul.addr %s413, 32
        %s415 = smul.addr %s414, 8
        %s416 = scalar_lea.vmem %s0, %s415
        %p417 = pneg %p46
        %p418 = pneg %p43
        %p419 = pneg %p67
        %p420 = pneg %p64
        %p421 = pneg %p88
        %p422 = pneg %p85
        %p423 = pneg %p109
        %p424 = pneg %p106
        %p425 = pneg %p130
        %p426 = pneg %p127
        %p427 = pneg %p151
        %p428 = pneg %p148
        %p429 = pneg %p172
        %p430 = pneg %p169
        %p431 = pneg %p193
        %p432 = pneg %p190
        %p433 = pneg %p214
        %p434 = pneg %p211
        %p435 = pneg %p235
        %p436 = pneg %p232
        %p437 = pneg %p256
        %p438 = pneg %p253
        %p439 = pneg %p282
        %p440 = pneg %p279
        %p441 = scmp.lt.s32.totalorder %s25, 1
        %s442 = scalar_select %p441, %s25, 1
        %s443 = scalar_lea.vmem %s11, %s442
        %p444 = scmp.lt.s32.totalorder %s25, 1
        %s445 = scalar_select %p444, %s25, 1
        %s446 = smul.addr %s445, 32
        %s447 = smul.addr %s446, 8
        %s448 = scalar_lea.vmem %s0, %s447
        %p449 = scmp.lt.s32.totalorder %s25, 1
        %s450 = scalar_select %p449, %s25, 1
        %s451 = scalar_lea.vmem %s11, %s450
        %453 = vst [vmem:[#allocation2] sm:$0xff] 0.0
        %454 = vst [vmem:[#allocation2 + $0x8] sm:$0xff] 0.0
        %455 = vst [vmem:[#allocation2 + $0x10] sm:$0xff] 0.0
        %456 = vst [vmem:[#allocation2 + $0x18] sm:$0xff] 0.0
        %457 = vst [vmem:[#allocation2 + $0x20] sm:$0xff] 0.0
        %458 = vst [vmem:[#allocation2 + $0x28] sm:$0xff] 0.0
        %459 = vst [vmem:[#allocation2 + $0x30] sm:$0xff] 0.0
        %460 = vst [vmem:[#allocation2 + $0x38] sm:$0xff] 0.0
        %461 = vst [vmem:[#allocation2 + $0x40] sm:$0xff] 0.0
        %462 = vst [vmem:[#allocation2 + $0x48] sm:$0xff] 0.0
        %463 = vst [vmem:[#allocation2 + $0x50] sm:$0xff] 0.0
        %464 = vst [vmem:[#allocation2 + $0x58] sm:$0xff] 0.0
        %465 = vst [vmem:[#allocation2 + $0x60] sm:$0xff] 0.0
        %466 = vst [vmem:[#allocation2 + $0x68] sm:$0xff] 0.0
        %467 = vst [vmem:[#allocation2 + $0x70] sm:$0xff] 0.0
        %468 = vst [vmem:[#allocation2 + $0x78] sm:$0xff] 0.0
        %469 = vst [vmem:[#allocation2 + $0x80] sm:$0xff] 0.0
        %470 = vst [vmem:[#allocation2 + $0x88] sm:$0xff] 0.0
        %471 = vst [vmem:[#allocation2 + $0x90] sm:$0xff] 0.0
        %472 = vst [vmem:[#allocation2 + $0x98] sm:$0xff] 0.0
        %473 = vst [vmem:[#allocation2 + $0xa0] sm:$0xff] 0.0
        %474 = vst [vmem:[#allocation2 + $0xa8] sm:$0xff] 0.0
        %475 = vst [vmem:[#allocation2 + $0xb0] sm:$0xff] 0.0
        %476 = vst [vmem:[#allocation2 + $0xb8] sm:$0xff] 0.0
        %477 = vst [vmem:[#allocation2 + $0xc0] sm:$0xff] 0.0
        %478 = vst [vmem:[#allocation2 + $0xc8] sm:$0xff] 0.0
        %479 = vst [vmem:[#allocation2 + $0xd0] sm:$0xff] 0.0
        %480 = vst [vmem:[#allocation2 + $0xd8] sm:$0xff] 0.0
        %481 = vst [vmem:[#allocation2 + $0xe0] sm:$0xff] 0.0
        %482 = vst [vmem:[#allocation2 + $0xe8] sm:$0xff] 0.0
        %483 = vst [vmem:[#allocation2 + $0xf0] sm:$0xff] 0.0
        %484 = vst [vmem:[#allocation2 + $0xf8] sm:$0xff] 0.0
        %485 = vst [vmem:[#allocation2 + $0x100] sm:$0xff] 0.0
        %486 = vst [vmem:[#allocation2 + $0x108] sm:$0xff] 0.0
        %487 = vst [vmem:[#allocation2 + $0x110] sm:$0xff] 0.0
        %488 = vst [vmem:[#allocation2 + $0x118] sm:$0xff] 0.0
        %489 = vst [vmem:[#allocation2 + $0x120] sm:$0xff] 0.0
        %490 = vst [vmem:[#allocation2 + $0x128] sm:$0xff] 0.0
        %491 = vst [vmem:[#allocation2 + $0x130] sm:$0xff] 0.0
        %492 = vst [vmem:[#allocation2 + $0x138] sm:$0xff] 0.0
        %493 = vst [vmem:[#allocation2 + $0x140] sm:$0xf] 0.0
        %v494 = vld [vmem:[%s448] sm:$0xff]
        %v495 = vld [vmem:[%s448 + $0x8] sm:$0xff]
        %vm496 = vcmask 31744
        %497 = vst.msk [vmem:[#allocation2 + $0x13] sm:$0xff] %vm496, %v494
        %498 = vst.msk [vmem:[#allocation2 + $0x1b] sm:$0xff] %vm496, %v495
        %v499 = vld [vmem:[%s448 + $0x10] sm:$0xff]
        %v500 = vld [vmem:[%s448 + $0x18] sm:$0xff]
        %501 = vst.msk [vmem:[#allocation2 + $0x25] sm:$0xff] %vm496, %v499
        %502 = vst.msk [vmem:[#allocation2 + $0x2d] sm:$0xff] %vm496, %v500
        %v503 = vld [vmem:[%s448 + $0x20] sm:$0xff]
        %v504 = vld [vmem:[%s448 + $0x28] sm:$0xff]
        %505 = vst.msk [vmem:[#allocation2 + $0x37] sm:$0xff] %vm496, %v503
        %506 = vst.msk [vmem:[#allocation2 + $0x3f] sm:$0xff] %vm496, %v504
        %v507 = vld [vmem:[%s448 + $0x30] sm:$0xff]
        %v508 = vld [vmem:[%s448 + $0x38] sm:$0xff]
        %509 = vst.msk [vmem:[#allocation2 + $0x49] sm:$0xff] %vm496, %v507
        %510 = vst.msk [vmem:[#allocation2 + $0x51] sm:$0xff] %vm496, %v508
        %v511 = vld [vmem:[%s448 + $0x40] sm:$0xff]
        %v512 = vld [vmem:[%s448 + $0x48] sm:$0xff]
        %513 = vst.msk [vmem:[#allocation2 + $0x5b] sm:$0xff] %vm496, %v511
        %514 = vst.msk [vmem:[#allocation2 + $0x63] sm:$0xff] %vm496, %v512
        %v515 = vld [vmem:[%s448 + $0x50] sm:$0xff]
        %v516 = vld [vmem:[%s448 + $0x58] sm:$0xff]
        %517 = vst.msk [vmem:[#allocation2 + $0x6d] sm:$0xff] %vm496, %v515
        %518 = vst.msk [vmem:[#allocation2 + $0x75] sm:$0xff] %vm496, %v516
        %v519 = vld [vmem:[%s448 + $0x60] sm:$0xff]
        %v520 = vld [vmem:[%s448 + $0x68] sm:$0xff]
        %521 = vst.msk [vmem:[#allocation2 + $0x7f] sm:$0xff] %vm496, %v519
        %522 = vst.msk [vmem:[#allocation2 + $0x87] sm:$0xff] %vm496, %v520
        %v523 = vld [vmem:[%s448 + $0x70] sm:$0xff]
        %v524 = vld [vmem:[%s448 + $0x78] sm:$0xff]
        %525 = vst.msk [vmem:[#allocation2 + $0x91] sm:$0xff] %vm496, %v523
        %526 = vst.msk [vmem:[#allocation2 + $0x99] sm:$0xff] %vm496, %v524
        %v527 = vld [vmem:[%s448 + $0x80] sm:$0xff]
        %v528 = vld [vmem:[%s448 + $0x88] sm:$0xff]
        %529 = vst.msk [vmem:[#allocation2 + $0xa3] sm:$0xff] %vm496, %v527
        %530 = vst.msk [vmem:[#allocation2 + $0xab] sm:$0xff] %vm496, %v528
        %v531 = vld [vmem:[%s448 + $0x90] sm:$0xff]
        %v532 = vld [vmem:[%s448 + $0x98] sm:$0xff]
        %533 = vst.msk [vmem:[#allocation2 + $0xb5] sm:$0xff] %vm496, %v531
        %534 = vst.msk [vmem:[#allocation2 + $0xbd] sm:$0xff] %vm496, %v532
        %v535 = vld [vmem:[%s448 + $0xa0] sm:$0xff]
        %v536 = vld [vmem:[%s448 + $0xa8] sm:$0xff]
        %537 = vst.msk [vmem:[#allocation2 + $0xc7] sm:$0xff] %vm496, %v535
        %538 = vst.msk [vmem:[#allocation2 + $0xcf] sm:$0xff] %vm496, %v536
        %v539 = vld [vmem:[%s448 + $0xb0] sm:$0xff]
        %v540 = vld [vmem:[%s448 + $0xb8] sm:$0xff]
        %541 = vst.msk [vmem:[#allocation2 + $0xd9] sm:$0xff] %vm496, %v539
        %542 = vst.msk [vmem:[#allocation2 + $0xe1] sm:$0xff] %vm496, %v540
        %v543 = vld [vmem:[%s448 + $0xc0] sm:$0xff]
        %v544 = vld [vmem:[%s448 + $0xc8] sm:$0xff]
        %545 = vst.msk [vmem:[#allocation2 + $0xeb] sm:$0xff] %vm496, %v543
        %546 = vst.msk [vmem:[#allocation2 + $0xf3] sm:$0xff] %vm496, %v544
        %v547 = vld [vmem:[%s448 + $0xd0] sm:$0xff]
        %v548 = vld [vmem:[%s448 + $0xd8] sm:$0xff]
        %549 = vst.msk [vmem:[#allocation2 + $0xfd] sm:$0xff] %vm496, %v547
        %550 = vst.msk [vmem:[#allocation2 + $0x105] sm:$0xff] %vm496, %v548
        %v551 = vld [vmem:[%s448 + $0xe0] sm:$0xff]
        %v552 = vld [vmem:[%s448 + $0xe8] sm:$0xff]
        %553 = vst.msk [vmem:[#allocation2 + $0x10f] sm:$0xff] %vm496, %v551
        %554 = vst.msk [vmem:[#allocation2 + $0x117] sm:$0xff] %vm496, %v552
        %v555 = vld [vmem:[%s448 + $0xf0] sm:$0xff]
        %v556 = vld [vmem:[%s448 + $0xf8] sm:$0xff]
        %557 = vst.msk [vmem:[#allocation2 + $0x121] sm:$0xff] %vm496, %v555
        %558 = vst.msk [vmem:[#allocation2 + $0x129] sm:$0xff] %vm496, %v556
        %559 = vst [vmem:[#allocation3] sm:$0xff] 0.0
        %560 = vst [vmem:[#allocation3 + $0x8] sm:$0xff] 0.0
        %561 = vst [vmem:[#allocation3 + $0x10] sm:$0xff] 0.0
        %562 = vst [vmem:[#allocation3 + $0x18] sm:$0xff] 0.0
        %563 = vst [vmem:[#allocation3 + $0x20] sm:$0xff] 0.0
        %564 = vst [vmem:[#allocation3 + $0x28] sm:$0xff] 0.0
        %565 = vst [vmem:[#allocation3 + $0x30] sm:$0xff] 0.0
        %566 = vst [vmem:[#allocation3 + $0x38] sm:$0xff] 0.0
        %567 = vst [vmem:[#allocation3 + $0x40] sm:$0xff] 0.0
        %568 = vst [vmem:[#allocation3 + $0x48] sm:$0xff] 0.0
        %569 = vst [vmem:[#allocation3 + $0x50] sm:$0xff] 0.0
        %570 = vst [vmem:[#allocation3 + $0x58] sm:$0xff] 0.0
        %571 = vst [vmem:[#allocation3 + $0x60] sm:$0xf] 0.0
        %v572 = vld [vmem:[%s1] sm:$0xf]
        %v573 = vld [vmem:[%s1 + $0x4] sm:$0xf]
        %v574 = vld [vmem:[%s1 + $0x8] sm:$0xf]
        %v575 = vld [vmem:[%s1 + $0xc] sm:$0xf]
        %v576 = vld [vmem:[%s1 + $0x10] sm:$0xf]
        %v577 = vld [vmem:[%s1 + $0x14] sm:$0xf]
        %v578 = vld [vmem:[%s1 + $0x18] sm:$0xf]
        %v579 = vld [vmem:[%s1 + $0x1c] sm:$0xf]
        %v580 = vld [vmem:[%s1 + $0x20] sm:$0xf]
        %v581 = vld [vmem:[%s1 + $0x24] sm:$0xf]
        %v582 = vld [vmem:[%s1 + $0x28] sm:$0xf]
        %v583 = vld [vmem:[%s1 + $0x2c] sm:$0xf]
        %v584 = vld [vmem:[%s1 + $0x30] sm:$0xf]
        %v585 = vld [vmem:[%s1 + $0x34] sm:$0xf]
        %v586 = vld [vmem:[%s1 + $0x38] sm:$0xf]
        %v587 = vld [vmem:[%s1 + $0x3c] sm:$0xf]
        %v588 = vld [vmem:[%s1 + $0x40] sm:$0xf]
        %v589 = vld [vmem:[%s1 + $0x44] sm:$0xf]
        %v590 = vld [vmem:[%s1 + $0x48] sm:$0xf]
        %v591 = vld [vmem:[%s1 + $0x4c] sm:$0xf]
        %v592 = vld [vmem:[%s1 + $0x50] sm:$0xf]
        %v593 = vld [vmem:[%s1 + $0x54] sm:$0xf]
        %v594 = vld [vmem:[%s1 + $0x58] sm:$0xf]
        %v595 = vld [vmem:[%s1 + $0x5c] sm:$0xf]
        %v596 = vld [vmem:[%s1 + $0x60] sm:$0xf]
        %v597 = vld [vmem:[%s1 + $0x64] sm:$0xf]
        %v598 = vld [vmem:[%s1 + $0x68] sm:$0xf]
        %v599 = vld [vmem:[%s1 + $0x6c] sm:$0xf]
        %v600 = vld [vmem:[%s1 + $0x70] sm:$0xf]
        %v601 = vld [vmem:[%s1 + $0x74] sm:$0xf]
        %v602 = vld [vmem:[%s1 + $0x78] sm:$0xf]
        %v603 = vld [vmem:[%s1 + $0x7c] sm:$0xf]
        %v604 = vld [vmem:[%s1 + $0x80] sm:$0xf]
        %v605 = vld [vmem:[%s1 + $0x84] sm:$0xf]
        %v606 = vld [vmem:[%s1 + $0x88] sm:$0xf]
        %v607 = vld [vmem:[%s1 + $0x8c] sm:$0xf]
        %v608 = vld [vmem:[%s1 + $0x90] sm:$0xf]
        %v609 = vld [vmem:[%s1 + $0x94] sm:$0xf]
        %v610 = vld [vmem:[%s1 + $0x98] sm:$0xf]
        %v611 = vld [vmem:[%s1 + $0x9c] sm:$0xf]
        %v612 = vld [vmem:[%s1 + $0xa0] sm:$0xf]
        %v613 = vld [vmem:[%s1 + $0xa4] sm:$0xf]
        %v614 = vld [vmem:[%s1 + $0xa8] sm:$0xf]
        %v615 = vld [vmem:[%s1 + $0xac] sm:$0xf]
        %v616 = vld [vmem:[%s1 + $0xb0] sm:$0xf]
        %v617 = vld [vmem:[%s1 + $0xb4] sm:$0xf]
        %v618 = vld [vmem:[%s1 + $0xb8] sm:$0xf]
        %v619 = vld [vmem:[%s1 + $0xbc] sm:$0xf]
        %v620 = vld [vmem:[%s1 + $0xc0] sm:$0xf]
        %v621 = vld [vmem:[%s1 + $0xc4] sm:$0xf]
        %v622 = vld [vmem:[%s1 + $0xc8] sm:$0xf]
        %v623 = vld [vmem:[%s1 + $0xcc] sm:$0xf]
        %v624 = vld [vmem:[%s1 + $0xd0] sm:$0xf]
        %v625 = vld [vmem:[%s1 + $0xd4] sm:$0xf]
        %v626 = vld [vmem:[%s1 + $0xd8] sm:$0xf]
        %v627 = vld [vmem:[%s1 + $0xdc] sm:$0xf]
        %v628 = vld [vmem:[%s1 + $0xe0] sm:$0xf]
        %v629 = vld [vmem:[%s1 + $0xe4] sm:$0xf]
        %v630 = vld [vmem:[%s1 + $0xe8] sm:$0xf]
        %v631 = vld [vmem:[%s1 + $0xec] sm:$0xf]
        %v632 = vld [vmem:[%s1 + $0xf0] sm:$0xf]
        %v633 = vld [vmem:[%s1 + $0xf4] sm:$0xf]
        %v634 = vld [vmem:[%s1 + $0xf8] sm:$0xf]
        %v635 = vld [vmem:[%s1 + $0xfc] sm:$0xf]
        %v636 = vld [vmem:[%s1 + $0x100] sm:$0xf]
        %v637 = vld [vmem:[%s1 + $0x104] sm:$0xf]
        %v638 = vld [vmem:[%s1 + $0x108] sm:$0xf]
        %v639 = vld [vmem:[%s1 + $0x10c] sm:$0xf]
        %v640 = vld [vmem:[%s1 + $0x110] sm:$0xf]
        %v641 = vld [vmem:[%s1 + $0x114] sm:$0xf]
        %v642 = vld [vmem:[%s1 + $0x118] sm:$0xf]
        %v643 = vld [vmem:[%s1 + $0x11c] sm:$0xf]
        %v644 = vld [vmem:[%s1 + $0x120] sm:$0xf]
        %v645 = vld [vmem:[%s1 + $0x124] sm:$0xf]
        %v646 = vld [vmem:[%s1 + $0x128] sm:$0xf]
        %v647 = vld [vmem:[%s1 + $0x12c] sm:$0xf]
        %v648 = vld [vmem:[%s1 + $0x130] sm:$0xf]
        %v649 = vld [vmem:[%s1 + $0x134] sm:$0xf]
        %v650 = vld [vmem:[%s1 + $0x138] sm:$0xf]
        %v651 = vld [vmem:[%s1 + $0x13c] sm:$0xf]
        %v652 = vld [vmem:[%s1 + $0x140] sm:$0xf]
        %v653 = vld [vmem:[%s1 + $0x144] sm:$0xf]
        %v654 = vld [vmem:[%s1 + $0x148] sm:$0xf]
        %v655 = vld [vmem:[%s1 + $0x14c] sm:$0xf]
        %v656 = vld [vmem:[%s1 + $0x150] sm:$0xf]
        %v657 = vld [vmem:[%s1 + $0x154] sm:$0xf]
        %v658 = vld [vmem:[%s1 + $0x158] sm:$0xf]
        %v659 = vld [vmem:[%s1 + $0x15c] sm:$0xf]
        %v660 = vld [vmem:[%s1 + $0x160] sm:$0xf]
        %v661 = vld [vmem:[%s1 + $0x164] sm:$0xf]
        %v662 = vld [vmem:[%s1 + $0x168] sm:$0xf]
        %v663 = vld [vmem:[%s1 + $0x16c] sm:$0xf]
        %v664 = vld [vmem:[%s1 + $0x170] sm:$0xf]
        %v665 = vld [vmem:[%s1 + $0x174] sm:$0xf]
        %v666 = vld [vmem:[%s1 + $0x178] sm:$0xf]
        %v667 = vld [vmem:[%s1 + $0x17c] sm:$0xf]
        %v668 = vld [vmem:[%s1 + $0x180] sm:$0xf]
        %v669 = vld [vmem:[%s1 + $0x184] sm:$0xf]
        %v670 = vld [vmem:[%s1 + $0x188] sm:$0xf]
        %v671 = vld [vmem:[%s1 + $0x18c] sm:$0xf]
        %v672 = vld [vmem:[%s1 + $0x190] sm:$0xf]
        %v673 = vld [vmem:[%s1 + $0x194] sm:$0xf]
        %v674 = vld [vmem:[%s1 + $0x198] sm:$0xf]
        %v675 = vld [vmem:[%s1 + $0x19c] sm:$0xf]
        %v676 = vld [vmem:[%s1 + $0x1a0] sm:$0xf]
        %v677 = vld [vmem:[%s1 + $0x1a4] sm:$0xf]
        %v678 = vld [vmem:[%s1 + $0x1a8] sm:$0xf]
        %v679 = vld [vmem:[%s1 + $0x1ac] sm:$0xf]
        %v680 = vld [vmem:[%s1 + $0x1b0] sm:$0xf]
        %v681 = vld [vmem:[%s1 + $0x1b4] sm:$0xf]
        %v682 = vld [vmem:[%s1 + $0x1b8] sm:$0xf]
        %v683 = vld [vmem:[%s1 + $0x1bc] sm:$0xf]
        %v684 = vld [vmem:[%s1 + $0x1c0] sm:$0xf]
        %v685 = vld [vmem:[%s1 + $0x1c4] sm:$0xf]
        %v686 = vld [vmem:[%s1 + $0x1c8] sm:$0xf]
        %v687 = vld [vmem:[%s1 + $0x1cc] sm:$0xf]
        %v688 = vld [vmem:[%s1 + $0x1d0] sm:$0xf]
        %v689 = vld [vmem:[%s1 + $0x1d4] sm:$0xf]
        %v690 = vld [vmem:[%s1 + $0x1d8] sm:$0xf]
        %v691 = vld [vmem:[%s1 + $0x1dc] sm:$0xf]
        %v692 = vld [vmem:[%s1 + $0x1e0] sm:$0xf]
        %v693 = vld [vmem:[%s1 + $0x1e4] sm:$0xf]
        %v694 = vld [vmem:[%s1 + $0x1e8] sm:$0xf]
        %v695 = vld [vmem:[%s1 + $0x1ec] sm:$0xf]
        %v696 = vld [vmem:[%s1 + $0x1f0] sm:$0xf]
        %v697 = vld [vmem:[%s1 + $0x1f4] sm:$0xf]
        %v698 = vld [vmem:[%s1 + $0x1f8] sm:$0xf]
        %v699 = vld [vmem:[%s1 + $0x1fc] sm:$0xf]
        %v700 = vld [vmem:[%s1 + $0x200] sm:$0xf]
        %v701 = vld [vmem:[%s1 + $0x204] sm:$0xf]
        %v702 = vld [vmem:[%s1 + $0x208] sm:$0xf]
        %v703 = vld [vmem:[%s1 + $0x20c] sm:$0xf]
        %v704 = vld [vmem:[%s1 + $0x210] sm:$0xf]
        %v705 = vld [vmem:[%s1 + $0x214] sm:$0xf]
        %v706 = vld [vmem:[%s1 + $0x218] sm:$0xf]
        %v707 = vld [vmem:[%s1 + $0x21c] sm:$0xf]
        %v708 = vld [vmem:[%s1 + $0x220] sm:$0xf]
        %v709 = vld [vmem:[%s1 + $0x224] sm:$0xf]
        %v710 = vld [vmem:[%s1 + $0x228] sm:$0xf]
        %v711 = vld [vmem:[%s1 + $0x22c] sm:$0xf]
        %v712 = vld [vmem:[%s1 + $0x230] sm:$0xf]
        %v713 = vld [vmem:[%s1 + $0x234] sm:$0xf]
        %v714 = vld [vmem:[%s1 + $0x238] sm:$0xf]
        %v715 = vld [vmem:[%s1 + $0x23c] sm:$0xf]
        %v716 = vld [vmem:[%s2] sm:$0x1]
        %v717 = vld [vmem:[%s2 + $0x1] sm:$0x1]
        %v718 = vld [vmem:[%s2 + $0x2] sm:$0x1]
        %v719 = vld [vmem:[#allocation2] ss:$2 sm:$0xff]
        %s720 = scalar_lea.vmem [#allocation2], 1
        %v721 = vld [vmem:[%s720] ss:$2 sm:$0xff]
        %s722 = scalar_lea.vmem [#allocation2], 2
        %v723 = vld [vmem:[%s722] ss:$2 sm:$0xff]
        %s724 = scalar_lea.vmem [#allocation2], 18
        %v725 = vld [vmem:[%s724] ss:$2 sm:$0xff]
        %s726 = scalar_lea.vmem [#allocation2], 19
        %v727 = vld [vmem:[%s726] ss:$2 sm:$0xff]
        %s728 = scalar_lea.vmem [#allocation2], 20
        %v729 = vld [vmem:[%s728] ss:$2 sm:$0xff]
        %s730 = scalar_lea.vmem [#allocation2], 36
        %v731 = vld [vmem:[%s730] ss:$2 sm:$0xff]
        %s732 = scalar_lea.vmem [#allocation2], 37
        %v733 = vld [vmem:[%s732] ss:$2 sm:$0xff]
        %s734 = scalar_lea.vmem [#allocation2], 38
        %v735 = vld [vmem:[%s734] ss:$2 sm:$0xff]
        %v736 = vpack.c.bf16 %v719, %v719
        %v737 = vpack.c.bf16 %v721, %v721
        %v738 = vpack.c.bf16 %v723, %v723
        %v739 = vpack.c.bf16 %v725, %v725
        %v740 = vpack.c.bf16 %v727, %v727
        %v741 = vpack.c.bf16 %v729, %v729
        %v742 = vpack.c.bf16 %v731, %v731
        %v743 = vpack.c.bf16 %v733, %v733
        %v744 = vpack.c.bf16 %v735, %v735
        %v745 = vlaneseq
        %v746 = vshrl.u32 %v745, 7
        %v747 = vsub.s32 0, %v746
        %v748 = vrot.slane %v716, %v747
        %v893 = vunpack.c.l.b16 %v572
        %v894 = vunpack.c.l.b16 %v573
        %v895 = vunpack.c.l.b16 %v574
        %v896 = vunpack.c.l.b16 %v575
        %v897 = vunpack.c.l.b16 %v576
        %v898 = vunpack.c.l.b16 %v577
        %v899 = vunpack.c.l.b16 %v578
        %v900 = vunpack.c.l.b16 %v579
        %v901 = vunpack.c.l.b16 %v580
        %v902 = vunpack.c.l.b16 %v581
        %v903 = vunpack.c.l.b16 %v582
        %v904 = vunpack.c.l.b16 %v583
        %v905 = vunpack.c.l.b16 %v584
        %v906 = vunpack.c.l.b16 %v585
        %v907 = vunpack.c.l.b16 %v586
        %v908 = vunpack.c.l.b16 %v587
        %v909 = vunpack.c.l.b16 %v588
        %v910 = vunpack.c.l.b16 %v589
        %v911 = vunpack.c.l.b16 %v590
        %v912 = vunpack.c.l.b16 %v591
        %v913 = vunpack.c.l.b16 %v592
        %v914 = vunpack.c.l.b16 %v593
        %v915 = vunpack.c.l.b16 %v594
        %v916 = vunpack.c.l.b16 %v595
        %v917 = vunpack.c.l.b16 %v596
        %v918 = vunpack.c.l.b16 %v597
        %v919 = vunpack.c.l.b16 %v598
        %v920 = vunpack.c.l.b16 %v599
        %v921 = vunpack.c.l.b16 %v600
        %v922 = vunpack.c.l.b16 %v601
        %v923 = vunpack.c.l.b16 %v602
        %v924 = vunpack.c.l.b16 %v603
        %v925 = vunpack.c.l.b16 %v604
        %v926 = vunpack.c.l.b16 %v605
        %v927 = vunpack.c.l.b16 %v606
        %v928 = vunpack.c.l.b16 %v607
        %v929 = vunpack.c.l.b16 %v608
        %v930 = vunpack.c.l.b16 %v609
        %v931 = vunpack.c.l.b16 %v610
        %v932 = vunpack.c.l.b16 %v611
        %v933 = vunpack.c.l.b16 %v612
        %v934 = vunpack.c.l.b16 %v613
        %v935 = vunpack.c.l.b16 %v614
        %v936 = vunpack.c.l.b16 %v615
        %v937 = vunpack.c.l.b16 %v616
        %v938 = vunpack.c.l.b16 %v617
        %v939 = vunpack.c.l.b16 %v618
        %v940 = vunpack.c.l.b16 %v619
        %v941 = vunpack.c.l.b16 %v620
        %v942 = vunpack.c.l.b16 %v621
        %v943 = vunpack.c.l.b16 %v622
        %v944 = vunpack.c.l.b16 %v623
        %v945 = vunpack.c.l.b16 %v624
        %v946 = vunpack.c.l.b16 %v625
        %v947 = vunpack.c.l.b16 %v626
        %v948 = vunpack.c.l.b16 %v627
        %v949 = vunpack.c.l.b16 %v628
        %v950 = vunpack.c.l.b16 %v629
        %v951 = vunpack.c.l.b16 %v630
        %v952 = vunpack.c.l.b16 %v631
        %v953 = vunpack.c.l.b16 %v632
        %v954 = vunpack.c.l.b16 %v633
        %v955 = vunpack.c.l.b16 %v634
        %v956 = vunpack.c.l.b16 %v635
        %v957 = vunpack.c.l.b16 %v636
        %v958 = vunpack.c.l.b16 %v637
        %v959 = vunpack.c.l.b16 %v638
        %v960 = vunpack.c.l.b16 %v639
        %v961 = vunpack.c.l.b16 %v640
        %v962 = vunpack.c.l.b16 %v641
        %v963 = vunpack.c.l.b16 %v642
        %v964 = vunpack.c.l.b16 %v643
        %v965 = vunpack.c.l.b16 %v644
        %v966 = vunpack.c.l.b16 %v645
        %v967 = vunpack.c.l.b16 %v646
        %v968 = vunpack.c.l.b16 %v647
        %v969 = vunpack.c.l.b16 %v648
        %v970 = vunpack.c.l.b16 %v649
        %v971 = vunpack.c.l.b16 %v650
        %v972 = vunpack.c.l.b16 %v651
        %v973 = vunpack.c.l.b16 %v652
        %v974 = vunpack.c.l.b16 %v653
        %v975 = vunpack.c.l.b16 %v654
        %v976 = vunpack.c.l.b16 %v655
        %v977 = vunpack.c.l.b16 %v656
        %v978 = vunpack.c.l.b16 %v657
        %v979 = vunpack.c.l.b16 %v658
        %v980 = vunpack.c.l.b16 %v659
        %v981 = vunpack.c.l.b16 %v660
        %v982 = vunpack.c.l.b16 %v661
        %v983 = vunpack.c.l.b16 %v662
        %v984 = vunpack.c.l.b16 %v663
        %v985 = vunpack.c.l.b16 %v664
        %v986 = vunpack.c.l.b16 %v665
        %v987 = vunpack.c.l.b16 %v666
        %v988 = vunpack.c.l.b16 %v667
        %v989 = vunpack.c.l.b16 %v668
        %v990 = vunpack.c.l.b16 %v669
        %v991 = vunpack.c.l.b16 %v670
        %v992 = vunpack.c.l.b16 %v671
        %v993 = vunpack.c.l.b16 %v672
        %v994 = vunpack.c.l.b16 %v673
        %v995 = vunpack.c.l.b16 %v674
        %v996 = vunpack.c.l.b16 %v675
        %v997 = vunpack.c.l.b16 %v676
        %v998 = vunpack.c.l.b16 %v677
        %v999 = vunpack.c.l.b16 %v678
        %v1000 = vunpack.c.l.b16 %v679
        %v1001 = vunpack.c.l.b16 %v680
        %v1002 = vunpack.c.l.b16 %v681
        %v1003 = vunpack.c.l.b16 %v682
        %v1004 = vunpack.c.l.b16 %v683
        %v1005 = vunpack.c.l.b16 %v684
        %v1006 = vunpack.c.l.b16 %v685
        %v1007 = vunpack.c.l.b16 %v686
        %v1008 = vunpack.c.l.b16 %v687
        %v1009 = vunpack.c.l.b16 %v688
        %v1010 = vunpack.c.l.b16 %v689
        %v1011 = vunpack.c.l.b16 %v690
        %v1012 = vunpack.c.l.b16 %v691
        %v1013 = vunpack.c.l.b16 %v692
        %v1014 = vunpack.c.l.b16 %v693
        %v1015 = vunpack.c.l.b16 %v694
        %v1016 = vunpack.c.l.b16 %v695
        %v1017 = vunpack.c.l.b16 %v696
        %v1018 = vunpack.c.l.b16 %v697
        %v1019 = vunpack.c.l.b16 %v698
        %v1020 = vunpack.c.l.b16 %v699
        %v1021 = vunpack.c.l.b16 %v700
        %v1022 = vunpack.c.l.b16 %v701
        %v1023 = vunpack.c.l.b16 %v702
        %v1024 = vunpack.c.l.b16 %v703
        %v1025 = vunpack.c.l.b16 %v704
        %v1026 = vunpack.c.l.b16 %v705
        %v1027 = vunpack.c.l.b16 %v706
        %v1028 = vunpack.c.l.b16 %v707
        %v1029 = vunpack.c.l.b16 %v708
        %v1030 = vunpack.c.l.b16 %v709
        %v1031 = vunpack.c.l.b16 %v710
        %v1032 = vunpack.c.l.b16 %v711
        %v1033 = vunpack.c.l.b16 %v712
        %v1034 = vunpack.c.l.b16 %v713
        %v1035 = vunpack.c.l.b16 %v714
        %v1036 = vunpack.c.l.b16 %v715
        %v1037 = vpack.c.b16 %v894, %v893
        %v1038 = vpack.c.b16 %v896, %v895
        %v1039 = vpack.c.b16 %v898, %v897
        %v1040 = vpack.c.b16 %v900, %v899
        %v1041 = vpack.c.b16 %v902, %v901
        %v1042 = vpack.c.b16 %v904, %v903
        %v1043 = vpack.c.b16 %v906, %v905
        %v1044 = vpack.c.b16 %v908, %v907
        %v1045 = vpack.c.b16 %v910, %v909
        %v1046 = vpack.c.b16 %v912, %v911
        %v1047 = vpack.c.b16 %v914, %v913
        %v1048 = vpack.c.b16 %v916, %v915
        %v1049 = vpack.c.b16 %v918, %v917
        %v1050 = vpack.c.b16 %v920, %v919
        %v1051 = vpack.c.b16 %v922, %v921
        %v1052 = vpack.c.b16 %v924, %v923
        %v1053 = vpack.c.b16 %v926, %v925
        %v1054 = vpack.c.b16 %v928, %v927
        %v1055 = vpack.c.b16 %v930, %v929
        %v1056 = vpack.c.b16 %v932, %v931
        %v1057 = vpack.c.b16 %v934, %v933
        %v1058 = vpack.c.b16 %v936, %v935
        %v1059 = vpack.c.b16 %v938, %v937
        %v1060 = vpack.c.b16 %v940, %v939
        %v1061 = vpack.c.b16 %v942, %v941
        %v1062 = vpack.c.b16 %v944, %v943
        %v1063 = vpack.c.b16 %v946, %v945
        %v1064 = vpack.c.b16 %v948, %v947
        %v1065 = vpack.c.b16 %v950, %v949
        %v1066 = vpack.c.b16 %v952, %v951
        %v1067 = vpack.c.b16 %v954, %v953
        %v1068 = vpack.c.b16 %v956, %v955
        %v1069 = vpack.c.b16 %v958, %v957
        %v1070 = vpack.c.b16 %v960, %v959
        %v1071 = vpack.c.b16 %v962, %v961
        %v1072 = vpack.c.b16 %v964, %v963
        %v1073 = vpack.c.b16 %v966, %v965
        %v1074 = vpack.c.b16 %v968, %v967
        %v1075 = vpack.c.b16 %v970, %v969
        %v1076 = vpack.c.b16 %v972, %v971
        %v1077 = vpack.c.b16 %v974, %v973
        %v1078 = vpack.c.b16 %v976, %v975
        %v1079 = vpack.c.b16 %v978, %v977
        %v1080 = vpack.c.b16 %v980, %v979
        %v1081 = vpack.c.b16 %v982, %v981
        %v1082 = vpack.c.b16 %v984, %v983
        %v1083 = vpack.c.b16 %v986, %v985
        %v1084 = vpack.c.b16 %v988, %v987
        %v1085 = vpack.c.b16 %v990, %v989
        %v1086 = vpack.c.b16 %v992, %v991
        %v1087 = vpack.c.b16 %v994, %v993
        %v1088 = vpack.c.b16 %v996, %v995
        %v1089 = vpack.c.b16 %v998, %v997
        %v1090 = vpack.c.b16 %v1000, %v999
        %v1091 = vpack.c.b16 %v1002, %v1001
        %v1092 = vpack.c.b16 %v1004, %v1003
        %v1093 = vpack.c.b16 %v1006, %v1005
        %v1094 = vpack.c.b16 %v1008, %v1007
        %v1095 = vpack.c.b16 %v1010, %v1009
        %v1096 = vpack.c.b16 %v1012, %v1011
        %v1097 = vpack.c.b16 %v1014, %v1013
        %v1098 = vpack.c.b16 %v1016, %v1015
        %v1099 = vpack.c.b16 %v1018, %v1017
        %v1100 = vpack.c.b16 %v1020, %v1019
        %v1101 = vpack.c.b16 %v1022, %v1021
        %v1102 = vpack.c.b16 %v1024, %v1023
        %v1103 = vpack.c.b16 %v1026, %v1025
        %v1104 = vpack.c.b16 %v1028, %v1027
        %v1105 = vpack.c.b16 %v1030, %v1029
        %v1106 = vpack.c.b16 %v1032, %v1031
        %v1107 = vpack.c.b16 %v1034, %v1033
        %v1108 = vpack.c.b16 %v1036, %v1035
        %1181 = vmatprep.subr.bf16.mxu0 0
        %1182 = vmatpush1.bf16.msra.mxu0 %v1044
        %1183 = vmatprep.subr.bf16.mxu0 0
        %1184 = vmatpush1.bf16.msra.mxu0 %v1043
        %1185 = vmatprep.subr.bf16.mxu0 0
        %1186 = vmatpush1.bf16.msra.mxu0 %v1042
        %1187 = vmatprep.subr.bf16.mxu0 0
        %1188 = vmatpush1.bf16.msra.mxu0 %v1041
        %1189 = vmatprep.subr.bf16.mxu0 0
        %1190 = vmatpush1.bf16.msra.mxu0 %v1040
        %1191 = vmatprep.subr.bf16.mxu0 0
        %1192 = vmatpush1.bf16.msra.mxu0 %v1039
        %1193 = vmatprep.subr.bf16.mxu0 0
        %1194 = vmatpush1.bf16.msra.mxu0 %v1038
        %1195 = vmatprep.subr.bf16.mxu0 0
        %1196 = vmatpush1.bf16.msra.mxu0 %v1037
        %1197 = vmatprep.subr.bf16.mxu0 0
        %1198 = vmatpush2.bf16.msra.mxu0 %v1052
        %1199 = vmatprep.subr.bf16.mxu0 0
        %1200 = vmatpush2.bf16.msra.mxu0 %v1051
        %1201 = vmatprep.subr.bf16.mxu0 0
        %1202 = vmatpush2.bf16.msra.mxu0 %v1050
        %1203 = vmatprep.subr.bf16.mxu0 0
        %1204 = vmatpush2.bf16.msra.mxu0 %v1049
        %1205 = vmatprep.subr.bf16.mxu0 0
        %1206 = vmatpush2.bf16.msra.mxu0 %v1048
        %1207 = vmatprep.subr.bf16.mxu0 0
        %1208 = vmatpush2.bf16.msra.mxu0 %v1047
        %1209 = vmatprep.subr.bf16.mxu0 0
        %1210 = vmatpush2.bf16.msra.mxu0 %v1046
        %1211 = vmatprep.subr.bf16.mxu0 0
        %1212 = vmatpush2.bf16.msra.mxu0 %v1045
        %1213 = vmatprep.mubr.bf16.mxu0 %v737
        %1214 = vmatmul.mubr.bf16.gmra.mxu0 %v736
        %v1215 = vpop.f32.mrf.mxu0
        %v1216 = vadd.f32 %v748, %v1215
        %v1217 = vpop.f32.mrf.mxu0
        %v1218 = vpop.f32.mrf.mxu0
        %v1219 = vpop.f32.mrf.mxu0
        %1220 = vdwg.mxu0
        %1221 = vmatprep.subr.bf16.mxu0 0
        %1222 = vmatpush1.bf16.msra.mxu0 %v1060
        %1223 = vmatprep.subr.bf16.mxu0 0
        %1224 = vmatpush1.bf16.msra.mxu0 %v1059
        %1225 = vmatprep.subr.bf16.mxu0 0
        %1226 = vmatpush1.bf16.msra.mxu0 %v1058
        %1227 = vmatprep.subr.bf16.mxu0 0
        %1228 = vmatpush1.bf16.msra.mxu0 %v1057
        %1229 = vmatprep.subr.bf16.mxu0 0
        %1230 = vmatpush1.bf16.msra.mxu0 %v1056
        %1231 = vmatprep.subr.bf16.mxu0 0
        %1232 = vmatpush1.bf16.msra.mxu0 %v1055
        %1233 = vmatprep.subr.bf16.mxu0 0
        %1234 = vmatpush1.bf16.msra.mxu0 %v1054
        %1235 = vmatprep.subr.bf16.mxu0 0
        %1236 = vmatpush1.bf16.msra.mxu0 %v1053
        %1237 = vmatprep.subr.bf16.mxu0 0
        %1238 = vmatpush2.bf16.msra.mxu0 %v1068
        %1239 = vmatprep.subr.bf16.mxu0 0
        %1240 = vmatpush2.bf16.msra.mxu0 %v1067
        %1241 = vmatprep.subr.bf16.mxu0 0
        %1242 = vmatpush2.bf16.msra.mxu0 %v1066
        %1243 = vmatprep.subr.bf16.mxu0 0
        %1244 = vmatpush2.bf16.msra.mxu0 %v1065
        %1245 = vmatprep.subr.bf16.mxu0 0
        %1246 = vmatpush2.bf16.msra.mxu0 %v1064
        %1247 = vmatprep.subr.bf16.mxu0 0
        %1248 = vmatpush2.bf16.msra.mxu0 %v1063
        %1249 = vmatprep.subr.bf16.mxu0 0
        %1250 = vmatpush2.bf16.msra.mxu0 %v1062
        %1251 = vmatprep.subr.bf16.mxu0 0
        %1252 = vmatpush2.bf16.msra.mxu0 %v1061
        %1253 = vmatprep.mubr.bf16.mxu0 %v739
        %1254 = vmatmul.mubr.bf16.gmra.mxu0 %v738
        %v1255 = vpop.f32.mrf.mxu0
        %v1256 = vadd.f32 %v1216, %v1255
        %v1257 = vpop.f32.mrf.mxu0
        %v1258 = vpop.f32.mrf.mxu0
        %v1259 = vpop.f32.mrf.mxu0
        %1260 = vdwg.mxu0
        %1261 = vmatprep.subr.bf16.mxu0 0
        %1262 = vmatpush1.bf16.msra.mxu0 %v1076
        %1263 = vmatprep.subr.bf16.mxu0 0
        %1264 = vmatpush1.bf16.msra.mxu0 %v1075
        %1265 = vmatprep.subr.bf16.mxu0 0
        %1266 = vmatpush1.bf16.msra.mxu0 %v1074
        %1267 = vmatprep.subr.bf16.mxu0 0
        %1268 = vmatpush1.bf16.msra.mxu0 %v1073
        %1269 = vmatprep.subr.bf16.mxu0 0
        %1270 = vmatpush1.bf16.msra.mxu0 %v1072
        %1271 = vmatprep.subr.bf16.mxu0 0
        %1272 = vmatpush1.bf16.msra.mxu0 %v1071
        %1273 = vmatprep.subr.bf16.mxu0 0
        %1274 = vmatpush1.bf16.msra.mxu0 %v1070
        %1275 = vmatprep.subr.bf16.mxu0 0
        %1276 = vmatpush1.bf16.msra.mxu0 %v1069
        %1277 = vmatprep.subr.bf16.mxu0 0
        %1278 = vmatpush2.bf16.msra.mxu0 %v1084
        %1279 = vmatprep.subr.bf16.mxu0 0
        %1280 = vmatpush2.bf16.msra.mxu0 %v1083
        %1281 = vmatprep.subr.bf16.mxu0 0
        %1282 = vmatpush2.bf16.msra.mxu0 %v1082
        %1283 = vmatprep.subr.bf16.mxu0 0
        %1284 = vmatpush2.bf16.msra.mxu0 %v1081
        %1285 = vmatprep.subr.bf16.mxu0 0
        %1286 = vmatpush2.bf16.msra.mxu0 %v1080
        %1287 = vmatprep.subr.bf16.mxu0 0
        %1288 = vmatpush2.bf16.msra.mxu0 %v1079
        %1289 = vmatprep.subr.bf16.mxu0 0
        %1290 = vmatpush2.bf16.msra.mxu0 %v1078
        %1291 = vmatprep.subr.bf16.mxu0 0
        %1292 = vmatpush2.bf16.msra.mxu0 %v1077
        %1293 = vmatprep.mubr.bf16.mxu0 %v741
        %1294 = vmatmul.mubr.bf16.gmra.mxu0 %v740
        %v1295 = vpop.f32.mrf.mxu0
        %v1296 = vadd.f32 %v1256, %v1295
        %v1297 = vpop.f32.mrf.mxu0
        %v1298 = vpop.f32.mrf.mxu0
        %v1299 = vpop.f32.mrf.mxu0
        %1300 = vdwg.mxu0
        %1301 = vmatprep.subr.bf16.mxu0 0
        %1302 = vmatpush1.bf16.msra.mxu0 %v1092
        %1303 = vmatprep.subr.bf16.mxu0 0
        %1304 = vmatpush1.bf16.msra.mxu0 %v1091
        %1305 = vmatprep.subr.bf16.mxu0 0
        %1306 = vmatpush1.bf16.msra.mxu0 %v1090
        %1307 = vmatprep.subr.bf16.mxu0 0
        %1308 = vmatpush1.bf16.msra.mxu0 %v1089
        %1309 = vmatprep.subr.bf16.mxu0 0
        %1310 = vmatpush1.bf16.msra.mxu0 %v1088
        %1311 = vmatprep.subr.bf16.mxu0 0
        %1312 = vmatpush1.bf16.msra.mxu0 %v1087
        %1313 = vmatprep.subr.bf16.mxu0 0
        %1314 = vmatpush1.bf16.msra.mxu0 %v1086
        %1315 = vmatprep.subr.bf16.mxu0 0
        %1316 = vmatpush1.bf16.msra.mxu0 %v1085
        %1317 = vmatprep.subr.bf16.mxu0 0
        %1318 = vmatpush2.bf16.msra.mxu0 %v1100
        %1319 = vmatprep.subr.bf16.mxu0 0
        %1320 = vmatpush2.bf16.msra.mxu0 %v1099
        %1321 = vmatprep.subr.bf16.mxu0 0
        %1322 = vmatpush2.bf16.msra.mxu0 %v1098
        %1323 = vmatprep.subr.bf16.mxu0 0
        %1324 = vmatpush2.bf16.msra.mxu0 %v1097
        %1325 = vmatprep.subr.bf16.mxu0 0
        %1326 = vmatpush2.bf16.msra.mxu0 %v1096
        %1327 = vmatprep.subr.bf16.mxu0 0
        %1328 = vmatpush2.bf16.msra.mxu0 %v1095
        %1329 = vmatprep.subr.bf16.mxu0 0
        %1330 = vmatpush2.bf16.msra.mxu0 %v1094
        %1331 = vmatprep.subr.bf16.mxu0 0
        %1332 = vmatpush2.bf16.msra.mxu0 %v1093
        %1333 = vmatprep.mubr.bf16.mxu0 %v743
        %1334 = vmatmul.mubr.bf16.gmra.mxu0 %v742
        %v1335 = vpop.f32.mrf.mxu0
        %v1336 = vadd.f32 %v1296, %v1335
        %v1337 = vpop.f32.mrf.mxu0
        %v1338 = vpop.f32.mrf.mxu0
        %v1339 = vpop.f32.mrf.mxu0
        %1340 = vdwg.mxu0
        %1341 = vmatprep.subr.bf16.mxu0 0
        %1342 = vmatpush1.bf16.msra.mxu0 %v1108
        %1343 = vmatprep.subr.bf16.mxu0 0
        %1344 = vmatpush1.bf16.msra.mxu0 %v1107
        %1345 = vmatprep.subr.bf16.mxu0 0
        %1346 = vmatpush1.bf16.msra.mxu0 %v1106
        %1347 = vmatprep.subr.bf16.mxu0 0
        %1348 = vmatpush1.bf16.msra.mxu0 %v1105
        %1349 = vmatprep.subr.bf16.mxu0 0
        %1350 = vmatpush1.bf16.msra.mxu0 %v1104
        %1351 = vmatprep.subr.bf16.mxu0 0
        %1352 = vmatpush1.bf16.msra.mxu0 %v1103
        %1353 = vmatprep.subr.bf16.mxu0 0
        %1354 = vmatpush1.bf16.msra.mxu0 %v1102
        %1355 = vmatprep.subr.bf16.mxu0 0
        %1356 = vmatpush1.bf16.msra.mxu0 %v1101
        %1357 = vmatprep.subr.bf16.mxu0 0
        %1358 = vmatpush2.bf16.msra.mxu0 0
        %1359 = vmatprep.subr.bf16.mxu0 0
        %1360 = vmatpush2.bf16.msra.mxu0 0
        %1361 = vmatprep.subr.bf16.mxu0 0
        %1362 = vmatpush2.bf16.msra.mxu0 0
        %1363 = vmatprep.subr.bf16.mxu0 0
        %1364 = vmatpush2.bf16.msra.mxu0 0
        %1365 = vmatprep.subr.bf16.mxu0 0
        %1366 = vmatpush2.bf16.msra.mxu0 0
        %1367 = vmatprep.subr.bf16.mxu0 0
        %1368 = vmatpush2.bf16.msra.mxu0 0
        %1369 = vmatprep.subr.bf16.mxu0 0
        %1370 = vmatpush2.bf16.msra.mxu0 0
        %1371 = vmatprep.subr.bf16.mxu0 0
        %1372 = vmatpush2.bf16.msra.mxu0 0
        %1373 = vmatprep.mubr.bf16.mxu0 0
        %1374 = vmatmul.mubr.bf16.gmra.mxu0 %v744
        %v1375 = vpop.f32.mrf.mxu0
        %v1376 = vadd.f32 %v1336, %v1375
        %v1377 = vpop.f32.mrf.mxu0
        %v1378 = vpop.f32.mrf.mxu0
        %v1379 = vpop.f32.mrf.mxu0
        %1380 = vdwg.mxu0
        %v1381 = vmul.f32 %v1376, 0.2
        %v1382 = vmax.f32 %v1376, %v1381
        %v1383 = vlaneseq
        %v1384 = vshrl.u32 %v1383, 7
        %v1385 = vsub.s32 0, %v1384
        %v1386 = vrot.slane %v717, %v1385
        %v1387 = vmul.f32 %v1382, %v1386
        %v1388 = vlaneseq
        %v1389 = vshrl.u32 %v1388, 7
        %v1390 = vsub.s32 0, %v1389
        %v1391 = vrot.slane %v718, %v1390
        %v1392 = vadd.f32 %v1387, %v1391
        %1393 = vst [vmem:[#allocation3 + $0xb] sm:$0xff] %v1392
        %v1394 = vld [vmem:[%s730] ss:$2 sm:$0xff]
        %v1395 = vld [vmem:[%s732] ss:$2 sm:$0xff]
        %v1396 = vld [vmem:[%s734] ss:$2 sm:$0xff]
        %s1397 = scalar_lea.vmem [#allocation2], 54
        %v1398 = vld [vmem:[%s1397] ss:$2 sm:$0xff]
        %s1399 = scalar_lea.vmem [#allocation2], 55
        %v1400 = vld [vmem:[%s1399] ss:$2 sm:$0xff]
        %s1401 = scalar_lea.vmem [#allocation2], 56
        %v1402 = vld [vmem:[%s1401] ss:$2 sm:$0xff]
        %s1403 = scalar_lea.vmem [#allocation2], 72
        %v1404 = vld [vmem:[%s1403] ss:$2 sm:$0xff]
        %s1405 = scalar_lea.vmem [#allocation2], 73
        %v1406 = vld [vmem:[%s1405] ss:$2 sm:$0xff]
        %s1407 = scalar_lea.vmem [#allocation2], 74
        %v1408 = vld [vmem:[%s1407] ss:$2 sm:$0xff]
        %v1409 = vpack.c.bf16 %v1394, %v1394
        %v1410 = vpack.c.bf16 %v1395, %v1395
        %v1411 = vpack.c.bf16 %v1396, %v1396
        %v1412 = vpack.c.bf16 %v1398, %v1398
        %v1413 = vpack.c.bf16 %v1400, %v1400
        %v1414 = vpack.c.bf16 %v1402, %v1402
        %v1415 = vpack.c.bf16 %v1404, %v1404
        %v1416 = vpack.c.bf16 %v1406, %v1406
        %v1417 = vpack.c.bf16 %v1408, %v1408
        %1418 = vmatprep.subr.bf16.mxu0 0
        %1419 = vmatpush1.bf16.msra.mxu0 %v1044
        %1420 = vmatprep.subr.bf16.mxu0 0
        %1421 = vmatpush1.bf16.msra.mxu0 %v1043
        %1422 = vmatprep.subr.bf16.mxu0 0
        %1423 = vmatpush1.bf16.msra.mxu0 %v1042
        %1424 = vmatprep.subr.bf16.mxu0 0
        %1425 = vmatpush1.bf16.msra.mxu0 %v1041
        %1426 = vmatprep.subr.bf16.mxu0 0
        %1427 = vmatpush1.bf16.msra.mxu0 %v1040
        %1428 = vmatprep.subr.bf16.mxu0 0
        %1429 = vmatpush1.bf16.msra.mxu0 %v1039
        %1430 = vmatprep.subr.bf16.mxu0 0
        %1431 = vmatpush1.bf16.msra.mxu0 %v1038
        %1432 = vmatprep.subr.bf16.mxu0 0
        %1433 = vmatpush1.bf16.msra.mxu0 %v1037
        %1434 = vmatprep.subr.bf16.mxu0 0
        %1435 = vmatpush2.bf16.msra.mxu0 %v1052
        %1436 = vmatprep.subr.bf16.mxu0 0
        %1437 = vmatpush2.bf16.msra.mxu0 %v1051
        %1438 = vmatprep.subr.bf16.mxu0 0
        %1439 = vmatpush2.bf16.msra.mxu0 %v1050
        %1440 = vmatprep.subr.bf16.mxu0 0
        %1441 = vmatpush2.bf16.msra.mxu0 %v1049
        %1442 = vmatprep.subr.bf16.mxu0 0
        %1443 = vmatpush2.bf16.msra.mxu0 %v1048
        %1444 = vmatprep.subr.bf16.mxu0 0
        %1445 = vmatpush2.bf16.msra.mxu0 %v1047
        %1446 = vmatprep.subr.bf16.mxu0 0
        %1447 = vmatpush2.bf16.msra.mxu0 %v1046
        %1448 = vmatprep.subr.bf16.mxu0 0
        %1449 = vmatpush2.bf16.msra.mxu0 %v1045
        %1450 = vmatprep.mubr.bf16.mxu0 %v1410
        %1451 = vmatmul.mubr.bf16.gmra.mxu0 %v1409
        %v1452 = vpop.f32.mrf.mxu0
        %v1453 = vadd.f32 %v748, %v1452
        %v1454 = vpop.f32.mrf.mxu0
        %v1455 = vpop.f32.mrf.mxu0
        %v1456 = vpop.f32.mrf.mxu0
        %1457 = vdwg.mxu0
        %1458 = vmatprep.subr.bf16.mxu0 0
        %1459 = vmatpush1.bf16.msra.mxu0 %v1060
        %1460 = vmatprep.subr.bf16.mxu0 0
        %1461 = vmatpush1.bf16.msra.mxu0 %v1059
        %1462 = vmatprep.subr.bf16.mxu0 0
        %1463 = vmatpush1.bf16.msra.mxu0 %v1058
        %1464 = vmatprep.subr.bf16.mxu0 0
        %1465 = vmatpush1.bf16.msra.mxu0 %v1057
        %1466 = vmatprep.subr.bf16.mxu0 0
        %1467 = vmatpush1.bf16.msra.mxu0 %v1056
        %1468 = vmatprep.subr.bf16.mxu0 0
        %1469 = vmatpush1.bf16.msra.mxu0 %v1055
        %1470 = vmatprep.subr.bf16.mxu0 0
        %1471 = vmatpush1.bf16.msra.mxu0 %v1054
        %1472 = vmatprep.subr.bf16.mxu0 0
        %1473 = vmatpush1.bf16.msra.mxu0 %v1053
        %1474 = vmatprep.subr.bf16.mxu0 0
        %1475 = vmatpush2.bf16.msra.mxu0 %v1068
        %1476 = vmatprep.subr.bf16.mxu0 0
        %1477 = vmatpush2.bf16.msra.mxu0 %v1067
        %1478 = vmatprep.subr.bf16.mxu0 0
        %1479 = vmatpush2.bf16.msra.mxu0 %v1066
        %1480 = vmatprep.subr.bf16.mxu0 0
        %1481 = vmatpush2.bf16.msra.mxu0 %v1065
        %1482 = vmatprep.subr.bf16.mxu0 0
        %1483 = vmatpush2.bf16.msra.mxu0 %v1064
        %1484 = vmatprep.subr.bf16.mxu0 0
        %1485 = vmatpush2.bf16.msra.mxu0 %v1063
        %1486 = vmatprep.subr.bf16.mxu0 0
        %1487 = vmatpush2.bf16.msra.mxu0 %v1062
        %1488 = vmatprep.subr.bf16.mxu0 0
        %1489 = vmatpush2.bf16.msra.mxu0 %v1061
        %1490 = vmatprep.mubr.bf16.mxu0 %v1412
        %1491 = vmatmul.mubr.bf16.gmra.mxu0 %v1411
        %v1492 = vpop.f32.mrf.mxu0
        %v1493 = vadd.f32 %v1453, %v1492
        %v1494 = vpop.f32.mrf.mxu0
        %v1495 = vpop.f32.mrf.mxu0
        %v1496 = vpop.f32.mrf.mxu0
        %1497 = vdwg.mxu0
        %1498 = vmatprep.subr.bf16.mxu0 0
        %1499 = vmatpush1.bf16.msra.mxu0 %v1076
        %1500 = vmatprep.subr.bf16.mxu0 0
        %1501 = vmatpush1.bf16.msra.mxu0 %v1075
        %1502 = vmatprep.subr.bf16.mxu0 0
        %1503 = vmatpush1.bf16.msra.mxu0 %v1074
        %1504 = vmatprep.subr.bf16.mxu0 0
        %1505 = vmatpush1.bf16.msra.mxu0 %v1073
        %1506 = vmatprep.subr.bf16.mxu0 0
        %1507 = vmatpush1.bf16.msra.mxu0 %v1072
        %1508 = vmatprep.subr.bf16.mxu0 0
        %1509 = vmatpush1.bf16.msra.mxu0 %v1071
        %1510 = vmatprep.subr.bf16.mxu0 0
        %1511 = vmatpush1.bf16.msra.mxu0 %v1070
        %1512 = vmatprep.subr.bf16.mxu0 0
        %1513 = vmatpush1.bf16.msra.mxu0 %v1069
        %1514 = vmatprep.subr.bf16.mxu0 0
        %1515 = vmatpush2.bf16.msra.mxu0 %v1084
        %1516 = vmatprep.subr.bf16.mxu0 0
        %1517 = vmatpush2.bf16.msra.mxu0 %v1083
        %1518 = vmatprep.subr.bf16.mxu0 0
        %1519 = vmatpush2.bf16.msra.mxu0 %v1082
        %1520 = vmatprep.subr.bf16.mxu0 0
        %1521 = vmatpush2.bf16.msra.mxu0 %v1081
        %1522 = vmatprep.subr.bf16.mxu0 0
        %1523 = vmatpush2.bf16.msra.mxu0 %v1080
        %1524 = vmatprep.subr.bf16.mxu0 0
        %1525 = vmatpush2.bf16.msra.mxu0 %v1079
        %1526 = vmatprep.subr.bf16.mxu0 0
        %1527 = vmatpush2.bf16.msra.mxu0 %v1078
        %1528 = vmatprep.subr.bf16.mxu0 0
        %1529 = vmatpush2.bf16.msra.mxu0 %v1077
        %1530 = vmatprep.mubr.bf16.mxu0 %v1414
        %1531 = vmatmul.mubr.bf16.gmra.mxu0 %v1413
        %v1532 = vpop.f32.mrf.mxu0
        %v1533 = vadd.f32 %v1493, %v1532
        %v1534 = vpop.f32.mrf.mxu0
        %v1535 = vpop.f32.mrf.mxu0
        %v1536 = vpop.f32.mrf.mxu0
        %1537 = vdwg.mxu0
        %1538 = vmatprep.subr.bf16.mxu0 0
        %1539 = vmatpush1.bf16.msra.mxu0 %v1092
        %1540 = vmatprep.subr.bf16.mxu0 0
        %1541 = vmatpush1.bf16.msra.mxu0 %v1091
        %1542 = vmatprep.subr.bf16.mxu0 0
        %1543 = vmatpush1.bf16.msra.mxu0 %v1090
        %1544 = vmatprep.subr.bf16.mxu0 0
        %1545 = vmatpush1.bf16.msra.mxu0 %v1089
        %1546 = vmatprep.subr.bf16.mxu0 0
        %1547 = vmatpush1.bf16.msra.mxu0 %v1088
        %1548 = vmatprep.subr.bf16.mxu0 0
        %1549 = vmatpush1.bf16.msra.mxu0 %v1087
        %1550 = vmatprep.subr.bf16.mxu0 0
        %1551 = vmatpush1.bf16.msra.mxu0 %v1086
        %1552 = vmatprep.subr.bf16.mxu0 0
        %1553 = vmatpush1.bf16.msra.mxu0 %v1085
        %1554 = vmatprep.subr.bf16.mxu0 0
        %1555 = vmatpush2.bf16.msra.mxu0 %v1100
        %1556 = vmatprep.subr.bf16.mxu0 0
        %1557 = vmatpush2.bf16.msra.mxu0 %v1099
        %1558 = vmatprep.subr.bf16.mxu0 0
        %1559 = vmatpush2.bf16.msra.mxu0 %v1098
        %1560 = vmatprep.subr.bf16.mxu0 0
        %1561 = vmatpush2.bf16.msra.mxu0 %v1097
        %1562 = vmatprep.subr.bf16.mxu0 0
        %1563 = vmatpush2.bf16.msra.mxu0 %v1096
        %1564 = vmatprep.subr.bf16.mxu0 0
        %1565 = vmatpush2.bf16.msra.mxu0 %v1095
        %1566 = vmatprep.subr.bf16.mxu0 0
        %1567 = vmatpush2.bf16.msra.mxu0 %v1094
        %1568 = vmatprep.subr.bf16.mxu0 0
        %1569 = vmatpush2.bf16.msra.mxu0 %v1093
        %1570 = vmatprep.mubr.bf16.mxu0 %v1416
        %1571 = vmatmul.mubr.bf16.gmra.mxu0 %v1415
        %v1572 = vpop.f32.mrf.mxu0
        %v1573 = vadd.f32 %v1533, %v1572
        %v1574 = vpop.f32.mrf.mxu0
        %v1575 = vpop.f32.mrf.mxu0
        %v1576 = vpop.f32.mrf.mxu0
        %1577 = vdwg.mxu0
        %1578 = vmatprep.subr.bf16.mxu0 0
        %1579 = vmatpush1.bf16.msra.mxu0 %v1108
        %1580 = vmatprep.subr.bf16.mxu0 0
        %1581 = vmatpush1.bf16.msra.mxu0 %v1107
        %1582 = vmatprep.subr.bf16.mxu0 0
        %1583 = vmatpush1.bf16.msra.mxu0 %v1106
        %1584 = vmatprep.subr.bf16.mxu0 0
        %1585 = vmatpush1.bf16.msra.mxu0 %v1105
        %1586 = vmatprep.subr.bf16.mxu0 0
        %1587 = vmatpush1.bf16.msra.mxu0 %v1104
        %1588 = vmatprep.subr.bf16.mxu0 0
        %1589 = vmatpush1.bf16.msra.mxu0 %v1103
        %1590 = vmatprep.subr.bf16.mxu0 0
        %1591 = vmatpush1.bf16.msra.mxu0 %v1102
        %1592 = vmatprep.subr.bf16.mxu0 0
        %1593 = vmatpush1.bf16.msra.mxu0 %v1101
        %1594 = vmatprep.subr.bf16.mxu0 0
        %1595 = vmatpush2.bf16.msra.mxu0 0
        %1596 = vmatprep.subr.bf16.mxu0 0
        %1597 = vmatpush2.bf16.msra.mxu0 0
        %1598 = vmatprep.subr.bf16.mxu0 0
        %1599 = vmatpush2.bf16.msra.mxu0 0
        %1600 = vmatprep.subr.bf16.mxu0 0
        %1601 = vmatpush2.bf16.msra.mxu0 0
        %1602 = vmatprep.subr.bf16.mxu0 0
        %1603 = vmatpush2.bf16.msra.mxu0 0
        %1604 = vmatprep.subr.bf16.mxu0 0
        %1605 = vmatpush2.bf16.msra.mxu0 0
        %1606 = vmatprep.subr.bf16.mxu0 0
        %1607 = vmatpush2.bf16.msra.mxu0 0
        %1608 = vmatprep.subr.bf16.mxu0 0
        %1609 = vmatpush2.bf16.msra.mxu0 0
        %1610 = vmatprep.mubr.bf16.mxu0 0
        %1611 = vmatmul.mubr.bf16.gmra.mxu0 %v1417
        %v1612 = vpop.f32.mrf.mxu0
        %v1613 = vadd.f32 %v1573, %v1612
        %v1614 = vpop.f32.mrf.mxu0
        %v1615 = vpop.f32.mrf.mxu0
        %v1616 = vpop.f32.mrf.mxu0
        %1617 = vdwg.mxu0
        %v1618 = vmul.f32 %v1613, 0.2
        %v1619 = vmax.f32 %v1613, %v1618
        %v1620 = vmul.f32 %v1619, %v1386
        %v1621 = vadd.f32 %v1620, %v1391
        %1622 = vst [vmem:[#allocation3 + $0x15] sm:$0xff] %v1621
        %v1623 = vld [vmem:[%s1403] ss:$2 sm:$0xff]
        %v1624 = vld [vmem:[%s1405] ss:$2 sm:$0xff]
        %v1625 = vld [vmem:[%s1407] ss:$2 sm:$0xff]
        %s1626 = scalar_lea.vmem [#allocation2], 90
        %v1627 = vld [vmem:[%s1626] ss:$2 sm:$0xff]
        %s1628 = scalar_lea.vmem [#allocation2], 91
        %v1629 = vld [vmem:[%s1628] ss:$2 sm:$0xff]
        %s1630 = scalar_lea.vmem [#allocation2], 92
        %v1631 = vld [vmem:[%s1630] ss:$2 sm:$0xff]
        %s1632 = scalar_lea.vmem [#allocation2], 108
        %v1633 = vld [vmem:[%s1632] ss:$2 sm:$0xff]
        %s1634 = scalar_lea.vmem [#allocation2], 109
        %v1635 = vld [vmem:[%s1634] ss:$2 sm:$0xff]
        %s1636 = scalar_lea.vmem [#allocation2], 110
        %v1637 = vld [vmem:[%s1636] ss:$2 sm:$0xff]
        %v1638 = vpack.c.bf16 %v1623, %v1623
        %v1639 = vpack.c.bf16 %v1624, %v1624
        %v1640 = vpack.c.bf16 %v1625, %v1625
        %v1641 = vpack.c.bf16 %v1627, %v1627
        %v1642 = vpack.c.bf16 %v1629, %v1629
        %v1643 = vpack.c.bf16 %v1631, %v1631
        %v1644 = vpack.c.bf16 %v1633, %v1633
        %v1645 = vpack.c.bf16 %v1635, %v1635
        %v1646 = vpack.c.bf16 %v1637, %v1637
        %1647 = vmatprep.subr.bf16.mxu0 0
        %1648 = vmatpush1.bf16.msra.mxu0 %v1044
        %1649 = vmatprep.subr.bf16.mxu0 0
        %1650 = vmatpush1.bf16.msra.mxu0 %v1043
        %1651 = vmatprep.subr.bf16.mxu0 0
        %1652 = vmatpush1.bf16.msra.mxu0 %v1042
        %1653 = vmatprep.subr.bf16.mxu0 0
        %1654 = vmatpush1.bf16.msra.mxu0 %v1041
        %1655 = vmatprep.subr.bf16.mxu0 0
        %1656 = vmatpush1.bf16.msra.mxu0 %v1040
        %1657 = vmatprep.subr.bf16.mxu0 0
        %1658 = vmatpush1.bf16.msra.mxu0 %v1039
        %1659 = vmatprep.subr.bf16.mxu0 0
        %1660 = vmatpush1.bf16.msra.mxu0 %v1038
        %1661 = vmatprep.subr.bf16.mxu0 0
        %1662 = vmatpush1.bf16.msra.mxu0 %v1037
        %1663 = vmatprep.subr.bf16.mxu0 0
        %1664 = vmatpush2.bf16.msra.mxu0 %v1052
        %1665 = vmatprep.subr.bf16.mxu0 0
        %1666 = vmatpush2.bf16.msra.mxu0 %v1051
        %1667 = vmatprep.subr.bf16.mxu0 0
        %1668 = vmatpush2.bf16.msra.mxu0 %v1050
        %1669 = vmatprep.subr.bf16.mxu0 0
        %1670 = vmatpush2.bf16.msra.mxu0 %v1049
        %1671 = vmatprep.subr.bf16.mxu0 0
        %1672 = vmatpush2.bf16.msra.mxu0 %v1048
        %1673 = vmatprep.subr.bf16.mxu0 0
        %1674 = vmatpush2.bf16.msra.mxu0 %v1047
        %1675 = vmatprep.subr.bf16.mxu0 0
        %1676 = vmatpush2.bf16.msra.mxu0 %v1046
        %1677 = vmatprep.subr.bf16.mxu0 0
        %1678 = vmatpush2.bf16.msra.mxu0 %v1045
        %1679 = vmatprep.mubr.bf16.mxu0 %v1639
        %1680 = vmatmul.mubr.bf16.gmra.mxu0 %v1638
        %v1681 = vpop.f32.mrf.mxu0
        %v1682 = vadd.f32 %v748, %v1681
        %v1683 = vpop.f32.mrf.mxu0
        %v1684 = vpop.f32.mrf.mxu0
        %v1685 = vpop.f32.mrf.mxu0
        %1686 = vdwg.mxu0
        %1687 = vmatprep.subr.bf16.mxu0 0
        %1688 = vmatpush1.bf16.msra.mxu0 %v1060
        %1689 = vmatprep.subr.bf16.mxu0 0
        %1690 = vmatpush1.bf16.msra.mxu0 %v1059
        %1691 = vmatprep.subr.bf16.mxu0 0
        %1692 = vmatpush1.bf16.msra.mxu0 %v1058
        %1693 = vmatprep.subr.bf16.mxu0 0
        %1694 = vmatpush1.bf16.msra.mxu0 %v1057
        %1695 = vmatprep.subr.bf16.mxu0 0
        %1696 = vmatpush1.bf16.msra.mxu0 %v1056
        %1697 = vmatprep.subr.bf16.mxu0 0
        %1698 = vmatpush1.bf16.msra.mxu0 %v1055
        %1699 = vmatprep.subr.bf16.mxu0 0
        %1700 = vmatpush1.bf16.msra.mxu0 %v1054
        %1701 = vmatprep.subr.bf16.mxu0 0
        %1702 = vmatpush1.bf16.msra.mxu0 %v1053
        %1703 = vmatprep.subr.bf16.mxu0 0
        %1704 = vmatpush2.bf16.msra.mxu0 %v1068
        %1705 = vmatprep.subr.bf16.mxu0 0
        %1706 = vmatpush2.bf16.msra.mxu0 %v1067
        %1707 = vmatprep.subr.bf16.mxu0 0
        %1708 = vmatpush2.bf16.msra.mxu0 %v1066
        %1709 = vmatprep.subr.bf16.mxu0 0
        %1710 = vmatpush2.bf16.msra.mxu0 %v1065
        %1711 = vmatprep.subr.bf16.mxu0 0
        %1712 = vmatpush2.bf16.msra.mxu0 %v1064
        %1713 = vmatprep.subr.bf16.mxu0 0
        %1714 = vmatpush2.bf16.msra.mxu0 %v1063
        %1715 = vmatprep.subr.bf16.mxu0 0
        %1716 = vmatpush2.bf16.msra.mxu0 %v1062
        %1717 = vmatprep.subr.bf16.mxu0 0
        %1718 = vmatpush2.bf16.msra.mxu0 %v1061
        %1719 = vmatprep.mubr.bf16.mxu0 %v1641
        %1720 = vmatmul.mubr.bf16.gmra.mxu0 %v1640
        %v1721 = vpop.f32.mrf.mxu0
        %v1722 = vadd.f32 %v1682, %v1721
        %v1723 = vpop.f32.mrf.mxu0
        %v1724 = vpop.f32.mrf.mxu0
        %v1725 = vpop.f32.mrf.mxu0
        %1726 = vdwg.mxu0
        %1727 = vmatprep.subr.bf16.mxu0 0
        %1728 = vmatpush1.bf16.msra.mxu0 %v1076
        %1729 = vmatprep.subr.bf16.mxu0 0
        %1730 = vmatpush1.bf16.msra.mxu0 %v1075
        %1731 = vmatprep.subr.bf16.mxu0 0
        %1732 = vmatpush1.bf16.msra.mxu0 %v1074
        %1733 = vmatprep.subr.bf16.mxu0 0
        %1734 = vmatpush1.bf16.msra.mxu0 %v1073
        %1735 = vmatprep.subr.bf16.mxu0 0
        %1736 = vmatpush1.bf16.msra.mxu0 %v1072
        %1737 = vmatprep.subr.bf16.mxu0 0
        %1738 = vmatpush1.bf16.msra.mxu0 %v1071
        %1739 = vmatprep.subr.bf16.mxu0 0
        %1740 = vmatpush1.bf16.msra.mxu0 %v1070
        %1741 = vmatprep.subr.bf16.mxu0 0
        %1742 = vmatpush1.bf16.msra.mxu0 %v1069
        %1743 = vmatprep.subr.bf16.mxu0 0
        %1744 = vmatpush2.bf16.msra.mxu0 %v1084
        %1745 = vmatprep.subr.bf16.mxu0 0
        %1746 = vmatpush2.bf16.msra.mxu0 %v1083
        %1747 = vmatprep.subr.bf16.mxu0 0
        %1748 = vmatpush2.bf16.msra.mxu0 %v1082
        %1749 = vmatprep.subr.bf16.mxu0 0
        %1750 = vmatpush2.bf16.msra.mxu0 %v1081
        %1751 = vmatprep.subr.bf16.mxu0 0
        %1752 = vmatpush2.bf16.msra.mxu0 %v1080
        %1753 = vmatprep.subr.bf16.mxu0 0
        %1754 = vmatpush2.bf16.msra.mxu0 %v1079
        %1755 = vmatprep.subr.bf16.mxu0 0
        %1756 = vmatpush2.bf16.msra.mxu0 %v1078
        %1757 = vmatprep.subr.bf16.mxu0 0
        %1758 = vmatpush2.bf16.msra.mxu0 %v1077
        %1759 = vmatprep.mubr.bf16.mxu0 %v1643
        %1760 = vmatmul.mubr.bf16.gmra.mxu0 %v1642
        %v1761 = vpop.f32.mrf.mxu0
        %v1762 = vadd.f32 %v1722, %v1761
        %v1763 = vpop.f32.mrf.mxu0
        %v1764 = vpop.f32.mrf.mxu0
        %v1765 = vpop.f32.mrf.mxu0
        %1766 = vdwg.mxu0
        %1767 = vmatprep.subr.bf16.mxu0 0
        %1768 = vmatpush1.bf16.msra.mxu0 %v1092
        %1769 = vmatprep.subr.bf16.mxu0 0
        %1770 = vmatpush1.bf16.msra.mxu0 %v1091
        %1771 = vmatprep.subr.bf16.mxu0 0
        %1772 = vmatpush1.bf16.msra.mxu0 %v1090
        %1773 = vmatprep.subr.bf16.mxu0 0
        %1774 = vmatpush1.bf16.msra.mxu0 %v1089
        %1775 = vmatprep.subr.bf16.mxu0 0
        %1776 = vmatpush1.bf16.msra.mxu0 %v1088
        %1777 = vmatprep.subr.bf16.mxu0 0
        %1778 = vmatpush1.bf16.msra.mxu0 %v1087
        %1779 = vmatprep.subr.bf16.mxu0 0
        %1780 = vmatpush1.bf16.msra.mxu0 %v1086
        %1781 = vmatprep.subr.bf16.mxu0 0
        %1782 = vmatpush1.bf16.msra.mxu0 %v1085
        %1783 = vmatprep.subr.bf16.mxu0 0
        %1784 = vmatpush2.bf16.msra.mxu0 %v1100
        %1785 = vmatprep.subr.bf16.mxu0 0
        %1786 = vmatpush2.bf16.msra.mxu0 %v1099
        %1787 = vmatprep.subr.bf16.mxu0 0
        %1788 = vmatpush2.bf16.msra.mxu0 %v1098
        %1789 = vmatprep.subr.bf16.mxu0 0
        %1790 = vmatpush2.bf16.msra.mxu0 %v1097
        %1791 = vmatprep.subr.bf16.mxu0 0
        %1792 = vmatpush2.bf16.msra.mxu0 %v1096
        %1793 = vmatprep.subr.bf16.mxu0 0
        %1794 = vmatpush2.bf16.msra.mxu0 %v1095
        %1795 = vmatprep.subr.bf16.mxu0 0
        %1796 = vmatpush2.bf16.msra.mxu0 %v1094
        %1797 = vmatprep.subr.bf16.mxu0 0
        %1798 = vmatpush2.bf16.msra.mxu0 %v1093
        %1799 = vmatprep.mubr.bf16.mxu0 %v1645
        %1800 = vmatmul.mubr.bf16.gmra.mxu0 %v1644
        %v1801 = vpop.f32.mrf.mxu0
        %v1802 = vadd.f32 %v1762, %v1801
        %v1803 = vpop.f32.mrf.mxu0
        %v1804 = vpop.f32.mrf.mxu0
        %v1805 = vpop.f32.mrf.mxu0
        %1806 = vdwg.mxu0
        %1807 = vmatprep.subr.bf16.mxu0 0
        %1808 = vmatpush1.bf16.msra.mxu0 %v1108
        %1809 = vmatprep.subr.bf16.mxu0 0
        %1810 = vmatpush1.bf16.msra.mxu0 %v1107
        %1811 = vmatprep.subr.bf16.mxu0 0
        %1812 = vmatpush1.bf16.msra.mxu0 %v1106
        %1813 = vmatprep.subr.bf16.mxu0 0
        %1814 = vmatpush1.bf16.msra.mxu0 %v1105
        %1815 = vmatprep.subr.bf16.mxu0 0
        %1816 = vmatpush1.bf16.msra.mxu0 %v1104
        %1817 = vmatprep.subr.bf16.mxu0 0
        %1818 = vmatpush1.bf16.msra.mxu0 %v1103
        %1819 = vmatprep.subr.bf16.mxu0 0
        %1820 = vmatpush1.bf16.msra.mxu0 %v1102
        %1821 = vmatprep.subr.bf16.mxu0 0
        %1822 = vmatpush1.bf16.msra.mxu0 %v1101
        %1823 = vmatprep.subr.bf16.mxu0 0
        %1824 = vmatpush2.bf16.msra.mxu0 0
        %1825 = vmatprep.subr.bf16.mxu0 0
        %1826 = vmatpush2.bf16.msra.mxu0 0
        %1827 = vmatprep.subr.bf16.mxu0 0
        %1828 = vmatpush2.bf16.msra.mxu0 0
        %1829 = vmatprep.subr.bf16.mxu0 0
        %1830 = vmatpush2.bf16.msra.mxu0 0
        %1831 = vmatprep.subr.bf16.mxu0 0
        %1832 = vmatpush2.bf16.msra.mxu0 0
        %1833 = vmatprep.subr.bf16.mxu0 0
        %1834 = vmatpush2.bf16.msra.mxu0 0
        %1835 = vmatprep.subr.bf16.mxu0 0
        %1836 = vmatpush2.bf16.msra.mxu0 0
        %1837 = vmatprep.subr.bf16.mxu0 0
        %1838 = vmatpush2.bf16.msra.mxu0 0
        %1839 = vmatprep.mubr.bf16.mxu0 0
        %1840 = vmatmul.mubr.bf16.gmra.mxu0 %v1646
        %v1841 = vpop.f32.mrf.mxu0
        %v1842 = vadd.f32 %v1802, %v1841
        %v1843 = vpop.f32.mrf.mxu0
        %v1844 = vpop.f32.mrf.mxu0
        %v1845 = vpop.f32.mrf.mxu0
        %1846 = vdwg.mxu0
        %v1847 = vmul.f32 %v1842, 0.2
        %v1848 = vmax.f32 %v1842, %v1847
        %v1849 = vmul.f32 %v1848, %v1386
        %v1850 = vadd.f32 %v1849, %v1391
        %1851 = vst [vmem:[#allocation3 + $0x1f] sm:$0xff] %v1850
        %v1852 = vld [vmem:[%s1632] ss:$2 sm:$0xff]
        %v1853 = vld [vmem:[%s1634] ss:$2 sm:$0xff]
        %v1854 = vld [vmem:[%s1636] ss:$2 sm:$0xff]
        %s1855 = scalar_lea.vmem [#allocation2], 126
        %v1856 = vld [vmem:[%s1855] ss:$2 sm:$0xff]
        %s1857 = scalar_lea.vmem [#allocation2], 127
        %v1858 = vld [vmem:[%s1857] ss:$2 sm:$0xff]
        %s1859 = scalar_lea.vmem [#allocation2], 128
        %v1860 = vld [vmem:[%s1859] ss:$2 sm:$0xff]
        %s1861 = scalar_lea.vmem [#allocation2], 144
        %v1862 = vld [vmem:[%s1861] ss:$2 sm:$0xff]
        %s1863 = scalar_lea.vmem [#allocation2], 145
        %v1864 = vld [vmem:[%s1863] ss:$2 sm:$0xff]
        %s1865 = scalar_lea.vmem [#allocation2], 146
        %v1866 = vld [vmem:[%s1865] ss:$2 sm:$0xff]
        %v1867 = vpack.c.bf16 %v1852, %v1852
        %v1868 = vpack.c.bf16 %v1853, %v1853
        %v1869 = vpack.c.bf16 %v1854, %v1854
        %v1870 = vpack.c.bf16 %v1856, %v1856
        %v1871 = vpack.c.bf16 %v1858, %v1858
        %v1872 = vpack.c.bf16 %v1860, %v1860
        %v1873 = vpack.c.bf16 %v1862, %v1862
        %v1874 = vpack.c.bf16 %v1864, %v1864
        %v1875 = vpack.c.bf16 %v1866, %v1866
        %1876 = vmatprep.subr.bf16.mxu0 0
        %1877 = vmatpush1.bf16.msra.mxu0 %v1044
        %1878 = vmatprep.subr.bf16.mxu0 0
        %1879 = vmatpush1.bf16.msra.mxu0 %v1043
        %1880 = vmatprep.subr.bf16.mxu0 0
        %1881 = vmatpush1.bf16.msra.mxu0 %v1042
        %1882 = vmatprep.subr.bf16.mxu0 0
        %1883 = vmatpush1.bf16.msra.mxu0 %v1041
        %1884 = vmatprep.subr.bf16.mxu0 0
        %1885 = vmatpush1.bf16.msra.mxu0 %v1040
        %1886 = vmatprep.subr.bf16.mxu0 0
        %1887 = vmatpush1.bf16.msra.mxu0 %v1039
        %1888 = vmatprep.subr.bf16.mxu0 0
        %1889 = vmatpush1.bf16.msra.mxu0 %v1038
        %1890 = vmatprep.subr.bf16.mxu0 0
        %1891 = vmatpush1.bf16.msra.mxu0 %v1037
        %1892 = vmatprep.subr.bf16.mxu0 0
        %1893 = vmatpush2.bf16.msra.mxu0 %v1052
        %1894 = vmatprep.subr.bf16.mxu0 0
        %1895 = vmatpush2.bf16.msra.mxu0 %v1051
        %1896 = vmatprep.subr.bf16.mxu0 0
        %1897 = vmatpush2.bf16.msra.mxu0 %v1050
        %1898 = vmatprep.subr.bf16.mxu0 0
        %1899 = vmatpush2.bf16.msra.mxu0 %v1049
        %1900 = vmatprep.subr.bf16.mxu0 0
        %1901 = vmatpush2.bf16.msra.mxu0 %v1048
        %1902 = vmatprep.subr.bf16.mxu0 0
        %1903 = vmatpush2.bf16.msra.mxu0 %v1047
        %1904 = vmatprep.subr.bf16.mxu0 0
        %1905 = vmatpush2.bf16.msra.mxu0 %v1046
        %1906 = vmatprep.subr.bf16.mxu0 0
        %1907 = vmatpush2.bf16.msra.mxu0 %v1045
        %1908 = vmatprep.mubr.bf16.mxu0 %v1868
        %1909 = vmatmul.mubr.bf16.gmra.mxu0 %v1867
        %v1910 = vpop.f32.mrf.mxu0
        %v1911 = vadd.f32 %v748, %v1910
        %v1912 = vpop.f32.mrf.mxu0
        %v1913 = vpop.f32.mrf.mxu0
        %v1914 = vpop.f32.mrf.mxu0
        %1915 = vdwg.mxu0
        %1916 = vmatprep.subr.bf16.mxu0 0
        %1917 = vmatpush1.bf16.msra.mxu0 %v1060
        %1918 = vmatprep.subr.bf16.mxu0 0
        %1919 = vmatpush1.bf16.msra.mxu0 %v1059
        %1920 = vmatprep.subr.bf16.mxu0 0
        %1921 = vmatpush1.bf16.msra.mxu0 %v1058
        %1922 = vmatprep.subr.bf16.mxu0 0
        %1923 = vmatpush1.bf16.msra.mxu0 %v1057
        %1924 = vmatprep.subr.bf16.mxu0 0
        %1925 = vmatpush1.bf16.msra.mxu0 %v1056
        %1926 = vmatprep.subr.bf16.mxu0 0
        %1927 = vmatpush1.bf16.msra.mxu0 %v1055
        %1928 = vmatprep.subr.bf16.mxu0 0
        %1929 = vmatpush1.bf16.msra.mxu0 %v1054
        %1930 = vmatprep.subr.bf16.mxu0 0
        %1931 = vmatpush1.bf16.msra.mxu0 %v1053
        %1932 = vmatprep.subr.bf16.mxu0 0
        %1933 = vmatpush2.bf16.msra.mxu0 %v1068
        %1934 = vmatprep.subr.bf16.mxu0 0
        %1935 = vmatpush2.bf16.msra.mxu0 %v1067
        %1936 = vmatprep.subr.bf16.mxu0 0
        %1937 = vmatpush2.bf16.msra.mxu0 %v1066
        %1938 = vmatprep.subr.bf16.mxu0 0
        %1939 = vmatpush2.bf16.msra.mxu0 %v1065
        %1940 = vmatprep.subr.bf16.mxu0 0
        %1941 = vmatpush2.bf16.msra.mxu0 %v1064
        %1942 = vmatprep.subr.bf16.mxu0 0
        %1943 = vmatpush2.bf16.msra.mxu0 %v1063
        %1944 = vmatprep.subr.bf16.mxu0 0
        %1945 = vmatpush2.bf16.msra.mxu0 %v1062
        %1946 = vmatprep.subr.bf16.mxu0 0
        %1947 = vmatpush2.bf16.msra.mxu0 %v1061
        %1948 = vmatprep.mubr.bf16.mxu0 %v1870
        %1949 = vmatmul.mubr.bf16.gmra.mxu0 %v1869
        %v1950 = vpop.f32.mrf.mxu0
        %v1951 = vadd.f32 %v1911, %v1950
        %v1952 = vpop.f32.mrf.mxu0
        %v1953 = vpop.f32.mrf.mxu0
        %v1954 = vpop.f32.mrf.mxu0
        %1955 = vdwg.mxu0
        %1956 = vmatprep.subr.bf16.mxu0 0
        %1957 = vmatpush1.bf16.msra.mxu0 %v1076
        %1958 = vmatprep.subr.bf16.mxu0 0
        %1959 = vmatpush1.bf16.msra.mxu0 %v1075
        %1960 = vmatprep.subr.bf16.mxu0 0
        %1961 = vmatpush1.bf16.msra.mxu0 %v1074
        %1962 = vmatprep.subr.bf16.mxu0 0
        %1963 = vmatpush1.bf16.msra.mxu0 %v1073
        %1964 = vmatprep.subr.bf16.mxu0 0
        %1965 = vmatpush1.bf16.msra.mxu0 %v1072
        %1966 = vmatprep.subr.bf16.mxu0 0
        %1967 = vmatpush1.bf16.msra.mxu0 %v1071
        %1968 = vmatprep.subr.bf16.mxu0 0
        %1969 = vmatpush1.bf16.msra.mxu0 %v1070
        %1970 = vmatprep.subr.bf16.mxu0 0
        %1971 = vmatpush1.bf16.msra.mxu0 %v1069
        %1972 = vmatprep.subr.bf16.mxu0 0
        %1973 = vmatpush2.bf16.msra.mxu0 %v1084
        %1974 = vmatprep.subr.bf16.mxu0 0
        %1975 = vmatpush2.bf16.msra.mxu0 %v1083
        %1976 = vmatprep.subr.bf16.mxu0 0
        %1977 = vmatpush2.bf16.msra.mxu0 %v1082
        %1978 = vmatprep.subr.bf16.mxu0 0
        %1979 = vmatpush2.bf16.msra.mxu0 %v1081
        %1980 = vmatprep.subr.bf16.mxu0 0
        %1981 = vmatpush2.bf16.msra.mxu0 %v1080
        %1982 = vmatprep.subr.bf16.mxu0 0
        %1983 = vmatpush2.bf16.msra.mxu0 %v1079
        %1984 = vmatprep.subr.bf16.mxu0 0
        %1985 = vmatpush2.bf16.msra.mxu0 %v1078
        %1986 = vmatprep.subr.bf16.mxu0 0
        %1987 = vmatpush2.bf16.msra.mxu0 %v1077
        %1988 = vmatprep.mubr.bf16.mxu0 %v1872
        %1989 = vmatmul.mubr.bf16.gmra.mxu0 %v1871
        %v1990 = vpop.f32.mrf.mxu0
        %v1991 = vadd.f32 %v1951, %v1990
        %v1992 = vpop.f32.mrf.mxu0
        %v1993 = vpop.f32.mrf.mxu0
        %v1994 = vpop.f32.mrf.mxu0
        %1995 = vdwg.mxu0
        %1996 = vmatprep.subr.bf16.mxu0 0
        %1997 = vmatpush1.bf16.msra.mxu0 %v1092
        %1998 = vmatprep.subr.bf16.mxu0 0
        %1999 = vmatpush1.bf16.msra.mxu0 %v1091
        %2000 = vmatprep.subr.bf16.mxu0 0
        %2001 = vmatpush1.bf16.msra.mxu0 %v1090
        %2002 = vmatprep.subr.bf16.mxu0 0
        %2003 = vmatpush1.bf16.msra.mxu0 %v1089
        %2004 = vmatprep.subr.bf16.mxu0 0
        %2005 = vmatpush1.bf16.msra.mxu0 %v1088
        %2006 = vmatprep.subr.bf16.mxu0 0
        %2007 = vmatpush1.bf16.msra.mxu0 %v1087
        %2008 = vmatprep.subr.bf16.mxu0 0
        %2009 = vmatpush1.bf16.msra.mxu0 %v1086
        %2010 = vmatprep.subr.bf16.mxu0 0
        %2011 = vmatpush1.bf16.msra.mxu0 %v1085
        %2012 = vmatprep.subr.bf16.mxu0 0
        %2013 = vmatpush2.bf16.msra.mxu0 %v1100
        %2014 = vmatprep.subr.bf16.mxu0 0
        %2015 = vmatpush2.bf16.msra.mxu0 %v1099
        %2016 = vmatprep.subr.bf16.mxu0 0
        %2017 = vmatpush2.bf16.msra.mxu0 %v1098
        %2018 = vmatprep.subr.bf16.mxu0 0
        %2019 = vmatpush2.bf16.msra.mxu0 %v1097
        %2020 = vmatprep.subr.bf16.mxu0 0
        %2021 = vmatpush2.bf16.msra.mxu0 %v1096
        %2022 = vmatprep.subr.bf16.mxu0 0
        %2023 = vmatpush2.bf16.msra.mxu0 %v1095
        %2024 = vmatprep.subr.bf16.mxu0 0
        %2025 = vmatpush2.bf16.msra.mxu0 %v1094
        %2026 = vmatprep.subr.bf16.mxu0 0
        %2027 = vmatpush2.bf16.msra.mxu0 %v1093
        %2028 = vmatprep.mubr.bf16.mxu0 %v1874
        %2029 = vmatmul.mubr.bf16.gmra.mxu0 %v1873
        %v2030 = vpop.f32.mrf.mxu0
        %v2031 = vadd.f32 %v1991, %v2030
        %v2032 = vpop.f32.mrf.mxu0
        %v2033 = vpop.f32.mrf.mxu0
        %v2034 = vpop.f32.mrf.mxu0
        %2035 = vdwg.mxu0
        %2036 = vmatprep.subr.bf16.mxu0 0
        %2037 = vmatpush1.bf16.msra.mxu0 %v1108
        %2038 = vmatprep.subr.bf16.mxu0 0
        %2039 = vmatpush1.bf16.msra.mxu0 %v1107
        %2040 = vmatprep.subr.bf16.mxu0 0
        %2041 = vmatpush1.bf16.msra.mxu0 %v1106
        %2042 = vmatprep.subr.bf16.mxu0 0
        %2043 = vmatpush1.bf16.msra.mxu0 %v1105
        %2044 = vmatprep.subr.bf16.mxu0 0
        %2045 = vmatpush1.bf16.msra.mxu0 %v1104
        %2046 = vmatprep.subr.bf16.mxu0 0
        %2047 = vmatpush1.bf16.msra.mxu0 %v1103
        %2048 = vmatprep.subr.bf16.mxu0 0
        %2049 = vmatpush1.bf16.msra.mxu0 %v1102
        %2050 = vmatprep.subr.bf16.mxu0 0
        %2051 = vmatpush1.bf16.msra.mxu0 %v1101
        %2052 = vmatprep.subr.bf16.mxu0 0
        %2053 = vmatpush2.bf16.msra.mxu0 0
        %2054 = vmatprep.subr.bf16.mxu0 0
        %2055 = vmatpush2.bf16.msra.mxu0 0
        %2056 = vmatprep.subr.bf16.mxu0 0
        %2057 = vmatpush2.bf16.msra.mxu0 0
        %2058 = vmatprep.subr.bf16.mxu0 0
        %2059 = vmatpush2.bf16.msra.mxu0 0
        %2060 = vmatprep.subr.bf16.mxu0 0
        %2061 = vmatpush2.bf16.msra.mxu0 0
        %2062 = vmatprep.subr.bf16.mxu0 0
        %2063 = vmatpush2.bf16.msra.mxu0 0
        %2064 = vmatprep.subr.bf16.mxu0 0
        %2065 = vmatpush2.bf16.msra.mxu0 0
        %2066 = vmatprep.subr.bf16.mxu0 0
        %2067 = vmatpush2.bf16.msra.mxu0 0
        %2068 = vmatprep.mubr.bf16.mxu0 0
        %2069 = vmatmul.mubr.bf16.gmra.mxu0 %v1875
        %v2070 = vpop.f32.mrf.mxu0
        %v2071 = vadd.f32 %v2031, %v2070
        %v2072 = vpop.f32.mrf.mxu0
        %v2073 = vpop.f32.mrf.mxu0
        %v2074 = vpop.f32.mrf.mxu0
        %2075 = vdwg.mxu0
        %v2076 = vmul.f32 %v2071, 0.2
        %v2077 = vmax.f32 %v2071, %v2076
        %v2078 = vmul.f32 %v2077, %v1386
        %v2079 = vadd.f32 %v2078, %v1391
        %2080 = vst [vmem:[#allocation3 + $0x29] sm:$0xff] %v2079
        %v2081 = vld [vmem:[%s1861] ss:$2 sm:$0xff]
        %v2082 = vld [vmem:[%s1863] ss:$2 sm:$0xff]
        %v2083 = vld [vmem:[%s1865] ss:$2 sm:$0xff]
        %s2084 = scalar_lea.vmem [#allocation2], 162
        %v2085 = vld [vmem:[%s2084] ss:$2 sm:$0xff]
        %s2086 = scalar_lea.vmem [#allocation2], 163
        %v2087 = vld [vmem:[%s2086] ss:$2 sm:$0xff]
        %s2088 = scalar_lea.vmem [#allocation2], 164
        %v2089 = vld [vmem:[%s2088] ss:$2 sm:$0xff]
        %s2090 = scalar_lea.vmem [#allocation2], 180
        %v2091 = vld [vmem:[%s2090] ss:$2 sm:$0xff]
        %s2092 = scalar_lea.vmem [#allocation2], 181
        %v2093 = vld [vmem:[%s2092] ss:$2 sm:$0xff]
        %s2094 = scalar_lea.vmem [#allocation2], 182
        %v2095 = vld [vmem:[%s2094] ss:$2 sm:$0xff]
        %v2096 = vpack.c.bf16 %v2081, %v2081
        %v2097 = vpack.c.bf16 %v2082, %v2082
        %v2098 = vpack.c.bf16 %v2083, %v2083
        %v2099 = vpack.c.bf16 %v2085, %v2085
        %v2100 = vpack.c.bf16 %v2087, %v2087
        %v2101 = vpack.c.bf16 %v2089, %v2089
        %v2102 = vpack.c.bf16 %v2091, %v2091
        %v2103 = vpack.c.bf16 %v2093, %v2093
        %v2104 = vpack.c.bf16 %v2095, %v2095
        %2105 = vmatprep.subr.bf16.mxu0 0
        %2106 = vmatpush1.bf16.msra.mxu0 %v1044
        %2107 = vmatprep.subr.bf16.mxu0 0
        %2108 = vmatpush1.bf16.msra.mxu0 %v1043
        %2109 = vmatprep.subr.bf16.mxu0 0
        %2110 = vmatpush1.bf16.msra.mxu0 %v1042
        %2111 = vmatprep.subr.bf16.mxu0 0
        %2112 = vmatpush1.bf16.msra.mxu0 %v1041
        %2113 = vmatprep.subr.bf16.mxu0 0
        %2114 = vmatpush1.bf16.msra.mxu0 %v1040
        %2115 = vmatprep.subr.bf16.mxu0 0
        %2116 = vmatpush1.bf16.msra.mxu0 %v1039
        %2117 = vmatprep.subr.bf16.mxu0 0
        %2118 = vmatpush1.bf16.msra.mxu0 %v1038
        %2119 = vmatprep.subr.bf16.mxu0 0
        %2120 = vmatpush1.bf16.msra.mxu0 %v1037
        %2121 = vmatprep.subr.bf16.mxu0 0
        %2122 = vmatpush2.bf16.msra.mxu0 %v1052
        %2123 = vmatprep.subr.bf16.mxu0 0
        %2124 = vmatpush2.bf16.msra.mxu0 %v1051
        %2125 = vmatprep.subr.bf16.mxu0 0
        %2126 = vmatpush2.bf16.msra.mxu0 %v1050
        %2127 = vmatprep.subr.bf16.mxu0 0
        %2128 = vmatpush2.bf16.msra.mxu0 %v1049
        %2129 = vmatprep.subr.bf16.mxu0 0
        %2130 = vmatpush2.bf16.msra.mxu0 %v1048
        %2131 = vmatprep.subr.bf16.mxu0 0
        %2132 = vmatpush2.bf16.msra.mxu0 %v1047
        %2133 = vmatprep.subr.bf16.mxu0 0
        %2134 = vmatpush2.bf16.msra.mxu0 %v1046
        %2135 = vmatprep.subr.bf16.mxu0 0
        %2136 = vmatpush2.bf16.msra.mxu0 %v1045
        %2137 = vmatprep.mubr.bf16.mxu0 %v2097
        %2138 = vmatmul.mubr.bf16.gmra.mxu0 %v2096
        %v2139 = vpop.f32.mrf.mxu0
        %v2140 = vadd.f32 %v748, %v2139
        %v2141 = vpop.f32.mrf.mxu0
        %v2142 = vpop.f32.mrf.mxu0
        %v2143 = vpop.f32.mrf.mxu0
        %2144 = vdwg.mxu0
        %2145 = vmatprep.subr.bf16.mxu0 0
        %2146 = vmatpush1.bf16.msra.mxu0 %v1060
        %2147 = vmatprep.subr.bf16.mxu0 0
        %2148 = vmatpush1.bf16.msra.mxu0 %v1059
        %2149 = vmatprep.subr.bf16.mxu0 0
        %2150 = vmatpush1.bf16.msra.mxu0 %v1058
        %2151 = vmatprep.subr.bf16.mxu0 0
        %2152 = vmatpush1.bf16.msra.mxu0 %v1057
        %2153 = vmatprep.subr.bf16.mxu0 0
        %2154 = vmatpush1.bf16.msra.mxu0 %v1056
        %2155 = vmatprep.subr.bf16.mxu0 0
        %2156 = vmatpush1.bf16.msra.mxu0 %v1055
        %2157 = vmatprep.subr.bf16.mxu0 0
        %2158 = vmatpush1.bf16.msra.mxu0 %v1054
        %2159 = vmatprep.subr.bf16.mxu0 0
        %2160 = vmatpush1.bf16.msra.mxu0 %v1053
        %2161 = vmatprep.subr.bf16.mxu0 0
        %2162 = vmatpush2.bf16.msra.mxu0 %v1068
        %2163 = vmatprep.subr.bf16.mxu0 0
        %2164 = vmatpush2.bf16.msra.mxu0 %v1067
        %2165 = vmatprep.subr.bf16.mxu0 0
        %2166 = vmatpush2.bf16.msra.mxu0 %v1066
        %2167 = vmatprep.subr.bf16.mxu0 0
        %2168 = vmatpush2.bf16.msra.mxu0 %v1065
        %2169 = vmatprep.subr.bf16.mxu0 0
        %2170 = vmatpush2.bf16.msra.mxu0 %v1064
        %2171 = vmatprep.subr.bf16.mxu0 0
        %2172 = vmatpush2.bf16.msra.mxu0 %v1063
        %2173 = vmatprep.subr.bf16.mxu0 0
        %2174 = vmatpush2.bf16.msra.mxu0 %v1062
        %2175 = vmatprep.subr.bf16.mxu0 0
        %2176 = vmatpush2.bf16.msra.mxu0 %v1061
        %2177 = vmatprep.mubr.bf16.mxu0 %v2099
        %2178 = vmatmul.mubr.bf16.gmra.mxu0 %v2098
        %v2179 = vpop.f32.mrf.mxu0
        %v2180 = vadd.f32 %v2140, %v2179
        %v2181 = vpop.f32.mrf.mxu0
        %v2182 = vpop.f32.mrf.mxu0
        %v2183 = vpop.f32.mrf.mxu0
        %2184 = vdwg.mxu0
        %2185 = vmatprep.subr.bf16.mxu0 0
        %2186 = vmatpush1.bf16.msra.mxu0 %v1076
        %2187 = vmatprep.subr.bf16.mxu0 0
        %2188 = vmatpush1.bf16.msra.mxu0 %v1075
        %2189 = vmatprep.subr.bf16.mxu0 0
        %2190 = vmatpush1.bf16.msra.mxu0 %v1074
        %2191 = vmatprep.subr.bf16.mxu0 0
        %2192 = vmatpush1.bf16.msra.mxu0 %v1073
        %2193 = vmatprep.subr.bf16.mxu0 0
        %2194 = vmatpush1.bf16.msra.mxu0 %v1072
        %2195 = vmatprep.subr.bf16.mxu0 0
        %2196 = vmatpush1.bf16.msra.mxu0 %v1071
        %2197 = vmatprep.subr.bf16.mxu0 0
        %2198 = vmatpush1.bf16.msra.mxu0 %v1070
        %2199 = vmatprep.subr.bf16.mxu0 0
        %2200 = vmatpush1.bf16.msra.mxu0 %v1069
        %2201 = vmatprep.subr.bf16.mxu0 0
        %2202 = vmatpush2.bf16.msra.mxu0 %v1084
        %2203 = vmatprep.subr.bf16.mxu0 0
        %2204 = vmatpush2.bf16.msra.mxu0 %v1083
        %2205 = vmatprep.subr.bf16.mxu0 0
        %2206 = vmatpush2.bf16.msra.mxu0 %v1082
        %2207 = vmatprep.subr.bf16.mxu0 0
        %2208 = vmatpush2.bf16.msra.mxu0 %v1081
        %2209 = vmatprep.subr.bf16.mxu0 0
        %2210 = vmatpush2.bf16.msra.mxu0 %v1080
        %2211 = vmatprep.subr.bf16.mxu0 0
        %2212 = vmatpush2.bf16.msra.mxu0 %v1079
        %2213 = vmatprep.subr.bf16.mxu0 0
        %2214 = vmatpush2.bf16.msra.mxu0 %v1078
        %2215 = vmatprep.subr.bf16.mxu0 0
        %2216 = vmatpush2.bf16.msra.mxu0 %v1077
        %2217 = vmatprep.mubr.bf16.mxu0 %v2101
        %2218 = vmatmul.mubr.bf16.gmra.mxu0 %v2100
        %v2219 = vpop.f32.mrf.mxu0
        %v2220 = vadd.f32 %v2180, %v2219
        %v2221 = vpop.f32.mrf.mxu0
        %v2222 = vpop.f32.mrf.mxu0
        %v2223 = vpop.f32.mrf.mxu0
        %2224 = vdwg.mxu0
        %2225 = vmatprep.subr.bf16.mxu0 0
        %2226 = vmatpush1.bf16.msra.mxu0 %v1092
        %2227 = vmatprep.subr.bf16.mxu0 0
        %2228 = vmatpush1.bf16.msra.mxu0 %v1091
        %2229 = vmatprep.subr.bf16.mxu0 0
        %2230 = vmatpush1.bf16.msra.mxu0 %v1090
        %2231 = vmatprep.subr.bf16.mxu0 0
        %2232 = vmatpush1.bf16.msra.mxu0 %v1089
        %2233 = vmatprep.subr.bf16.mxu0 0
        %2234 = vmatpush1.bf16.msra.mxu0 %v1088
        %2235 = vmatprep.subr.bf16.mxu0 0
        %2236 = vmatpush1.bf16.msra.mxu0 %v1087
        %2237 = vmatprep.subr.bf16.mxu0 0
        %2238 = vmatpush1.bf16.msra.mxu0 %v1086
        %2239 = vmatprep.subr.bf16.mxu0 0
        %2240 = vmatpush1.bf16.msra.mxu0 %v1085
        %2241 = vmatprep.subr.bf16.mxu0 0
        %2242 = vmatpush2.bf16.msra.mxu0 %v1100
        %2243 = vmatprep.subr.bf16.mxu0 0
        %2244 = vmatpush2.bf16.msra.mxu0 %v1099
        %2245 = vmatprep.subr.bf16.mxu0 0
        %2246 = vmatpush2.bf16.msra.mxu0 %v1098
        %2247 = vmatprep.subr.bf16.mxu0 0
        %2248 = vmatpush2.bf16.msra.mxu0 %v1097
        %2249 = vmatprep.subr.bf16.mxu0 0
        %2250 = vmatpush2.bf16.msra.mxu0 %v1096
        %2251 = vmatprep.subr.bf16.mxu0 0
        %2252 = vmatpush2.bf16.msra.mxu0 %v1095
        %2253 = vmatprep.subr.bf16.mxu0 0
        %2254 = vmatpush2.bf16.msra.mxu0 %v1094
        %2255 = vmatprep.subr.bf16.mxu0 0
        %2256 = vmatpush2.bf16.msra.mxu0 %v1093
        %2257 = vmatprep.mubr.bf16.mxu0 %v2103
        %2258 = vmatmul.mubr.bf16.gmra.mxu0 %v2102
        %v2259 = vpop.f32.mrf.mxu0
        %v2260 = vadd.f32 %v2220, %v2259
        %v2261 = vpop.f32.mrf.mxu0
        %v2262 = vpop.f32.mrf.mxu0
        %v2263 = vpop.f32.mrf.mxu0
        %2264 = vdwg.mxu0
        %2265 = vmatprep.subr.bf16.mxu0 0
        %2266 = vmatpush1.bf16.msra.mxu0 %v1108
        %2267 = vmatprep.subr.bf16.mxu0 0
        %2268 = vmatpush1.bf16.msra.mxu0 %v1107
        %2269 = vmatprep.subr.bf16.mxu0 0
        %2270 = vmatpush1.bf16.msra.mxu0 %v1106
        %2271 = vmatprep.subr.bf16.mxu0 0
        %2272 = vmatpush1.bf16.msra.mxu0 %v1105
        %2273 = vmatprep.subr.bf16.mxu0 0
        %2274 = vmatpush1.bf16.msra.mxu0 %v1104
        %2275 = vmatprep.subr.bf16.mxu0 0
        %2276 = vmatpush1.bf16.msra.mxu0 %v1103
        %2277 = vmatprep.subr.bf16.mxu0 0
        %2278 = vmatpush1.bf16.msra.mxu0 %v1102
        %2279 = vmatprep.subr.bf16.mxu0 0
        %2280 = vmatpush1.bf16.msra.mxu0 %v1101
        %2281 = vmatprep.subr.bf16.mxu0 0
        %2282 = vmatpush2.bf16.msra.mxu0 0
        %2283 = vmatprep.subr.bf16.mxu0 0
        %2284 = vmatpush2.bf16.msra.mxu0 0
        %2285 = vmatprep.subr.bf16.mxu0 0
        %2286 = vmatpush2.bf16.msra.mxu0 0
        %2287 = vmatprep.subr.bf16.mxu0 0
        %2288 = vmatpush2.bf16.msra.mxu0 0
        %2289 = vmatprep.subr.bf16.mxu0 0
        %2290 = vmatpush2.bf16.msra.mxu0 0
        %2291 = vmatprep.subr.bf16.mxu0 0
        %2292 = vmatpush2.bf16.msra.mxu0 0
        %2293 = vmatprep.subr.bf16.mxu0 0
        %2294 = vmatpush2.bf16.msra.mxu0 0
        %2295 = vmatprep.subr.bf16.mxu0 0
        %2296 = vmatpush2.bf16.msra.mxu0 0
        %2297 = vmatprep.mubr.bf16.mxu0 0
        %2298 = vmatmul.mubr.bf16.gmra.mxu0 %v2104
        %v2299 = vpop.f32.mrf.mxu0
        %v2300 = vadd.f32 %v2260, %v2299
        %v2301 = vpop.f32.mrf.mxu0
        %v2302 = vpop.f32.mrf.mxu0
        %v2303 = vpop.f32.mrf.mxu0
        %2304 = vdwg.mxu0
        %v2305 = vmul.f32 %v2300, 0.2
        %v2306 = vmax.f32 %v2300, %v2305
        %v2307 = vmul.f32 %v2306, %v1386
        %v2308 = vadd.f32 %v2307, %v1391
        %2309 = vst [vmem:[#allocation3 + $0x33] sm:$0xff] %v2308
        %v2310 = vld [vmem:[%s2090] ss:$2 sm:$0xff]
        %v2311 = vld [vmem:[%s2092] ss:$2 sm:$0xff]
        %v2312 = vld [vmem:[%s2094] ss:$2 sm:$0xff]
        %s2313 = scalar_lea.vmem [#allocation2], 198
        %v2314 = vld [vmem:[%s2313] ss:$2 sm:$0xff]
        %s2315 = scalar_lea.vmem [#allocation2], 199
        %v2316 = vld [vmem:[%s2315] ss:$2 sm:$0xff]
        %s2317 = scalar_lea.vmem [#allocation2], 200
        %v2318 = vld [vmem:[%s2317] ss:$2 sm:$0xff]
        %s2319 = scalar_lea.vmem [#allocation2], 216
        %v2320 = vld [vmem:[%s2319] ss:$2 sm:$0xff]
        %s2321 = scalar_lea.vmem [#allocation2], 217
        %v2322 = vld [vmem:[%s2321] ss:$2 sm:$0xff]
        %s2323 = scalar_lea.vmem [#allocation2], 218
        %v2324 = vld [vmem:[%s2323] ss:$2 sm:$0xff]
        %v2325 = vpack.c.bf16 %v2310, %v2310
        %v2326 = vpack.c.bf16 %v2311, %v2311
        %v2327 = vpack.c.bf16 %v2312, %v2312
        %v2328 = vpack.c.bf16 %v2314, %v2314
        %v2329 = vpack.c.bf16 %v2316, %v2316
        %v2330 = vpack.c.bf16 %v2318, %v2318
        %v2331 = vpack.c.bf16 %v2320, %v2320
        %v2332 = vpack.c.bf16 %v2322, %v2322
        %v2333 = vpack.c.bf16 %v2324, %v2324
        %2334 = vmatprep.subr.bf16.mxu0 0
        %2335 = vmatpush1.bf16.msra.mxu0 %v1044
        %2336 = vmatprep.subr.bf16.mxu0 0
        %2337 = vmatpush1.bf16.msra.mxu0 %v1043
        %2338 = vmatprep.subr.bf16.mxu0 0
        %2339 = vmatpush1.bf16.msra.mxu0 %v1042
        %2340 = vmatprep.subr.bf16.mxu0 0
        %2341 = vmatpush1.bf16.msra.mxu0 %v1041
        %2342 = vmatprep.subr.bf16.mxu0 0
        %2343 = vmatpush1.bf16.msra.mxu0 %v1040
        %2344 = vmatprep.subr.bf16.mxu0 0
        %2345 = vmatpush1.bf16.msra.mxu0 %v1039
        %2346 = vmatprep.subr.bf16.mxu0 0
        %2347 = vmatpush1.bf16.msra.mxu0 %v1038
        %2348 = vmatprep.subr.bf16.mxu0 0
        %2349 = vmatpush1.bf16.msra.mxu0 %v1037
        %2350 = vmatprep.subr.bf16.mxu0 0
        %2351 = vmatpush2.bf16.msra.mxu0 %v1052
        %2352 = vmatprep.subr.bf16.mxu0 0
        %2353 = vmatpush2.bf16.msra.mxu0 %v1051
        %2354 = vmatprep.subr.bf16.mxu0 0
        %2355 = vmatpush2.bf16.msra.mxu0 %v1050
        %2356 = vmatprep.subr.bf16.mxu0 0
        %2357 = vmatpush2.bf16.msra.mxu0 %v1049
        %2358 = vmatprep.subr.bf16.mxu0 0
        %2359 = vmatpush2.bf16.msra.mxu0 %v1048
        %2360 = vmatprep.subr.bf16.mxu0 0
        %2361 = vmatpush2.bf16.msra.mxu0 %v1047
        %2362 = vmatprep.subr.bf16.mxu0 0
        %2363 = vmatpush2.bf16.msra.mxu0 %v1046
        %2364 = vmatprep.subr.bf16.mxu0 0
        %2365 = vmatpush2.bf16.msra.mxu0 %v1045
        %2366 = vmatprep.mubr.bf16.mxu0 %v2326
        %2367 = vmatmul.mubr.bf16.gmra.mxu0 %v2325
        %v2368 = vpop.f32.mrf.mxu0
        %v2369 = vadd.f32 %v748, %v2368
        %v2370 = vpop.f32.mrf.mxu0
        %v2371 = vpop.f32.mrf.mxu0
        %v2372 = vpop.f32.mrf.mxu0
        %2373 = vdwg.mxu0
        %2374 = vmatprep.subr.bf16.mxu0 0
        %2375 = vmatpush1.bf16.msra.mxu0 %v1060
        %2376 = vmatprep.subr.bf16.mxu0 0
        %2377 = vmatpush1.bf16.msra.mxu0 %v1059
        %2378 = vmatprep.subr.bf16.mxu0 0
        %2379 = vmatpush1.bf16.msra.mxu0 %v1058
        %2380 = vmatprep.subr.bf16.mxu0 0
        %2381 = vmatpush1.bf16.msra.mxu0 %v1057
        %2382 = vmatprep.subr.bf16.mxu0 0
        %2383 = vmatpush1.bf16.msra.mxu0 %v1056
        %2384 = vmatprep.subr.bf16.mxu0 0
        %2385 = vmatpush1.bf16.msra.mxu0 %v1055
        %2386 = vmatprep.subr.bf16.mxu0 0
        %2387 = vmatpush1.bf16.msra.mxu0 %v1054
        %2388 = vmatprep.subr.bf16.mxu0 0
        %2389 = vmatpush1.bf16.msra.mxu0 %v1053
        %2390 = vmatprep.subr.bf16.mxu0 0
        %2391 = vmatpush2.bf16.msra.mxu0 %v1068
        %2392 = vmatprep.subr.bf16.mxu0 0
        %2393 = vmatpush2.bf16.msra.mxu0 %v1067
        %2394 = vmatprep.subr.bf16.mxu0 0
        %2395 = vmatpush2.bf16.msra.mxu0 %v1066
        %2396 = vmatprep.subr.bf16.mxu0 0
        %2397 = vmatpush2.bf16.msra.mxu0 %v1065
        %2398 = vmatprep.subr.bf16.mxu0 0
        %2399 = vmatpush2.bf16.msra.mxu0 %v1064
        %2400 = vmatprep.subr.bf16.mxu0 0
        %2401 = vmatpush2.bf16.msra.mxu0 %v1063
        %2402 = vmatprep.subr.bf16.mxu0 0
        %2403 = vmatpush2.bf16.msra.mxu0 %v1062
        %2404 = vmatprep.subr.bf16.mxu0 0
        %2405 = vmatpush2.bf16.msra.mxu0 %v1061
        %2406 = vmatprep.mubr.bf16.mxu0 %v2328
        %2407 = vmatmul.mubr.bf16.gmra.mxu0 %v2327
        %v2408 = vpop.f32.mrf.mxu0
        %v2409 = vadd.f32 %v2369, %v2408
        %v2410 = vpop.f32.mrf.mxu0
        %v2411 = vpop.f32.mrf.mxu0
        %v2412 = vpop.f32.mrf.mxu0
        %2413 = vdwg.mxu0
        %2414 = vmatprep.subr.bf16.mxu0 0
        %2415 = vmatpush1.bf16.msra.mxu0 %v1076
        %2416 = vmatprep.subr.bf16.mxu0 0
        %2417 = vmatpush1.bf16.msra.mxu0 %v1075
        %2418 = vmatprep.subr.bf16.mxu0 0
        %2419 = vmatpush1.bf16.msra.mxu0 %v1074
        %2420 = vmatprep.subr.bf16.mxu0 0
        %2421 = vmatpush1.bf16.msra.mxu0 %v1073
        %2422 = vmatprep.subr.bf16.mxu0 0
        %2423 = vmatpush1.bf16.msra.mxu0 %v1072
        %2424 = vmatprep.subr.bf16.mxu0 0
        %2425 = vmatpush1.bf16.msra.mxu0 %v1071
        %2426 = vmatprep.subr.bf16.mxu0 0
        %2427 = vmatpush1.bf16.msra.mxu0 %v1070
        %2428 = vmatprep.subr.bf16.mxu0 0
        %2429 = vmatpush1.bf16.msra.mxu0 %v1069
        %2430 = vmatprep.subr.bf16.mxu0 0
        %2431 = vmatpush2.bf16.msra.mxu0 %v1084
        %2432 = vmatprep.subr.bf16.mxu0 0
        %2433 = vmatpush2.bf16.msra.mxu0 %v1083
        %2434 = vmatprep.subr.bf16.mxu0 0
        %2435 = vmatpush2.bf16.msra.mxu0 %v1082
        %2436 = vmatprep.subr.bf16.mxu0 0
        %2437 = vmatpush2.bf16.msra.mxu0 %v1081
        %2438 = vmatprep.subr.bf16.mxu0 0
        %2439 = vmatpush2.bf16.msra.mxu0 %v1080
        %2440 = vmatprep.subr.bf16.mxu0 0
        %2441 = vmatpush2.bf16.msra.mxu0 %v1079
        %2442 = vmatprep.subr.bf16.mxu0 0
        %2443 = vmatpush2.bf16.msra.mxu0 %v1078
        %2444 = vmatprep.subr.bf16.mxu0 0
        %2445 = vmatpush2.bf16.msra.mxu0 %v1077
        %2446 = vmatprep.mubr.bf16.mxu0 %v2330
        %2447 = vmatmul.mubr.bf16.gmra.mxu0 %v2329
        %v2448 = vpop.f32.mrf.mxu0
        %v2449 = vadd.f32 %v2409, %v2448
        %v2450 = vpop.f32.mrf.mxu0
        %v2451 = vpop.f32.mrf.mxu0
        %v2452 = vpop.f32.mrf.mxu0
        %2453 = vdwg.mxu0
        %2454 = vmatprep.subr.bf16.mxu0 0
        %2455 = vmatpush1.bf16.msra.mxu0 %v1092
        %2456 = vmatprep.subr.bf16.mxu0 0
        %2457 = vmatpush1.bf16.msra.mxu0 %v1091
        %2458 = vmatprep.subr.bf16.mxu0 0
        %2459 = vmatpush1.bf16.msra.mxu0 %v1090
        %2460 = vmatprep.subr.bf16.mxu0 0
        %2461 = vmatpush1.bf16.msra.mxu0 %v1089
        %2462 = vmatprep.subr.bf16.mxu0 0
        %2463 = vmatpush1.bf16.msra.mxu0 %v1088
        %2464 = vmatprep.subr.bf16.mxu0 0
        %2465 = vmatpush1.bf16.msra.mxu0 %v1087
        %2466 = vmatprep.subr.bf16.mxu0 0
        %2467 = vmatpush1.bf16.msra.mxu0 %v1086
        %2468 = vmatprep.subr.bf16.mxu0 0
        %2469 = vmatpush1.bf16.msra.mxu0 %v1085
        %2470 = vmatprep.subr.bf16.mxu0 0
        %2471 = vmatpush2.bf16.msra.mxu0 %v1100
        %2472 = vmatprep.subr.bf16.mxu0 0
        %2473 = vmatpush2.bf16.msra.mxu0 %v1099
        %2474 = vmatprep.subr.bf16.mxu0 0
        %2475 = vmatpush2.bf16.msra.mxu0 %v1098
        %2476 = vmatprep.subr.bf16.mxu0 0
        %2477 = vmatpush2.bf16.msra.mxu0 %v1097
        %2478 = vmatprep.subr.bf16.mxu0 0
        %2479 = vmatpush2.bf16.msra.mxu0 %v1096
        %2480 = vmatprep.subr.bf16.mxu0 0
        %2481 = vmatpush2.bf16.msra.mxu0 %v1095
        %2482 = vmatprep.subr.bf16.mxu0 0
        %2483 = vmatpush2.bf16.msra.mxu0 %v1094
        %2484 = vmatprep.subr.bf16.mxu0 0
        %2485 = vmatpush2.bf16.msra.mxu0 %v1093
        %2486 = vmatprep.mubr.bf16.mxu0 %v2332
        %2487 = vmatmul.mubr.bf16.gmra.mxu0 %v2331
        %v2488 = vpop.f32.mrf.mxu0
        %v2489 = vadd.f32 %v2449, %v2488
        %v2490 = vpop.f32.mrf.mxu0
        %v2491 = vpop.f32.mrf.mxu0
        %v2492 = vpop.f32.mrf.mxu0
        %2493 = vdwg.mxu0
        %2494 = vmatprep.subr.bf16.mxu0 0
        %2495 = vmatpush1.bf16.msra.mxu0 %v1108
        %2496 = vmatprep.subr.bf16.mxu0 0
        %2497 = vmatpush1.bf16.msra.mxu0 %v1107
        %2498 = vmatprep.subr.bf16.mxu0 0
        %2499 = vmatpush1.bf16.msra.mxu0 %v1106
        %2500 = vmatprep.subr.bf16.mxu0 0
        %2501 = vmatpush1.bf16.msra.mxu0 %v1105
        %2502 = vmatprep.subr.bf16.mxu0 0
        %2503 = vmatpush1.bf16.msra.mxu0 %v1104
        %2504 = vmatprep.subr.bf16.mxu0 0
        %2505 = vmatpush1.bf16.msra.mxu0 %v1103
        %2506 = vmatprep.subr.bf16.mxu0 0
        %2507 = vmatpush1.bf16.msra.mxu0 %v1102
        %2508 = vmatprep.subr.bf16.mxu0 0
        %2509 = vmatpush1.bf16.msra.mxu0 %v1101
        %2510 = vmatprep.subr.bf16.mxu0 0
        %2511 = vmatpush2.bf16.msra.mxu0 0
        %2512 = vmatprep.subr.bf16.mxu0 0
        %2513 = vmatpush2.bf16.msra.mxu0 0
        %2514 = vmatprep.subr.bf16.mxu0 0
        %2515 = vmatpush2.bf16.msra.mxu0 0
        %2516 = vmatprep.subr.bf16.mxu0 0
        %2517 = vmatpush2.bf16.msra.mxu0 0
        %2518 = vmatprep.subr.bf16.mxu0 0
        %2519 = vmatpush2.bf16.msra.mxu0 0
        %2520 = vmatprep.subr.bf16.mxu0 0
        %2521 = vmatpush2.bf16.msra.mxu0 0
        %2522 = vmatprep.subr.bf16.mxu0 0
        %2523 = vmatpush2.bf16.msra.mxu0 0
        %2524 = vmatprep.subr.bf16.mxu0 0
        %2525 = vmatpush2.bf16.msra.mxu0 0
        %2526 = vmatprep.mubr.bf16.mxu0 0
        %2527 = vmatmul.mubr.bf16.gmra.mxu0 %v2333
        %v2528 = vpop.f32.mrf.mxu0
        %v2529 = vadd.f32 %v2489, %v2528
        %v2530 = vpop.f32.mrf.mxu0
        %v2531 = vpop.f32.mrf.mxu0
        %v2532 = vpop.f32.mrf.mxu0
        %2533 = vdwg.mxu0
        %v2534 = vmul.f32 %v2529, 0.2
        %v2535 = vmax.f32 %v2529, %v2534
        %v2536 = vmul.f32 %v2535, %v1386
        %v2537 = vadd.f32 %v2536, %v1391
        %2538 = vst [vmem:[#allocation3 + $0x3d] sm:$0xff] %v2537
        %v2539 = vld [vmem:[%s2319] ss:$2 sm:$0xff]
        %v2540 = vld [vmem:[%s2321] ss:$2 sm:$0xff]
        %v2541 = vld [vmem:[%s2323] ss:$2 sm:$0xff]
        %s2542 = scalar_lea.vmem [#allocation2], 234
        %v2543 = vld [vmem:[%s2542] ss:$2 sm:$0xff]
        %s2544 = scalar_lea.vmem [#allocation2], 235
        %v2545 = vld [vmem:[%s2544] ss:$2 sm:$0xff]
        %s2546 = scalar_lea.vmem [#allocation2], 236
        %v2547 = vld [vmem:[%s2546] ss:$2 sm:$0xff]
        %s2548 = scalar_lea.vmem [#allocation2], 252
        %v2549 = vld [vmem:[%s2548] ss:$2 sm:$0xff]
        %s2550 = scalar_lea.vmem [#allocation2], 253
        %v2551 = vld [vmem:[%s2550] ss:$2 sm:$0xff]
        %s2552 = scalar_lea.vmem [#allocation2], 254
        %v2553 = vld [vmem:[%s2552] ss:$2 sm:$0xff]
        %v2554 = vpack.c.bf16 %v2539, %v2539
        %v2555 = vpack.c.bf16 %v2540, %v2540
        %v2556 = vpack.c.bf16 %v2541, %v2541
        %v2557 = vpack.c.bf16 %v2543, %v2543
        %v2558 = vpack.c.bf16 %v2545, %v2545
        %v2559 = vpack.c.bf16 %v2547, %v2547
        %v2560 = vpack.c.bf16 %v2549, %v2549
        %v2561 = vpack.c.bf16 %v2551, %v2551
        %v2562 = vpack.c.bf16 %v2553, %v2553
        %2563 = vmatprep.subr.bf16.mxu0 0
        %2564 = vmatpush1.bf16.msra.mxu0 %v1044
        %2565 = vmatprep.subr.bf16.mxu0 0
        %2566 = vmatpush1.bf16.msra.mxu0 %v1043
        %2567 = vmatprep.subr.bf16.mxu0 0
        %2568 = vmatpush1.bf16.msra.mxu0 %v1042
        %2569 = vmatprep.subr.bf16.mxu0 0
        %2570 = vmatpush1.bf16.msra.mxu0 %v1041
        %2571 = vmatprep.subr.bf16.mxu0 0
        %2572 = vmatpush1.bf16.msra.mxu0 %v1040
        %2573 = vmatprep.subr.bf16.mxu0 0
        %2574 = vmatpush1.bf16.msra.mxu0 %v1039
        %2575 = vmatprep.subr.bf16.mxu0 0
        %2576 = vmatpush1.bf16.msra.mxu0 %v1038
        %2577 = vmatprep.subr.bf16.mxu0 0
        %2578 = vmatpush1.bf16.msra.mxu0 %v1037
        %2579 = vmatprep.subr.bf16.mxu0 0
        %2580 = vmatpush2.bf16.msra.mxu0 %v1052
        %2581 = vmatprep.subr.bf16.mxu0 0
        %2582 = vmatpush2.bf16.msra.mxu0 %v1051
        %2583 = vmatprep.subr.bf16.mxu0 0
        %2584 = vmatpush2.bf16.msra.mxu0 %v1050
        %2585 = vmatprep.subr.bf16.mxu0 0
        %2586 = vmatpush2.bf16.msra.mxu0 %v1049
        %2587 = vmatprep.subr.bf16.mxu0 0
        %2588 = vmatpush2.bf16.msra.mxu0 %v1048
        %2589 = vmatprep.subr.bf16.mxu0 0
        %2590 = vmatpush2.bf16.msra.mxu0 %v1047
        %2591 = vmatprep.subr.bf16.mxu0 0
        %2592 = vmatpush2.bf16.msra.mxu0 %v1046
        %2593 = vmatprep.subr.bf16.mxu0 0
        %2594 = vmatpush2.bf16.msra.mxu0 %v1045
        %2595 = vmatprep.mubr.bf16.mxu0 %v2555
        %2596 = vmatmul.mubr.bf16.gmra.mxu0 %v2554
        %v2597 = vpop.f32.mrf.mxu0
        %v2598 = vadd.f32 %v748, %v2597
        %v2599 = vpop.f32.mrf.mxu0
        %v2600 = vpop.f32.mrf.mxu0
        %v2601 = vpop.f32.mrf.mxu0
        %2602 = vdwg.mxu0
        %2603 = vmatprep.subr.bf16.mxu0 0
        %2604 = vmatpush1.bf16.msra.mxu0 %v1060
        %2605 = vmatprep.subr.bf16.mxu0 0
        %2606 = vmatpush1.bf16.msra.mxu0 %v1059
        %2607 = vmatprep.subr.bf16.mxu0 0
        %2608 = vmatpush1.bf16.msra.mxu0 %v1058
        %2609 = vmatprep.subr.bf16.mxu0 0
        %2610 = vmatpush1.bf16.msra.mxu0 %v1057
        %2611 = vmatprep.subr.bf16.mxu0 0
        %2612 = vmatpush1.bf16.msra.mxu0 %v1056
        %2613 = vmatprep.subr.bf16.mxu0 0
        %2614 = vmatpush1.bf16.msra.mxu0 %v1055
        %2615 = vmatprep.subr.bf16.mxu0 0
        %2616 = vmatpush1.bf16.msra.mxu0 %v1054
        %2617 = vmatprep.subr.bf16.mxu0 0
        %2618 = vmatpush1.bf16.msra.mxu0 %v1053
        %2619 = vmatprep.subr.bf16.mxu0 0
        %2620 = vmatpush2.bf16.msra.mxu0 %v1068
        %2621 = vmatprep.subr.bf16.mxu0 0
        %2622 = vmatpush2.bf16.msra.mxu0 %v1067
        %2623 = vmatprep.subr.bf16.mxu0 0
        %2624 = vmatpush2.bf16.msra.mxu0 %v1066
        %2625 = vmatprep.subr.bf16.mxu0 0
        %2626 = vmatpush2.bf16.msra.mxu0 %v1065
        %2627 = vmatprep.subr.bf16.mxu0 0
        %2628 = vmatpush2.bf16.msra.mxu0 %v1064
        %2629 = vmatprep.subr.bf16.mxu0 0
        %2630 = vmatpush2.bf16.msra.mxu0 %v1063
        %2631 = vmatprep.subr.bf16.mxu0 0
        %2632 = vmatpush2.bf16.msra.mxu0 %v1062
        %2633 = vmatprep.subr.bf16.mxu0 0
        %2634 = vmatpush2.bf16.msra.mxu0 %v1061
        %2635 = vmatprep.mubr.bf16.mxu0 %v2557
        %2636 = vmatmul.mubr.bf16.gmra.mxu0 %v2556
        %v2637 = vpop.f32.mrf.mxu0
        %v2638 = vadd.f32 %v2598, %v2637
        %v2639 = vpop.f32.mrf.mxu0
        %v2640 = vpop.f32.mrf.mxu0
        %v2641 = vpop.f32.mrf.mxu0
        %2642 = vdwg.mxu0
        %2643 = vmatprep.subr.bf16.mxu0 0
        %2644 = vmatpush1.bf16.msra.mxu0 %v1076
        %2645 = vmatprep.subr.bf16.mxu0 0
        %2646 = vmatpush1.bf16.msra.mxu0 %v1075
        %2647 = vmatprep.subr.bf16.mxu0 0
        %2648 = vmatpush1.bf16.msra.mxu0 %v1074
        %2649 = vmatprep.subr.bf16.mxu0 0
        %2650 = vmatpush1.bf16.msra.mxu0 %v1073
        %2651 = vmatprep.subr.bf16.mxu0 0
        %2652 = vmatpush1.bf16.msra.mxu0 %v1072
        %2653 = vmatprep.subr.bf16.mxu0 0
        %2654 = vmatpush1.bf16.msra.mxu0 %v1071
        %2655 = vmatprep.subr.bf16.mxu0 0
        %2656 = vmatpush1.bf16.msra.mxu0 %v1070
        %2657 = vmatprep.subr.bf16.mxu0 0
        %2658 = vmatpush1.bf16.msra.mxu0 %v1069
        %2659 = vmatprep.subr.bf16.mxu0 0
        %2660 = vmatpush2.bf16.msra.mxu0 %v1084
        %2661 = vmatprep.subr.bf16.mxu0 0
        %2662 = vmatpush2.bf16.msra.mxu0 %v1083
        %2663 = vmatprep.subr.bf16.mxu0 0
        %2664 = vmatpush2.bf16.msra.mxu0 %v1082
        %2665 = vmatprep.subr.bf16.mxu0 0
        %2666 = vmatpush2.bf16.msra.mxu0 %v1081
        %2667 = vmatprep.subr.bf16.mxu0 0
        %2668 = vmatpush2.bf16.msra.mxu0 %v1080
        %2669 = vmatprep.subr.bf16.mxu0 0
        %2670 = vmatpush2.bf16.msra.mxu0 %v1079
        %2671 = vmatprep.subr.bf16.mxu0 0
        %2672 = vmatpush2.bf16.msra.mxu0 %v1078
        %2673 = vmatprep.subr.bf16.mxu0 0
        %2674 = vmatpush2.bf16.msra.mxu0 %v1077
        %2675 = vmatprep.mubr.bf16.mxu0 %v2559
        %2676 = vmatmul.mubr.bf16.gmra.mxu0 %v2558
        %v2677 = vpop.f32.mrf.mxu0
        %v2678 = vadd.f32 %v2638, %v2677
        %v2679 = vpop.f32.mrf.mxu0
        %v2680 = vpop.f32.mrf.mxu0
        %v2681 = vpop.f32.mrf.mxu0
        %2682 = vdwg.mxu0
        %2683 = vmatprep.subr.bf16.mxu0 0
        %2684 = vmatpush1.bf16.msra.mxu0 %v1092
        %2685 = vmatprep.subr.bf16.mxu0 0
        %2686 = vmatpush1.bf16.msra.mxu0 %v1091
        %2687 = vmatprep.subr.bf16.mxu0 0
        %2688 = vmatpush1.bf16.msra.mxu0 %v1090
        %2689 = vmatprep.subr.bf16.mxu0 0
        %2690 = vmatpush1.bf16.msra.mxu0 %v1089
        %2691 = vmatprep.subr.bf16.mxu0 0
        %2692 = vmatpush1.bf16.msra.mxu0 %v1088
        %2693 = vmatprep.subr.bf16.mxu0 0
        %2694 = vmatpush1.bf16.msra.mxu0 %v1087
        %2695 = vmatprep.subr.bf16.mxu0 0
        %2696 = vmatpush1.bf16.msra.mxu0 %v1086
        %2697 = vmatprep.subr.bf16.mxu0 0
        %2698 = vmatpush1.bf16.msra.mxu0 %v1085
        %2699 = vmatprep.subr.bf16.mxu0 0
        %2700 = vmatpush2.bf16.msra.mxu0 %v1100
        %2701 = vmatprep.subr.bf16.mxu0 0
        %2702 = vmatpush2.bf16.msra.mxu0 %v1099
        %2703 = vmatprep.subr.bf16.mxu0 0
        %2704 = vmatpush2.bf16.msra.mxu0 %v1098
        %2705 = vmatprep.subr.bf16.mxu0 0
        %2706 = vmatpush2.bf16.msra.mxu0 %v1097
        %2707 = vmatprep.subr.bf16.mxu0 0
        %2708 = vmatpush2.bf16.msra.mxu0 %v1096
        %2709 = vmatprep.subr.bf16.mxu0 0
        %2710 = vmatpush2.bf16.msra.mxu0 %v1095
        %2711 = vmatprep.subr.bf16.mxu0 0
        %2712 = vmatpush2.bf16.msra.mxu0 %v1094
        %2713 = vmatprep.subr.bf16.mxu0 0
        %2714 = vmatpush2.bf16.msra.mxu0 %v1093
        %2715 = vmatprep.mubr.bf16.mxu0 %v2561
        %2716 = vmatmul.mubr.bf16.gmra.mxu0 %v2560
        %v2717 = vpop.f32.mrf.mxu0
        %v2718 = vadd.f32 %v2678, %v2717
        %v2719 = vpop.f32.mrf.mxu0
        %v2720 = vpop.f32.mrf.mxu0
        %v2721 = vpop.f32.mrf.mxu0
        %2722 = vdwg.mxu0
        %2723 = vmatprep.subr.bf16.mxu0 0
        %2724 = vmatpush1.bf16.msra.mxu0 %v1108
        %2725 = vmatprep.subr.bf16.mxu0 0
        %2726 = vmatpush1.bf16.msra.mxu0 %v1107
        %2727 = vmatprep.subr.bf16.mxu0 0
        %2728 = vmatpush1.bf16.msra.mxu0 %v1106
        %2729 = vmatprep.subr.bf16.mxu0 0
        %2730 = vmatpush1.bf16.msra.mxu0 %v1105
        %2731 = vmatprep.subr.bf16.mxu0 0
        %2732 = vmatpush1.bf16.msra.mxu0 %v1104
        %2733 = vmatprep.subr.bf16.mxu0 0
        %2734 = vmatpush1.bf16.msra.mxu0 %v1103
        %2735 = vmatprep.subr.bf16.mxu0 0
        %2736 = vmatpush1.bf16.msra.mxu0 %v1102
        %2737 = vmatprep.subr.bf16.mxu0 0
        %2738 = vmatpush1.bf16.msra.mxu0 %v1101
        %2739 = vmatprep.subr.bf16.mxu0 0
        %2740 = vmatpush2.bf16.msra.mxu0 0
        %2741 = vmatprep.subr.bf16.mxu0 0
        %2742 = vmatpush2.bf16.msra.mxu0 0
        %2743 = vmatprep.subr.bf16.mxu0 0
        %2744 = vmatpush2.bf16.msra.mxu0 0
        %2745 = vmatprep.subr.bf16.mxu0 0
        %2746 = vmatpush2.bf16.msra.mxu0 0
        %2747 = vmatprep.subr.bf16.mxu0 0
        %2748 = vmatpush2.bf16.msra.mxu0 0
        %2749 = vmatprep.subr.bf16.mxu0 0
        %2750 = vmatpush2.bf16.msra.mxu0 0
        %2751 = vmatprep.subr.bf16.mxu0 0
        %2752 = vmatpush2.bf16.msra.mxu0 0
        %2753 = vmatprep.subr.bf16.mxu0 0
        %2754 = vmatpush2.bf16.msra.mxu0 0
        %2755 = vmatprep.mubr.bf16.mxu0 0
        %2756 = vmatmul.mubr.bf16.gmra.mxu0 %v2562
        %v2757 = vpop.f32.mrf.mxu0
        %v2758 = vadd.f32 %v2718, %v2757
        %v2759 = vpop.f32.mrf.mxu0
        %v2760 = vpop.f32.mrf.mxu0
        %v2761 = vpop.f32.mrf.mxu0
        %2762 = vdwg.mxu0
        %v2763 = vmul.f32 %v2758, 0.2
        %v2764 = vmax.f32 %v2758, %v2763
        %v2765 = vmul.f32 %v2764, %v1386
        %v2766 = vadd.f32 %v2765, %v1391
        %2767 = vst [vmem:[#allocation3 + $0x47] sm:$0xff] %v2766
        %v2768 = vld [vmem:[%s2548] ss:$2 sm:$0xff]
        %v2769 = vld [vmem:[%s2550] ss:$2 sm:$0xff]
        %v2770 = vld [vmem:[%s2552] ss:$2 sm:$0xff]
        %s2771 = scalar_lea.vmem [#allocation2], 270
        %v2772 = vld [vmem:[%s2771] ss:$2 sm:$0xff]
        %s2773 = scalar_lea.vmem [#allocation2], 271
        %v2774 = vld [vmem:[%s2773] ss:$2 sm:$0xff]
        %s2775 = scalar_lea.vmem [#allocation2], 272
        %v2776 = vld [vmem:[%s2775] ss:$2 sm:$0xff]
        %s2777 = scalar_lea.vmem [#allocation2], 288
        %v2778 = vld [vmem:[%s2777] ss:$2 sm:$0xff]
        %s2779 = scalar_lea.vmem [#allocation2], 289
        %v2780 = vld [vmem:[%s2779] ss:$2 sm:$0xff]
        %s2781 = scalar_lea.vmem [#allocation2], 290
        %v2782 = vld [vmem:[%s2781] ss:$2 sm:$0xff]
        %v2783 = vpack.c.bf16 %v2768, %v2768
        %v2784 = vpack.c.bf16 %v2769, %v2769
        %v2785 = vpack.c.bf16 %v2770, %v2770
        %v2786 = vpack.c.bf16 %v2772, %v2772
        %v2787 = vpack.c.bf16 %v2774, %v2774
        %v2788 = vpack.c.bf16 %v2776, %v2776
        %v2789 = vpack.c.bf16 %v2778, %v2778
        %v2790 = vpack.c.bf16 %v2780, %v2780
        %v2791 = vpack.c.bf16 %v2782, %v2782
        %2792 = vmatprep.subr.bf16.mxu0 0
        %2793 = vmatpush1.bf16.msra.mxu0 %v1044
        %2794 = vmatprep.subr.bf16.mxu0 0
        %2795 = vmatpush1.bf16.msra.mxu0 %v1043
        %2796 = vmatprep.subr.bf16.mxu0 0
        %2797 = vmatpush1.bf16.msra.mxu0 %v1042
        %2798 = vmatprep.subr.bf16.mxu0 0
        %2799 = vmatpush1.bf16.msra.mxu0 %v1041
        %2800 = vmatprep.subr.bf16.mxu0 0
        %2801 = vmatpush1.bf16.msra.mxu0 %v1040
        %2802 = vmatprep.subr.bf16.mxu0 0
        %2803 = vmatpush1.bf16.msra.mxu0 %v1039
        %2804 = vmatprep.subr.bf16.mxu0 0
        %2805 = vmatpush1.bf16.msra.mxu0 %v1038
        %2806 = vmatprep.subr.bf16.mxu0 0
        %2807 = vmatpush1.bf16.msra.mxu0 %v1037
        %2808 = vmatprep.subr.bf16.mxu0 0
        %2809 = vmatpush2.bf16.msra.mxu0 %v1052
        %2810 = vmatprep.subr.bf16.mxu0 0
        %2811 = vmatpush2.bf16.msra.mxu0 %v1051
        %2812 = vmatprep.subr.bf16.mxu0 0
        %2813 = vmatpush2.bf16.msra.mxu0 %v1050
        %2814 = vmatprep.subr.bf16.mxu0 0
        %2815 = vmatpush2.bf16.msra.mxu0 %v1049
        %2816 = vmatprep.subr.bf16.mxu0 0
        %2817 = vmatpush2.bf16.msra.mxu0 %v1048
        %2818 = vmatprep.subr.bf16.mxu0 0
        %2819 = vmatpush2.bf16.msra.mxu0 %v1047
        %2820 = vmatprep.subr.bf16.mxu0 0
        %2821 = vmatpush2.bf16.msra.mxu0 %v1046
        %2822 = vmatprep.subr.bf16.mxu0 0
        %2823 = vmatpush2.bf16.msra.mxu0 %v1045
        %2824 = vmatprep.mubr.bf16.mxu0 %v2784
        %2825 = vmatmul.mubr.bf16.gmra.mxu0 %v2783
        %v2826 = vpop.f32.mrf.mxu0
        %v2827 = vadd.f32 %v748, %v2826
        %v2828 = vpop.f32.mrf.mxu0
        %v2829 = vpop.f32.mrf.mxu0
        %v2830 = vpop.f32.mrf.mxu0
        %2831 = vdwg.mxu0
        %2832 = vmatprep.subr.bf16.mxu0 0
        %2833 = vmatpush1.bf16.msra.mxu0 %v1060
        %2834 = vmatprep.subr.bf16.mxu0 0
        %2835 = vmatpush1.bf16.msra.mxu0 %v1059
        %2836 = vmatprep.subr.bf16.mxu0 0
        %2837 = vmatpush1.bf16.msra.mxu0 %v1058
        %2838 = vmatprep.subr.bf16.mxu0 0
        %2839 = vmatpush1.bf16.msra.mxu0 %v1057
        %2840 = vmatprep.subr.bf16.mxu0 0
        %2841 = vmatpush1.bf16.msra.mxu0 %v1056
        %2842 = vmatprep.subr.bf16.mxu0 0
        %2843 = vmatpush1.bf16.msra.mxu0 %v1055
        %2844 = vmatprep.subr.bf16.mxu0 0
        %2845 = vmatpush1.bf16.msra.mxu0 %v1054
        %2846 = vmatprep.subr.bf16.mxu0 0
        %2847 = vmatpush1.bf16.msra.mxu0 %v1053
        %2848 = vmatprep.subr.bf16.mxu0 0
        %2849 = vmatpush2.bf16.msra.mxu0 %v1068
        %2850 = vmatprep.subr.bf16.mxu0 0
        %2851 = vmatpush2.bf16.msra.mxu0 %v1067
        %2852 = vmatprep.subr.bf16.mxu0 0
        %2853 = vmatpush2.bf16.msra.mxu0 %v1066
        %2854 = vmatprep.subr.bf16.mxu0 0
        %2855 = vmatpush2.bf16.msra.mxu0 %v1065
        %2856 = vmatprep.subr.bf16.mxu0 0
        %2857 = vmatpush2.bf16.msra.mxu0 %v1064
        %2858 = vmatprep.subr.bf16.mxu0 0
        %2859 = vmatpush2.bf16.msra.mxu0 %v1063
        %2860 = vmatprep.subr.bf16.mxu0 0
        %2861 = vmatpush2.bf16.msra.mxu0 %v1062
        %2862 = vmatprep.subr.bf16.mxu0 0
        %2863 = vmatpush2.bf16.msra.mxu0 %v1061
        %2864 = vmatprep.mubr.bf16.mxu0 %v2786
        %2865 = vmatmul.mubr.bf16.gmra.mxu0 %v2785
        %v2866 = vpop.f32.mrf.mxu0
        %v2867 = vadd.f32 %v2827, %v2866
        %v2868 = vpop.f32.mrf.mxu0
        %v2869 = vpop.f32.mrf.mxu0
        %v2870 = vpop.f32.mrf.mxu0
        %2871 = vdwg.mxu0
        %2872 = vmatprep.subr.bf16.mxu0 0
        %2873 = vmatpush1.bf16.msra.mxu0 %v1076
        %2874 = vmatprep.subr.bf16.mxu0 0
        %2875 = vmatpush1.bf16.msra.mxu0 %v1075
        %2876 = vmatprep.subr.bf16.mxu0 0
        %2877 = vmatpush1.bf16.msra.mxu0 %v1074
        %2878 = vmatprep.subr.bf16.mxu0 0
        %2879 = vmatpush1.bf16.msra.mxu0 %v1073
        %2880 = vmatprep.subr.bf16.mxu0 0
        %2881 = vmatpush1.bf16.msra.mxu0 %v1072
        %2882 = vmatprep.subr.bf16.mxu0 0
        %2883 = vmatpush1.bf16.msra.mxu0 %v1071
        %2884 = vmatprep.subr.bf16.mxu0 0
        %2885 = vmatpush1.bf16.msra.mxu0 %v1070
        %2886 = vmatprep.subr.bf16.mxu0 0
        %2887 = vmatpush1.bf16.msra.mxu0 %v1069
        %2888 = vmatprep.subr.bf16.mxu0 0
        %2889 = vmatpush2.bf16.msra.mxu0 %v1084
        %2890 = vmatprep.subr.bf16.mxu0 0
        %2891 = vmatpush2.bf16.msra.mxu0 %v1083
        %2892 = vmatprep.subr.bf16.mxu0 0
        %2893 = vmatpush2.bf16.msra.mxu0 %v1082
        %2894 = vmatprep.subr.bf16.mxu0 0
        %2895 = vmatpush2.bf16.msra.mxu0 %v1081
        %2896 = vmatprep.subr.bf16.mxu0 0
        %2897 = vmatpush2.bf16.msra.mxu0 %v1080
        %2898 = vmatprep.subr.bf16.mxu0 0
        %2899 = vmatpush2.bf16.msra.mxu0 %v1079
        %2900 = vmatprep.subr.bf16.mxu0 0
        %2901 = vmatpush2.bf16.msra.mxu0 %v1078
        %2902 = vmatprep.subr.bf16.mxu0 0
        %2903 = vmatpush2.bf16.msra.mxu0 %v1077
        %2904 = vmatprep.mubr.bf16.mxu0 %v2788
        %2905 = vmatmul.mubr.bf16.gmra.mxu0 %v2787
        %v2906 = vpop.f32.mrf.mxu0
        %v2907 = vadd.f32 %v2867, %v2906
        %v2908 = vpop.f32.mrf.mxu0
        %v2909 = vpop.f32.mrf.mxu0
        %v2910 = vpop.f32.mrf.mxu0
        %2911 = vdwg.mxu0
        %2912 = vmatprep.subr.bf16.mxu0 0
        %2913 = vmatpush1.bf16.msra.mxu0 %v1092
        %2914 = vmatprep.subr.bf16.mxu0 0
        %2915 = vmatpush1.bf16.msra.mxu0 %v1091
        %2916 = vmatprep.subr.bf16.mxu0 0
        %2917 = vmatpush1.bf16.msra.mxu0 %v1090
        %2918 = vmatprep.subr.bf16.mxu0 0
        %2919 = vmatpush1.bf16.msra.mxu0 %v1089
        %2920 = vmatprep.subr.bf16.mxu0 0
        %2921 = vmatpush1.bf16.msra.mxu0 %v1088
        %2922 = vmatprep.subr.bf16.mxu0 0
        %2923 = vmatpush1.bf16.msra.mxu0 %v1087
        %2924 = vmatprep.subr.bf16.mxu0 0
        %2925 = vmatpush1.bf16.msra.mxu0 %v1086
        %2926 = vmatprep.subr.bf16.mxu0 0
        %2927 = vmatpush1.bf16.msra.mxu0 %v1085
        %2928 = vmatprep.subr.bf16.mxu0 0
        %2929 = vmatpush2.bf16.msra.mxu0 %v1100
        %2930 = vmatprep.subr.bf16.mxu0 0
        %2931 = vmatpush2.bf16.msra.mxu0 %v1099
        %2932 = vmatprep.subr.bf16.mxu0 0
        %2933 = vmatpush2.bf16.msra.mxu0 %v1098
        %2934 = vmatprep.subr.bf16.mxu0 0
        %2935 = vmatpush2.bf16.msra.mxu0 %v1097
        %2936 = vmatprep.subr.bf16.mxu0 0
        %2937 = vmatpush2.bf16.msra.mxu0 %v1096
        %2938 = vmatprep.subr.bf16.mxu0 0
        %2939 = vmatpush2.bf16.msra.mxu0 %v1095
        %2940 = vmatprep.subr.bf16.mxu0 0
        %2941 = vmatpush2.bf16.msra.mxu0 %v1094
        %2942 = vmatprep.subr.bf16.mxu0 0
        %2943 = vmatpush2.bf16.msra.mxu0 %v1093
        %2944 = vmatprep.mubr.bf16.mxu0 %v2790
        %2945 = vmatmul.mubr.bf16.gmra.mxu0 %v2789
        %v2946 = vpop.f32.mrf.mxu0
        %v2947 = vadd.f32 %v2907, %v2946
        %v2948 = vpop.f32.mrf.mxu0
        %v2949 = vpop.f32.mrf.mxu0
        %v2950 = vpop.f32.mrf.mxu0
        %2951 = vdwg.mxu0
        %2952 = vmatprep.subr.bf16.mxu0 0
        %2953 = vmatpush1.bf16.msra.mxu0 %v1108
        %2954 = vmatprep.subr.bf16.mxu0 0
        %2955 = vmatpush1.bf16.msra.mxu0 %v1107
        %2956 = vmatprep.subr.bf16.mxu0 0
        %2957 = vmatpush1.bf16.msra.mxu0 %v1106
        %2958 = vmatprep.subr.bf16.mxu0 0
        %2959 = vmatpush1.bf16.msra.mxu0 %v1105
        %2960 = vmatprep.subr.bf16.mxu0 0
        %2961 = vmatpush1.bf16.msra.mxu0 %v1104
        %2962 = vmatprep.subr.bf16.mxu0 0
        %2963 = vmatpush1.bf16.msra.mxu0 %v1103
        %2964 = vmatprep.subr.bf16.mxu0 0
        %2965 = vmatpush1.bf16.msra.mxu0 %v1102
        %2966 = vmatprep.subr.bf16.mxu0 0
        %2967 = vmatpush1.bf16.msra.mxu0 %v1101
        %2968 = vmatprep.subr.bf16.mxu0 0
        %2969 = vmatpush2.bf16.msra.mxu0 0
        %2970 = vmatprep.subr.bf16.mxu0 0
        %2971 = vmatpush2.bf16.msra.mxu0 0
        %2972 = vmatprep.subr.bf16.mxu0 0
        %2973 = vmatpush2.bf16.msra.mxu0 0
        %2974 = vmatprep.subr.bf16.mxu0 0
        %2975 = vmatpush2.bf16.msra.mxu0 0
        %2976 = vmatprep.subr.bf16.mxu0 0
        %2977 = vmatpush2.bf16.msra.mxu0 0
        %2978 = vmatprep.subr.bf16.mxu0 0
        %2979 = vmatpush2.bf16.msra.mxu0 0
        %2980 = vmatprep.subr.bf16.mxu0 0
        %2981 = vmatpush2.bf16.msra.mxu0 0
        %2982 = vmatprep.subr.bf16.mxu0 0
        %2983 = vmatpush2.bf16.msra.mxu0 0
        %2984 = vmatprep.mubr.bf16.mxu0 0
        %2985 = vmatmul.mubr.bf16.gmra.mxu0 %v2791
        %v2986 = vpop.f32.mrf.mxu0
        %v2987 = vadd.f32 %v2947, %v2986
        %v2988 = vpop.f32.mrf.mxu0
        %v2989 = vpop.f32.mrf.mxu0
        %v2990 = vpop.f32.mrf.mxu0
        %2991 = vdwg.mxu0
        %v2992 = vmul.f32 %v2987, 0.2
        %v2993 = vmax.f32 %v2987, %v2992
        %v2994 = vmul.f32 %v2993, %v1386
        %v2995 = vadd.f32 %v2994, %v1391
        %2996 = vst [vmem:[#allocation3 + $0x51] sm:$0xff] %v2995
        %2997 = vst [vmem:[#allocation4] sm:$0xff] 0.0
        %2998 = vst [vmem:[#allocation4 + $0x8] sm:$0xff] 0.0
        %2999 = vst [vmem:[#allocation4 + $0x10] sm:$0xff] 0.0
        %3000 = vst [vmem:[#allocation4 + $0x18] sm:$0xff] 0.0
        %3001 = vst [vmem:[#allocation4 + $0x20] sm:$0xf] 0.0
        %v3002 = vld [vmem:[#allocation6] sm:$0xf]
        %v3003 = vld [vmem:[#allocation6 + $0x4] sm:$0xf]
        %v3004 = vld [vmem:[#allocation6 + $0x8] sm:$0xf]
        %v3005 = vld [vmem:[#allocation6 + $0xc] sm:$0xf]
        %v3006 = vld [vmem:[#allocation6 + $0x10] sm:$0xf]
        %v3007 = vld [vmem:[#allocation6 + $0x14] sm:$0xf]
        %v3008 = vld [vmem:[#allocation6 + $0x18] sm:$0xf]
        %v3009 = vld [vmem:[#allocation6 + $0x1c] sm:$0xf]
        %v3010 = vld [vmem:[#allocation6 + $0x20] sm:$0xf]
        %v3011 = vld [vmem:[#allocation6 + $0x24] sm:$0xf]
        %v3012 = vld [vmem:[#allocation6 + $0x28] sm:$0xf]
        %v3013 = vld [vmem:[#allocation6 + $0x2c] sm:$0xf]
        %v3014 = vld [vmem:[#allocation6 + $0x30] sm:$0xf]
        %v3015 = vld [vmem:[#allocation6 + $0x34] sm:$0xf]
        %v3016 = vld [vmem:[#allocation6 + $0x38] sm:$0xf]
        %v3017 = vld [vmem:[#allocation6 + $0x3c] sm:$0xf]
        %v3018 = vld [vmem:[#allocation6 + $0x40] sm:$0xf]
        %v3019 = vld [vmem:[#allocation6 + $0x44] sm:$0xf]
        %v3020 = vld [vmem:[#allocation6 + $0x48] sm:$0xf]
        %v3021 = vld [vmem:[#allocation6 + $0x4c] sm:$0xf]
        %v3022 = vld [vmem:[#allocation6 + $0x50] sm:$0xf]
        %v3023 = vld [vmem:[#allocation6 + $0x54] sm:$0xf]
        %v3024 = vld [vmem:[#allocation6 + $0x58] sm:$0xf]
        %v3025 = vld [vmem:[#allocation6 + $0x5c] sm:$0xf]
        %v3026 = vld [vmem:[#allocation6 + $0x60] sm:$0xf]
        %v3027 = vld [vmem:[#allocation6 + $0x64] sm:$0xf]
        %v3028 = vld [vmem:[#allocation6 + $0x68] sm:$0xf]
        %v3029 = vld [vmem:[#allocation6 + $0x6c] sm:$0xf]
        %v3030 = vld [vmem:[#allocation6 + $0x70] sm:$0xf]
        %v3031 = vld [vmem:[#allocation6 + $0x74] sm:$0xf]
        %v3032 = vld [vmem:[#allocation6 + $0x78] sm:$0xf]
        %v3033 = vld [vmem:[#allocation6 + $0x7c] sm:$0xf]
        %v3034 = vld [vmem:[#allocation6 + $0x80] sm:$0xf]
        %v3035 = vld [vmem:[#allocation6 + $0x84] sm:$0xf]
        %v3036 = vld [vmem:[#allocation6 + $0x88] sm:$0xf]
        %v3037 = vld [vmem:[#allocation6 + $0x8c] sm:$0xf]
        %v3038 = vld [vmem:[#allocation6 + $0x90] sm:$0xf]
        %v3039 = vld [vmem:[#allocation6 + $0x94] sm:$0xf]
        %v3040 = vld [vmem:[#allocation6 + $0x98] sm:$0xf]
        %v3041 = vld [vmem:[#allocation6 + $0x9c] sm:$0xf]
        %v3042 = vld [vmem:[#allocation6 + $0xa0] sm:$0xf]
        %v3043 = vld [vmem:[#allocation6 + $0xa4] sm:$0xf]
        %v3044 = vld [vmem:[#allocation6 + $0xa8] sm:$0xf]
        %v3045 = vld [vmem:[#allocation6 + $0xac] sm:$0xf]
        %v3046 = vld [vmem:[#allocation6 + $0xb0] sm:$0xf]
        %v3047 = vld [vmem:[#allocation6 + $0xb4] sm:$0xf]
        %v3048 = vld [vmem:[#allocation6 + $0xb8] sm:$0xf]
        %v3049 = vld [vmem:[#allocation6 + $0xbc] sm:$0xf]
        %v3050 = vld [vmem:[#allocation6 + $0xc0] sm:$0xf]
        %v3051 = vld [vmem:[#allocation6 + $0xc4] sm:$0xf]
        %v3052 = vld [vmem:[#allocation6 + $0xc8] sm:$0xf]
        %v3053 = vld [vmem:[#allocation6 + $0xcc] sm:$0xf]
        %v3054 = vld [vmem:[#allocation6 + $0xd0] sm:$0xf]
        %v3055 = vld [vmem:[#allocation6 + $0xd4] sm:$0xf]
        %v3056 = vld [vmem:[#allocation6 + $0xd8] sm:$0xf]
        %v3057 = vld [vmem:[#allocation6 + $0xdc] sm:$0xf]
        %v3058 = vld [vmem:[#allocation6 + $0xe0] sm:$0xf]
        %v3059 = vld [vmem:[#allocation6 + $0xe4] sm:$0xf]
        %v3060 = vld [vmem:[#allocation6 + $0xe8] sm:$0xf]
        %v3061 = vld [vmem:[#allocation6 + $0xec] sm:$0xf]
        %v3062 = vld [vmem:[#allocation6 + $0xf0] sm:$0xf]
        %v3063 = vld [vmem:[#allocation6 + $0xf4] sm:$0xf]
        %v3064 = vld [vmem:[#allocation6 + $0xf8] sm:$0xf]
        %v3065 = vld [vmem:[#allocation6 + $0xfc] sm:$0xf]
        %v3066 = vld [vmem:[#allocation6 + $0x100] sm:$0xf]
        %v3067 = vld [vmem:[#allocation6 + $0x104] sm:$0xf]
        %v3068 = vld [vmem:[#allocation6 + $0x108] sm:$0xf]
        %v3069 = vld [vmem:[#allocation6 + $0x10c] sm:$0xf]
        %v3070 = vld [vmem:[#allocation6 + $0x110] sm:$0xf]
        %v3071 = vld [vmem:[#allocation6 + $0x114] sm:$0xf]
        %v3072 = vld [vmem:[#allocation6 + $0x118] sm:$0xf]
        %v3073 = vld [vmem:[#allocation6 + $0x11c] sm:$0xf]
        %v3074 = vld [vmem:[#allocation6 + $0x120] sm:$0xf]
        %v3075 = vld [vmem:[#allocation6 + $0x124] sm:$0xf]
        %v3076 = vld [vmem:[#allocation6 + $0x128] sm:$0xf]
        %v3077 = vld [vmem:[#allocation6 + $0x12c] sm:$0xf]
        %v3078 = vld [vmem:[#allocation6 + $0x130] sm:$0xf]
        %v3079 = vld [vmem:[#allocation6 + $0x134] sm:$0xf]
        %v3080 = vld [vmem:[#allocation6 + $0x138] sm:$0xf]
        %v3081 = vld [vmem:[#allocation6 + $0x13c] sm:$0xf]
        %v3082 = vld [vmem:[#allocation6 + $0x140] sm:$0xf]
        %v3083 = vld [vmem:[#allocation6 + $0x144] sm:$0xf]
        %v3084 = vld [vmem:[#allocation6 + $0x148] sm:$0xf]
        %v3085 = vld [vmem:[#allocation6 + $0x14c] sm:$0xf]
        %v3086 = vld [vmem:[#allocation6 + $0x150] sm:$0xf]
        %v3087 = vld [vmem:[#allocation6 + $0x154] sm:$0xf]
        %v3088 = vld [vmem:[#allocation6 + $0x158] sm:$0xf]
        %v3089 = vld [vmem:[#allocation6 + $0x15c] sm:$0xf]
        %v3090 = vld [vmem:[#allocation6 + $0x160] sm:$0xf]
        %v3091 = vld [vmem:[#allocation6 + $0x164] sm:$0xf]
        %v3092 = vld [vmem:[#allocation6 + $0x168] sm:$0xf]
        %v3093 = vld [vmem:[#allocation6 + $0x16c] sm:$0xf]
        %v3094 = vld [vmem:[#allocation6 + $0x170] sm:$0xf]
        %v3095 = vld [vmem:[#allocation6 + $0x174] sm:$0xf]
        %v3096 = vld [vmem:[#allocation6 + $0x178] sm:$0xf]
        %v3097 = vld [vmem:[#allocation6 + $0x17c] sm:$0xf]
        %v3098 = vld [vmem:[#allocation6 + $0x180] sm:$0xf]
        %v3099 = vld [vmem:[#allocation6 + $0x184] sm:$0xf]
        %v3100 = vld [vmem:[#allocation6 + $0x188] sm:$0xf]
        %v3101 = vld [vmem:[#allocation6 + $0x18c] sm:$0xf]
        %v3102 = vld [vmem:[#allocation6 + $0x190] sm:$0xf]
        %v3103 = vld [vmem:[#allocation6 + $0x194] sm:$0xf]
        %v3104 = vld [vmem:[#allocation6 + $0x198] sm:$0xf]
        %v3105 = vld [vmem:[#allocation6 + $0x19c] sm:$0xf]
        %v3106 = vld [vmem:[#allocation6 + $0x1a0] sm:$0xf]
        %v3107 = vld [vmem:[#allocation6 + $0x1a4] sm:$0xf]
        %v3108 = vld [vmem:[#allocation6 + $0x1a8] sm:$0xf]
        %v3109 = vld [vmem:[#allocation6 + $0x1ac] sm:$0xf]
        %v3110 = vld [vmem:[#allocation6 + $0x1b0] sm:$0xf]
        %v3111 = vld [vmem:[#allocation6 + $0x1b4] sm:$0xf]
        %v3112 = vld [vmem:[#allocation6 + $0x1b8] sm:$0xf]
        %v3113 = vld [vmem:[#allocation6 + $0x1bc] sm:$0xf]
        %v3114 = vld [vmem:[#allocation6 + $0x1c0] sm:$0xf]
        %v3115 = vld [vmem:[#allocation6 + $0x1c4] sm:$0xf]
        %v3116 = vld [vmem:[#allocation6 + $0x1c8] sm:$0xf]
        %v3117 = vld [vmem:[#allocation6 + $0x1cc] sm:$0xf]
        %v3118 = vld [vmem:[#allocation6 + $0x1d0] sm:$0xf]
        %v3119 = vld [vmem:[#allocation6 + $0x1d4] sm:$0xf]
        %v3120 = vld [vmem:[#allocation6 + $0x1d8] sm:$0xf]
        %v3121 = vld [vmem:[#allocation6 + $0x1dc] sm:$0xf]
        %v3122 = vld [vmem:[#allocation6 + $0x1e0] sm:$0xf]
        %v3123 = vld [vmem:[#allocation6 + $0x1e4] sm:$0xf]
        %v3124 = vld [vmem:[#allocation6 + $0x1e8] sm:$0xf]
        %v3125 = vld [vmem:[#allocation6 + $0x1ec] sm:$0xf]
        %v3126 = vld [vmem:[#allocation6 + $0x1f0] sm:$0xf]
        %v3127 = vld [vmem:[#allocation6 + $0x1f4] sm:$0xf]
        %v3128 = vld [vmem:[#allocation6 + $0x1f8] sm:$0xf]
        %v3129 = vld [vmem:[#allocation6 + $0x1fc] sm:$0xf]
        %v3130 = vld [vmem:[#allocation6 + $0x200] sm:$0xf]
        %v3131 = vld [vmem:[#allocation6 + $0x204] sm:$0xf]
        %v3132 = vld [vmem:[#allocation6 + $0x208] sm:$0xf]
        %v3133 = vld [vmem:[#allocation6 + $0x20c] sm:$0xf]
        %v3134 = vld [vmem:[#allocation6 + $0x210] sm:$0xf]
        %v3135 = vld [vmem:[#allocation6 + $0x214] sm:$0xf]
        %v3136 = vld [vmem:[#allocation6 + $0x218] sm:$0xf]
        %v3137 = vld [vmem:[#allocation6 + $0x21c] sm:$0xf]
        %v3138 = vld [vmem:[#allocation6 + $0x220] sm:$0xf]
        %v3139 = vld [vmem:[#allocation6 + $0x224] sm:$0xf]
        %v3140 = vld [vmem:[#allocation6 + $0x228] sm:$0xf]
        %v3141 = vld [vmem:[#allocation6 + $0x22c] sm:$0xf]
        %v3142 = vld [vmem:[#allocation6 + $0x230] sm:$0xf]
        %v3143 = vld [vmem:[#allocation6 + $0x234] sm:$0xf]
        %v3144 = vld [vmem:[#allocation6 + $0x238] sm:$0xf]
        %v3145 = vld [vmem:[#allocation6 + $0x23c] sm:$0xf]
        %v3146 = vld [vmem:[#allocation8] sm:$0x1]
        %v3147 = vld [vmem:[#allocation8 + $0x1] sm:$0x1]
        %v3148 = vld [vmem:[#allocation8 + $0x2] sm:$0x1]
        %v3149 = vld [vmem:[#allocation3] ss:$2 sm:$0xf]
        %s3150 = scalar_lea.vmem [#allocation3], 1
        %v3151 = vld [vmem:[%s3150] ss:$2 sm:$0xf]
        %s3152 = scalar_lea.vmem [#allocation3], 2
        %v3153 = vld [vmem:[%s3152] ss:$2 sm:$0xf]
        %s3154 = scalar_lea.vmem [#allocation3], 10
        %v3155 = vld [vmem:[%s3154] ss:$2 sm:$0xf]
        %s3156 = scalar_lea.vmem [#allocation3], 11
        %v3157 = vld [vmem:[%s3156] ss:$2 sm:$0xf]
        %s3158 = scalar_lea.vmem [#allocation3], 12
        %v3159 = vld [vmem:[%s3158] ss:$2 sm:$0xf]
        %s3160 = scalar_lea.vmem [#allocation3], 20
        %v3161 = vld [vmem:[%s3160] ss:$2 sm:$0xf]
        %s3162 = scalar_lea.vmem [#allocation3], 21
        %v3163 = vld [vmem:[%s3162] ss:$2 sm:$0xf]
        %s3164 = scalar_lea.vmem [#allocation3], 22
        %v3165 = vld [vmem:[%s3164] ss:$2 sm:$0xf]
        %v3166 = vpack.c.bf16 %v3149, %v3149
        %v3167 = vpack.c.bf16 %v3151, %v3151
        %v3168 = vpack.c.bf16 %v3153, %v3153
        %v3169 = vpack.c.bf16 %v3155, %v3155
        %v3170 = vpack.c.bf16 %v3157, %v3157
        %v3171 = vpack.c.bf16 %v3159, %v3159
        %v3172 = vpack.c.bf16 %v3161, %v3161
        %v3173 = vpack.c.bf16 %v3163, %v3163
        %v3174 = vpack.c.bf16 %v3165, %v3165
        %v3175 = vlaneseq
        %v3176 = vshrl.u32 %v3175, 7
        %v3177 = vsub.s32 0, %v3176
        %v3178 = vrot.slane %v3146, %v3177
        %v3323 = vunpack.c.l.b16 %v3002
        %v3324 = vunpack.c.l.b16 %v3003
        %v3325 = vunpack.c.l.b16 %v3004
        %v3326 = vunpack.c.l.b16 %v3005
        %v3327 = vunpack.c.l.b16 %v3006
        %v3328 = vunpack.c.l.b16 %v3007
        %v3329 = vunpack.c.l.b16 %v3008
        %v3330 = vunpack.c.l.b16 %v3009
        %v3331 = vunpack.c.l.b16 %v3010
        %v3332 = vunpack.c.l.b16 %v3011
        %v3333 = vunpack.c.l.b16 %v3012
        %v3334 = vunpack.c.l.b16 %v3013
        %v3335 = vunpack.c.l.b16 %v3014
        %v3336 = vunpack.c.l.b16 %v3015
        %v3337 = vunpack.c.l.b16 %v3016
        %v3338 = vunpack.c.l.b16 %v3017
        %v3339 = vunpack.c.l.b16 %v3018
        %v3340 = vunpack.c.l.b16 %v3019
        %v3341 = vunpack.c.l.b16 %v3020
        %v3342 = vunpack.c.l.b16 %v3021
        %v3343 = vunpack.c.l.b16 %v3022
        %v3344 = vunpack.c.l.b16 %v3023
        %v3345 = vunpack.c.l.b16 %v3024
        %v3346 = vunpack.c.l.b16 %v3025
        %v3347 = vunpack.c.l.b16 %v3026
        %v3348 = vunpack.c.l.b16 %v3027
        %v3349 = vunpack.c.l.b16 %v3028
        %v3350 = vunpack.c.l.b16 %v3029
        %v3351 = vunpack.c.l.b16 %v3030
        %v3352 = vunpack.c.l.b16 %v3031
        %v3353 = vunpack.c.l.b16 %v3032
        %v3354 = vunpack.c.l.b16 %v3033
        %v3355 = vunpack.c.l.b16 %v3034
        %v3356 = vunpack.c.l.b16 %v3035
        %v3357 = vunpack.c.l.b16 %v3036
        %v3358 = vunpack.c.l.b16 %v3037
        %v3359 = vunpack.c.l.b16 %v3038
        %v3360 = vunpack.c.l.b16 %v3039
        %v3361 = vunpack.c.l.b16 %v3040
        %v3362 = vunpack.c.l.b16 %v3041
        %v3363 = vunpack.c.l.b16 %v3042
        %v3364 = vunpack.c.l.b16 %v3043
        %v3365 = vunpack.c.l.b16 %v3044
        %v3366 = vunpack.c.l.b16 %v3045
        %v3367 = vunpack.c.l.b16 %v3046
        %v3368 = vunpack.c.l.b16 %v3047
        %v3369 = vunpack.c.l.b16 %v3048
        %v3370 = vunpack.c.l.b16 %v3049
        %v3371 = vunpack.c.l.b16 %v3050
        %v3372 = vunpack.c.l.b16 %v3051
        %v3373 = vunpack.c.l.b16 %v3052
        %v3374 = vunpack.c.l.b16 %v3053
        %v3375 = vunpack.c.l.b16 %v3054
        %v3376 = vunpack.c.l.b16 %v3055
        %v3377 = vunpack.c.l.b16 %v3056
        %v3378 = vunpack.c.l.b16 %v3057
        %v3379 = vunpack.c.l.b16 %v3058
        %v3380 = vunpack.c.l.b16 %v3059
        %v3381 = vunpack.c.l.b16 %v3060
        %v3382 = vunpack.c.l.b16 %v3061
        %v3383 = vunpack.c.l.b16 %v3062
        %v3384 = vunpack.c.l.b16 %v3063
        %v3385 = vunpack.c.l.b16 %v3064
        %v3386 = vunpack.c.l.b16 %v3065
        %v3387 = vunpack.c.l.b16 %v3066
        %v3388 = vunpack.c.l.b16 %v3067
        %v3389 = vunpack.c.l.b16 %v3068
        %v3390 = vunpack.c.l.b16 %v3069
        %v3391 = vunpack.c.l.b16 %v3070
        %v3392 = vunpack.c.l.b16 %v3071
        %v3393 = vunpack.c.l.b16 %v3072
        %v3394 = vunpack.c.l.b16 %v3073
        %v3395 = vunpack.c.l.b16 %v3074
        %v3396 = vunpack.c.l.b16 %v3075
        %v3397 = vunpack.c.l.b16 %v3076
        %v3398 = vunpack.c.l.b16 %v3077
        %v3399 = vunpack.c.l.b16 %v3078
        %v3400 = vunpack.c.l.b16 %v3079
        %v3401 = vunpack.c.l.b16 %v3080
        %v3402 = vunpack.c.l.b16 %v3081
        %v3403 = vunpack.c.l.b16 %v3082
        %v3404 = vunpack.c.l.b16 %v3083
        %v3405 = vunpack.c.l.b16 %v3084
        %v3406 = vunpack.c.l.b16 %v3085
        %v3407 = vunpack.c.l.b16 %v3086
        %v3408 = vunpack.c.l.b16 %v3087
        %v3409 = vunpack.c.l.b16 %v3088
        %v3410 = vunpack.c.l.b16 %v3089
        %v3411 = vunpack.c.l.b16 %v3090
        %v3412 = vunpack.c.l.b16 %v3091
        %v3413 = vunpack.c.l.b16 %v3092
        %v3414 = vunpack.c.l.b16 %v3093
        %v3415 = vunpack.c.l.b16 %v3094
        %v3416 = vunpack.c.l.b16 %v3095
        %v3417 = vunpack.c.l.b16 %v3096
        %v3418 = vunpack.c.l.b16 %v3097
        %v3419 = vunpack.c.l.b16 %v3098
        %v3420 = vunpack.c.l.b16 %v3099
        %v3421 = vunpack.c.l.b16 %v3100
        %v3422 = vunpack.c.l.b16 %v3101
        %v3423 = vunpack.c.l.b16 %v3102
        %v3424 = vunpack.c.l.b16 %v3103
        %v3425 = vunpack.c.l.b16 %v3104
        %v3426 = vunpack.c.l.b16 %v3105
        %v3427 = vunpack.c.l.b16 %v3106
        %v3428 = vunpack.c.l.b16 %v3107
        %v3429 = vunpack.c.l.b16 %v3108
        %v3430 = vunpack.c.l.b16 %v3109
        %v3431 = vunpack.c.l.b16 %v3110
        %v3432 = vunpack.c.l.b16 %v3111
        %v3433 = vunpack.c.l.b16 %v3112
        %v3434 = vunpack.c.l.b16 %v3113
        %v3435 = vunpack.c.l.b16 %v3114
        %v3436 = vunpack.c.l.b16 %v3115
        %v3437 = vunpack.c.l.b16 %v3116
        %v3438 = vunpack.c.l.b16 %v3117
        %v3439 = vunpack.c.l.b16 %v3118
        %v3440 = vunpack.c.l.b16 %v3119
        %v3441 = vunpack.c.l.b16 %v3120
        %v3442 = vunpack.c.l.b16 %v3121
        %v3443 = vunpack.c.l.b16 %v3122
        %v3444 = vunpack.c.l.b16 %v3123
        %v3445 = vunpack.c.l.b16 %v3124
        %v3446 = vunpack.c.l.b16 %v3125
        %v3447 = vunpack.c.l.b16 %v3126
        %v3448 = vunpack.c.l.b16 %v3127
        %v3449 = vunpack.c.l.b16 %v3128
        %v3450 = vunpack.c.l.b16 %v3129
        %v3451 = vunpack.c.l.b16 %v3130
        %v3452 = vunpack.c.l.b16 %v3131
        %v3453 = vunpack.c.l.b16 %v3132
        %v3454 = vunpack.c.l.b16 %v3133
        %v3455 = vunpack.c.l.b16 %v3134
        %v3456 = vunpack.c.l.b16 %v3135
        %v3457 = vunpack.c.l.b16 %v3136
        %v3458 = vunpack.c.l.b16 %v3137
        %v3459 = vunpack.c.l.b16 %v3138
        %v3460 = vunpack.c.l.b16 %v3139
        %v3461 = vunpack.c.l.b16 %v3140
        %v3462 = vunpack.c.l.b16 %v3141
        %v3463 = vunpack.c.l.b16 %v3142
        %v3464 = vunpack.c.l.b16 %v3143
        %v3465 = vunpack.c.l.b16 %v3144
        %v3466 = vunpack.c.l.b16 %v3145
        %v3467 = vpack.c.b16 %v3324, %v3323
        %v3468 = vpack.c.b16 %v3326, %v3325
        %v3469 = vpack.c.b16 %v3328, %v3327
        %v3470 = vpack.c.b16 %v3330, %v3329
        %v3471 = vpack.c.b16 %v3332, %v3331
        %v3472 = vpack.c.b16 %v3334, %v3333
        %v3473 = vpack.c.b16 %v3336, %v3335
        %v3474 = vpack.c.b16 %v3338, %v3337
        %v3475 = vpack.c.b16 %v3340, %v3339
        %v3476 = vpack.c.b16 %v3342, %v3341
        %v3477 = vpack.c.b16 %v3344, %v3343
        %v3478 = vpack.c.b16 %v3346, %v3345
        %v3479 = vpack.c.b16 %v3348, %v3347
        %v3480 = vpack.c.b16 %v3350, %v3349
        %v3481 = vpack.c.b16 %v3352, %v3351
        %v3482 = vpack.c.b16 %v3354, %v3353
        %v3483 = vpack.c.b16 %v3356, %v3355
        %v3484 = vpack.c.b16 %v3358, %v3357
        %v3485 = vpack.c.b16 %v3360, %v3359
        %v3486 = vpack.c.b16 %v3362, %v3361
        %v3487 = vpack.c.b16 %v3364, %v3363
        %v3488 = vpack.c.b16 %v3366, %v3365
        %v3489 = vpack.c.b16 %v3368, %v3367
        %v3490 = vpack.c.b16 %v3370, %v3369
        %v3491 = vpack.c.b16 %v3372, %v3371
        %v3492 = vpack.c.b16 %v3374, %v3373
        %v3493 = vpack.c.b16 %v3376, %v3375
        %v3494 = vpack.c.b16 %v3378, %v3377
        %v3495 = vpack.c.b16 %v3380, %v3379
        %v3496 = vpack.c.b16 %v3382, %v3381
        %v3497 = vpack.c.b16 %v3384, %v3383
        %v3498 = vpack.c.b16 %v3386, %v3385
        %v3499 = vpack.c.b16 %v3388, %v3387
        %v3500 = vpack.c.b16 %v3390, %v3389
        %v3501 = vpack.c.b16 %v3392, %v3391
        %v3502 = vpack.c.b16 %v3394, %v3393
        %v3503 = vpack.c.b16 %v3396, %v3395
        %v3504 = vpack.c.b16 %v3398, %v3397
        %v3505 = vpack.c.b16 %v3400, %v3399
        %v3506 = vpack.c.b16 %v3402, %v3401
        %v3507 = vpack.c.b16 %v3404, %v3403
        %v3508 = vpack.c.b16 %v3406, %v3405
        %v3509 = vpack.c.b16 %v3408, %v3407
        %v3510 = vpack.c.b16 %v3410, %v3409
        %v3511 = vpack.c.b16 %v3412, %v3411
        %v3512 = vpack.c.b16 %v3414, %v3413
        %v3513 = vpack.c.b16 %v3416, %v3415
        %v3514 = vpack.c.b16 %v3418, %v3417
        %v3515 = vpack.c.b16 %v3420, %v3419
        %v3516 = vpack.c.b16 %v3422, %v3421
        %v3517 = vpack.c.b16 %v3424, %v3423
        %v3518 = vpack.c.b16 %v3426, %v3425
        %v3519 = vpack.c.b16 %v3428, %v3427
        %v3520 = vpack.c.b16 %v3430, %v3429
        %v3521 = vpack.c.b16 %v3432, %v3431
        %v3522 = vpack.c.b16 %v3434, %v3433
        %v3523 = vpack.c.b16 %v3436, %v3435
        %v3524 = vpack.c.b16 %v3438, %v3437
        %v3525 = vpack.c.b16 %v3440, %v3439
        %v3526 = vpack.c.b16 %v3442, %v3441
        %v3527 = vpack.c.b16 %v3444, %v3443
        %v3528 = vpack.c.b16 %v3446, %v3445
        %v3529 = vpack.c.b16 %v3448, %v3447
        %v3530 = vpack.c.b16 %v3450, %v3449
        %v3531 = vpack.c.b16 %v3452, %v3451
        %v3532 = vpack.c.b16 %v3454, %v3453
        %v3533 = vpack.c.b16 %v3456, %v3455
        %v3534 = vpack.c.b16 %v3458, %v3457
        %v3535 = vpack.c.b16 %v3460, %v3459
        %v3536 = vpack.c.b16 %v3462, %v3461
        %v3537 = vpack.c.b16 %v3464, %v3463
        %v3538 = vpack.c.b16 %v3466, %v3465
        %3611 = vmatprep.subr.bf16.mxu0 0
        %3612 = vmatpush1.bf16.msra.mxu0 %v3474
        %3613 = vmatprep.subr.bf16.mxu0 0
        %3614 = vmatpush1.bf16.msra.mxu0 %v3473
        %3615 = vmatprep.subr.bf16.mxu0 0
        %3616 = vmatpush1.bf16.msra.mxu0 %v3472
        %3617 = vmatprep.subr.bf16.mxu0 0
        %3618 = vmatpush1.bf16.msra.mxu0 %v3471
        %3619 = vmatprep.subr.bf16.mxu0 0
        %3620 = vmatpush1.bf16.msra.mxu0 %v3470
        %3621 = vmatprep.subr.bf16.mxu0 0
        %3622 = vmatpush1.bf16.msra.mxu0 %v3469
        %3623 = vmatprep.subr.bf16.mxu0 0
        %3624 = vmatpush1.bf16.msra.mxu0 %v3468
        %3625 = vmatprep.subr.bf16.mxu0 0
        %3626 = vmatpush1.bf16.msra.mxu0 %v3467
        %3627 = vmatprep.subr.bf16.mxu0 0
        %3628 = vmatpush2.bf16.msra.mxu0 %v3482
        %3629 = vmatprep.subr.bf16.mxu0 0
        %3630 = vmatpush2.bf16.msra.mxu0 %v3481
        %3631 = vmatprep.subr.bf16.mxu0 0
        %3632 = vmatpush2.bf16.msra.mxu0 %v3480
        %3633 = vmatprep.subr.bf16.mxu0 0
        %3634 = vmatpush2.bf16.msra.mxu0 %v3479
        %3635 = vmatprep.subr.bf16.mxu0 0
        %3636 = vmatpush2.bf16.msra.mxu0 %v3478
        %3637 = vmatprep.subr.bf16.mxu0 0
        %3638 = vmatpush2.bf16.msra.mxu0 %v3477
        %3639 = vmatprep.subr.bf16.mxu0 0
        %3640 = vmatpush2.bf16.msra.mxu0 %v3476
        %3641 = vmatprep.subr.bf16.mxu0 0
        %3642 = vmatpush2.bf16.msra.mxu0 %v3475
        %3643 = vmatprep.mubr.bf16.mxu0 %v3167
        %3644 = vmatmul.mubr.bf16.gmra.mxu0 %v3166
        %v3645 = vpop.f32.mrf.mxu0
        %v3646 = vadd.f32 %v3178, %v3645
        %v3647 = vpop.f32.mrf.mxu0
        %v3648 = vpop.f32.mrf.mxu0
        %v3649 = vpop.f32.mrf.mxu0
        %3650 = vdwg.mxu0
        %3651 = vmatprep.subr.bf16.mxu0 0
        %3652 = vmatpush1.bf16.msra.mxu0 %v3490
        %3653 = vmatprep.subr.bf16.mxu0 0
        %3654 = vmatpush1.bf16.msra.mxu0 %v3489
        %3655 = vmatprep.subr.bf16.mxu0 0
        %3656 = vmatpush1.bf16.msra.mxu0 %v3488
        %3657 = vmatprep.subr.bf16.mxu0 0
        %3658 = vmatpush1.bf16.msra.mxu0 %v3487
        %3659 = vmatprep.subr.bf16.mxu0 0
        %3660 = vmatpush1.bf16.msra.mxu0 %v3486
        %3661 = vmatprep.subr.bf16.mxu0 0
        %3662 = vmatpush1.bf16.msra.mxu0 %v3485
        %3663 = vmatprep.subr.bf16.mxu0 0
        %3664 = vmatpush1.bf16.msra.mxu0 %v3484
        %3665 = vmatprep.subr.bf16.mxu0 0
        %3666 = vmatpush1.bf16.msra.mxu0 %v3483
        %3667 = vmatprep.subr.bf16.mxu0 0
        %3668 = vmatpush2.bf16.msra.mxu0 %v3498
        %3669 = vmatprep.subr.bf16.mxu0 0
        %3670 = vmatpush2.bf16.msra.mxu0 %v3497
        %3671 = vmatprep.subr.bf16.mxu0 0
        %3672 = vmatpush2.bf16.msra.mxu0 %v3496
        %3673 = vmatprep.subr.bf16.mxu0 0
        %3674 = vmatpush2.bf16.msra.mxu0 %v3495
        %3675 = vmatprep.subr.bf16.mxu0 0
        %3676 = vmatpush2.bf16.msra.mxu0 %v3494
        %3677 = vmatprep.subr.bf16.mxu0 0
        %3678 = vmatpush2.bf16.msra.mxu0 %v3493
        %3679 = vmatprep.subr.bf16.mxu0 0
        %3680 = vmatpush2.bf16.msra.mxu0 %v3492
        %3681 = vmatprep.subr.bf16.mxu0 0
        %3682 = vmatpush2.bf16.msra.mxu0 %v3491
        %3683 = vmatprep.mubr.bf16.mxu0 %v3169
        %3684 = vmatmul.mubr.bf16.gmra.mxu0 %v3168
        %v3685 = vpop.f32.mrf.mxu0
        %v3686 = vadd.f32 %v3646, %v3685
        %v3687 = vpop.f32.mrf.mxu0
        %v3688 = vpop.f32.mrf.mxu0
        %v3689 = vpop.f32.mrf.mxu0
        %3690 = vdwg.mxu0
        %3691 = vmatprep.subr.bf16.mxu0 0
        %3692 = vmatpush1.bf16.msra.mxu0 %v3506
        %3693 = vmatprep.subr.bf16.mxu0 0
        %3694 = vmatpush1.bf16.msra.mxu0 %v3505
        %3695 = vmatprep.subr.bf16.mxu0 0
        %3696 = vmatpush1.bf16.msra.mxu0 %v3504
        %3697 = vmatprep.subr.bf16.mxu0 0
        %3698 = vmatpush1.bf16.msra.mxu0 %v3503
        %3699 = vmatprep.subr.bf16.mxu0 0
        %3700 = vmatpush1.bf16.msra.mxu0 %v3502
        %3701 = vmatprep.subr.bf16.mxu0 0
        %3702 = vmatpush1.bf16.msra.mxu0 %v3501
        %3703 = vmatprep.subr.bf16.mxu0 0
        %3704 = vmatpush1.bf16.msra.mxu0 %v3500
        %3705 = vmatprep.subr.bf16.mxu0 0
        %3706 = vmatpush1.bf16.msra.mxu0 %v3499
        %3707 = vmatprep.subr.bf16.mxu0 0
        %3708 = vmatpush2.bf16.msra.mxu0 %v3514
        %3709 = vmatprep.subr.bf16.mxu0 0
        %3710 = vmatpush2.bf16.msra.mxu0 %v3513
        %3711 = vmatprep.subr.bf16.mxu0 0
        %3712 = vmatpush2.bf16.msra.mxu0 %v3512
        %3713 = vmatprep.subr.bf16.mxu0 0
        %3714 = vmatpush2.bf16.msra.mxu0 %v3511
        %3715 = vmatprep.subr.bf16.mxu0 0
        %3716 = vmatpush2.bf16.msra.mxu0 %v3510
        %3717 = vmatprep.subr.bf16.mxu0 0
        %3718 = vmatpush2.bf16.msra.mxu0 %v3509
        %3719 = vmatprep.subr.bf16.mxu0 0
        %3720 = vmatpush2.bf16.msra.mxu0 %v3508
        %3721 = vmatprep.subr.bf16.mxu0 0
        %3722 = vmatpush2.bf16.msra.mxu0 %v3507
        %3723 = vmatprep.mubr.bf16.mxu0 %v3171
        %3724 = vmatmul.mubr.bf16.gmra.mxu0 %v3170
        %v3725 = vpop.f32.mrf.mxu0
        %v3726 = vadd.f32 %v3686, %v3725
        %v3727 = vpop.f32.mrf.mxu0
        %v3728 = vpop.f32.mrf.mxu0
        %v3729 = vpop.f32.mrf.mxu0
        %3730 = vdwg.mxu0
        %3731 = vmatprep.subr.bf16.mxu0 0
        %3732 = vmatpush1.bf16.msra.mxu0 %v3522
        %3733 = vmatprep.subr.bf16.mxu0 0
        %3734 = vmatpush1.bf16.msra.mxu0 %v3521
        %3735 = vmatprep.subr.bf16.mxu0 0
        %3736 = vmatpush1.bf16.msra.mxu0 %v3520
        %3737 = vmatprep.subr.bf16.mxu0 0
        %3738 = vmatpush1.bf16.msra.mxu0 %v3519
        %3739 = vmatprep.subr.bf16.mxu0 0
        %3740 = vmatpush1.bf16.msra.mxu0 %v3518
        %3741 = vmatprep.subr.bf16.mxu0 0
        %3742 = vmatpush1.bf16.msra.mxu0 %v3517
        %3743 = vmatprep.subr.bf16.mxu0 0
        %3744 = vmatpush1.bf16.msra.mxu0 %v3516
        %3745 = vmatprep.subr.bf16.mxu0 0
        %3746 = vmatpush1.bf16.msra.mxu0 %v3515
        %3747 = vmatprep.subr.bf16.mxu0 0
        %3748 = vmatpush2.bf16.msra.mxu0 %v3530
        %3749 = vmatprep.subr.bf16.mxu0 0
        %3750 = vmatpush2.bf16.msra.mxu0 %v3529
        %3751 = vmatprep.subr.bf16.mxu0 0
        %3752 = vmatpush2.bf16.msra.mxu0 %v3528
        %3753 = vmatprep.subr.bf16.mxu0 0
        %3754 = vmatpush2.bf16.msra.mxu0 %v3527
        %3755 = vmatprep.subr.bf16.mxu0 0
        %3756 = vmatpush2.bf16.msra.mxu0 %v3526
        %3757 = vmatprep.subr.bf16.mxu0 0
        %3758 = vmatpush2.bf16.msra.mxu0 %v3525
        %3759 = vmatprep.subr.bf16.mxu0 0
        %3760 = vmatpush2.bf16.msra.mxu0 %v3524
        %3761 = vmatprep.subr.bf16.mxu0 0
        %3762 = vmatpush2.bf16.msra.mxu0 %v3523
        %3763 = vmatprep.mubr.bf16.mxu0 %v3173
        %3764 = vmatmul.mubr.bf16.gmra.mxu0 %v3172
        %v3765 = vpop.f32.mrf.mxu0
        %v3766 = vadd.f32 %v3726, %v3765
        %v3767 = vpop.f32.mrf.mxu0
        %v3768 = vpop.f32.mrf.mxu0
        %v3769 = vpop.f32.mrf.mxu0
        %3770 = vdwg.mxu0
        %3771 = vmatprep.subr.bf16.mxu0 0
        %3772 = vmatpush1.bf16.msra.mxu0 %v3538
        %3773 = vmatprep.subr.bf16.mxu0 0
        %3774 = vmatpush1.bf16.msra.mxu0 %v3537
        %3775 = vmatprep.subr.bf16.mxu0 0
        %3776 = vmatpush1.bf16.msra.mxu0 %v3536
        %3777 = vmatprep.subr.bf16.mxu0 0
        %3778 = vmatpush1.bf16.msra.mxu0 %v3535
        %3779 = vmatprep.subr.bf16.mxu0 0
        %3780 = vmatpush1.bf16.msra.mxu0 %v3534
        %3781 = vmatprep.subr.bf16.mxu0 0
        %3782 = vmatpush1.bf16.msra.mxu0 %v3533
        %3783 = vmatprep.subr.bf16.mxu0 0
        %3784 = vmatpush1.bf16.msra.mxu0 %v3532
        %3785 = vmatprep.subr.bf16.mxu0 0
        %3786 = vmatpush1.bf16.msra.mxu0 %v3531
        %3787 = vmatprep.subr.bf16.mxu0 0
        %3788 = vmatpush2.bf16.msra.mxu0 0
        %3789 = vmatprep.subr.bf16.mxu0 0
        %3790 = vmatpush2.bf16.msra.mxu0 0
        %3791 = vmatprep.subr.bf16.mxu0 0
        %3792 = vmatpush2.bf16.msra.mxu0 0
        %3793 = vmatprep.subr.bf16.mxu0 0
        %3794 = vmatpush2.bf16.msra.mxu0 0
        %3795 = vmatprep.subr.bf16.mxu0 0
        %3796 = vmatpush2.bf16.msra.mxu0 0
        %3797 = vmatprep.subr.bf16.mxu0 0
        %3798 = vmatpush2.bf16.msra.mxu0 0
        %3799 = vmatprep.subr.bf16.mxu0 0
        %3800 = vmatpush2.bf16.msra.mxu0 0
        %3801 = vmatprep.subr.bf16.mxu0 0
        %3802 = vmatpush2.bf16.msra.mxu0 0
        %3803 = vmatprep.mubr.bf16.mxu0 0
        %3804 = vmatmul.mubr.bf16.gmra.mxu0 %v3174
        %v3805 = vpop.f32.mrf.mxu0
        %v3806 = vadd.f32 %v3766, %v3805
        %v3807 = vpop.f32.mrf.mxu0
        %v3808 = vpop.f32.mrf.mxu0
        %v3809 = vpop.f32.mrf.mxu0
        %3810 = vdwg.mxu0
        %v3811 = vmul.f32 %v3806, 0.2
        %v3812 = vmax.f32 %v3806, %v3811
        %v3813 = vlaneseq
        %v3814 = vshrl.u32 %v3813, 7
        %v3815 = vsub.s32 0, %v3814
        %v3816 = vrot.slane %v3147, %v3815
        %v3817 = vmul.f32 %v3812, %v3816
        %v3818 = vlaneseq
        %v3819 = vshrl.u32 %v3818, 7
        %v3820 = vsub.s32 0, %v3819
        %v3821 = vrot.slane %v3148, %v3820
        %v3822 = vadd.f32 %v3817, %v3821
        %3823 = vst [vmem:[#allocation4 + $0x7] sm:$0xf] %v3822
        %v3824 = vld [vmem:[%s3160] ss:$2 sm:$0xf]
        %v3825 = vld [vmem:[%s3162] ss:$2 sm:$0xf]
        %v3826 = vld [vmem:[%s3164] ss:$2 sm:$0xf]
        %s3827 = scalar_lea.vmem [#allocation3], 30
        %v3828 = vld [vmem:[%s3827] ss:$2 sm:$0xf]
        %s3829 = scalar_lea.vmem [#allocation3], 31
        %v3830 = vld [vmem:[%s3829] ss:$2 sm:$0xf]
        %s3831 = scalar_lea.vmem [#allocation3], 32
        %v3832 = vld [vmem:[%s3831] ss:$2 sm:$0xf]
        %s3833 = scalar_lea.vmem [#allocation3], 40
        %v3834 = vld [vmem:[%s3833] ss:$2 sm:$0xf]
        %s3835 = scalar_lea.vmem [#allocation3], 41
        %v3836 = vld [vmem:[%s3835] ss:$2 sm:$0xf]
        %s3837 = scalar_lea.vmem [#allocation3], 42
        %v3838 = vld [vmem:[%s3837] ss:$2 sm:$0xf]
        %v3839 = vpack.c.bf16 %v3824, %v3824
        %v3840 = vpack.c.bf16 %v3825, %v3825
        %v3841 = vpack.c.bf16 %v3826, %v3826
        %v3842 = vpack.c.bf16 %v3828, %v3828
        %v3843 = vpack.c.bf16 %v3830, %v3830
        %v3844 = vpack.c.bf16 %v3832, %v3832
        %v3845 = vpack.c.bf16 %v3834, %v3834
        %v3846 = vpack.c.bf16 %v3836, %v3836
        %v3847 = vpack.c.bf16 %v3838, %v3838
        %3848 = vmatprep.subr.bf16.mxu0 0
        %3849 = vmatpush1.bf16.msra.mxu0 %v3474
        %3850 = vmatprep.subr.bf16.mxu0 0
        %3851 = vmatpush1.bf16.msra.mxu0 %v3473
        %3852 = vmatprep.subr.bf16.mxu0 0
        %3853 = vmatpush1.bf16.msra.mxu0 %v3472
        %3854 = vmatprep.subr.bf16.mxu0 0
        %3855 = vmatpush1.bf16.msra.mxu0 %v3471
        %3856 = vmatprep.subr.bf16.mxu0 0
        %3857 = vmatpush1.bf16.msra.mxu0 %v3470
        %3858 = vmatprep.subr.bf16.mxu0 0
        %3859 = vmatpush1.bf16.msra.mxu0 %v3469
        %3860 = vmatprep.subr.bf16.mxu0 0
        %3861 = vmatpush1.bf16.msra.mxu0 %v3468
        %3862 = vmatprep.subr.bf16.mxu0 0
        %3863 = vmatpush1.bf16.msra.mxu0 %v3467
        %3864 = vmatprep.subr.bf16.mxu0 0
        %3865 = vmatpush2.bf16.msra.mxu0 %v3482
        %3866 = vmatprep.subr.bf16.mxu0 0
        %3867 = vmatpush2.bf16.msra.mxu0 %v3481
        %3868 = vmatprep.subr.bf16.mxu0 0
        %3869 = vmatpush2.bf16.msra.mxu0 %v3480
        %3870 = vmatprep.subr.bf16.mxu0 0
        %3871 = vmatpush2.bf16.msra.mxu0 %v3479
        %3872 = vmatprep.subr.bf16.mxu0 0
        %3873 = vmatpush2.bf16.msra.mxu0 %v3478
        %3874 = vmatprep.subr.bf16.mxu0 0
        %3875 = vmatpush2.bf16.msra.mxu0 %v3477
        %3876 = vmatprep.subr.bf16.mxu0 0
        %3877 = vmatpush2.bf16.msra.mxu0 %v3476
        %3878 = vmatprep.subr.bf16.mxu0 0
        %3879 = vmatpush2.bf16.msra.mxu0 %v3475
        %3880 = vmatprep.mubr.bf16.mxu0 %v3840
        %3881 = vmatmul.mubr.bf16.gmra.mxu0 %v3839
        %v3882 = vpop.f32.mrf.mxu0
        %v3883 = vadd.f32 %v3178, %v3882
        %v3884 = vpop.f32.mrf.mxu0
        %v3885 = vpop.f32.mrf.mxu0
        %v3886 = vpop.f32.mrf.mxu0
        %3887 = vdwg.mxu0
        %3888 = vmatprep.subr.bf16.mxu0 0
        %3889 = vmatpush1.bf16.msra.mxu0 %v3490
        %3890 = vmatprep.subr.bf16.mxu0 0
        %3891 = vmatpush1.bf16.msra.mxu0 %v3489
        %3892 = vmatprep.subr.bf16.mxu0 0
        %3893 = vmatpush1.bf16.msra.mxu0 %v3488
        %3894 = vmatprep.subr.bf16.mxu0 0
        %3895 = vmatpush1.bf16.msra.mxu0 %v3487
        %3896 = vmatprep.subr.bf16.mxu0 0
        %3897 = vmatpush1.bf16.msra.mxu0 %v3486
        %3898 = vmatprep.subr.bf16.mxu0 0
        %3899 = vmatpush1.bf16.msra.mxu0 %v3485
        %3900 = vmatprep.subr.bf16.mxu0 0
        %3901 = vmatpush1.bf16.msra.mxu0 %v3484
        %3902 = vmatprep.subr.bf16.mxu0 0
        %3903 = vmatpush1.bf16.msra.mxu0 %v3483
        %3904 = vmatprep.subr.bf16.mxu0 0
        %3905 = vmatpush2.bf16.msra.mxu0 %v3498
        %3906 = vmatprep.subr.bf16.mxu0 0
        %3907 = vmatpush2.bf16.msra.mxu0 %v3497
        %3908 = vmatprep.subr.bf16.mxu0 0
        %3909 = vmatpush2.bf16.msra.mxu0 %v3496
        %3910 = vmatprep.subr.bf16.mxu0 0
        %3911 = vmatpush2.bf16.msra.mxu0 %v3495
        %3912 = vmatprep.subr.bf16.mxu0 0
        %3913 = vmatpush2.bf16.msra.mxu0 %v3494
        %3914 = vmatprep.subr.bf16.mxu0 0
        %3915 = vmatpush2.bf16.msra.mxu0 %v3493
        %3916 = vmatprep.subr.bf16.mxu0 0
        %3917 = vmatpush2.bf16.msra.mxu0 %v3492
        %3918 = vmatprep.subr.bf16.mxu0 0
        %3919 = vmatpush2.bf16.msra.mxu0 %v3491
        %3920 = vmatprep.mubr.bf16.mxu0 %v3842
        %3921 = vmatmul.mubr.bf16.gmra.mxu0 %v3841
        %v3922 = vpop.f32.mrf.mxu0
        %v3923 = vadd.f32 %v3883, %v3922
        %v3924 = vpop.f32.mrf.mxu0
        %v3925 = vpop.f32.mrf.mxu0
        %v3926 = vpop.f32.mrf.mxu0
        %3927 = vdwg.mxu0
        %3928 = vmatprep.subr.bf16.mxu0 0
        %3929 = vmatpush1.bf16.msra.mxu0 %v3506
        %3930 = vmatprep.subr.bf16.mxu0 0
        %3931 = vmatpush1.bf16.msra.mxu0 %v3505
        %3932 = vmatprep.subr.bf16.mxu0 0
        %3933 = vmatpush1.bf16.msra.mxu0 %v3504
        %3934 = vmatprep.subr.bf16.mxu0 0
        %3935 = vmatpush1.bf16.msra.mxu0 %v3503
        %3936 = vmatprep.subr.bf16.mxu0 0
        %3937 = vmatpush1.bf16.msra.mxu0 %v3502
        %3938 = vmatprep.subr.bf16.mxu0 0
        %3939 = vmatpush1.bf16.msra.mxu0 %v3501
        %3940 = vmatprep.subr.bf16.mxu0 0
        %3941 = vmatpush1.bf16.msra.mxu0 %v3500
        %3942 = vmatprep.subr.bf16.mxu0 0
        %3943 = vmatpush1.bf16.msra.mxu0 %v3499
        %3944 = vmatprep.subr.bf16.mxu0 0
        %3945 = vmatpush2.bf16.msra.mxu0 %v3514
        %3946 = vmatprep.subr.bf16.mxu0 0
        %3947 = vmatpush2.bf16.msra.mxu0 %v3513
        %3948 = vmatprep.subr.bf16.mxu0 0
        %3949 = vmatpush2.bf16.msra.mxu0 %v3512
        %3950 = vmatprep.subr.bf16.mxu0 0
        %3951 = vmatpush2.bf16.msra.mxu0 %v3511
        %3952 = vmatprep.subr.bf16.mxu0 0
        %3953 = vmatpush2.bf16.msra.mxu0 %v3510
        %3954 = vmatprep.subr.bf16.mxu0 0
        %3955 = vmatpush2.bf16.msra.mxu0 %v3509
        %3956 = vmatprep.subr.bf16.mxu0 0
        %3957 = vmatpush2.bf16.msra.mxu0 %v3508
        %3958 = vmatprep.subr.bf16.mxu0 0
        %3959 = vmatpush2.bf16.msra.mxu0 %v3507
        %3960 = vmatprep.mubr.bf16.mxu0 %v3844
        %3961 = vmatmul.mubr.bf16.gmra.mxu0 %v3843
        %v3962 = vpop.f32.mrf.mxu0
        %v3963 = vadd.f32 %v3923, %v3962
        %v3964 = vpop.f32.mrf.mxu0
        %v3965 = vpop.f32.mrf.mxu0
        %v3966 = vpop.f32.mrf.mxu0
        %3967 = vdwg.mxu0
        %3968 = vmatprep.subr.bf16.mxu0 0
        %3969 = vmatpush1.bf16.msra.mxu0 %v3522
        %3970 = vmatprep.subr.bf16.mxu0 0
        %3971 = vmatpush1.bf16.msra.mxu0 %v3521
        %3972 = vmatprep.subr.bf16.mxu0 0
        %3973 = vmatpush1.bf16.msra.mxu0 %v3520
        %3974 = vmatprep.subr.bf16.mxu0 0
        %3975 = vmatpush1.bf16.msra.mxu0 %v3519
        %3976 = vmatprep.subr.bf16.mxu0 0
        %3977 = vmatpush1.bf16.msra.mxu0 %v3518
        %3978 = vmatprep.subr.bf16.mxu0 0
        %3979 = vmatpush1.bf16.msra.mxu0 %v3517
        %3980 = vmatprep.subr.bf16.mxu0 0
        %3981 = vmatpush1.bf16.msra.mxu0 %v3516
        %3982 = vmatprep.subr.bf16.mxu0 0
        %3983 = vmatpush1.bf16.msra.mxu0 %v3515
        %3984 = vmatprep.subr.bf16.mxu0 0
        %3985 = vmatpush2.bf16.msra.mxu0 %v3530
        %3986 = vmatprep.subr.bf16.mxu0 0
        %3987 = vmatpush2.bf16.msra.mxu0 %v3529
        %3988 = vmatprep.subr.bf16.mxu0 0
        %3989 = vmatpush2.bf16.msra.mxu0 %v3528
        %3990 = vmatprep.subr.bf16.mxu0 0
        %3991 = vmatpush2.bf16.msra.mxu0 %v3527
        %3992 = vmatprep.subr.bf16.mxu0 0
        %3993 = vmatpush2.bf16.msra.mxu0 %v3526
        %3994 = vmatprep.subr.bf16.mxu0 0
        %3995 = vmatpush2.bf16.msra.mxu0 %v3525
        %3996 = vmatprep.subr.bf16.mxu0 0
        %3997 = vmatpush2.bf16.msra.mxu0 %v3524
        %3998 = vmatprep.subr.bf16.mxu0 0
        %3999 = vmatpush2.bf16.msra.mxu0 %v3523
        %4000 = vmatprep.mubr.bf16.mxu0 %v3846
        %4001 = vmatmul.mubr.bf16.gmra.mxu0 %v3845
        %v4002 = vpop.f32.mrf.mxu0
        %v4003 = vadd.f32 %v3963, %v4002
        %v4004 = vpop.f32.mrf.mxu0
        %v4005 = vpop.f32.mrf.mxu0
        %v4006 = vpop.f32.mrf.mxu0
        %4007 = vdwg.mxu0
        %4008 = vmatprep.subr.bf16.mxu0 0
        %4009 = vmatpush1.bf16.msra.mxu0 %v3538
        %4010 = vmatprep.subr.bf16.mxu0 0
        %4011 = vmatpush1.bf16.msra.mxu0 %v3537
        %4012 = vmatprep.subr.bf16.mxu0 0
        %4013 = vmatpush1.bf16.msra.mxu0 %v3536
        %4014 = vmatprep.subr.bf16.mxu0 0
        %4015 = vmatpush1.bf16.msra.mxu0 %v3535
        %4016 = vmatprep.subr.bf16.mxu0 0
        %4017 = vmatpush1.bf16.msra.mxu0 %v3534
        %4018 = vmatprep.subr.bf16.mxu0 0
        %4019 = vmatpush1.bf16.msra.mxu0 %v3533
        %4020 = vmatprep.subr.bf16.mxu0 0
        %4021 = vmatpush1.bf16.msra.mxu0 %v3532
        %4022 = vmatprep.subr.bf16.mxu0 0
        %4023 = vmatpush1.bf16.msra.mxu0 %v3531
        %4024 = vmatprep.subr.bf16.mxu0 0
        %4025 = vmatpush2.bf16.msra.mxu0 0
        %4026 = vmatprep.subr.bf16.mxu0 0
        %4027 = vmatpush2.bf16.msra.mxu0 0
        %4028 = vmatprep.subr.bf16.mxu0 0
        %4029 = vmatpush2.bf16.msra.mxu0 0
        %4030 = vmatprep.subr.bf16.mxu0 0
        %4031 = vmatpush2.bf16.msra.mxu0 0
        %4032 = vmatprep.subr.bf16.mxu0 0
        %4033 = vmatpush2.bf16.msra.mxu0 0
        %4034 = vmatprep.subr.bf16.mxu0 0
        %4035 = vmatpush2.bf16.msra.mxu0 0
        %4036 = vmatprep.subr.bf16.mxu0 0
        %4037 = vmatpush2.bf16.msra.mxu0 0
        %4038 = vmatprep.subr.bf16.mxu0 0
        %4039 = vmatpush2.bf16.msra.mxu0 0
        %4040 = vmatprep.mubr.bf16.mxu0 0
        %4041 = vmatmul.mubr.bf16.gmra.mxu0 %v3847
        %v4042 = vpop.f32.mrf.mxu0
        %v4043 = vadd.f32 %v4003, %v4042
        %v4044 = vpop.f32.mrf.mxu0
        %v4045 = vpop.f32.mrf.mxu0
        %v4046 = vpop.f32.mrf.mxu0
        %4047 = vdwg.mxu0
        %v4048 = vmul.f32 %v4043, 0.2
        %v4049 = vmax.f32 %v4043, %v4048
        %v4050 = vmul.f32 %v4049, %v3816
        %v4051 = vadd.f32 %v4050, %v3821
        %4052 = vst [vmem:[#allocation4 + $0xd] sm:$0xf] %v4051
        %v4053 = vld [vmem:[%s3833] ss:$2 sm:$0xf]
        %v4054 = vld [vmem:[%s3835] ss:$2 sm:$0xf]
        %v4055 = vld [vmem:[%s3837] ss:$2 sm:$0xf]
        %s4056 = scalar_lea.vmem [#allocation3], 50
        %v4057 = vld [vmem:[%s4056] ss:$2 sm:$0xf]
        %s4058 = scalar_lea.vmem [#allocation3], 51
        %v4059 = vld [vmem:[%s4058] ss:$2 sm:$0xf]
        %s4060 = scalar_lea.vmem [#allocation3], 52
        %v4061 = vld [vmem:[%s4060] ss:$2 sm:$0xf]
        %s4062 = scalar_lea.vmem [#allocation3], 60
        %v4063 = vld [vmem:[%s4062] ss:$2 sm:$0xf]
        %s4064 = scalar_lea.vmem [#allocation3], 61
        %v4065 = vld [vmem:[%s4064] ss:$2 sm:$0xf]
        %s4066 = scalar_lea.vmem [#allocation3], 62
        %v4067 = vld [vmem:[%s4066] ss:$2 sm:$0xf]
        %v4068 = vpack.c.bf16 %v4053, %v4053
        %v4069 = vpack.c.bf16 %v4054, %v4054
        %v4070 = vpack.c.bf16 %v4055, %v4055
        %v4071 = vpack.c.bf16 %v4057, %v4057
        %v4072 = vpack.c.bf16 %v4059, %v4059
        %v4073 = vpack.c.bf16 %v4061, %v4061
        %v4074 = vpack.c.bf16 %v4063, %v4063
        %v4075 = vpack.c.bf16 %v4065, %v4065
        %v4076 = vpack.c.bf16 %v4067, %v4067
        %4077 = vmatprep.subr.bf16.mxu0 0
        %4078 = vmatpush1.bf16.msra.mxu0 %v3474
        %4079 = vmatprep.subr.bf16.mxu0 0
        %4080 = vmatpush1.bf16.msra.mxu0 %v3473
        %4081 = vmatprep.subr.bf16.mxu0 0
        %4082 = vmatpush1.bf16.msra.mxu0 %v3472
        %4083 = vmatprep.subr.bf16.mxu0 0
        %4084 = vmatpush1.bf16.msra.mxu0 %v3471
        %4085 = vmatprep.subr.bf16.mxu0 0
        %4086 = vmatpush1.bf16.msra.mxu0 %v3470
        %4087 = vmatprep.subr.bf16.mxu0 0
        %4088 = vmatpush1.bf16.msra.mxu0 %v3469
        %4089 = vmatprep.subr.bf16.mxu0 0
        %4090 = vmatpush1.bf16.msra.mxu0 %v3468
        %4091 = vmatprep.subr.bf16.mxu0 0
        %4092 = vmatpush1.bf16.msra.mxu0 %v3467
        %4093 = vmatprep.subr.bf16.mxu0 0
        %4094 = vmatpush2.bf16.msra.mxu0 %v3482
        %4095 = vmatprep.subr.bf16.mxu0 0
        %4096 = vmatpush2.bf16.msra.mxu0 %v3481
        %4097 = vmatprep.subr.bf16.mxu0 0
        %4098 = vmatpush2.bf16.msra.mxu0 %v3480
        %4099 = vmatprep.subr.bf16.mxu0 0
        %4100 = vmatpush2.bf16.msra.mxu0 %v3479
        %4101 = vmatprep.subr.bf16.mxu0 0
        %4102 = vmatpush2.bf16.msra.mxu0 %v3478
        %4103 = vmatprep.subr.bf16.mxu0 0
        %4104 = vmatpush2.bf16.msra.mxu0 %v3477
        %4105 = vmatprep.subr.bf16.mxu0 0
        %4106 = vmatpush2.bf16.msra.mxu0 %v3476
        %4107 = vmatprep.subr.bf16.mxu0 0
        %4108 = vmatpush2.bf16.msra.mxu0 %v3475
        %4109 = vmatprep.mubr.bf16.mxu0 %v4069
        %4110 = vmatmul.mubr.bf16.gmra.mxu0 %v4068
        %v4111 = vpop.f32.mrf.mxu0
        %v4112 = vadd.f32 %v3178, %v4111
        %v4113 = vpop.f32.mrf.mxu0
        %v4114 = vpop.f32.mrf.mxu0
        %v4115 = vpop.f32.mrf.mxu0
        %4116 = vdwg.mxu0
        %4117 = vmatprep.subr.bf16.mxu0 0
        %4118 = vmatpush1.bf16.msra.mxu0 %v3490
        %4119 = vmatprep.subr.bf16.mxu0 0
        %4120 = vmatpush1.bf16.msra.mxu0 %v3489
        %4121 = vmatprep.subr.bf16.mxu0 0
        %4122 = vmatpush1.bf16.msra.mxu0 %v3488
        %4123 = vmatprep.subr.bf16.mxu0 0
        %4124 = vmatpush1.bf16.msra.mxu0 %v3487
        %4125 = vmatprep.subr.bf16.mxu0 0
        %4126 = vmatpush1.bf16.msra.mxu0 %v3486
        %4127 = vmatprep.subr.bf16.mxu0 0
        %4128 = vmatpush1.bf16.msra.mxu0 %v3485
        %4129 = vmatprep.subr.bf16.mxu0 0
        %4130 = vmatpush1.bf16.msra.mxu0 %v3484
        %4131 = vmatprep.subr.bf16.mxu0 0
        %4132 = vmatpush1.bf16.msra.mxu0 %v3483
        %4133 = vmatprep.subr.bf16.mxu0 0
        %4134 = vmatpush2.bf16.msra.mxu0 %v3498
        %4135 = vmatprep.subr.bf16.mxu0 0
        %4136 = vmatpush2.bf16.msra.mxu0 %v3497
        %4137 = vmatprep.subr.bf16.mxu0 0
        %4138 = vmatpush2.bf16.msra.mxu0 %v3496
        %4139 = vmatprep.subr.bf16.mxu0 0
        %4140 = vmatpush2.bf16.msra.mxu0 %v3495
        %4141 = vmatprep.subr.bf16.mxu0 0
        %4142 = vmatpush2.bf16.msra.mxu0 %v3494
        %4143 = vmatprep.subr.bf16.mxu0 0
        %4144 = vmatpush2.bf16.msra.mxu0 %v3493
        %4145 = vmatprep.subr.bf16.mxu0 0
        %4146 = vmatpush2.bf16.msra.mxu0 %v3492
        %4147 = vmatprep.subr.bf16.mxu0 0
        %4148 = vmatpush2.bf16.msra.mxu0 %v3491
        %4149 = vmatprep.mubr.bf16.mxu0 %v4071
        %4150 = vmatmul.mubr.bf16.gmra.mxu0 %v4070
        %v4151 = vpop.f32.mrf.mxu0
        %v4152 = vadd.f32 %v4112, %v4151
        %v4153 = vpop.f32.mrf.mxu0
        %v4154 = vpop.f32.mrf.mxu0
        %v4155 = vpop.f32.mrf.mxu0
        %4156 = vdwg.mxu0
        %4157 = vmatprep.subr.bf16.mxu0 0
        %4158 = vmatpush1.bf16.msra.mxu0 %v3506
        %4159 = vmatprep.subr.bf16.mxu0 0
        %4160 = vmatpush1.bf16.msra.mxu0 %v3505
        %4161 = vmatprep.subr.bf16.mxu0 0
        %4162 = vmatpush1.bf16.msra.mxu0 %v3504
        %4163 = vmatprep.subr.bf16.mxu0 0
        %4164 = vmatpush1.bf16.msra.mxu0 %v3503
        %4165 = vmatprep.subr.bf16.mxu0 0
        %4166 = vmatpush1.bf16.msra.mxu0 %v3502
        %4167 = vmatprep.subr.bf16.mxu0 0
        %4168 = vmatpush1.bf16.msra.mxu0 %v3501
        %4169 = vmatprep.subr.bf16.mxu0 0
        %4170 = vmatpush1.bf16.msra.mxu0 %v3500
        %4171 = vmatprep.subr.bf16.mxu0 0
        %4172 = vmatpush1.bf16.msra.mxu0 %v3499
        %4173 = vmatprep.subr.bf16.mxu0 0
        %4174 = vmatpush2.bf16.msra.mxu0 %v3514
        %4175 = vmatprep.subr.bf16.mxu0 0
        %4176 = vmatpush2.bf16.msra.mxu0 %v3513
        %4177 = vmatprep.subr.bf16.mxu0 0
        %4178 = vmatpush2.bf16.msra.mxu0 %v3512
        %4179 = vmatprep.subr.bf16.mxu0 0
        %4180 = vmatpush2.bf16.msra.mxu0 %v3511
        %4181 = vmatprep.subr.bf16.mxu0 0
        %4182 = vmatpush2.bf16.msra.mxu0 %v3510
        %4183 = vmatprep.subr.bf16.mxu0 0
        %4184 = vmatpush2.bf16.msra.mxu0 %v3509
        %4185 = vmatprep.subr.bf16.mxu0 0
        %4186 = vmatpush2.bf16.msra.mxu0 %v3508
        %4187 = vmatprep.subr.bf16.mxu0 0
        %4188 = vmatpush2.bf16.msra.mxu0 %v3507
        %4189 = vmatprep.mubr.bf16.mxu0 %v4073
        %4190 = vmatmul.mubr.bf16.gmra.mxu0 %v4072
        %v4191 = vpop.f32.mrf.mxu0
        %v4192 = vadd.f32 %v4152, %v4191
        %v4193 = vpop.f32.mrf.mxu0
        %v4194 = vpop.f32.mrf.mxu0
        %v4195 = vpop.f32.mrf.mxu0
        %4196 = vdwg.mxu0
        %4197 = vmatprep.subr.bf16.mxu0 0
        %4198 = vmatpush1.bf16.msra.mxu0 %v3522
        %4199 = vmatprep.subr.bf16.mxu0 0
        %4200 = vmatpush1.bf16.msra.mxu0 %v3521
        %4201 = vmatprep.subr.bf16.mxu0 0
        %4202 = vmatpush1.bf16.msra.mxu0 %v3520
        %4203 = vmatprep.subr.bf16.mxu0 0
        %4204 = vmatpush1.bf16.msra.mxu0 %v3519
        %4205 = vmatprep.subr.bf16.mxu0 0
        %4206 = vmatpush1.bf16.msra.mxu0 %v3518
        %4207 = vmatprep.subr.bf16.mxu0 0
        %4208 = vmatpush1.bf16.msra.mxu0 %v3517
        %4209 = vmatprep.subr.bf16.mxu0 0
        %4210 = vmatpush1.bf16.msra.mxu0 %v3516
        %4211 = vmatprep.subr.bf16.mxu0 0
        %4212 = vmatpush1.bf16.msra.mxu0 %v3515
        %4213 = vmatprep.subr.bf16.mxu0 0
        %4214 = vmatpush2.bf16.msra.mxu0 %v3530
        %4215 = vmatprep.subr.bf16.mxu0 0
        %4216 = vmatpush2.bf16.msra.mxu0 %v3529
        %4217 = vmatprep.subr.bf16.mxu0 0
        %4218 = vmatpush2.bf16.msra.mxu0 %v3528
        %4219 = vmatprep.subr.bf16.mxu0 0
        %4220 = vmatpush2.bf16.msra.mxu0 %v3527
        %4221 = vmatprep.subr.bf16.mxu0 0
        %4222 = vmatpush2.bf16.msra.mxu0 %v3526
        %4223 = vmatprep.subr.bf16.mxu0 0
        %4224 = vmatpush2.bf16.msra.mxu0 %v3525
        %4225 = vmatprep.subr.bf16.mxu0 0
        %4226 = vmatpush2.bf16.msra.mxu0 %v3524
        %4227 = vmatprep.subr.bf16.mxu0 0
        %4228 = vmatpush2.bf16.msra.mxu0 %v3523
        %4229 = vmatprep.mubr.bf16.mxu0 %v4075
        %4230 = vmatmul.mubr.bf16.gmra.mxu0 %v4074
        %v4231 = vpop.f32.mrf.mxu0
        %v4232 = vadd.f32 %v4192, %v4231
        %v4233 = vpop.f32.mrf.mxu0
        %v4234 = vpop.f32.mrf.mxu0
        %v4235 = vpop.f32.mrf.mxu0
        %4236 = vdwg.mxu0
        %4237 = vmatprep.subr.bf16.mxu0 0
        %4238 = vmatpush1.bf16.msra.mxu0 %v3538
        %4239 = vmatprep.subr.bf16.mxu0 0
        %4240 = vmatpush1.bf16.msra.mxu0 %v3537
        %4241 = vmatprep.subr.bf16.mxu0 0
        %4242 = vmatpush1.bf16.msra.mxu0 %v3536
        %4243 = vmatprep.subr.bf16.mxu0 0
        %4244 = vmatpush1.bf16.msra.mxu0 %v3535
        %4245 = vmatprep.subr.bf16.mxu0 0
        %4246 = vmatpush1.bf16.msra.mxu0 %v3534
        %4247 = vmatprep.subr.bf16.mxu0 0
        %4248 = vmatpush1.bf16.msra.mxu0 %v3533
        %4249 = vmatprep.subr.bf16.mxu0 0
        %4250 = vmatpush1.bf16.msra.mxu0 %v3532
        %4251 = vmatprep.subr.bf16.mxu0 0
        %4252 = vmatpush1.bf16.msra.mxu0 %v3531
        %4253 = vmatprep.subr.bf16.mxu0 0
        %4254 = vmatpush2.bf16.msra.mxu0 0
        %4255 = vmatprep.subr.bf16.mxu0 0
        %4256 = vmatpush2.bf16.msra.mxu0 0
        %4257 = vmatprep.subr.bf16.mxu0 0
        %4258 = vmatpush2.bf16.msra.mxu0 0
        %4259 = vmatprep.subr.bf16.mxu0 0
        %4260 = vmatpush2.bf16.msra.mxu0 0
        %4261 = vmatprep.subr.bf16.mxu0 0
        %4262 = vmatpush2.bf16.msra.mxu0 0
        %4263 = vmatprep.subr.bf16.mxu0 0
        %4264 = vmatpush2.bf16.msra.mxu0 0
        %4265 = vmatprep.subr.bf16.mxu0 0
        %4266 = vmatpush2.bf16.msra.mxu0 0
        %4267 = vmatprep.subr.bf16.mxu0 0
        %4268 = vmatpush2.bf16.msra.mxu0 0
        %4269 = vmatprep.mubr.bf16.mxu0 0
        %4270 = vmatmul.mubr.bf16.gmra.mxu0 %v4076
        %v4271 = vpop.f32.mrf.mxu0
        %v4272 = vadd.f32 %v4232, %v4271
        %v4273 = vpop.f32.mrf.mxu0
        %v4274 = vpop.f32.mrf.mxu0
        %v4275 = vpop.f32.mrf.mxu0
        %4276 = vdwg.mxu0
        %v4277 = vmul.f32 %v4272, 0.2
        %v4278 = vmax.f32 %v4272, %v4277
        %v4279 = vmul.f32 %v4278, %v3816
        %v4280 = vadd.f32 %v4279, %v3821
        %4281 = vst [vmem:[#allocation4 + $0x13] sm:$0xf] %v4280
        %v4282 = vld [vmem:[%s4062] ss:$2 sm:$0xf]
        %v4283 = vld [vmem:[%s4064] ss:$2 sm:$0xf]
        %v4284 = vld [vmem:[%s4066] ss:$2 sm:$0xf]
        %s4285 = scalar_lea.vmem [#allocation3], 70
        %v4286 = vld [vmem:[%s4285] ss:$2 sm:$0xf]
        %s4287 = scalar_lea.vmem [#allocation3], 71
        %v4288 = vld [vmem:[%s4287] ss:$2 sm:$0xf]
        %s4289 = scalar_lea.vmem [#allocation3], 72
        %v4290 = vld [vmem:[%s4289] ss:$2 sm:$0xf]
        %s4291 = scalar_lea.vmem [#allocation3], 80
        %v4292 = vld [vmem:[%s4291] ss:$2 sm:$0xf]
        %s4293 = scalar_lea.vmem [#allocation3], 81
        %v4294 = vld [vmem:[%s4293] ss:$2 sm:$0xf]
        %s4295 = scalar_lea.vmem [#allocation3], 82
        %v4296 = vld [vmem:[%s4295] ss:$2 sm:$0xf]
        %v4297 = vpack.c.bf16 %v4282, %v4282
        %v4298 = vpack.c.bf16 %v4283, %v4283
        %v4299 = vpack.c.bf16 %v4284, %v4284
        %v4300 = vpack.c.bf16 %v4286, %v4286
        %v4301 = vpack.c.bf16 %v4288, %v4288
        %v4302 = vpack.c.bf16 %v4290, %v4290
        %v4303 = vpack.c.bf16 %v4292, %v4292
        %v4304 = vpack.c.bf16 %v4294, %v4294
        %v4305 = vpack.c.bf16 %v4296, %v4296
        %4306 = vmatprep.subr.bf16.mxu0 0
        %4307 = vmatpush1.bf16.msra.mxu0 %v3474
        %4308 = vmatprep.subr.bf16.mxu0 0
        %4309 = vmatpush1.bf16.msra.mxu0 %v3473
        %4310 = vmatprep.subr.bf16.mxu0 0
        %4311 = vmatpush1.bf16.msra.mxu0 %v3472
        %4312 = vmatprep.subr.bf16.mxu0 0
        %4313 = vmatpush1.bf16.msra.mxu0 %v3471
        %4314 = vmatprep.subr.bf16.mxu0 0
        %4315 = vmatpush1.bf16.msra.mxu0 %v3470
        %4316 = vmatprep.subr.bf16.mxu0 0
        %4317 = vmatpush1.bf16.msra.mxu0 %v3469
        %4318 = vmatprep.subr.bf16.mxu0 0
        %4319 = vmatpush1.bf16.msra.mxu0 %v3468
        %4320 = vmatprep.subr.bf16.mxu0 0
        %4321 = vmatpush1.bf16.msra.mxu0 %v3467
        %4322 = vmatprep.subr.bf16.mxu0 0
        %4323 = vmatpush2.bf16.msra.mxu0 %v3482
        %4324 = vmatprep.subr.bf16.mxu0 0
        %4325 = vmatpush2.bf16.msra.mxu0 %v3481
        %4326 = vmatprep.subr.bf16.mxu0 0
        %4327 = vmatpush2.bf16.msra.mxu0 %v3480
        %4328 = vmatprep.subr.bf16.mxu0 0
        %4329 = vmatpush2.bf16.msra.mxu0 %v3479
        %4330 = vmatprep.subr.bf16.mxu0 0
        %4331 = vmatpush2.bf16.msra.mxu0 %v3478
        %4332 = vmatprep.subr.bf16.mxu0 0
        %4333 = vmatpush2.bf16.msra.mxu0 %v3477
        %4334 = vmatprep.subr.bf16.mxu0 0
        %4335 = vmatpush2.bf16.msra.mxu0 %v3476
        %4336 = vmatprep.subr.bf16.mxu0 0
        %4337 = vmatpush2.bf16.msra.mxu0 %v3475
        %4338 = vmatprep.mubr.bf16.mxu0 %v4298
        %4339 = vmatmul.mubr.bf16.gmra.mxu0 %v4297
        %v4340 = vpop.f32.mrf.mxu0
        %v4341 = vadd.f32 %v3178, %v4340
        %v4342 = vpop.f32.mrf.mxu0
        %v4343 = vpop.f32.mrf.mxu0
        %v4344 = vpop.f32.mrf.mxu0
        %4345 = vdwg.mxu0
        %4346 = vmatprep.subr.bf16.mxu0 0
        %4347 = vmatpush1.bf16.msra.mxu0 %v3490
        %4348 = vmatprep.subr.bf16.mxu0 0
        %4349 = vmatpush1.bf16.msra.mxu0 %v3489
        %4350 = vmatprep.subr.bf16.mxu0 0
        %4351 = vmatpush1.bf16.msra.mxu0 %v3488
        %4352 = vmatprep.subr.bf16.mxu0 0
        %4353 = vmatpush1.bf16.msra.mxu0 %v3487
        %4354 = vmatprep.subr.bf16.mxu0 0
        %4355 = vmatpush1.bf16.msra.mxu0 %v3486
        %4356 = vmatprep.subr.bf16.mxu0 0
        %4357 = vmatpush1.bf16.msra.mxu0 %v3485
        %4358 = vmatprep.subr.bf16.mxu0 0
        %4359 = vmatpush1.bf16.msra.mxu0 %v3484
        %4360 = vmatprep.subr.bf16.mxu0 0
        %4361 = vmatpush1.bf16.msra.mxu0 %v3483
        %4362 = vmatprep.subr.bf16.mxu0 0
        %4363 = vmatpush2.bf16.msra.mxu0 %v3498
        %4364 = vmatprep.subr.bf16.mxu0 0
        %4365 = vmatpush2.bf16.msra.mxu0 %v3497
        %4366 = vmatprep.subr.bf16.mxu0 0
        %4367 = vmatpush2.bf16.msra.mxu0 %v3496
        %4368 = vmatprep.subr.bf16.mxu0 0
        %4369 = vmatpush2.bf16.msra.mxu0 %v3495
        %4370 = vmatprep.subr.bf16.mxu0 0
        %4371 = vmatpush2.bf16.msra.mxu0 %v3494
        %4372 = vmatprep.subr.bf16.mxu0 0
        %4373 = vmatpush2.bf16.msra.mxu0 %v3493
        %4374 = vmatprep.subr.bf16.mxu0 0
        %4375 = vmatpush2.bf16.msra.mxu0 %v3492
        %4376 = vmatprep.subr.bf16.mxu0 0
        %4377 = vmatpush2.bf16.msra.mxu0 %v3491
        %4378 = vmatprep.mubr.bf16.mxu0 %v4300
        %4379 = vmatmul.mubr.bf16.gmra.mxu0 %v4299
        %v4380 = vpop.f32.mrf.mxu0
        %v4381 = vadd.f32 %v4341, %v4380
        %v4382 = vpop.f32.mrf.mxu0
        %v4383 = vpop.f32.mrf.mxu0
        %v4384 = vpop.f32.mrf.mxu0
        %4385 = vdwg.mxu0
        %4386 = vmatprep.subr.bf16.mxu0 0
        %4387 = vmatpush1.bf16.msra.mxu0 %v3506
        %4388 = vmatprep.subr.bf16.mxu0 0
        %4389 = vmatpush1.bf16.msra.mxu0 %v3505
        %4390 = vmatprep.subr.bf16.mxu0 0
        %4391 = vmatpush1.bf16.msra.mxu0 %v3504
        %4392 = vmatprep.subr.bf16.mxu0 0
        %4393 = vmatpush1.bf16.msra.mxu0 %v3503
        %4394 = vmatprep.subr.bf16.mxu0 0
        %4395 = vmatpush1.bf16.msra.mxu0 %v3502
        %4396 = vmatprep.subr.bf16.mxu0 0
        %4397 = vmatpush1.bf16.msra.mxu0 %v3501
        %4398 = vmatprep.subr.bf16.mxu0 0
        %4399 = vmatpush1.bf16.msra.mxu0 %v3500
        %4400 = vmatprep.subr.bf16.mxu0 0
        %4401 = vmatpush1.bf16.msra.mxu0 %v3499
        %4402 = vmatprep.subr.bf16.mxu0 0
        %4403 = vmatpush2.bf16.msra.mxu0 %v3514
        %4404 = vmatprep.subr.bf16.mxu0 0
        %4405 = vmatpush2.bf16.msra.mxu0 %v3513
        %4406 = vmatprep.subr.bf16.mxu0 0
        %4407 = vmatpush2.bf16.msra.mxu0 %v3512
        %4408 = vmatprep.subr.bf16.mxu0 0
        %4409 = vmatpush2.bf16.msra.mxu0 %v3511
        %4410 = vmatprep.subr.bf16.mxu0 0
        %4411 = vmatpush2.bf16.msra.mxu0 %v3510
        %4412 = vmatprep.subr.bf16.mxu0 0
        %4413 = vmatpush2.bf16.msra.mxu0 %v3509
        %4414 = vmatprep.subr.bf16.mxu0 0
        %4415 = vmatpush2.bf16.msra.mxu0 %v3508
        %4416 = vmatprep.subr.bf16.mxu0 0
        %4417 = vmatpush2.bf16.msra.mxu0 %v3507
        %4418 = vmatprep.mubr.bf16.mxu0 %v4302
        %4419 = vmatmul.mubr.bf16.gmra.mxu0 %v4301
        %v4420 = vpop.f32.mrf.mxu0
        %v4421 = vadd.f32 %v4381, %v4420
        %v4422 = vpop.f32.mrf.mxu0
        %v4423 = vpop.f32.mrf.mxu0
        %v4424 = vpop.f32.mrf.mxu0
        %4425 = vdwg.mxu0
        %4426 = vmatprep.subr.bf16.mxu0 0
        %4427 = vmatpush1.bf16.msra.mxu0 %v3522
        %4428 = vmatprep.subr.bf16.mxu0 0
        %4429 = vmatpush1.bf16.msra.mxu0 %v3521
        %4430 = vmatprep.subr.bf16.mxu0 0
        %4431 = vmatpush1.bf16.msra.mxu0 %v3520
        %4432 = vmatprep.subr.bf16.mxu0 0
        %4433 = vmatpush1.bf16.msra.mxu0 %v3519
        %4434 = vmatprep.subr.bf16.mxu0 0
        %4435 = vmatpush1.bf16.msra.mxu0 %v3518
        %4436 = vmatprep.subr.bf16.mxu0 0
        %4437 = vmatpush1.bf16.msra.mxu0 %v3517
        %4438 = vmatprep.subr.bf16.mxu0 0
        %4439 = vmatpush1.bf16.msra.mxu0 %v3516
        %4440 = vmatprep.subr.bf16.mxu0 0
        %4441 = vmatpush1.bf16.msra.mxu0 %v3515
        %4442 = vmatprep.subr.bf16.mxu0 0
        %4443 = vmatpush2.bf16.msra.mxu0 %v3530
        %4444 = vmatprep.subr.bf16.mxu0 0
        %4445 = vmatpush2.bf16.msra.mxu0 %v3529
        %4446 = vmatprep.subr.bf16.mxu0 0
        %4447 = vmatpush2.bf16.msra.mxu0 %v3528
        %4448 = vmatprep.subr.bf16.mxu0 0
        %4449 = vmatpush2.bf16.msra.mxu0 %v3527
        %4450 = vmatprep.subr.bf16.mxu0 0
        %4451 = vmatpush2.bf16.msra.mxu0 %v3526
        %4452 = vmatprep.subr.bf16.mxu0 0
        %4453 = vmatpush2.bf16.msra.mxu0 %v3525
        %4454 = vmatprep.subr.bf16.mxu0 0
        %4455 = vmatpush2.bf16.msra.mxu0 %v3524
        %4456 = vmatprep.subr.bf16.mxu0 0
        %4457 = vmatpush2.bf16.msra.mxu0 %v3523
        %4458 = vmatprep.mubr.bf16.mxu0 %v4304
        %4459 = vmatmul.mubr.bf16.gmra.mxu0 %v4303
        %v4460 = vpop.f32.mrf.mxu0
        %v4461 = vadd.f32 %v4421, %v4460
        %v4462 = vpop.f32.mrf.mxu0
        %v4463 = vpop.f32.mrf.mxu0
        %v4464 = vpop.f32.mrf.mxu0
        %4465 = vdwg.mxu0
        %4466 = vmatprep.subr.bf16.mxu0 0
        %4467 = vmatpush1.bf16.msra.mxu0 %v3538
        %4468 = vmatprep.subr.bf16.mxu0 0
        %4469 = vmatpush1.bf16.msra.mxu0 %v3537
        %4470 = vmatprep.subr.bf16.mxu0 0
        %4471 = vmatpush1.bf16.msra.mxu0 %v3536
        %4472 = vmatprep.subr.bf16.mxu0 0
        %4473 = vmatpush1.bf16.msra.mxu0 %v3535
        %4474 = vmatprep.subr.bf16.mxu0 0
        %4475 = vmatpush1.bf16.msra.mxu0 %v3534
        %4476 = vmatprep.subr.bf16.mxu0 0
        %4477 = vmatpush1.bf16.msra.mxu0 %v3533
        %4478 = vmatprep.subr.bf16.mxu0 0
        %4479 = vmatpush1.bf16.msra.mxu0 %v3532
        %4480 = vmatprep.subr.bf16.mxu0 0
        %4481 = vmatpush1.bf16.msra.mxu0 %v3531
        %4482 = vmatprep.subr.bf16.mxu0 0
        %4483 = vmatpush2.bf16.msra.mxu0 0
        %4484 = vmatprep.subr.bf16.mxu0 0
        %4485 = vmatpush2.bf16.msra.mxu0 0
        %4486 = vmatprep.subr.bf16.mxu0 0
        %4487 = vmatpush2.bf16.msra.mxu0 0
        %4488 = vmatprep.subr.bf16.mxu0 0
        %4489 = vmatpush2.bf16.msra.mxu0 0
        %4490 = vmatprep.subr.bf16.mxu0 0
        %4491 = vmatpush2.bf16.msra.mxu0 0
        %4492 = vmatprep.subr.bf16.mxu0 0
        %4493 = vmatpush2.bf16.msra.mxu0 0
        %4494 = vmatprep.subr.bf16.mxu0 0
        %4495 = vmatpush2.bf16.msra.mxu0 0
        %4496 = vmatprep.subr.bf16.mxu0 0
        %4497 = vmatpush2.bf16.msra.mxu0 0
        %4498 = vmatprep.mubr.bf16.mxu0 0
        %4499 = vmatmul.mubr.bf16.gmra.mxu0 %v4305
        %v4500 = vpop.f32.mrf.mxu0
        %v4501 = vadd.f32 %v4461, %v4500
        %v4502 = vpop.f32.mrf.mxu0
        %v4503 = vpop.f32.mrf.mxu0
        %v4504 = vpop.f32.mrf.mxu0
        %4505 = vdwg.mxu0
        %v4506 = vmul.f32 %v4501, 0.2
        %v4507 = vmax.f32 %v4501, %v4506
        %v4508 = vmul.f32 %v4507, %v3816
        %v4509 = vadd.f32 %v4508, %v3821
        %4510 = vst [vmem:[#allocation4 + $0x19] sm:$0xf] %v4509
        %4511 = vst [vmem:[#allocation5] sm:$0xff] 0.0
        %4512 = vst [vmem:[#allocation5 + $0x8] sm:$0xff] 0.0
        %v4513 = vld [vmem:[#allocation10] sm:$0xf]
        %v4514 = vld [vmem:[#allocation10 + $0x4] sm:$0xf]
        %v4515 = vld [vmem:[#allocation10 + $0x8] sm:$0xf]
        %v4516 = vld [vmem:[#allocation10 + $0xc] sm:$0xf]
        %v4517 = vld [vmem:[#allocation10 + $0x10] sm:$0xf]
        %v4518 = vld [vmem:[#allocation10 + $0x14] sm:$0xf]
        %v4519 = vld [vmem:[#allocation10 + $0x18] sm:$0xf]
        %v4520 = vld [vmem:[#allocation10 + $0x1c] sm:$0xf]
        %v4521 = vld [vmem:[#allocation10 + $0x20] sm:$0xf]
        %v4522 = vld [vmem:[#allocation10 + $0x24] sm:$0xf]
        %v4523 = vld [vmem:[#allocation10 + $0x28] sm:$0xf]
        %v4524 = vld [vmem:[#allocation10 + $0x2c] sm:$0xf]
        %v4525 = vld [vmem:[#allocation10 + $0x30] sm:$0xf]
        %v4526 = vld [vmem:[#allocation10 + $0x34] sm:$0xf]
        %v4527 = vld [vmem:[#allocation10 + $0x38] sm:$0xf]
        %v4528 = vld [vmem:[#allocation10 + $0x3c] sm:$0xf]
        %v4529 = vld [vmem:[#allocation10 + $0x40] sm:$0xf]
        %v4530 = vld [vmem:[#allocation10 + $0x44] sm:$0xf]
        %v4531 = vld [vmem:[#allocation10 + $0x48] sm:$0xf]
        %v4532 = vld [vmem:[#allocation10 + $0x4c] sm:$0xf]
        %v4533 = vld [vmem:[#allocation10 + $0x50] sm:$0xf]
        %v4534 = vld [vmem:[#allocation10 + $0x54] sm:$0xf]
        %v4535 = vld [vmem:[#allocation10 + $0x58] sm:$0xf]
        %v4536 = vld [vmem:[#allocation10 + $0x5c] sm:$0xf]
        %v4537 = vld [vmem:[#allocation10 + $0x60] sm:$0xf]
        %v4538 = vld [vmem:[#allocation10 + $0x64] sm:$0xf]
        %v4539 = vld [vmem:[#allocation10 + $0x68] sm:$0xf]
        %v4540 = vld [vmem:[#allocation10 + $0x6c] sm:$0xf]
        %v4541 = vld [vmem:[#allocation10 + $0x70] sm:$0xf]
        %v4542 = vld [vmem:[#allocation10 + $0x74] sm:$0xf]
        %v4543 = vld [vmem:[#allocation10 + $0x78] sm:$0xf]
        %v4544 = vld [vmem:[#allocation10 + $0x7c] sm:$0xf]
        %v4545 = vld [vmem:[#allocation10 + $0x80] sm:$0xf]
        %v4546 = vld [vmem:[#allocation10 + $0x84] sm:$0xf]
        %v4547 = vld [vmem:[#allocation10 + $0x88] sm:$0xf]
        %v4548 = vld [vmem:[#allocation10 + $0x8c] sm:$0xf]
        %v4549 = vld [vmem:[#allocation10 + $0x90] sm:$0xf]
        %v4550 = vld [vmem:[#allocation10 + $0x94] sm:$0xf]
        %v4551 = vld [vmem:[#allocation10 + $0x98] sm:$0xf]
        %v4552 = vld [vmem:[#allocation10 + $0x9c] sm:$0xf]
        %v4553 = vld [vmem:[#allocation10 + $0xa0] sm:$0xf]
        %v4554 = vld [vmem:[#allocation10 + $0xa4] sm:$0xf]
        %v4555 = vld [vmem:[#allocation10 + $0xa8] sm:$0xf]
        %v4556 = vld [vmem:[#allocation10 + $0xac] sm:$0xf]
        %v4557 = vld [vmem:[#allocation10 + $0xb0] sm:$0xf]
        %v4558 = vld [vmem:[#allocation10 + $0xb4] sm:$0xf]
        %v4559 = vld [vmem:[#allocation10 + $0xb8] sm:$0xf]
        %v4560 = vld [vmem:[#allocation10 + $0xbc] sm:$0xf]
        %v4561 = vld [vmem:[#allocation10 + $0xc0] sm:$0xf]
        %v4562 = vld [vmem:[#allocation10 + $0xc4] sm:$0xf]
        %v4563 = vld [vmem:[#allocation10 + $0xc8] sm:$0xf]
        %v4564 = vld [vmem:[#allocation10 + $0xcc] sm:$0xf]
        %v4565 = vld [vmem:[#allocation10 + $0xd0] sm:$0xf]
        %v4566 = vld [vmem:[#allocation10 + $0xd4] sm:$0xf]
        %v4567 = vld [vmem:[#allocation10 + $0xd8] sm:$0xf]
        %v4568 = vld [vmem:[#allocation10 + $0xdc] sm:$0xf]
        %v4569 = vld [vmem:[#allocation10 + $0xe0] sm:$0xf]
        %v4570 = vld [vmem:[#allocation10 + $0xe4] sm:$0xf]
        %v4571 = vld [vmem:[#allocation10 + $0xe8] sm:$0xf]
        %v4572 = vld [vmem:[#allocation10 + $0xec] sm:$0xf]
        %v4573 = vld [vmem:[#allocation10 + $0xf0] sm:$0xf]
        %v4574 = vld [vmem:[#allocation10 + $0xf4] sm:$0xf]
        %v4575 = vld [vmem:[#allocation10 + $0xf8] sm:$0xf]
        %v4576 = vld [vmem:[#allocation10 + $0xfc] sm:$0xf]
        %v4577 = vld [vmem:[#allocation10 + $0x100] sm:$0xf]
        %v4578 = vld [vmem:[#allocation10 + $0x104] sm:$0xf]
        %v4579 = vld [vmem:[#allocation10 + $0x108] sm:$0xf]
        %v4580 = vld [vmem:[#allocation10 + $0x10c] sm:$0xf]
        %v4581 = vld [vmem:[#allocation10 + $0x110] sm:$0xf]
        %v4582 = vld [vmem:[#allocation10 + $0x114] sm:$0xf]
        %v4583 = vld [vmem:[#allocation10 + $0x118] sm:$0xf]
        %v4584 = vld [vmem:[#allocation10 + $0x11c] sm:$0xf]
        %v4585 = vld [vmem:[#allocation10 + $0x120] sm:$0xf]
        %v4586 = vld [vmem:[#allocation10 + $0x124] sm:$0xf]
        %v4587 = vld [vmem:[#allocation10 + $0x128] sm:$0xf]
        %v4588 = vld [vmem:[#allocation10 + $0x12c] sm:$0xf]
        %v4589 = vld [vmem:[#allocation10 + $0x130] sm:$0xf]
        %v4590 = vld [vmem:[#allocation10 + $0x134] sm:$0xf]
        %v4591 = vld [vmem:[#allocation10 + $0x138] sm:$0xf]
        %v4592 = vld [vmem:[#allocation10 + $0x13c] sm:$0xf]
        %v4593 = vld [vmem:[#allocation10 + $0x140] sm:$0xf]
        %v4594 = vld [vmem:[#allocation10 + $0x144] sm:$0xf]
        %v4595 = vld [vmem:[#allocation10 + $0x148] sm:$0xf]
        %v4596 = vld [vmem:[#allocation10 + $0x14c] sm:$0xf]
        %v4597 = vld [vmem:[#allocation10 + $0x150] sm:$0xf]
        %v4598 = vld [vmem:[#allocation10 + $0x154] sm:$0xf]
        %v4599 = vld [vmem:[#allocation10 + $0x158] sm:$0xf]
        %v4600 = vld [vmem:[#allocation10 + $0x15c] sm:$0xf]
        %v4601 = vld [vmem:[#allocation10 + $0x160] sm:$0xf]
        %v4602 = vld [vmem:[#allocation10 + $0x164] sm:$0xf]
        %v4603 = vld [vmem:[#allocation10 + $0x168] sm:$0xf]
        %v4604 = vld [vmem:[#allocation10 + $0x16c] sm:$0xf]
        %v4605 = vld [vmem:[#allocation10 + $0x170] sm:$0xf]
        %v4606 = vld [vmem:[#allocation10 + $0x174] sm:$0xf]
        %v4607 = vld [vmem:[#allocation10 + $0x178] sm:$0xf]
        %v4608 = vld [vmem:[#allocation10 + $0x17c] sm:$0xf]
        %v4609 = vld [vmem:[#allocation10 + $0x180] sm:$0xf]
        %v4610 = vld [vmem:[#allocation10 + $0x184] sm:$0xf]
        %v4611 = vld [vmem:[#allocation10 + $0x188] sm:$0xf]
        %v4612 = vld [vmem:[#allocation10 + $0x18c] sm:$0xf]
        %v4613 = vld [vmem:[#allocation10 + $0x190] sm:$0xf]
        %v4614 = vld [vmem:[#allocation10 + $0x194] sm:$0xf]
        %v4615 = vld [vmem:[#allocation10 + $0x198] sm:$0xf]
        %v4616 = vld [vmem:[#allocation10 + $0x19c] sm:$0xf]
        %v4617 = vld [vmem:[#allocation10 + $0x1a0] sm:$0xf]
        %v4618 = vld [vmem:[#allocation10 + $0x1a4] sm:$0xf]
        %v4619 = vld [vmem:[#allocation10 + $0x1a8] sm:$0xf]
        %v4620 = vld [vmem:[#allocation10 + $0x1ac] sm:$0xf]
        %v4621 = vld [vmem:[#allocation10 + $0x1b0] sm:$0xf]
        %v4622 = vld [vmem:[#allocation10 + $0x1b4] sm:$0xf]
        %v4623 = vld [vmem:[#allocation10 + $0x1b8] sm:$0xf]
        %v4624 = vld [vmem:[#allocation10 + $0x1bc] sm:$0xf]
        %v4625 = vld [vmem:[#allocation10 + $0x1c0] sm:$0xf]
        %v4626 = vld [vmem:[#allocation10 + $0x1c4] sm:$0xf]
        %v4627 = vld [vmem:[#allocation10 + $0x1c8] sm:$0xf]
        %v4628 = vld [vmem:[#allocation10 + $0x1cc] sm:$0xf]
        %v4629 = vld [vmem:[#allocation10 + $0x1d0] sm:$0xf]
        %v4630 = vld [vmem:[#allocation10 + $0x1d4] sm:$0xf]
        %v4631 = vld [vmem:[#allocation10 + $0x1d8] sm:$0xf]
        %v4632 = vld [vmem:[#allocation10 + $0x1dc] sm:$0xf]
        %v4633 = vld [vmem:[#allocation10 + $0x1e0] sm:$0xf]
        %v4634 = vld [vmem:[#allocation10 + $0x1e4] sm:$0xf]
        %v4635 = vld [vmem:[#allocation10 + $0x1e8] sm:$0xf]
        %v4636 = vld [vmem:[#allocation10 + $0x1ec] sm:$0xf]
        %v4637 = vld [vmem:[#allocation10 + $0x1f0] sm:$0xf]
        %v4638 = vld [vmem:[#allocation10 + $0x1f4] sm:$0xf]
        %v4639 = vld [vmem:[#allocation10 + $0x1f8] sm:$0xf]
        %v4640 = vld [vmem:[#allocation10 + $0x1fc] sm:$0xf]
        %v4641 = vld [vmem:[#allocation10 + $0x200] sm:$0xf]
        %v4642 = vld [vmem:[#allocation10 + $0x204] sm:$0xf]
        %v4643 = vld [vmem:[#allocation10 + $0x208] sm:$0xf]
        %v4644 = vld [vmem:[#allocation10 + $0x20c] sm:$0xf]
        %v4645 = vld [vmem:[#allocation10 + $0x210] sm:$0xf]
        %v4646 = vld [vmem:[#allocation10 + $0x214] sm:$0xf]
        %v4647 = vld [vmem:[#allocation10 + $0x218] sm:$0xf]
        %v4648 = vld [vmem:[#allocation10 + $0x21c] sm:$0xf]
        %v4649 = vld [vmem:[#allocation10 + $0x220] sm:$0xf]
        %v4650 = vld [vmem:[#allocation10 + $0x224] sm:$0xf]
        %v4651 = vld [vmem:[#allocation10 + $0x228] sm:$0xf]
        %v4652 = vld [vmem:[#allocation10 + $0x22c] sm:$0xf]
        %v4653 = vld [vmem:[#allocation10 + $0x230] sm:$0xf]
        %v4654 = vld [vmem:[#allocation10 + $0x234] sm:$0xf]
        %v4655 = vld [vmem:[#allocation10 + $0x238] sm:$0xf]
        %v4656 = vld [vmem:[#allocation10 + $0x23c] sm:$0xf]
        %v4657 = vld [vmem:[%s6] sm:$0x1]
        %v4658 = vld [vmem:[%s6 + $0x1] sm:$0x1]
        %v4659 = vld [vmem:[%s6 + $0x2] sm:$0x1]
        %v4660 = vld [vmem:[#allocation4] ss:$2 sm:$0x3]
        %s4661 = scalar_lea.vmem [#allocation4], 1
        %v4662 = vld [vmem:[%s4661] ss:$2 sm:$0x3]
        %s4663 = scalar_lea.vmem [#allocation4], 2
        %v4664 = vld [vmem:[%s4663] ss:$2 sm:$0x3]
        %s4665 = scalar_lea.vmem [#allocation4], 6
        %v4666 = vld [vmem:[%s4665] ss:$2 sm:$0x3]
        %s4667 = scalar_lea.vmem [#allocation4], 7
        %v4668 = vld [vmem:[%s4667] ss:$2 sm:$0x3]
        %s4669 = scalar_lea.vmem [#allocation4], 8
        %v4670 = vld [vmem:[%s4669] ss:$2 sm:$0x3]
        %s4671 = scalar_lea.vmem [#allocation4], 12
        %v4672 = vld [vmem:[%s4671] ss:$2 sm:$0x3]
        %s4673 = scalar_lea.vmem [#allocation4], 13
        %v4674 = vld [vmem:[%s4673] ss:$2 sm:$0x3]
        %s4675 = scalar_lea.vmem [#allocation4], 14
        %v4676 = vld [vmem:[%s4675] ss:$2 sm:$0x3]
        %v4677 = vpack.c.bf16 %v4660, %v4660
        %v4678 = vpack.c.bf16 %v4662, %v4662
        %v4679 = vpack.c.bf16 %v4664, %v4664
        %v4680 = vpack.c.bf16 %v4666, %v4666
        %v4681 = vpack.c.bf16 %v4668, %v4668
        %v4682 = vpack.c.bf16 %v4670, %v4670
        %v4683 = vpack.c.bf16 %v4672, %v4672
        %v4684 = vpack.c.bf16 %v4674, %v4674
        %v4685 = vpack.c.bf16 %v4676, %v4676
        %v4686 = vlaneseq
        %v4687 = vshrl.u32 %v4686, 7
        %v4688 = vsub.s32 0, %v4687
        %v4689 = vrot.slane %v4657, %v4688
        %v4834 = vunpack.c.l.b16 %v4513
        %v4835 = vunpack.c.l.b16 %v4514
        %v4836 = vunpack.c.l.b16 %v4515
        %v4837 = vunpack.c.l.b16 %v4516
        %v4838 = vunpack.c.l.b16 %v4517
        %v4839 = vunpack.c.l.b16 %v4518
        %v4840 = vunpack.c.l.b16 %v4519
        %v4841 = vunpack.c.l.b16 %v4520
        %v4842 = vunpack.c.l.b16 %v4521
        %v4843 = vunpack.c.l.b16 %v4522
        %v4844 = vunpack.c.l.b16 %v4523
        %v4845 = vunpack.c.l.b16 %v4524
        %v4846 = vunpack.c.l.b16 %v4525
        %v4847 = vunpack.c.l.b16 %v4526
        %v4848 = vunpack.c.l.b16 %v4527
        %v4849 = vunpack.c.l.b16 %v4528
        %v4850 = vunpack.c.l.b16 %v4529
        %v4851 = vunpack.c.l.b16 %v4530
        %v4852 = vunpack.c.l.b16 %v4531
        %v4853 = vunpack.c.l.b16 %v4532
        %v4854 = vunpack.c.l.b16 %v4533
        %v4855 = vunpack.c.l.b16 %v4534
        %v4856 = vunpack.c.l.b16 %v4535
        %v4857 = vunpack.c.l.b16 %v4536
        %v4858 = vunpack.c.l.b16 %v4537
        %v4859 = vunpack.c.l.b16 %v4538
        %v4860 = vunpack.c.l.b16 %v4539
        %v4861 = vunpack.c.l.b16 %v4540
        %v4862 = vunpack.c.l.b16 %v4541
        %v4863 = vunpack.c.l.b16 %v4542
        %v4864 = vunpack.c.l.b16 %v4543
        %v4865 = vunpack.c.l.b16 %v4544
        %v4866 = vunpack.c.l.b16 %v4545
        %v4867 = vunpack.c.l.b16 %v4546
        %v4868 = vunpack.c.l.b16 %v4547
        %v4869 = vunpack.c.l.b16 %v4548
        %v4870 = vunpack.c.l.b16 %v4549
        %v4871 = vunpack.c.l.b16 %v4550
        %v4872 = vunpack.c.l.b16 %v4551
        %v4873 = vunpack.c.l.b16 %v4552
        %v4874 = vunpack.c.l.b16 %v4553
        %v4875 = vunpack.c.l.b16 %v4554
        %v4876 = vunpack.c.l.b16 %v4555
        %v4877 = vunpack.c.l.b16 %v4556
        %v4878 = vunpack.c.l.b16 %v4557
        %v4879 = vunpack.c.l.b16 %v4558
        %v4880 = vunpack.c.l.b16 %v4559
        %v4881 = vunpack.c.l.b16 %v4560
        %v4882 = vunpack.c.l.b16 %v4561
        %v4883 = vunpack.c.l.b16 %v4562
        %v4884 = vunpack.c.l.b16 %v4563
        %v4885 = vunpack.c.l.b16 %v4564
        %v4886 = vunpack.c.l.b16 %v4565
        %v4887 = vunpack.c.l.b16 %v4566
        %v4888 = vunpack.c.l.b16 %v4567
        %v4889 = vunpack.c.l.b16 %v4568
        %v4890 = vunpack.c.l.b16 %v4569
        %v4891 = vunpack.c.l.b16 %v4570
        %v4892 = vunpack.c.l.b16 %v4571
        %v4893 = vunpack.c.l.b16 %v4572
        %v4894 = vunpack.c.l.b16 %v4573
        %v4895 = vunpack.c.l.b16 %v4574
        %v4896 = vunpack.c.l.b16 %v4575
        %v4897 = vunpack.c.l.b16 %v4576
        %v4898 = vunpack.c.l.b16 %v4577
        %v4899 = vunpack.c.l.b16 %v4578
        %v4900 = vunpack.c.l.b16 %v4579
        %v4901 = vunpack.c.l.b16 %v4580
        %v4902 = vunpack.c.l.b16 %v4581
        %v4903 = vunpack.c.l.b16 %v4582
        %v4904 = vunpack.c.l.b16 %v4583
        %v4905 = vunpack.c.l.b16 %v4584
        %v4906 = vunpack.c.l.b16 %v4585
        %v4907 = vunpack.c.l.b16 %v4586
        %v4908 = vunpack.c.l.b16 %v4587
        %v4909 = vunpack.c.l.b16 %v4588
        %v4910 = vunpack.c.l.b16 %v4589
        %v4911 = vunpack.c.l.b16 %v4590
        %v4912 = vunpack.c.l.b16 %v4591
        %v4913 = vunpack.c.l.b16 %v4592
        %v4914 = vunpack.c.l.b16 %v4593
        %v4915 = vunpack.c.l.b16 %v4594
        %v4916 = vunpack.c.l.b16 %v4595
        %v4917 = vunpack.c.l.b16 %v4596
        %v4918 = vunpack.c.l.b16 %v4597
        %v4919 = vunpack.c.l.b16 %v4598
        %v4920 = vunpack.c.l.b16 %v4599
        %v4921 = vunpack.c.l.b16 %v4600
        %v4922 = vunpack.c.l.b16 %v4601
        %v4923 = vunpack.c.l.b16 %v4602
        %v4924 = vunpack.c.l.b16 %v4603
        %v4925 = vunpack.c.l.b16 %v4604
        %v4926 = vunpack.c.l.b16 %v4605
        %v4927 = vunpack.c.l.b16 %v4606
        %v4928 = vunpack.c.l.b16 %v4607
        %v4929 = vunpack.c.l.b16 %v4608
        %v4930 = vunpack.c.l.b16 %v4609
        %v4931 = vunpack.c.l.b16 %v4610
        %v4932 = vunpack.c.l.b16 %v4611
        %v4933 = vunpack.c.l.b16 %v4612
        %v4934 = vunpack.c.l.b16 %v4613
        %v4935 = vunpack.c.l.b16 %v4614
        %v4936 = vunpack.c.l.b16 %v4615
        %v4937 = vunpack.c.l.b16 %v4616
        %v4938 = vunpack.c.l.b16 %v4617
        %v4939 = vunpack.c.l.b16 %v4618
        %v4940 = vunpack.c.l.b16 %v4619
        %v4941 = vunpack.c.l.b16 %v4620
        %v4942 = vunpack.c.l.b16 %v4621
        %v4943 = vunpack.c.l.b16 %v4622
        %v4944 = vunpack.c.l.b16 %v4623
        %v4945 = vunpack.c.l.b16 %v4624
        %v4946 = vunpack.c.l.b16 %v4625
        %v4947 = vunpack.c.l.b16 %v4626
        %v4948 = vunpack.c.l.b16 %v4627
        %v4949 = vunpack.c.l.b16 %v4628
        %v4950 = vunpack.c.l.b16 %v4629
        %v4951 = vunpack.c.l.b16 %v4630
        %v4952 = vunpack.c.l.b16 %v4631
        %v4953 = vunpack.c.l.b16 %v4632
        %v4954 = vunpack.c.l.b16 %v4633
        %v4955 = vunpack.c.l.b16 %v4634
        %v4956 = vunpack.c.l.b16 %v4635
        %v4957 = vunpack.c.l.b16 %v4636
        %v4958 = vunpack.c.l.b16 %v4637
        %v4959 = vunpack.c.l.b16 %v4638
        %v4960 = vunpack.c.l.b16 %v4639
        %v4961 = vunpack.c.l.b16 %v4640
        %v4962 = vunpack.c.l.b16 %v4641
        %v4963 = vunpack.c.l.b16 %v4642
        %v4964 = vunpack.c.l.b16 %v4643
        %v4965 = vunpack.c.l.b16 %v4644
        %v4966 = vunpack.c.l.b16 %v4645
        %v4967 = vunpack.c.l.b16 %v4646
        %v4968 = vunpack.c.l.b16 %v4647
        %v4969 = vunpack.c.l.b16 %v4648
        %v4970 = vunpack.c.l.b16 %v4649
        %v4971 = vunpack.c.l.b16 %v4650
        %v4972 = vunpack.c.l.b16 %v4651
        %v4973 = vunpack.c.l.b16 %v4652
        %v4974 = vunpack.c.l.b16 %v4653
        %v4975 = vunpack.c.l.b16 %v4654
        %v4976 = vunpack.c.l.b16 %v4655
        %v4977 = vunpack.c.l.b16 %v4656
        %v4978 = vpack.c.b16 %v4835, %v4834
        %v4979 = vpack.c.b16 %v4837, %v4836
        %v4980 = vpack.c.b16 %v4839, %v4838
        %v4981 = vpack.c.b16 %v4841, %v4840
        %v4982 = vpack.c.b16 %v4843, %v4842
        %v4983 = vpack.c.b16 %v4845, %v4844
        %v4984 = vpack.c.b16 %v4847, %v4846
        %v4985 = vpack.c.b16 %v4849, %v4848
        %v4986 = vpack.c.b16 %v4851, %v4850
        %v4987 = vpack.c.b16 %v4853, %v4852
        %v4988 = vpack.c.b16 %v4855, %v4854
        %v4989 = vpack.c.b16 %v4857, %v4856
        %v4990 = vpack.c.b16 %v4859, %v4858
        %v4991 = vpack.c.b16 %v4861, %v4860
        %v4992 = vpack.c.b16 %v4863, %v4862
        %v4993 = vpack.c.b16 %v4865, %v4864
        %v4994 = vpack.c.b16 %v4867, %v4866
        %v4995 = vpack.c.b16 %v4869, %v4868
        %v4996 = vpack.c.b16 %v4871, %v4870
        %v4997 = vpack.c.b16 %v4873, %v4872
        %v4998 = vpack.c.b16 %v4875, %v4874
        %v4999 = vpack.c.b16 %v4877, %v4876
        %v5000 = vpack.c.b16 %v4879, %v4878
        %v5001 = vpack.c.b16 %v4881, %v4880
        %v5002 = vpack.c.b16 %v4883, %v4882
        %v5003 = vpack.c.b16 %v4885, %v4884
        %v5004 = vpack.c.b16 %v4887, %v4886
        %v5005 = vpack.c.b16 %v4889, %v4888
        %v5006 = vpack.c.b16 %v4891, %v4890
        %v5007 = vpack.c.b16 %v4893, %v4892
        %v5008 = vpack.c.b16 %v4895, %v4894
        %v5009 = vpack.c.b16 %v4897, %v4896
        %v5010 = vpack.c.b16 %v4899, %v4898
        %v5011 = vpack.c.b16 %v4901, %v4900
        %v5012 = vpack.c.b16 %v4903, %v4902
        %v5013 = vpack.c.b16 %v4905, %v4904
        %v5014 = vpack.c.b16 %v4907, %v4906
        %v5015 = vpack.c.b16 %v4909, %v4908
        %v5016 = vpack.c.b16 %v4911, %v4910
        %v5017 = vpack.c.b16 %v4913, %v4912
        %v5018 = vpack.c.b16 %v4915, %v4914
        %v5019 = vpack.c.b16 %v4917, %v4916
        %v5020 = vpack.c.b16 %v4919, %v4918
        %v5021 = vpack.c.b16 %v4921, %v4920
        %v5022 = vpack.c.b16 %v4923, %v4922
        %v5023 = vpack.c.b16 %v4925, %v4924
        %v5024 = vpack.c.b16 %v4927, %v4926
        %v5025 = vpack.c.b16 %v4929, %v4928
        %v5026 = vpack.c.b16 %v4931, %v4930
        %v5027 = vpack.c.b16 %v4933, %v4932
        %v5028 = vpack.c.b16 %v4935, %v4934
        %v5029 = vpack.c.b16 %v4937, %v4936
        %v5030 = vpack.c.b16 %v4939, %v4938
        %v5031 = vpack.c.b16 %v4941, %v4940
        %v5032 = vpack.c.b16 %v4943, %v4942
        %v5033 = vpack.c.b16 %v4945, %v4944
        %v5034 = vpack.c.b16 %v4947, %v4946
        %v5035 = vpack.c.b16 %v4949, %v4948
        %v5036 = vpack.c.b16 %v4951, %v4950
        %v5037 = vpack.c.b16 %v4953, %v4952
        %v5038 = vpack.c.b16 %v4955, %v4954
        %v5039 = vpack.c.b16 %v4957, %v4956
        %v5040 = vpack.c.b16 %v4959, %v4958
        %v5041 = vpack.c.b16 %v4961, %v4960
        %v5042 = vpack.c.b16 %v4963, %v4962
        %v5043 = vpack.c.b16 %v4965, %v4964
        %v5044 = vpack.c.b16 %v4967, %v4966
        %v5045 = vpack.c.b16 %v4969, %v4968
        %v5046 = vpack.c.b16 %v4971, %v4970
        %v5047 = vpack.c.b16 %v4973, %v4972
        %v5048 = vpack.c.b16 %v4975, %v4974
        %v5049 = vpack.c.b16 %v4977, %v4976
        %5122 = vmatprep.subr.bf16.mxu0 0
        %5123 = vmatpush1.bf16.msra.mxu0 %v4985
        %5124 = vmatprep.subr.bf16.mxu0 0
        %5125 = vmatpush1.bf16.msra.mxu0 %v4984
        %5126 = vmatprep.subr.bf16.mxu0 0
        %5127 = vmatpush1.bf16.msra.mxu0 %v4983
        %5128 = vmatprep.subr.bf16.mxu0 0
        %5129 = vmatpush1.bf16.msra.mxu0 %v4982
        %5130 = vmatprep.subr.bf16.mxu0 0
        %5131 = vmatpush1.bf16.msra.mxu0 %v4981
        %5132 = vmatprep.subr.bf16.mxu0 0
        %5133 = vmatpush1.bf16.msra.mxu0 %v4980
        %5134 = vmatprep.subr.bf16.mxu0 0
        %5135 = vmatpush1.bf16.msra.mxu0 %v4979
        %5136 = vmatprep.subr.bf16.mxu0 0
        %5137 = vmatpush1.bf16.msra.mxu0 %v4978
        %5138 = vmatprep.subr.bf16.mxu0 0
        %5139 = vmatpush2.bf16.msra.mxu0 %v4993
        %5140 = vmatprep.subr.bf16.mxu0 0
        %5141 = vmatpush2.bf16.msra.mxu0 %v4992
        %5142 = vmatprep.subr.bf16.mxu0 0
        %5143 = vmatpush2.bf16.msra.mxu0 %v4991
        %5144 = vmatprep.subr.bf16.mxu0 0
        %5145 = vmatpush2.bf16.msra.mxu0 %v4990
        %5146 = vmatprep.subr.bf16.mxu0 0
        %5147 = vmatpush2.bf16.msra.mxu0 %v4989
        %5148 = vmatprep.subr.bf16.mxu0 0
        %5149 = vmatpush2.bf16.msra.mxu0 %v4988
        %5150 = vmatprep.subr.bf16.mxu0 0
        %5151 = vmatpush2.bf16.msra.mxu0 %v4987
        %5152 = vmatprep.subr.bf16.mxu0 0
        %5153 = vmatpush2.bf16.msra.mxu0 %v4986
        %5154 = vmatprep.mubr.bf16.mxu0 %v4678
        %5155 = vmatmul.mubr.bf16.gmra.mxu0 %v4677
        %v5156 = vpop.f32.mrf.mxu0
        %v5157 = vadd.f32 %v4689, %v5156
        %v5158 = vpop.f32.mrf.mxu0
        %v5159 = vpop.f32.mrf.mxu0
        %v5160 = vpop.f32.mrf.mxu0
        %5161 = vdwg.mxu0
        %5162 = vmatprep.subr.bf16.mxu0 0
        %5163 = vmatpush1.bf16.msra.mxu0 %v5001
        %5164 = vmatprep.subr.bf16.mxu0 0
        %5165 = vmatpush1.bf16.msra.mxu0 %v5000
        %5166 = vmatprep.subr.bf16.mxu0 0
        %5167 = vmatpush1.bf16.msra.mxu0 %v4999
        %5168 = vmatprep.subr.bf16.mxu0 0
        %5169 = vmatpush1.bf16.msra.mxu0 %v4998
        %5170 = vmatprep.subr.bf16.mxu0 0
        %5171 = vmatpush1.bf16.msra.mxu0 %v4997
        %5172 = vmatprep.subr.bf16.mxu0 0
        %5173 = vmatpush1.bf16.msra.mxu0 %v4996
        %5174 = vmatprep.subr.bf16.mxu0 0
        %5175 = vmatpush1.bf16.msra.mxu0 %v4995
        %5176 = vmatprep.subr.bf16.mxu0 0
        %5177 = vmatpush1.bf16.msra.mxu0 %v4994
        %5178 = vmatprep.subr.bf16.mxu0 0
        %5179 = vmatpush2.bf16.msra.mxu0 %v5009
        %5180 = vmatprep.subr.bf16.mxu0 0
        %5181 = vmatpush2.bf16.msra.mxu0 %v5008
        %5182 = vmatprep.subr.bf16.mxu0 0
        %5183 = vmatpush2.bf16.msra.mxu0 %v5007
        %5184 = vmatprep.subr.bf16.mxu0 0
        %5185 = vmatpush2.bf16.msra.mxu0 %v5006
        %5186 = vmatprep.subr.bf16.mxu0 0
        %5187 = vmatpush2.bf16.msra.mxu0 %v5005
        %5188 = vmatprep.subr.bf16.mxu0 0
        %5189 = vmatpush2.bf16.msra.mxu0 %v5004
        %5190 = vmatprep.subr.bf16.mxu0 0
        %5191 = vmatpush2.bf16.msra.mxu0 %v5003
        %5192 = vmatprep.subr.bf16.mxu0 0
        %5193 = vmatpush2.bf16.msra.mxu0 %v5002
        %5194 = vmatprep.mubr.bf16.mxu0 %v4680
        %5195 = vmatmul.mubr.bf16.gmra.mxu0 %v4679
        %v5196 = vpop.f32.mrf.mxu0
        %v5197 = vadd.f32 %v5157, %v5196
        %v5198 = vpop.f32.mrf.mxu0
        %v5199 = vpop.f32.mrf.mxu0
        %v5200 = vpop.f32.mrf.mxu0
        %5201 = vdwg.mxu0
        %5202 = vmatprep.subr.bf16.mxu0 0
        %5203 = vmatpush1.bf16.msra.mxu0 %v5017
        %5204 = vmatprep.subr.bf16.mxu0 0
        %5205 = vmatpush1.bf16.msra.mxu0 %v5016
        %5206 = vmatprep.subr.bf16.mxu0 0
        %5207 = vmatpush1.bf16.msra.mxu0 %v5015
        %5208 = vmatprep.subr.bf16.mxu0 0
        %5209 = vmatpush1.bf16.msra.mxu0 %v5014
        %5210 = vmatprep.subr.bf16.mxu0 0
        %5211 = vmatpush1.bf16.msra.mxu0 %v5013
        %5212 = vmatprep.subr.bf16.mxu0 0
        %5213 = vmatpush1.bf16.msra.mxu0 %v5012
        %5214 = vmatprep.subr.bf16.mxu0 0
        %5215 = vmatpush1.bf16.msra.mxu0 %v5011
        %5216 = vmatprep.subr.bf16.mxu0 0
        %5217 = vmatpush1.bf16.msra.mxu0 %v5010
        %5218 = vmatprep.subr.bf16.mxu0 0
        %5219 = vmatpush2.bf16.msra.mxu0 %v5025
        %5220 = vmatprep.subr.bf16.mxu0 0
        %5221 = vmatpush2.bf16.msra.mxu0 %v5024
        %5222 = vmatprep.subr.bf16.mxu0 0
        %5223 = vmatpush2.bf16.msra.mxu0 %v5023
        %5224 = vmatprep.subr.bf16.mxu0 0
        %5225 = vmatpush2.bf16.msra.mxu0 %v5022
        %5226 = vmatprep.subr.bf16.mxu0 0
        %5227 = vmatpush2.bf16.msra.mxu0 %v5021
        %5228 = vmatprep.subr.bf16.mxu0 0
        %5229 = vmatpush2.bf16.msra.mxu0 %v5020
        %5230 = vmatprep.subr.bf16.mxu0 0
        %5231 = vmatpush2.bf16.msra.mxu0 %v5019
        %5232 = vmatprep.subr.bf16.mxu0 0
        %5233 = vmatpush2.bf16.msra.mxu0 %v5018
        %5234 = vmatprep.mubr.bf16.mxu0 %v4682
        %5235 = vmatmul.mubr.bf16.gmra.mxu0 %v4681
        %v5236 = vpop.f32.mrf.mxu0
        %v5237 = vadd.f32 %v5197, %v5236
        %v5238 = vpop.f32.mrf.mxu0
        %v5239 = vpop.f32.mrf.mxu0
        %v5240 = vpop.f32.mrf.mxu0
        %5241 = vdwg.mxu0
        %5242 = vmatprep.subr.bf16.mxu0 0
        %5243 = vmatpush1.bf16.msra.mxu0 %v5033
        %5244 = vmatprep.subr.bf16.mxu0 0
        %5245 = vmatpush1.bf16.msra.mxu0 %v5032
        %5246 = vmatprep.subr.bf16.mxu0 0
        %5247 = vmatpush1.bf16.msra.mxu0 %v5031
        %5248 = vmatprep.subr.bf16.mxu0 0
        %5249 = vmatpush1.bf16.msra.mxu0 %v5030
        %5250 = vmatprep.subr.bf16.mxu0 0
        %5251 = vmatpush1.bf16.msra.mxu0 %v5029
        %5252 = vmatprep.subr.bf16.mxu0 0
        %5253 = vmatpush1.bf16.msra.mxu0 %v5028
        %5254 = vmatprep.subr.bf16.mxu0 0
        %5255 = vmatpush1.bf16.msra.mxu0 %v5027
        %5256 = vmatprep.subr.bf16.mxu0 0
        %5257 = vmatpush1.bf16.msra.mxu0 %v5026
        %5258 = vmatprep.subr.bf16.mxu0 0
        %5259 = vmatpush2.bf16.msra.mxu0 %v5041
        %5260 = vmatprep.subr.bf16.mxu0 0
        %5261 = vmatpush2.bf16.msra.mxu0 %v5040
        %5262 = vmatprep.subr.bf16.mxu0 0
        %5263 = vmatpush2.bf16.msra.mxu0 %v5039
        %5264 = vmatprep.subr.bf16.mxu0 0
        %5265 = vmatpush2.bf16.msra.mxu0 %v5038
        %5266 = vmatprep.subr.bf16.mxu0 0
        %5267 = vmatpush2.bf16.msra.mxu0 %v5037
        %5268 = vmatprep.subr.bf16.mxu0 0
        %5269 = vmatpush2.bf16.msra.mxu0 %v5036
        %5270 = vmatprep.subr.bf16.mxu0 0
        %5271 = vmatpush2.bf16.msra.mxu0 %v5035
        %5272 = vmatprep.subr.bf16.mxu0 0
        %5273 = vmatpush2.bf16.msra.mxu0 %v5034
        %5274 = vmatprep.mubr.bf16.mxu0 %v4684
        %5275 = vmatmul.mubr.bf16.gmra.mxu0 %v4683
        %v5276 = vpop.f32.mrf.mxu0
        %v5277 = vadd.f32 %v5237, %v5276
        %v5278 = vpop.f32.mrf.mxu0
        %v5279 = vpop.f32.mrf.mxu0
        %v5280 = vpop.f32.mrf.mxu0
        %5281 = vdwg.mxu0
        %5282 = vmatprep.subr.bf16.mxu0 0
        %5283 = vmatpush1.bf16.msra.mxu0 %v5049
        %5284 = vmatprep.subr.bf16.mxu0 0
        %5285 = vmatpush1.bf16.msra.mxu0 %v5048
        %5286 = vmatprep.subr.bf16.mxu0 0
        %5287 = vmatpush1.bf16.msra.mxu0 %v5047
        %5288 = vmatprep.subr.bf16.mxu0 0
        %5289 = vmatpush1.bf16.msra.mxu0 %v5046
        %5290 = vmatprep.subr.bf16.mxu0 0
        %5291 = vmatpush1.bf16.msra.mxu0 %v5045
        %5292 = vmatprep.subr.bf16.mxu0 0
        %5293 = vmatpush1.bf16.msra.mxu0 %v5044
        %5294 = vmatprep.subr.bf16.mxu0 0
        %5295 = vmatpush1.bf16.msra.mxu0 %v5043
        %5296 = vmatprep.subr.bf16.mxu0 0
        %5297 = vmatpush1.bf16.msra.mxu0 %v5042
        %5298 = vmatprep.subr.bf16.mxu0 0
        %5299 = vmatpush2.bf16.msra.mxu0 0
        %5300 = vmatprep.subr.bf16.mxu0 0
        %5301 = vmatpush2.bf16.msra.mxu0 0
        %5302 = vmatprep.subr.bf16.mxu0 0
        %5303 = vmatpush2.bf16.msra.mxu0 0
        %5304 = vmatprep.subr.bf16.mxu0 0
        %5305 = vmatpush2.bf16.msra.mxu0 0
        %5306 = vmatprep.subr.bf16.mxu0 0
        %5307 = vmatpush2.bf16.msra.mxu0 0
        %5308 = vmatprep.subr.bf16.mxu0 0
        %5309 = vmatpush2.bf16.msra.mxu0 0
        %5310 = vmatprep.subr.bf16.mxu0 0
        %5311 = vmatpush2.bf16.msra.mxu0 0
        %5312 = vmatprep.subr.bf16.mxu0 0
        %5313 = vmatpush2.bf16.msra.mxu0 0
        %5314 = vmatprep.mubr.bf16.mxu0 0
        %5315 = vmatmul.mubr.bf16.gmra.mxu0 %v4685
        %v5316 = vpop.f32.mrf.mxu0
        %v5317 = vadd.f32 %v5277, %v5316
        %v5318 = vpop.f32.mrf.mxu0
        %v5319 = vpop.f32.mrf.mxu0
        %v5320 = vpop.f32.mrf.mxu0
        %5321 = vdwg.mxu0
        %v5322 = vmul.f32 %v5317, 0.2
        %v5323 = vmax.f32 %v5317, %v5322
        %v5324 = vlaneseq
        %v5325 = vshrl.u32 %v5324, 7
        %v5326 = vsub.s32 0, %v5325
        %v5327 = vrot.slane %v4658, %v5326
        %v5328 = vmul.f32 %v5323, %v5327
        %v5329 = vlaneseq
        %v5330 = vshrl.u32 %v5329, 7
        %v5331 = vsub.s32 0, %v5330
        %v5332 = vrot.slane %v4659, %v5331
        %v5333 = vadd.f32 %v5328, %v5332
        %5334 = vst [vmem:[#allocation5 + $0x5] sm:$0x3] %v5333
        %v5335 = vld [vmem:[%s4671] ss:$2 sm:$0x3]
        %v5336 = vld [vmem:[%s4673] ss:$2 sm:$0x3]
        %v5337 = vld [vmem:[%s4675] ss:$2 sm:$0x3]
        %s5338 = scalar_lea.vmem [#allocation4], 18
        %v5339 = vld [vmem:[%s5338] ss:$2 sm:$0x3]
        %s5340 = scalar_lea.vmem [#allocation4], 19
        %v5341 = vld [vmem:[%s5340] ss:$2 sm:$0x3]
        %s5342 = scalar_lea.vmem [#allocation4], 20
        %v5343 = vld [vmem:[%s5342] ss:$2 sm:$0x3]
        %s5344 = scalar_lea.vmem [#allocation4], 24
        %v5345 = vld [vmem:[%s5344] ss:$2 sm:$0x3]
        %s5346 = scalar_lea.vmem [#allocation4], 25
        %v5347 = vld [vmem:[%s5346] ss:$2 sm:$0x3]
        %s5348 = scalar_lea.vmem [#allocation4], 26
        %v5349 = vld [vmem:[%s5348] ss:$2 sm:$0x3]
        %v5350 = vpack.c.bf16 %v5335, %v5335
        %v5351 = vpack.c.bf16 %v5336, %v5336
        %v5352 = vpack.c.bf16 %v5337, %v5337
        %v5353 = vpack.c.bf16 %v5339, %v5339
        %v5354 = vpack.c.bf16 %v5341, %v5341
        %v5355 = vpack.c.bf16 %v5343, %v5343
        %v5356 = vpack.c.bf16 %v5345, %v5345
        %v5357 = vpack.c.bf16 %v5347, %v5347
        %v5358 = vpack.c.bf16 %v5349, %v5349
        %5359 = vmatprep.subr.bf16.mxu0 0
        %5360 = vmatpush1.bf16.msra.mxu0 %v4985
        %5361 = vmatprep.subr.bf16.mxu0 0
        %5362 = vmatpush1.bf16.msra.mxu0 %v4984
        %5363 = vmatprep.subr.bf16.mxu0 0
        %5364 = vmatpush1.bf16.msra.mxu0 %v4983
        %5365 = vmatprep.subr.bf16.mxu0 0
        %5366 = vmatpush1.bf16.msra.mxu0 %v4982
        %5367 = vmatprep.subr.bf16.mxu0 0
        %5368 = vmatpush1.bf16.msra.mxu0 %v4981
        %5369 = vmatprep.subr.bf16.mxu0 0
        %5370 = vmatpush1.bf16.msra.mxu0 %v4980
        %5371 = vmatprep.subr.bf16.mxu0 0
        %5372 = vmatpush1.bf16.msra.mxu0 %v4979
        %5373 = vmatprep.subr.bf16.mxu0 0
        %5374 = vmatpush1.bf16.msra.mxu0 %v4978
        %5375 = vmatprep.subr.bf16.mxu0 0
        %5376 = vmatpush2.bf16.msra.mxu0 %v4993
        %5377 = vmatprep.subr.bf16.mxu0 0
        %5378 = vmatpush2.bf16.msra.mxu0 %v4992
        %5379 = vmatprep.subr.bf16.mxu0 0
        %5380 = vmatpush2.bf16.msra.mxu0 %v4991
        %5381 = vmatprep.subr.bf16.mxu0 0
        %5382 = vmatpush2.bf16.msra.mxu0 %v4990
        %5383 = vmatprep.subr.bf16.mxu0 0
        %5384 = vmatpush2.bf16.msra.mxu0 %v4989
        %5385 = vmatprep.subr.bf16.mxu0 0
        %5386 = vmatpush2.bf16.msra.mxu0 %v4988
        %5387 = vmatprep.subr.bf16.mxu0 0
        %5388 = vmatpush2.bf16.msra.mxu0 %v4987
        %5389 = vmatprep.subr.bf16.mxu0 0
        %5390 = vmatpush2.bf16.msra.mxu0 %v4986
        %5391 = vmatprep.mubr.bf16.mxu0 %v5351
        %5392 = vmatmul.mubr.bf16.gmra.mxu0 %v5350
        %v5393 = vpop.f32.mrf.mxu0
        %v5394 = vadd.f32 %v4689, %v5393
        %v5395 = vpop.f32.mrf.mxu0
        %v5396 = vpop.f32.mrf.mxu0
        %v5397 = vpop.f32.mrf.mxu0
        %5398 = vdwg.mxu0
        %5399 = vmatprep.subr.bf16.mxu0 0
        %5400 = vmatpush1.bf16.msra.mxu0 %v5001
        %5401 = vmatprep.subr.bf16.mxu0 0
        %5402 = vmatpush1.bf16.msra.mxu0 %v5000
        %5403 = vmatprep.subr.bf16.mxu0 0
        %5404 = vmatpush1.bf16.msra.mxu0 %v4999
        %5405 = vmatprep.subr.bf16.mxu0 0
        %5406 = vmatpush1.bf16.msra.mxu0 %v4998
        %5407 = vmatprep.subr.bf16.mxu0 0
        %5408 = vmatpush1.bf16.msra.mxu0 %v4997
        %5409 = vmatprep.subr.bf16.mxu0 0
        %5410 = vmatpush1.bf16.msra.mxu0 %v4996
        %5411 = vmatprep.subr.bf16.mxu0 0
        %5412 = vmatpush1.bf16.msra.mxu0 %v4995
        %5413 = vmatprep.subr.bf16.mxu0 0
        %5414 = vmatpush1.bf16.msra.mxu0 %v4994
        %5415 = vmatprep.subr.bf16.mxu0 0
        %5416 = vmatpush2.bf16.msra.mxu0 %v5009
        %5417 = vmatprep.subr.bf16.mxu0 0
        %5418 = vmatpush2.bf16.msra.mxu0 %v5008
        %5419 = vmatprep.subr.bf16.mxu0 0
        %5420 = vmatpush2.bf16.msra.mxu0 %v5007
        %5421 = vmatprep.subr.bf16.mxu0 0
        %5422 = vmatpush2.bf16.msra.mxu0 %v5006
        %5423 = vmatprep.subr.bf16.mxu0 0
        %5424 = vmatpush2.bf16.msra.mxu0 %v5005
        %5425 = vmatprep.subr.bf16.mxu0 0
        %5426 = vmatpush2.bf16.msra.mxu0 %v5004
        %5427 = vmatprep.subr.bf16.mxu0 0
        %5428 = vmatpush2.bf16.msra.mxu0 %v5003
        %5429 = vmatprep.subr.bf16.mxu0 0
        %5430 = vmatpush2.bf16.msra.mxu0 %v5002
        %5431 = vmatprep.mubr.bf16.mxu0 %v5353
        %5432 = vmatmul.mubr.bf16.gmra.mxu0 %v5352
        %v5433 = vpop.f32.mrf.mxu0
        %v5434 = vadd.f32 %v5394, %v5433
        %v5435 = vpop.f32.mrf.mxu0
        %v5436 = vpop.f32.mrf.mxu0
        %v5437 = vpop.f32.mrf.mxu0
        %5438 = vdwg.mxu0
        %5439 = vmatprep.subr.bf16.mxu0 0
        %5440 = vmatpush1.bf16.msra.mxu0 %v5017
        %5441 = vmatprep.subr.bf16.mxu0 0
        %5442 = vmatpush1.bf16.msra.mxu0 %v5016
        %5443 = vmatprep.subr.bf16.mxu0 0
        %5444 = vmatpush1.bf16.msra.mxu0 %v5015
        %5445 = vmatprep.subr.bf16.mxu0 0
        %5446 = vmatpush1.bf16.msra.mxu0 %v5014
        %5447 = vmatprep.subr.bf16.mxu0 0
        %5448 = vmatpush1.bf16.msra.mxu0 %v5013
        %5449 = vmatprep.subr.bf16.mxu0 0
        %5450 = vmatpush1.bf16.msra.mxu0 %v5012
        %5451 = vmatprep.subr.bf16.mxu0 0
        %5452 = vmatpush1.bf16.msra.mxu0 %v5011
        %5453 = vmatprep.subr.bf16.mxu0 0
        %5454 = vmatpush1.bf16.msra.mxu0 %v5010
        %5455 = vmatprep.subr.bf16.mxu0 0
        %5456 = vmatpush2.bf16.msra.mxu0 %v5025
        %5457 = vmatprep.subr.bf16.mxu0 0
        %5458 = vmatpush2.bf16.msra.mxu0 %v5024
        %5459 = vmatprep.subr.bf16.mxu0 0
        %5460 = vmatpush2.bf16.msra.mxu0 %v5023
        %5461 = vmatprep.subr.bf16.mxu0 0
        %5462 = vmatpush2.bf16.msra.mxu0 %v5022
        %5463 = vmatprep.subr.bf16.mxu0 0
        %5464 = vmatpush2.bf16.msra.mxu0 %v5021
        %5465 = vmatprep.subr.bf16.mxu0 0
        %5466 = vmatpush2.bf16.msra.mxu0 %v5020
        %5467 = vmatprep.subr.bf16.mxu0 0
        %5468 = vmatpush2.bf16.msra.mxu0 %v5019
        %5469 = vmatprep.subr.bf16.mxu0 0
        %5470 = vmatpush2.bf16.msra.mxu0 %v5018
        %5471 = vmatprep.mubr.bf16.mxu0 %v5355
        %5472 = vmatmul.mubr.bf16.gmra.mxu0 %v5354
        %v5473 = vpop.f32.mrf.mxu0
        %v5474 = vadd.f32 %v5434, %v5473
        %v5475 = vpop.f32.mrf.mxu0
        %v5476 = vpop.f32.mrf.mxu0
        %v5477 = vpop.f32.mrf.mxu0
        %5478 = vdwg.mxu0
        %5479 = vmatprep.subr.bf16.mxu0 0
        %5480 = vmatpush1.bf16.msra.mxu0 %v5033
        %5481 = vmatprep.subr.bf16.mxu0 0
        %5482 = vmatpush1.bf16.msra.mxu0 %v5032
        %5483 = vmatprep.subr.bf16.mxu0 0
        %5484 = vmatpush1.bf16.msra.mxu0 %v5031
        %5485 = vmatprep.subr.bf16.mxu0 0
        %5486 = vmatpush1.bf16.msra.mxu0 %v5030
        %5487 = vmatprep.subr.bf16.mxu0 0
        %5488 = vmatpush1.bf16.msra.mxu0 %v5029
        %5489 = vmatprep.subr.bf16.mxu0 0
        %5490 = vmatpush1.bf16.msra.mxu0 %v5028
        %5491 = vmatprep.subr.bf16.mxu0 0
        %5492 = vmatpush1.bf16.msra.mxu0 %v5027
        %5493 = vmatprep.subr.bf16.mxu0 0
        %5494 = vmatpush1.bf16.msra.mxu0 %v5026
        %5495 = vmatprep.subr.bf16.mxu0 0
        %5496 = vmatpush2.bf16.msra.mxu0 %v5041
        %5497 = vmatprep.subr.bf16.mxu0 0
        %5498 = vmatpush2.bf16.msra.mxu0 %v5040
        %5499 = vmatprep.subr.bf16.mxu0 0
        %5500 = vmatpush2.bf16.msra.mxu0 %v5039
        %5501 = vmatprep.subr.bf16.mxu0 0
        %5502 = vmatpush2.bf16.msra.mxu0 %v5038
        %5503 = vmatprep.subr.bf16.mxu0 0
        %5504 = vmatpush2.bf16.msra.mxu0 %v5037
        %5505 = vmatprep.subr.bf16.mxu0 0
        %5506 = vmatpush2.bf16.msra.mxu0 %v5036
        %5507 = vmatprep.subr.bf16.mxu0 0
        %5508 = vmatpush2.bf16.msra.mxu0 %v5035
        %5509 = vmatprep.subr.bf16.mxu0 0
        %5510 = vmatpush2.bf16.msra.mxu0 %v5034
        %5511 = vmatprep.mubr.bf16.mxu0 %v5357
        %5512 = vmatmul.mubr.bf16.gmra.mxu0 %v5356
        %v5513 = vpop.f32.mrf.mxu0
        %v5514 = vadd.f32 %v5474, %v5513
        %v5515 = vpop.f32.mrf.mxu0
        %v5516 = vpop.f32.mrf.mxu0
        %v5517 = vpop.f32.mrf.mxu0
        %5518 = vdwg.mxu0
        %5519 = vmatprep.subr.bf16.mxu0 0
        %5520 = vmatpush1.bf16.msra.mxu0 %v5049
        %5521 = vmatprep.subr.bf16.mxu0 0
        %5522 = vmatpush1.bf16.msra.mxu0 %v5048
        %5523 = vmatprep.subr.bf16.mxu0 0
        %5524 = vmatpush1.bf16.msra.mxu0 %v5047
        %5525 = vmatprep.subr.bf16.mxu0 0
        %5526 = vmatpush1.bf16.msra.mxu0 %v5046
        %5527 = vmatprep.subr.bf16.mxu0 0
        %5528 = vmatpush1.bf16.msra.mxu0 %v5045
        %5529 = vmatprep.subr.bf16.mxu0 0
        %5530 = vmatpush1.bf16.msra.mxu0 %v5044
        %5531 = vmatprep.subr.bf16.mxu0 0
        %5532 = vmatpush1.bf16.msra.mxu0 %v5043
        %5533 = vmatprep.subr.bf16.mxu0 0
        %5534 = vmatpush1.bf16.msra.mxu0 %v5042
        %5535 = vmatprep.subr.bf16.mxu0 0
        %5536 = vmatpush2.bf16.msra.mxu0 0
        %5537 = vmatprep.subr.bf16.mxu0 0
        %5538 = vmatpush2.bf16.msra.mxu0 0
        %5539 = vmatprep.subr.bf16.mxu0 0
        %5540 = vmatpush2.bf16.msra.mxu0 0
        %5541 = vmatprep.subr.bf16.mxu0 0
        %5542 = vmatpush2.bf16.msra.mxu0 0
        %5543 = vmatprep.subr.bf16.mxu0 0
        %5544 = vmatpush2.bf16.msra.mxu0 0
        %5545 = vmatprep.subr.bf16.mxu0 0
        %5546 = vmatpush2.bf16.msra.mxu0 0
        %5547 = vmatprep.subr.bf16.mxu0 0
        %5548 = vmatpush2.bf16.msra.mxu0 0
        %5549 = vmatprep.subr.bf16.mxu0 0
        %5550 = vmatpush2.bf16.msra.mxu0 0
        %5551 = vmatprep.mubr.bf16.mxu0 0
        %5552 = vmatmul.mubr.bf16.gmra.mxu0 %v5358
        %v5553 = vpop.f32.mrf.mxu0
        %v5554 = vadd.f32 %v5514, %v5553
        %v5555 = vpop.f32.mrf.mxu0
        %v5556 = vpop.f32.mrf.mxu0
        %v5557 = vpop.f32.mrf.mxu0
        %5558 = vdwg.mxu0
        %v5559 = vmul.f32 %v5554, 0.2
        %v5560 = vmax.f32 %v5554, %v5559
        %v5561 = vmul.f32 %v5560, %v5327
        %v5562 = vadd.f32 %v5561, %v5332
        %5563 = vst [vmem:[#allocation5 + $0x9] sm:$0x3] %v5562
        %v5564 = vld [vmem:[#allocation11] sm:$0xf]
        %v5565 = vld [vmem:[#allocation11 + $0x4] sm:$0xf]
        %v5566 = vld [vmem:[#allocation11 + $0x8] sm:$0xf]
        %v5567 = vld [vmem:[#allocation11 + $0xc] sm:$0xf]
        %v5568 = vld [vmem:[#allocation11 + $0x10] sm:$0xf]
        %v5569 = vld [vmem:[#allocation11 + $0x14] sm:$0xf]
        %v5570 = vld [vmem:[#allocation11 + $0x18] sm:$0xf]
        %v5571 = vld [vmem:[#allocation11 + $0x1c] sm:$0xf]
        %v5572 = vld [vmem:[#allocation11 + $0x20] sm:$0xf]
        %v5573 = vld [vmem:[#allocation11 + $0x24] sm:$0xf]
        %v5574 = vld [vmem:[#allocation11 + $0x28] sm:$0xf]
        %v5575 = vld [vmem:[#allocation11 + $0x2c] sm:$0xf]
        %v5576 = vld [vmem:[#allocation11 + $0x30] sm:$0xf]
        %v5577 = vld [vmem:[#allocation11 + $0x34] sm:$0xf]
        %v5578 = vld [vmem:[#allocation11 + $0x38] sm:$0xf]
        %v5579 = vld [vmem:[#allocation11 + $0x3c] sm:$0xf]
        %v5580 = vld [vmem:[#allocation11 + $0x40] sm:$0xf]
        %v5581 = vld [vmem:[#allocation11 + $0x44] sm:$0xf]
        %v5582 = vld [vmem:[#allocation11 + $0x48] sm:$0xf]
        %v5583 = vld [vmem:[#allocation11 + $0x4c] sm:$0xf]
        %v5584 = vld [vmem:[#allocation11 + $0x50] sm:$0xf]
        %v5585 = vld [vmem:[#allocation11 + $0x54] sm:$0xf]
        %v5586 = vld [vmem:[#allocation11 + $0x58] sm:$0xf]
        %v5587 = vld [vmem:[#allocation11 + $0x5c] sm:$0xf]
        %v5588 = vld [vmem:[#allocation11 + $0x60] sm:$0xf]
        %v5589 = vld [vmem:[#allocation11 + $0x64] sm:$0xf]
        %v5590 = vld [vmem:[#allocation11 + $0x68] sm:$0xf]
        %v5591 = vld [vmem:[#allocation11 + $0x6c] sm:$0xf]
        %v5592 = vld [vmem:[#allocation11 + $0x70] sm:$0xf]
        %v5593 = vld [vmem:[#allocation11 + $0x74] sm:$0xf]
        %v5594 = vld [vmem:[#allocation11 + $0x78] sm:$0xf]
        %v5595 = vld [vmem:[#allocation11 + $0x7c] sm:$0xf]
        %v5596 = vld [vmem:[#allocation11 + $0x80] sm:$0xf]
        %v5597 = vld [vmem:[#allocation11 + $0x84] sm:$0xf]
        %v5598 = vld [vmem:[#allocation11 + $0x88] sm:$0xf]
        %v5599 = vld [vmem:[#allocation11 + $0x8c] sm:$0xf]
        %v5600 = vld [vmem:[#allocation11 + $0x90] sm:$0xf]
        %v5601 = vld [vmem:[#allocation11 + $0x94] sm:$0xf]
        %v5602 = vld [vmem:[#allocation11 + $0x98] sm:$0xf]
        %v5603 = vld [vmem:[#allocation11 + $0x9c] sm:$0xf]
        %v5604 = vld [vmem:[#allocation11 + $0xa0] sm:$0xf]
        %v5605 = vld [vmem:[#allocation11 + $0xa4] sm:$0xf]
        %v5606 = vld [vmem:[#allocation11 + $0xa8] sm:$0xf]
        %v5607 = vld [vmem:[#allocation11 + $0xac] sm:$0xf]
        %v5608 = vld [vmem:[#allocation11 + $0xb0] sm:$0xf]
        %v5609 = vld [vmem:[#allocation11 + $0xb4] sm:$0xf]
        %v5610 = vld [vmem:[#allocation11 + $0xb8] sm:$0xf]
        %v5611 = vld [vmem:[#allocation11 + $0xbc] sm:$0xf]
        %v5612 = vld [vmem:[#allocation11 + $0xc0] sm:$0xf]
        %v5613 = vld [vmem:[#allocation11 + $0xc4] sm:$0xf]
        %v5614 = vld [vmem:[#allocation11 + $0xc8] sm:$0xf]
        %v5615 = vld [vmem:[#allocation11 + $0xcc] sm:$0xf]
        %v5616 = vld [vmem:[#allocation11 + $0xd0] sm:$0xf]
        %v5617 = vld [vmem:[#allocation11 + $0xd4] sm:$0xf]
        %v5618 = vld [vmem:[#allocation11 + $0xd8] sm:$0xf]
        %v5619 = vld [vmem:[#allocation11 + $0xdc] sm:$0xf]
        %v5620 = vld [vmem:[#allocation11 + $0xe0] sm:$0xf]
        %v5621 = vld [vmem:[#allocation11 + $0xe4] sm:$0xf]
        %v5622 = vld [vmem:[#allocation11 + $0xe8] sm:$0xf]
        %v5623 = vld [vmem:[#allocation11 + $0xec] sm:$0xf]
        %v5624 = vld [vmem:[#allocation11 + $0xf0] sm:$0xf]
        %v5625 = vld [vmem:[#allocation11 + $0xf4] sm:$0xf]
        %v5626 = vld [vmem:[#allocation11 + $0xf8] sm:$0xf]
        %v5627 = vld [vmem:[#allocation11 + $0xfc] sm:$0xf]
        %v5628 = vld [vmem:[#allocation11 + $0x100] sm:$0xf]
        %v5629 = vld [vmem:[#allocation11 + $0x104] sm:$0xf]
        %v5630 = vld [vmem:[#allocation11 + $0x108] sm:$0xf]
        %v5631 = vld [vmem:[#allocation11 + $0x10c] sm:$0xf]
        %v5632 = vld [vmem:[#allocation11 + $0x110] sm:$0xf]
        %v5633 = vld [vmem:[#allocation11 + $0x114] sm:$0xf]
        %v5634 = vld [vmem:[#allocation11 + $0x118] sm:$0xf]
        %v5635 = vld [vmem:[#allocation11 + $0x11c] sm:$0xf]
        %v5636 = vld [vmem:[#allocation11 + $0x120] sm:$0xf]
        %v5637 = vld [vmem:[#allocation11 + $0x124] sm:$0xf]
        %v5638 = vld [vmem:[#allocation11 + $0x128] sm:$0xf]
        %v5639 = vld [vmem:[#allocation11 + $0x12c] sm:$0xf]
        %v5640 = vld [vmem:[#allocation11 + $0x130] sm:$0xf]
        %v5641 = vld [vmem:[#allocation11 + $0x134] sm:$0xf]
        %v5642 = vld [vmem:[#allocation11 + $0x138] sm:$0xf]
        %v5643 = vld [vmem:[#allocation11 + $0x13c] sm:$0xf]
        %v5644 = vld [vmem:[#allocation11 + $0x140] sm:$0xf]
        %v5645 = vld [vmem:[#allocation11 + $0x144] sm:$0xf]
        %v5646 = vld [vmem:[#allocation11 + $0x148] sm:$0xf]
        %v5647 = vld [vmem:[#allocation11 + $0x14c] sm:$0xf]
        %v5648 = vld [vmem:[#allocation11 + $0x150] sm:$0xf]
        %v5649 = vld [vmem:[#allocation11 + $0x154] sm:$0xf]
        %v5650 = vld [vmem:[#allocation11 + $0x158] sm:$0xf]
        %v5651 = vld [vmem:[#allocation11 + $0x15c] sm:$0xf]
        %v5652 = vld [vmem:[#allocation11 + $0x160] sm:$0xf]
        %v5653 = vld [vmem:[#allocation11 + $0x164] sm:$0xf]
        %v5654 = vld [vmem:[#allocation11 + $0x168] sm:$0xf]
        %v5655 = vld [vmem:[#allocation11 + $0x16c] sm:$0xf]
        %v5656 = vld [vmem:[#allocation11 + $0x170] sm:$0xf]
        %v5657 = vld [vmem:[#allocation11 + $0x174] sm:$0xf]
        %v5658 = vld [vmem:[#allocation11 + $0x178] sm:$0xf]
        %v5659 = vld [vmem:[#allocation11 + $0x17c] sm:$0xf]
        %v5660 = vld [vmem:[#allocation11 + $0x180] sm:$0xf]
        %v5661 = vld [vmem:[#allocation11 + $0x184] sm:$0xf]
        %v5662 = vld [vmem:[#allocation11 + $0x188] sm:$0xf]
        %v5663 = vld [vmem:[#allocation11 + $0x18c] sm:$0xf]
        %v5664 = vld [vmem:[#allocation11 + $0x190] sm:$0xf]
        %v5665 = vld [vmem:[#allocation11 + $0x194] sm:$0xf]
        %v5666 = vld [vmem:[#allocation11 + $0x198] sm:$0xf]
        %v5667 = vld [vmem:[#allocation11 + $0x19c] sm:$0xf]
        %v5668 = vld [vmem:[#allocation11 + $0x1a0] sm:$0xf]
        %v5669 = vld [vmem:[#allocation11 + $0x1a4] sm:$0xf]
        %v5670 = vld [vmem:[#allocation11 + $0x1a8] sm:$0xf]
        %v5671 = vld [vmem:[#allocation11 + $0x1ac] sm:$0xf]
        %v5672 = vld [vmem:[#allocation11 + $0x1b0] sm:$0xf]
        %v5673 = vld [vmem:[#allocation11 + $0x1b4] sm:$0xf]
        %v5674 = vld [vmem:[#allocation11 + $0x1b8] sm:$0xf]
        %v5675 = vld [vmem:[#allocation11 + $0x1bc] sm:$0xf]
        %v5676 = vld [vmem:[#allocation11 + $0x1c0] sm:$0xf]
        %v5677 = vld [vmem:[#allocation11 + $0x1c4] sm:$0xf]
        %v5678 = vld [vmem:[#allocation11 + $0x1c8] sm:$0xf]
        %v5679 = vld [vmem:[#allocation11 + $0x1cc] sm:$0xf]
        %v5680 = vld [vmem:[#allocation11 + $0x1d0] sm:$0xf]
        %v5681 = vld [vmem:[#allocation11 + $0x1d4] sm:$0xf]
        %v5682 = vld [vmem:[#allocation11 + $0x1d8] sm:$0xf]
        %v5683 = vld [vmem:[#allocation11 + $0x1dc] sm:$0xf]
        %v5684 = vld [vmem:[#allocation11 + $0x1e0] sm:$0xf]
        %v5685 = vld [vmem:[#allocation11 + $0x1e4] sm:$0xf]
        %v5686 = vld [vmem:[#allocation11 + $0x1e8] sm:$0xf]
        %v5687 = vld [vmem:[#allocation11 + $0x1ec] sm:$0xf]
        %v5688 = vld [vmem:[#allocation11 + $0x1f0] sm:$0xf]
        %v5689 = vld [vmem:[#allocation11 + $0x1f4] sm:$0xf]
        %v5690 = vld [vmem:[#allocation11 + $0x1f8] sm:$0xf]
        %v5691 = vld [vmem:[#allocation11 + $0x1fc] sm:$0xf]
        %v5692 = vld [vmem:[#allocation11 + $0x200] sm:$0xf]
        %v5693 = vld [vmem:[#allocation11 + $0x204] sm:$0xf]
        %v5694 = vld [vmem:[#allocation11 + $0x208] sm:$0xf]
        %v5695 = vld [vmem:[#allocation11 + $0x20c] sm:$0xf]
        %v5696 = vld [vmem:[#allocation11 + $0x210] sm:$0xf]
        %v5697 = vld [vmem:[#allocation11 + $0x214] sm:$0xf]
        %v5698 = vld [vmem:[#allocation11 + $0x218] sm:$0xf]
        %v5699 = vld [vmem:[#allocation11 + $0x21c] sm:$0xf]
        %v5700 = vld [vmem:[#allocation11 + $0x220] sm:$0xf]
        %v5701 = vld [vmem:[#allocation11 + $0x224] sm:$0xf]
        %v5702 = vld [vmem:[#allocation11 + $0x228] sm:$0xf]
        %v5703 = vld [vmem:[#allocation11 + $0x22c] sm:$0xf]
        %v5704 = vld [vmem:[#allocation11 + $0x230] sm:$0xf]
        %v5705 = vld [vmem:[#allocation11 + $0x234] sm:$0xf]
        %v5706 = vld [vmem:[#allocation11 + $0x238] sm:$0xf]
        %v5707 = vld [vmem:[#allocation11 + $0x23c] sm:$0xf]
        %v5708 = vld [vmem:[#allocation13] sm:$0x1]
        %v5709 = vld [vmem:[#allocation13 + $0x1] sm:$0x1]
        %v5710 = vld [vmem:[#allocation13 + $0x2] sm:$0x1]
        %v5711 = vld [vmem:[#allocation5] sm:$0x1]
        %v5712 = vld [vmem:[#allocation5 + $0x1] sm:$0x1]
        %v5713 = vld [vmem:[#allocation5 + $0x2] sm:$0x1]
        %v5714 = vld [vmem:[#allocation5 + $0x4] sm:$0x1]
        %v5715 = vld [vmem:[#allocation5 + $0x5] sm:$0x1]
        %v5716 = vld [vmem:[#allocation5 + $0x6] sm:$0x1]
        %v5717 = vld [vmem:[#allocation5 + $0x8] sm:$0x1]
        %v5718 = vld [vmem:[#allocation5 + $0x9] sm:$0x1]
        %v5719 = vld [vmem:[#allocation5 + $0xa] sm:$0x1]
        %v5720 = vpack.c.bf16 %v5711, %v5711
        %v5721 = vpack.c.bf16 %v5712, %v5712
        %v5722 = vpack.c.bf16 %v5713, %v5713
        %v5723 = vpack.c.bf16 %v5714, %v5714
        %v5724 = vpack.c.bf16 %v5715, %v5715
        %v5725 = vpack.c.bf16 %v5716, %v5716
        %v5726 = vpack.c.bf16 %v5717, %v5717
        %v5727 = vpack.c.bf16 %v5718, %v5718
        %v5728 = vpack.c.bf16 %v5719, %v5719
        %v5873 = vunpack.c.l.b16 %v5564
        %v5874 = vunpack.c.l.b16 %v5565
        %v5875 = vunpack.c.l.b16 %v5566
        %v5876 = vunpack.c.l.b16 %v5567
        %v5877 = vunpack.c.l.b16 %v5568
        %v5878 = vunpack.c.l.b16 %v5569
        %v5879 = vunpack.c.l.b16 %v5570
        %v5880 = vunpack.c.l.b16 %v5571
        %v5881 = vunpack.c.l.b16 %v5572
        %v5882 = vunpack.c.l.b16 %v5573
        %v5883 = vunpack.c.l.b16 %v5574
        %v5884 = vunpack.c.l.b16 %v5575
        %v5885 = vunpack.c.l.b16 %v5576
        %v5886 = vunpack.c.l.b16 %v5577
        %v5887 = vunpack.c.l.b16 %v5578
        %v5888 = vunpack.c.l.b16 %v5579
        %v5889 = vunpack.c.l.b16 %v5580
        %v5890 = vunpack.c.l.b16 %v5581
        %v5891 = vunpack.c.l.b16 %v5582
        %v5892 = vunpack.c.l.b16 %v5583
        %v5893 = vunpack.c.l.b16 %v5584
        %v5894 = vunpack.c.l.b16 %v5585
        %v5895 = vunpack.c.l.b16 %v5586
        %v5896 = vunpack.c.l.b16 %v5587
        %v5897 = vunpack.c.l.b16 %v5588
        %v5898 = vunpack.c.l.b16 %v5589
        %v5899 = vunpack.c.l.b16 %v5590
        %v5900 = vunpack.c.l.b16 %v5591
        %v5901 = vunpack.c.l.b16 %v5592
        %v5902 = vunpack.c.l.b16 %v5593
        %v5903 = vunpack.c.l.b16 %v5594
        %v5904 = vunpack.c.l.b16 %v5595
        %v5905 = vunpack.c.l.b16 %v5596
        %v5906 = vunpack.c.l.b16 %v5597
        %v5907 = vunpack.c.l.b16 %v5598
        %v5908 = vunpack.c.l.b16 %v5599
        %v5909 = vunpack.c.l.b16 %v5600
        %v5910 = vunpack.c.l.b16 %v5601
        %v5911 = vunpack.c.l.b16 %v5602
        %v5912 = vunpack.c.l.b16 %v5603
        %v5913 = vunpack.c.l.b16 %v5604
        %v5914 = vunpack.c.l.b16 %v5605
        %v5915 = vunpack.c.l.b16 %v5606
        %v5916 = vunpack.c.l.b16 %v5607
        %v5917 = vunpack.c.l.b16 %v5608
        %v5918 = vunpack.c.l.b16 %v5609
        %v5919 = vunpack.c.l.b16 %v5610
        %v5920 = vunpack.c.l.b16 %v5611
        %v5921 = vunpack.c.l.b16 %v5612
        %v5922 = vunpack.c.l.b16 %v5613
        %v5923 = vunpack.c.l.b16 %v5614
        %v5924 = vunpack.c.l.b16 %v5615
        %v5925 = vunpack.c.l.b16 %v5616
        %v5926 = vunpack.c.l.b16 %v5617
        %v5927 = vunpack.c.l.b16 %v5618
        %v5928 = vunpack.c.l.b16 %v5619
        %v5929 = vunpack.c.l.b16 %v5620
        %v5930 = vunpack.c.l.b16 %v5621
        %v5931 = vunpack.c.l.b16 %v5622
        %v5932 = vunpack.c.l.b16 %v5623
        %v5933 = vunpack.c.l.b16 %v5624
        %v5934 = vunpack.c.l.b16 %v5625
        %v5935 = vunpack.c.l.b16 %v5626
        %v5936 = vunpack.c.l.b16 %v5627
        %v5937 = vunpack.c.l.b16 %v5628
        %v5938 = vunpack.c.l.b16 %v5629
        %v5939 = vunpack.c.l.b16 %v5630
        %v5940 = vunpack.c.l.b16 %v5631
        %v5941 = vunpack.c.l.b16 %v5632
        %v5942 = vunpack.c.l.b16 %v5633
        %v5943 = vunpack.c.l.b16 %v5634
        %v5944 = vunpack.c.l.b16 %v5635
        %v5945 = vunpack.c.l.b16 %v5636
        %v5946 = vunpack.c.l.b16 %v5637
        %v5947 = vunpack.c.l.b16 %v5638
        %v5948 = vunpack.c.l.b16 %v5639
        %v5949 = vunpack.c.l.b16 %v5640
        %v5950 = vunpack.c.l.b16 %v5641
        %v5951 = vunpack.c.l.b16 %v5642
        %v5952 = vunpack.c.l.b16 %v5643
        %v5953 = vunpack.c.l.b16 %v5644
        %v5954 = vunpack.c.l.b16 %v5645
        %v5955 = vunpack.c.l.b16 %v5646
        %v5956 = vunpack.c.l.b16 %v5647
        %v5957 = vunpack.c.l.b16 %v5648
        %v5958 = vunpack.c.l.b16 %v5649
        %v5959 = vunpack.c.l.b16 %v5650
        %v5960 = vunpack.c.l.b16 %v5651
        %v5961 = vunpack.c.l.b16 %v5652
        %v5962 = vunpack.c.l.b16 %v5653
        %v5963 = vunpack.c.l.b16 %v5654
        %v5964 = vunpack.c.l.b16 %v5655
        %v5965 = vunpack.c.l.b16 %v5656
        %v5966 = vunpack.c.l.b16 %v5657
        %v5967 = vunpack.c.l.b16 %v5658
        %v5968 = vunpack.c.l.b16 %v5659
        %v5969 = vunpack.c.l.b16 %v5660
        %v5970 = vunpack.c.l.b16 %v5661
        %v5971 = vunpack.c.l.b16 %v5662
        %v5972 = vunpack.c.l.b16 %v5663
        %v5973 = vunpack.c.l.b16 %v5664
        %v5974 = vunpack.c.l.b16 %v5665
        %v5975 = vunpack.c.l.b16 %v5666
        %v5976 = vunpack.c.l.b16 %v5667
        %v5977 = vunpack.c.l.b16 %v5668
        %v5978 = vunpack.c.l.b16 %v5669
        %v5979 = vunpack.c.l.b16 %v5670
        %v5980 = vunpack.c.l.b16 %v5671
        %v5981 = vunpack.c.l.b16 %v5672
        %v5982 = vunpack.c.l.b16 %v5673
        %v5983 = vunpack.c.l.b16 %v5674
        %v5984 = vunpack.c.l.b16 %v5675
        %v5985 = vunpack.c.l.b16 %v5676
        %v5986 = vunpack.c.l.b16 %v5677
        %v5987 = vunpack.c.l.b16 %v5678
        %v5988 = vunpack.c.l.b16 %v5679
        %v5989 = vunpack.c.l.b16 %v5680
        %v5990 = vunpack.c.l.b16 %v5681
        %v5991 = vunpack.c.l.b16 %v5682
        %v5992 = vunpack.c.l.b16 %v5683
        %v5993 = vunpack.c.l.b16 %v5684
        %v5994 = vunpack.c.l.b16 %v5685
        %v5995 = vunpack.c.l.b16 %v5686
        %v5996 = vunpack.c.l.b16 %v5687
        %v5997 = vunpack.c.l.b16 %v5688
        %v5998 = vunpack.c.l.b16 %v5689
        %v5999 = vunpack.c.l.b16 %v5690
        %v6000 = vunpack.c.l.b16 %v5691
        %v6001 = vunpack.c.l.b16 %v5692
        %v6002 = vunpack.c.l.b16 %v5693
        %v6003 = vunpack.c.l.b16 %v5694
        %v6004 = vunpack.c.l.b16 %v5695
        %v6005 = vunpack.c.l.b16 %v5696
        %v6006 = vunpack.c.l.b16 %v5697
        %v6007 = vunpack.c.l.b16 %v5698
        %v6008 = vunpack.c.l.b16 %v5699
        %v6009 = vunpack.c.l.b16 %v5700
        %v6010 = vunpack.c.l.b16 %v5701
        %v6011 = vunpack.c.l.b16 %v5702
        %v6012 = vunpack.c.l.b16 %v5703
        %v6013 = vunpack.c.l.b16 %v5704
        %v6014 = vunpack.c.l.b16 %v5705
        %v6015 = vunpack.c.l.b16 %v5706
        %v6016 = vunpack.c.l.b16 %v5707
        %v6017 = vpack.c.b16 %v5874, %v5873
        %v6018 = vpack.c.b16 %v5876, %v5875
        %v6019 = vpack.c.b16 %v5878, %v5877
        %v6020 = vpack.c.b16 %v5880, %v5879
        %v6021 = vpack.c.b16 %v5882, %v5881
        %v6022 = vpack.c.b16 %v5884, %v5883
        %v6023 = vpack.c.b16 %v5886, %v5885
        %v6024 = vpack.c.b16 %v5888, %v5887
        %v6025 = vpack.c.b16 %v5890, %v5889
        %v6026 = vpack.c.b16 %v5892, %v5891
        %v6027 = vpack.c.b16 %v5894, %v5893
        %v6028 = vpack.c.b16 %v5896, %v5895
        %v6029 = vpack.c.b16 %v5898, %v5897
        %v6030 = vpack.c.b16 %v5900, %v5899
        %v6031 = vpack.c.b16 %v5902, %v5901
        %v6032 = vpack.c.b16 %v5904, %v5903
        %v6033 = vpack.c.b16 %v5906, %v5905
        %v6034 = vpack.c.b16 %v5908, %v5907
        %v6035 = vpack.c.b16 %v5910, %v5909
        %v6036 = vpack.c.b16 %v5912, %v5911
        %v6037 = vpack.c.b16 %v5914, %v5913
        %v6038 = vpack.c.b16 %v5916, %v5915
        %v6039 = vpack.c.b16 %v5918, %v5917
        %v6040 = vpack.c.b16 %v5920, %v5919
        %v6041 = vpack.c.b16 %v5922, %v5921
        %v6042 = vpack.c.b16 %v5924, %v5923
        %v6043 = vpack.c.b16 %v5926, %v5925
        %v6044 = vpack.c.b16 %v5928, %v5927
        %v6045 = vpack.c.b16 %v5930, %v5929
        %v6046 = vpack.c.b16 %v5932, %v5931
        %v6047 = vpack.c.b16 %v5934, %v5933
        %v6048 = vpack.c.b16 %v5936, %v5935
        %v6049 = vpack.c.b16 %v5938, %v5937
        %v6050 = vpack.c.b16 %v5940, %v5939
        %v6051 = vpack.c.b16 %v5942, %v5941
        %v6052 = vpack.c.b16 %v5944, %v5943
        %v6053 = vpack.c.b16 %v5946, %v5945
        %v6054 = vpack.c.b16 %v5948, %v5947
        %v6055 = vpack.c.b16 %v5950, %v5949
        %v6056 = vpack.c.b16 %v5952, %v5951
        %v6057 = vpack.c.b16 %v5954, %v5953
        %v6058 = vpack.c.b16 %v5956, %v5955
        %v6059 = vpack.c.b16 %v5958, %v5957
        %v6060 = vpack.c.b16 %v5960, %v5959
        %v6061 = vpack.c.b16 %v5962, %v5961
        %v6062 = vpack.c.b16 %v5964, %v5963
        %v6063 = vpack.c.b16 %v5966, %v5965
        %v6064 = vpack.c.b16 %v5968, %v5967
        %v6065 = vpack.c.b16 %v5970, %v5969
        %v6066 = vpack.c.b16 %v5972, %v5971
        %v6067 = vpack.c.b16 %v5974, %v5973
        %v6068 = vpack.c.b16 %v5976, %v5975
        %v6069 = vpack.c.b16 %v5978, %v5977
        %v6070 = vpack.c.b16 %v5980, %v5979
        %v6071 = vpack.c.b16 %v5982, %v5981
        %v6072 = vpack.c.b16 %v5984, %v5983
        %v6073 = vpack.c.b16 %v5986, %v5985
        %v6074 = vpack.c.b16 %v5988, %v5987
        %v6075 = vpack.c.b16 %v5990, %v5989
        %v6076 = vpack.c.b16 %v5992, %v5991
        %v6077 = vpack.c.b16 %v5994, %v5993
        %v6078 = vpack.c.b16 %v5996, %v5995
        %v6079 = vpack.c.b16 %v5998, %v5997
        %v6080 = vpack.c.b16 %v6000, %v5999
        %v6081 = vpack.c.b16 %v6002, %v6001
        %v6082 = vpack.c.b16 %v6004, %v6003
        %v6083 = vpack.c.b16 %v6006, %v6005
        %v6084 = vpack.c.b16 %v6008, %v6007
        %v6085 = vpack.c.b16 %v6010, %v6009
        %v6086 = vpack.c.b16 %v6012, %v6011
        %v6087 = vpack.c.b16 %v6014, %v6013
        %v6088 = vpack.c.b16 %v6016, %v6015
        %6161 = vmatprep.subr.bf16.mxu0 0
        %6162 = vmatpush1.bf16.msra.mxu0 %v6024
        %6163 = vmatprep.subr.bf16.mxu0 0
        %6164 = vmatpush1.bf16.msra.mxu0 %v6023
        %6165 = vmatprep.subr.bf16.mxu0 0
        %6166 = vmatpush1.bf16.msra.mxu0 %v6022
        %6167 = vmatprep.subr.bf16.mxu0 0
        %6168 = vmatpush1.bf16.msra.mxu0 %v6021
        %6169 = vmatprep.subr.bf16.mxu0 0
        %6170 = vmatpush1.bf16.msra.mxu0 %v6020
        %6171 = vmatprep.subr.bf16.mxu0 0
        %6172 = vmatpush1.bf16.msra.mxu0 %v6019
        %6173 = vmatprep.subr.bf16.mxu0 0
        %6174 = vmatpush1.bf16.msra.mxu0 %v6018
        %6175 = vmatprep.subr.bf16.mxu0 0
        %6176 = vmatpush1.bf16.msra.mxu0 %v6017
        %6177 = vmatprep.subr.bf16.mxu0 0
        %6178 = vmatpush2.bf16.msra.mxu0 %v6032
        %6179 = vmatprep.subr.bf16.mxu0 0
        %6180 = vmatpush2.bf16.msra.mxu0 %v6031
        %6181 = vmatprep.subr.bf16.mxu0 0
        %6182 = vmatpush2.bf16.msra.mxu0 %v6030
        %6183 = vmatprep.subr.bf16.mxu0 0
        %6184 = vmatpush2.bf16.msra.mxu0 %v6029
        %6185 = vmatprep.subr.bf16.mxu0 0
        %6186 = vmatpush2.bf16.msra.mxu0 %v6028
        %6187 = vmatprep.subr.bf16.mxu0 0
        %6188 = vmatpush2.bf16.msra.mxu0 %v6027
        %6189 = vmatprep.subr.bf16.mxu0 0
        %6190 = vmatpush2.bf16.msra.mxu0 %v6026
        %6191 = vmatprep.subr.bf16.mxu0 0
        %6192 = vmatpush2.bf16.msra.mxu0 %v6025
        %6193 = vmatprep.mubr.bf16.mxu0 %v5721
        %6194 = vmatmul.mubr.bf16.gmra.mxu0 %v5720
        %v6195 = vpop.f32.mrf.mxu0
        %v6196 = vadd.f32 %v5708, %v6195
        %v6197 = vpop.f32.mrf.mxu0
        %v6198 = vpop.f32.mrf.mxu0
        %v6199 = vpop.f32.mrf.mxu0
        %6200 = vdwg.mxu0
        %6201 = vmatprep.subr.bf16.mxu0 0
        %6202 = vmatpush1.bf16.msra.mxu0 %v6040
        %6203 = vmatprep.subr.bf16.mxu0 0
        %6204 = vmatpush1.bf16.msra.mxu0 %v6039
        %6205 = vmatprep.subr.bf16.mxu0 0
        %6206 = vmatpush1.bf16.msra.mxu0 %v6038
        %6207 = vmatprep.subr.bf16.mxu0 0
        %6208 = vmatpush1.bf16.msra.mxu0 %v6037
        %6209 = vmatprep.subr.bf16.mxu0 0
        %6210 = vmatpush1.bf16.msra.mxu0 %v6036
        %6211 = vmatprep.subr.bf16.mxu0 0
        %6212 = vmatpush1.bf16.msra.mxu0 %v6035
        %6213 = vmatprep.subr.bf16.mxu0 0
        %6214 = vmatpush1.bf16.msra.mxu0 %v6034
        %6215 = vmatprep.subr.bf16.mxu0 0
        %6216 = vmatpush1.bf16.msra.mxu0 %v6033
        %6217 = vmatprep.subr.bf16.mxu0 0
        %6218 = vmatpush2.bf16.msra.mxu0 %v6048
        %6219 = vmatprep.subr.bf16.mxu0 0
        %6220 = vmatpush2.bf16.msra.mxu0 %v6047
        %6221 = vmatprep.subr.bf16.mxu0 0
        %6222 = vmatpush2.bf16.msra.mxu0 %v6046
        %6223 = vmatprep.subr.bf16.mxu0 0
        %6224 = vmatpush2.bf16.msra.mxu0 %v6045
        %6225 = vmatprep.subr.bf16.mxu0 0
        %6226 = vmatpush2.bf16.msra.mxu0 %v6044
        %6227 = vmatprep.subr.bf16.mxu0 0
        %6228 = vmatpush2.bf16.msra.mxu0 %v6043
        %6229 = vmatprep.subr.bf16.mxu0 0
        %6230 = vmatpush2.bf16.msra.mxu0 %v6042
        %6231 = vmatprep.subr.bf16.mxu0 0
        %6232 = vmatpush2.bf16.msra.mxu0 %v6041
        %6233 = vmatprep.mubr.bf16.mxu0 %v5723
        %6234 = vmatmul.mubr.bf16.gmra.mxu0 %v5722
        %v6235 = vpop.f32.mrf.mxu0
        %v6236 = vadd.f32 %v6196, %v6235
        %v6237 = vpop.f32.mrf.mxu0
        %v6238 = vpop.f32.mrf.mxu0
        %v6239 = vpop.f32.mrf.mxu0
        %6240 = vdwg.mxu0
        %6241 = vmatprep.subr.bf16.mxu0 0
        %6242 = vmatpush1.bf16.msra.mxu0 %v6056
        %6243 = vmatprep.subr.bf16.mxu0 0
        %6244 = vmatpush1.bf16.msra.mxu0 %v6055
        %6245 = vmatprep.subr.bf16.mxu0 0
        %6246 = vmatpush1.bf16.msra.mxu0 %v6054
        %6247 = vmatprep.subr.bf16.mxu0 0
        %6248 = vmatpush1.bf16.msra.mxu0 %v6053
        %6249 = vmatprep.subr.bf16.mxu0 0
        %6250 = vmatpush1.bf16.msra.mxu0 %v6052
        %6251 = vmatprep.subr.bf16.mxu0 0
        %6252 = vmatpush1.bf16.msra.mxu0 %v6051
        %6253 = vmatprep.subr.bf16.mxu0 0
        %6254 = vmatpush1.bf16.msra.mxu0 %v6050
        %6255 = vmatprep.subr.bf16.mxu0 0
        %6256 = vmatpush1.bf16.msra.mxu0 %v6049
        %6257 = vmatprep.subr.bf16.mxu0 0
        %6258 = vmatpush2.bf16.msra.mxu0 %v6064
        %6259 = vmatprep.subr.bf16.mxu0 0
        %6260 = vmatpush2.bf16.msra.mxu0 %v6063
        %6261 = vmatprep.subr.bf16.mxu0 0
        %6262 = vmatpush2.bf16.msra.mxu0 %v6062
        %6263 = vmatprep.subr.bf16.mxu0 0
        %6264 = vmatpush2.bf16.msra.mxu0 %v6061
        %6265 = vmatprep.subr.bf16.mxu0 0
        %6266 = vmatpush2.bf16.msra.mxu0 %v6060
        %6267 = vmatprep.subr.bf16.mxu0 0
        %6268 = vmatpush2.bf16.msra.mxu0 %v6059
        %6269 = vmatprep.subr.bf16.mxu0 0
        %6270 = vmatpush2.bf16.msra.mxu0 %v6058
        %6271 = vmatprep.subr.bf16.mxu0 0
        %6272 = vmatpush2.bf16.msra.mxu0 %v6057
        %6273 = vmatprep.mubr.bf16.mxu0 %v5725
        %6274 = vmatmul.mubr.bf16.gmra.mxu0 %v5724
        %v6275 = vpop.f32.mrf.mxu0
        %v6276 = vadd.f32 %v6236, %v6275
        %v6277 = vpop.f32.mrf.mxu0
        %v6278 = vpop.f32.mrf.mxu0
        %v6279 = vpop.f32.mrf.mxu0
        %6280 = vdwg.mxu0
        %6281 = vmatprep.subr.bf16.mxu0 0
        %6282 = vmatpush1.bf16.msra.mxu0 %v6072
        %6283 = vmatprep.subr.bf16.mxu0 0
        %6284 = vmatpush1.bf16.msra.mxu0 %v6071
        %6285 = vmatprep.subr.bf16.mxu0 0
        %6286 = vmatpush1.bf16.msra.mxu0 %v6070
        %6287 = vmatprep.subr.bf16.mxu0 0
        %6288 = vmatpush1.bf16.msra.mxu0 %v6069
        %6289 = vmatprep.subr.bf16.mxu0 0
        %6290 = vmatpush1.bf16.msra.mxu0 %v6068
        %6291 = vmatprep.subr.bf16.mxu0 0
        %6292 = vmatpush1.bf16.msra.mxu0 %v6067
        %6293 = vmatprep.subr.bf16.mxu0 0
        %6294 = vmatpush1.bf16.msra.mxu0 %v6066
        %6295 = vmatprep.subr.bf16.mxu0 0
        %6296 = vmatpush1.bf16.msra.mxu0 %v6065
        %6297 = vmatprep.subr.bf16.mxu0 0
        %6298 = vmatpush2.bf16.msra.mxu0 %v6080
        %6299 = vmatprep.subr.bf16.mxu0 0
        %6300 = vmatpush2.bf16.msra.mxu0 %v6079
        %6301 = vmatprep.subr.bf16.mxu0 0
        %6302 = vmatpush2.bf16.msra.mxu0 %v6078
        %6303 = vmatprep.subr.bf16.mxu0 0
        %6304 = vmatpush2.bf16.msra.mxu0 %v6077
        %6305 = vmatprep.subr.bf16.mxu0 0
        %6306 = vmatpush2.bf16.msra.mxu0 %v6076
        %6307 = vmatprep.subr.bf16.mxu0 0
        %6308 = vmatpush2.bf16.msra.mxu0 %v6075
        %6309 = vmatprep.subr.bf16.mxu0 0
        %6310 = vmatpush2.bf16.msra.mxu0 %v6074
        %6311 = vmatprep.subr.bf16.mxu0 0
        %6312 = vmatpush2.bf16.msra.mxu0 %v6073
        %6313 = vmatprep.mubr.bf16.mxu0 %v5727
        %6314 = vmatmul.mubr.bf16.gmra.mxu0 %v5726
        %v6315 = vpop.f32.mrf.mxu0
        %v6316 = vadd.f32 %v6276, %v6315
        %v6317 = vpop.f32.mrf.mxu0
        %v6318 = vpop.f32.mrf.mxu0
        %v6319 = vpop.f32.mrf.mxu0
        %6320 = vdwg.mxu0
        %6321 = vmatprep.subr.bf16.mxu0 0
        %6322 = vmatpush1.bf16.msra.mxu0 %v6088
        %6323 = vmatprep.subr.bf16.mxu0 0
        %6324 = vmatpush1.bf16.msra.mxu0 %v6087
        %6325 = vmatprep.subr.bf16.mxu0 0
        %6326 = vmatpush1.bf16.msra.mxu0 %v6086
        %6327 = vmatprep.subr.bf16.mxu0 0
        %6328 = vmatpush1.bf16.msra.mxu0 %v6085
        %6329 = vmatprep.subr.bf16.mxu0 0
        %6330 = vmatpush1.bf16.msra.mxu0 %v6084
        %6331 = vmatprep.subr.bf16.mxu0 0
        %6332 = vmatpush1.bf16.msra.mxu0 %v6083
        %6333 = vmatprep.subr.bf16.mxu0 0
        %6334 = vmatpush1.bf16.msra.mxu0 %v6082
        %6335 = vmatprep.subr.bf16.mxu0 0
        %6336 = vmatpush1.bf16.msra.mxu0 %v6081
        %6337 = vmatprep.subr.bf16.mxu0 0
        %6338 = vmatpush2.bf16.msra.mxu0 0
        %6339 = vmatprep.subr.bf16.mxu0 0
        %6340 = vmatpush2.bf16.msra.mxu0 0
        %6341 = vmatprep.subr.bf16.mxu0 0
        %6342 = vmatpush2.bf16.msra.mxu0 0
        %6343 = vmatprep.subr.bf16.mxu0 0
        %6344 = vmatpush2.bf16.msra.mxu0 0
        %6345 = vmatprep.subr.bf16.mxu0 0
        %6346 = vmatpush2.bf16.msra.mxu0 0
        %6347 = vmatprep.subr.bf16.mxu0 0
        %6348 = vmatpush2.bf16.msra.mxu0 0
        %6349 = vmatprep.subr.bf16.mxu0 0
        %6350 = vmatpush2.bf16.msra.mxu0 0
        %6351 = vmatprep.subr.bf16.mxu0 0
        %6352 = vmatpush2.bf16.msra.mxu0 0
        %6353 = vmatprep.mubr.bf16.mxu0 0
        %6354 = vmatmul.mubr.bf16.gmra.mxu0 %v5728
        %v6355 = vpop.f32.mrf.mxu0
        %v6356 = vadd.f32 %v6316, %v6355
        %v6357 = vpop.f32.mrf.mxu0
        %v6358 = vpop.f32.mrf.mxu0
        %v6359 = vpop.f32.mrf.mxu0
        %6360 = vdwg.mxu0
        %v6361 = vmul.f32 %v6356, 0.2
        %v6362 = vmax.f32 %v6356, %v6361
        %v6363 = vmul.f32 %v6362, %v5709
        %v6364 = vadd.f32 %v6363, %v5710
        %v6365 = vld [vmem:[%s10] sm:$0x1]
        %v6366 = vpack.c.bf16 %v6364, %v6364
        %v6367 = vld [vmem:[%s9] sm:$0xf]
        %v6368 = vld [vmem:[%s9 + $0x4] sm:$0xf]
        %v6369 = vld [vmem:[%s9 + $0x8] sm:$0xf]
        %v6370 = vld [vmem:[%s9 + $0xc] sm:$0xf]
        %v6371 = vld [vmem:[%s9 + $0x10] sm:$0xf]
        %v6372 = vld [vmem:[%s9 + $0x14] sm:$0xf]
        %v6373 = vld [vmem:[%s9 + $0x18] sm:$0xf]
        %v6374 = vld [vmem:[%s9 + $0x1c] sm:$0xf]
        %v6375 = vld [vmem:[%s9 + $0x20] sm:$0xf]
        %v6376 = vld [vmem:[%s9 + $0x24] sm:$0xf]
        %v6377 = vld [vmem:[%s9 + $0x28] sm:$0xf]
        %v6378 = vld [vmem:[%s9 + $0x2c] sm:$0xf]
        %v6379 = vld [vmem:[%s9 + $0x30] sm:$0xf]
        %v6380 = vld [vmem:[%s9 + $0x34] sm:$0xf]
        %v6381 = vld [vmem:[%s9 + $0x38] sm:$0xf]
        %v6382 = vld [vmem:[%s9 + $0x3c] sm:$0xf]
        %v6399 = vunpack.c.l.b16 %v6367
        %v6400 = vunpack.c.l.b16 %v6368
        %v6401 = vunpack.c.l.b16 %v6369
        %v6402 = vunpack.c.l.b16 %v6370
        %v6403 = vunpack.c.l.b16 %v6371
        %v6404 = vunpack.c.l.b16 %v6372
        %v6405 = vunpack.c.l.b16 %v6373
        %v6406 = vunpack.c.l.b16 %v6374
        %v6407 = vunpack.c.l.b16 %v6375
        %v6408 = vunpack.c.l.b16 %v6376
        %v6409 = vunpack.c.l.b16 %v6377
        %v6410 = vunpack.c.l.b16 %v6378
        %v6411 = vunpack.c.l.b16 %v6379
        %v6412 = vunpack.c.l.b16 %v6380
        %v6413 = vunpack.c.l.b16 %v6381
        %v6414 = vunpack.c.l.b16 %v6382
        %v6415 = vpack.c.b16 %v6400, %v6399
        %v6416 = vpack.c.b16 %v6402, %v6401
        %v6417 = vpack.c.b16 %v6404, %v6403
        %v6418 = vpack.c.b16 %v6406, %v6405
        %v6419 = vpack.c.b16 %v6408, %v6407
        %v6420 = vpack.c.b16 %v6410, %v6409
        %v6421 = vpack.c.b16 %v6412, %v6411
        %v6422 = vpack.c.b16 %v6414, %v6413
        %6431 = vmatprep.subr.bf16.mxu0 0
        %6432 = vmatpush1.bf16.msra.mxu0 %v6422
        %6433 = vmatprep.subr.bf16.mxu0 0
        %6434 = vmatpush1.bf16.msra.mxu0 %v6421
        %6435 = vmatprep.subr.bf16.mxu0 0
        %6436 = vmatpush1.bf16.msra.mxu0 %v6420
        %6437 = vmatprep.subr.bf16.mxu0 0
        %6438 = vmatpush1.bf16.msra.mxu0 %v6419
        %6439 = vmatprep.subr.bf16.mxu0 0
        %6440 = vmatpush1.bf16.msra.mxu0 %v6418
        %6441 = vmatprep.subr.bf16.mxu0 0
        %6442 = vmatpush1.bf16.msra.mxu0 %v6417
        %6443 = vmatprep.subr.bf16.mxu0 0
        %6444 = vmatpush1.bf16.msra.mxu0 %v6416
        %6445 = vmatprep.subr.bf16.mxu0 0
        %6446 = vmatpush1.bf16.msra.mxu0 %v6415
        %6447 = vmatprep.subr.bf16.mxu0 0
        %6448 = vmatpush2.bf16.msra.mxu0 0
        %6449 = vmatprep.subr.bf16.mxu0 0
        %6450 = vmatpush2.bf16.msra.mxu0 0
        %6451 = vmatprep.subr.bf16.mxu0 0
        %6452 = vmatpush2.bf16.msra.mxu0 0
        %6453 = vmatprep.subr.bf16.mxu0 0
        %6454 = vmatpush2.bf16.msra.mxu0 0
        %6455 = vmatprep.subr.bf16.mxu0 0
        %6456 = vmatpush2.bf16.msra.mxu0 0
        %6457 = vmatprep.subr.bf16.mxu0 0
        %6458 = vmatpush2.bf16.msra.mxu0 0
        %6459 = vmatprep.subr.bf16.mxu0 0
        %6460 = vmatpush2.bf16.msra.mxu0 0
        %6461 = vmatprep.subr.bf16.mxu0 0
        %6462 = vmatpush2.bf16.msra.mxu0 0
        %6463 = vmatprep.mubr.bf16.mxu0 0
        %6464 = vmatmul.mubr.bf16.gmra.mxu0 %v6366
        %v6465 = vpop.f32.mrf.mxu0
        %v6466 = vadd.f32 0.0, %v6465
        %v6467 = vpop.f32.mrf.mxu0
        %v6468 = vpop.f32.mrf.mxu0
        %v6469 = vpop.f32.mrf.mxu0
        %6470 = vdwg.mxu0
        %v6471 = vadd.f32 %v6365, %v6466
        %v6472 = vlaneseq
        %v6473 = vand.u32 %v6472, 127
        %v6474 = vmul.f32 %v6471, 0.5
        %v6475 = vtanh.pop %v6474
        %v6476 = vadd.f32 %v6475, 1.0
        %v6477 = vmul.f32 %v6476, 0.5
        %vm6478 = vcmp.ge.s32.totalorder %v6473, 1
        %vm6479 = vcmp.le.s32.totalorder %v6473, 10
        %vm6480 = vmand %vm6478, %vm6479
        %v6481 = vsel %vm6480, %v6471, -1e+30
        %vm6482 = vcmask 1040384
        %v6483 = vsel %vm6482, %v6481, -inf
        %6484 = vmax.xlane.f32.xlu0 %v6483
        %v6485 = vpop.xlane.xlu0 %6484
        %v6486 = vsub.f32 %v6481, %v6485
        %v6487 = vmul.f32 %v6486, 1.442695
        %v6488 = vpow.pop %v6487
        %v6489 = vsel %vm6480, %v6488, 0.0
        %v6490 = vsel %vm6482, %v6489, 0.0
        %6491 = vadd.xlane.f32.xlu0 %v6490
        %v6492 = vpop.xlane.xlu0 %6491
        %v6493 = vrcp.pop %v6492
        %v6494 = vmul.f32 %v6489, %v6493
        %vm6495 = vcmp.eq.s32.totalorder %v6473, 0
        %v6496 = vsel %vm6495, %v6477, %v6494
        %6497 = vst [vmem:[%s451] sm:$0x1] %v6496
        %p6498 = scmp.lt.s32.totalorder %s25, 1
        %s6499 = scalar_select %p6498, %s25, 1
        %s6500 = scalar_lea.vmem %s11, %s6499
        // Predicated region
        $region85: #{fwd.1} parent=63 // pred_check
          %p6501 = pneg %p279
        $region86: #{fwd.1} parent=63 // pred_check_branch
          %6503 = sbr.rel (%p6501) target = $region88
        $region87: #{fwd.1} parent=63 // pred_region
          _
        $region88: #{fwd.1} parent=63 // pred_fallthru
          _
      $region64: #{fwd.1} parent=5 // pred_fallthru
        _
      %p6504 = scmp.le.s32.totalorder 2, %s20
      // Predicated region
      $region89: #{fwd.1} parent=5 // pred_check
        %p6505 = pneg %p6504
      $region90: #{fwd.1} parent=5 // pred_check_branch
        %6507 = sbr.rel (%p6505) target = $region92
      $region91: #{fwd.1} parent=5 // pred_region
        %s6508 = ssub.s32 %s20, 2
        // Predicated region
        $region93: #{fwd.1} parent=91 // pred_check
          %p6509 = pneg %p285
        $region94: #{fwd.1} parent=91 // pred_check_branch
          %6511 = sbr.rel (%p6509) target = $region96
        $region95: #{fwd.1} parent=91 // pred_region
          %p6512 = scmp.lt.s32.totalorder %s26, 1
          %s6513 = scalar_select %p6512, %s26, 1
          %s6514 = scalar_lea.vmem %s11, %s6513
        $region96: #{fwd.1} parent=91 // pred_fallthru
          _
      $region92: #{fwd.1} parent=5 // pred_fallthru
        _
    $region6: #{fwd.1} parent=1 // loop_footer
      %s24 = sadd.s32 1, %s20
    $region7: #{fwd.1} parent=1 // loop_footer_branch
      %19 = sbr.rel target = $region3
    $region8: #{fwd.1} parent=1 // loop_exit
      _
    %6515 = vsyncpa [#allocation7], 1
    %s6516 = scalar_lea.sflag [#allocation7], 1
    %6517 = vsyncpa %s6516, 1
    %6518 = vsyncpa [#allocation9], 1
    %6519 = vsyncpa [#allocation12], 1

</llo_original>
